<compile_context>
chip_gen: v7x
topology: tpu7x:2x2x1
jax: 0.10.0
libtpu: 0.0.40
codegen_flags: <defaults>
</compile_context>

<pallas_src>
import numpy as np

import jax
import jax.numpy as jnp
from jax.experimental import pallas as pl
from jax.experimental.pallas import tpu as pltpu


# -----------------------------------------------------------------------------
# Fused Pallas kernel: conv1 -> BN -> LReLU -> conv2 -> BN -> LReLU ->
#                      conv3 -> BN -> LReLU -> conv4 -> sigmoid
# -----------------------------------------------------------------------------
def _encoder_kernel(p1_ref, w1_ref, w2_ref, w3_ref, w4_ref,
                    g2_ref, g3_ref, g4_ref, bn_ref, o_ref):
    f32, bf16 = jnp.float32, jnp.bfloat16
    n = o_ref.shape[0]                      # static batch size

    def bn_lrelu(y, layer):
        # training-mode BatchNorm2d (batch stats, biased var, eps=1e-5) + LeakyReLU(0.2)
        m, c = y.shape
        gamma = bn_ref[2 * layer:2 * layer + 1, 0:c]          # [1, c]
        beta = bn_ref[2 * layer + 1:2 * layer + 2, 0:c]       # [1, c]
        inv_m = 1.0 / m
        mean = jnp.sum(y, axis=0, keepdims=True) * inv_m       # one pass:
        mean_sq = jnp.sum(y * y, axis=0, keepdims=True) * inv_m  # sum & sum-of-squares
        var = mean_sq - mean * mean
        y_hat = (y - mean) * (jax.lax.rsqrt(var + 1e-5) * gamma) + beta
        return jnp.where(y_hat > 0, y_hat, 0.2 * y_hat)

    def conv_block(y, g_ref, w_ref):
        # y: [n*hw_in, cin] f32.  Per sample: gather per tap (bf16 0/1 matmul), concat the
        # taps along lanes into an im2col block, then ONE weight matmul (K = k*k*cin).
        n_taps, hw_out, hw_in = g_ref.shape
        y_bf = y.astype(bf16)
        outs = []
        for b in range(n):
            yb = y_bf[b * hw_in:(b + 1) * hw_in, :]             # [hw_in, cin] bf16
            pieces = [jnp.dot(g_ref[t], yb, preferred_element_type=f32)
                      for t in range(n_taps)]                   # each [hw_out, cin]
            patches = jnp.concatenate(pieces, axis=1).astype(bf16)  # [hw_out, n_taps*cin]
            outs.append(jnp.dot(patches, w_ref[...],
                                preferred_element_type=f32))    # [hw_out, cout]
        return jnp.concatenate(outs, axis=0) if n > 1 else outs[0]

    # layer 1: Conv(nc->ndf, 4, 2, 1) via pre-built im2col patches (one matmul, K=16*nc)
    y = jnp.dot(p1_ref[...], w1_ref[...], preferred_element_type=f32)   # [n*256, ndf]
    y = bn_lrelu(y, 0)
    # layer 2: Conv(ndf->2ndf, 4, 2, 1)          K = 16*ndf  = 128
    y = bn_lrelu(conv_block(y, g2_ref, w2_ref), 1)
    # layer 3: Conv(2ndf->4ndf, 4, 2, 1)         K = 16*2ndf = 256
    y = bn_lrelu(conv_block(y, g3_ref, w3_ref), 2)
    # layer 4: Conv(4ndf->nz, 3, 4, 0)           K = 9*4ndf  = 288, then Sigmoid
    y = conv_block(y, g4_ref, w4_ref)                                   # [n, nz]
    o_ref[...] = 1.0 / (1.0 + jnp.exp(-y))


def _full_spec(shape):
    nd = len(shape)
    return pl.BlockSpec(shape, lambda i, _nd=nd: (0,) * _nd)


# -----------------------------------------------------------------------------
# Host-side constant builders (run once, outside jit) — PER-SAMPLE gather matrices
# -----------------------------------------------------------------------------
def _gather_mats(hi, wi, k, s, p):
    """0/1 gather matrices, one per filter tap: [k*k, ho*wo, hi*wi] (zero rows = padding)."""
    ho = (hi + 2 * p - k) // s + 1
    wo = (wi + 2 * p - k) // s + 1
    g = np.zeros((k * k, ho * wo, hi * wi), np.float32)
    for oh in range(ho):
        for ow in range(wo):
            mo = oh * wo + ow
            for i in range(k):
                for j in range(k):
                    h = s * oh + i - p
                    w = s * ow + j - p
                    if 0 <= h < hi and 0 <= w < wi:
                        g[i * k + j, mo, h * wi + w] = 1.0
    return g


def build_encoder_consts():
    # spatial sizes implied by the module: 32 -> 16 -> 8 -> 4 -> 1 (per-sample, batch-free)
    return {
        "g2": jnp.asarray(_gather_mats(16, 16, 4, 2, 1), jnp.bfloat16),  # [16, 64, 256]
        "g3": jnp.asarray(_gather_mats(8, 8, 4, 2, 1), jnp.bfloat16),    # [16, 16, 64]
        "g4": jnp.asarray(_gather_mats(4, 4, 3, 4, 0), jnp.bfloat16),    # [9, 1, 16]
    }


def init_encoder_params(key, nc, ndf, nz):
    """DCGAN-style N(0, 0.02) conv weights (bf16 for the MXU); BN gamma=1, beta=0."""
    def conv_w(k, shape):
        return 0.02 * jax.random.normal(k, shape, jnp.float32)

    k1, k2, k3, k4 = jax.random.split(key, 4)
    bf16 = jnp.bfloat16
    # w1 row ordering (c*16 + i*4 + j) matches conv_general_dilated_patches output channels;
    # w2/w3/w4 row ordering (t*Cin + c) matches the in-kernel lane-concat of gathered taps.
    w1 = conv_w(k1, (nc, 4, 4, ndf)).reshape(16 * nc, ndf)
    w2 = conv_w(k2, (4, 4, ndf, 2 * ndf)).reshape(16 * ndf, 2 * ndf)
    w3 = conv_w(k3, (4, 4, 2 * ndf, 4 * ndf)).reshape(16 * 2 * ndf, 4 * ndf)
    w4 = conv_w(k4, (3, 3, 4 * ndf, nz)).reshape(9 * 4 * ndf, nz)
    bn = np.zeros((6, 128), np.float32)   # rows: g1,b1,g2,b2,g3,b3 (lane-padded)
    bn[0, :ndf] = 1.0
    bn[2, :2 * ndf] = 1.0
    bn[4, :4 * ndf] = 1.0
    return {"w1": w1.astype(bf16), "w2": w2.astype(bf16),
            "w3": w3.astype(bf16), "w4": w4.astype(bf16),
            "bn": jnp.asarray(bn)}


# -----------------------------------------------------------------------------
# Wrapper: layer-1 im2col is one fused HLO; everything else lives in the kernel
# -----------------------------------------------------------------------------
@jax.jit
def encoder_forward(params, consts, x_nchw):
    """x_nchw: [N, nc, 32, 32] -> [N, nz, 1, 1] (matches PyTorch Encoder.forward)."""
    n = x_nchw.shape[0]
    nz = params["w4"].shape[-1]

    # im2col for layer 1: out[..., c*16 + i*4 + j] = x_pad[n, c, 2*oh+i-1, 2*ow+j-1]
    patches = jax.lax.conv_general_dilated_patches(
        x_nchw.astype(jnp.float32), (4, 4), (2, 2), ((1, 1), (1, 1)),
        dimension_numbers=("NCHW", "OIHW", "NHWC"))           # [n, 16, 16, 16*nc]
    p1 = patches.reshape(n * 16 * 16, -1).astype(jnp.bfloat16)  # [n*256, 16*nc]

    operands = (p1, params["w1"], params["w2"], params["w3"], params["w4"],
                consts["g2"], consts["g3"], consts["g4"], params["bn"])
    out = pl.pallas_call(
        _encoder_kernel,
        grid=(1,),
        in_specs=[_full_spec(a.shape) for a in operands],
        out_specs=_full_spec((n, nz)),
        out_shape=jax.ShapeDtypeStruct((n, nz), jnp.float32),
        compiler_params=pltpu.CompilerParams(
            dimension_semantics=("arbitrary",)),
    )(*operands)
    return out.reshape(n, nz, 1, 1)


# -----------------------------------------------------------------------------
# Main
# -----------------------------------------------------------------------------
if __name__ == "__main__":
    # cfg = {'nc': 4, 'ndf': 8, 'nz': 16}; spatial must be 32x32 so the final
    # 3x3/stride-4 conv sees a 4x4 map and yields a 1x1 output.
    nc, ndf, nz = 4, 8, 16
    N, H, W = 2, 32, 32

    key = jax.random.PRNGKey(0)
    k_par, k_inp = jax.random.split(key)
    params = init_encoder_params(k_par, nc, ndf, nz)
    consts = build_encoder_consts()
    x = jax.random.normal(k_inp, (N, nc, H, W), jnp.float32)

    out = jax.block_until_ready(encoder_forward(params, consts, x))
    assert out.shape == (N, nz, 1, 1), out.shape
    assert bool(jnp.all(jnp.isfinite(out)))
    print("KERNEL_OK")
</pallas_src>

<mosaic_0001>
module attributes {stable_mosaic.version = 11 : i64} {
  func.func @_encoder_kernel(%arg0: i32, %arg1: memref<512x64xbf16, #tpu.memory_space<vmem>>, %arg2: memref<64x8xbf16, #tpu.memory_space<vmem>>, %arg3: memref<128x16xbf16, #tpu.memory_space<vmem>>, %arg4: memref<256x32xbf16, #tpu.memory_space<vmem>>, %arg5: memref<288x16xbf16, #tpu.memory_space<vmem>>, %arg6: memref<16x64x256xbf16, #tpu.memory_space<vmem>>, %arg7: memref<16x16x64xbf16, #tpu.memory_space<vmem>>, %arg8: memref<9x1x16xbf16, #tpu.memory_space<vmem>>, %arg9: memref<6x128xf32, #tpu.memory_space<vmem>>, %arg10: memref<2x16xf32, #tpu.memory_space<vmem>>) attributes {dimension_semantics = [#tpu.dimension_semantics<arbitrary>], iteration_bounds = array<i64: 1>, scalar_prefetch = 0 : i64, scratch_operands = 0 : i64, tpu.core_type = #tpu.core_type<tc>, window_params = [{pipeline_mode = #tpu.pipeline_mode<synchronous>, transform_indices = @transform_0, window_bounds = array<i64: 512, 64>}, {pipeline_mode = #tpu.pipeline_mode<synchronous>, transform_indices = @transform_1, window_bounds = array<i64: 64, 8>}, {pipeline_mode = #tpu.pipeline_mode<synchronous>, transform_indices = @transform_2, window_bounds = array<i64: 128, 16>}, {pipeline_mode = #tpu.pipeline_mode<synchronous>, transform_indices = @transform_3, window_bounds = array<i64: 256, 32>}, {pipeline_mode = #tpu.pipeline_mode<synchronous>, transform_indices = @transform_4, window_bounds = array<i64: 288, 16>}, {pipeline_mode = #tpu.pipeline_mode<synchronous>, transform_indices = @transform_5, window_bounds = array<i64: 16, 64, 256>}, {pipeline_mode = #tpu.pipeline_mode<synchronous>, transform_indices = @transform_6, window_bounds = array<i64: 16, 16, 64>}, {pipeline_mode = #tpu.pipeline_mode<synchronous>, transform_indices = @transform_7, window_bounds = array<i64: 9, 1, 16>}, {pipeline_mode = #tpu.pipeline_mode<synchronous>, transform_indices = @transform_8, window_bounds = array<i64: 6, 128>}, {pipeline_mode = #tpu.pipeline_mode<synchronous>, transform_indices = @transform_9, window_bounds = array<i64: 2, 16>}]} {
    %c0 = arith.constant 0 : index
    %c0_0 = arith.constant 0 : index
    %0 = vector.load %arg1[%c0, %c0_0] : memref<512x64xbf16, #tpu.memory_space<vmem>>, vector<512x64xbf16>
    %c0_1 = arith.constant 0 : index
    %c0_2 = arith.constant 0 : index
    %1 = vector.load %arg2[%c0_1, %c0_2] : memref<64x8xbf16, #tpu.memory_space<vmem>>, vector<64x8xbf16>
    %cst = arith.constant dense<0.000000e+00> : vector<512x8xf32>
    %2 = tpu.matmul %0, %1, %cst {dimension_numbers = #tpu.dot_dimension_numbers<[1], [0], [0], [1], [0, 0, 1, 1], [], []>} : vector<512x64xbf16>, vector<64x8xbf16>, vector<512x8xf32> -> vector<512x8xf32>
    %c0_3 = arith.constant 0 : index
    %c0_4 = arith.constant 0 : index
    %3 = vector.load %arg9[%c0_3, %c0_4] : memref<6x128xf32, #tpu.memory_space<vmem>>, vector<1x8xf32>
    %c1 = arith.constant 1 : index
    %c0_5 = arith.constant 0 : index
    %4 = vector.load %arg9[%c1, %c0_5] : memref<6x128xf32, #tpu.memory_space<vmem>>, vector<1x8xf32>
    %cst_6 = arith.constant dense<0.000000e+00> : vector<8xf32>
    %5 = vector.multi_reduction <add>, %2, %cst_6 [0] : vector<512x8xf32> to vector<8xf32>
    %6 = vector.shape_cast %5 : vector<8xf32> to vector<1x8xf32>
    %cst_7 = arith.constant 0.001953125 : f32
    %7 = vector.broadcast %cst_7 : f32 to vector<1x8xf32>
    %8 = arith.mulf %6, %7 : vector<1x8xf32>
    %9 = arith.mulf %2, %2 : vector<512x8xf32>
    %cst_8 = arith.constant dense<0.000000e+00> : vector<8xf32>
    %10 = vector.multi_reduction <add>, %9, %cst_8 [0] : vector<512x8xf32> to vector<8xf32>
    %11 = vector.shape_cast %10 : vector<8xf32> to vector<1x8xf32>
    %cst_9 = arith.constant 0.001953125 : f32
    %12 = vector.broadcast %cst_9 : f32 to vector<1x8xf32>
    %13 = arith.mulf %11, %12 : vector<1x8xf32>
    %14 = arith.mulf %8, %8 : vector<1x8xf32>
    %15 = arith.subf %13, %14 : vector<1x8xf32>
    %16 = vector.broadcast %8 : vector<1x8xf32> to vector<512x8xf32>
    %17 = arith.subf %2, %16 : vector<512x8xf32>
    %cst_10 = arith.constant 9.99999974E-6 : f32
    %18 = vector.broadcast %cst_10 : f32 to vector<1x8xf32>
    %19 = arith.addf %15, %18 : vector<1x8xf32>
    %20 = math.rsqrt %19 : vector<1x8xf32>
    %21 = arith.mulf %20, %3 : vector<1x8xf32>
    %22 = vector.broadcast %21 : vector<1x8xf32> to vector<512x8xf32>
    %23 = arith.mulf %17, %22 : vector<512x8xf32>
    %24 = vector.broadcast %4 : vector<1x8xf32> to vector<512x8xf32>
    %25 = arith.addf %23, %24 : vector<512x8xf32>
    %cst_11 = arith.constant 0.000000e+00 : f32
    %26 = vector.broadcast %cst_11 : f32 to vector<512x8xf32>
    %27 = arith.cmpf ogt, %25, %26 : vector<512x8xf32>
    %cst_12 = arith.constant 2.000000e-01 : f32
    %28 = vector.broadcast %cst_12 : f32 to vector<512x8xf32>
    %29 = arith.mulf %28, %25 : vector<512x8xf32>
    %30 = arith.select %27, %25, %29 : vector<512x8xi1>, vector<512x8xf32>
    %31 = arith.truncf %30 : vector<512x8xf32> to vector<512x8xbf16>
    %32 = vector.extract_strided_slice %31 {offsets = [0, 0], sizes = [256, 8], strides = [1, 1]} : vector<512x8xbf16> to vector<256x8xbf16>
    %c0_13 = arith.constant 0 : index
    %c0_14 = arith.constant 0 : index
    %c0_15 = arith.constant 0 : index
    %33 = vector.load %arg6[%c0_13, %c0_14, %c0_15] : memref<16x64x256xbf16, #tpu.memory_space<vmem>>, vector<1x64x256xbf16>
    %34 = vector.shape_cast %33 : vector<1x64x256xbf16> to vector<64x256xbf16>
    %cst_16 = arith.constant dense<0.000000e+00> : vector<64x8xf32>
    %35 = tpu.matmul %34, %32, %cst_16 {dimension_numbers = #tpu.dot_dimension_numbers<[1], [0], [0], [1], [0, 0, 1, 1], [], []>} : vector<64x256xbf16>, vector<256x8xbf16>, vector<64x8xf32> -> vector<64x8xf32>
    %c1_17 = arith.constant 1 : index
    %c0_18 = arith.constant 0 : index
    %c0_19 = arith.constant 0 : index
    %36 = vector.load %arg6[%c1_17, %c0_18, %c0_19] : memref<16x64x256xbf16, #tpu.memory_space<vmem>>, vector<1x64x256xbf16>
    %37 = vector.shape_cast %36 : vector<1x64x256xbf16> to vector<64x256xbf16>
    %cst_20 = arith.constant dense<0.000000e+00> : vector<64x8xf32>
    %38 = tpu.matmul %37, %32, %cst_20 {dimension_numbers = #tpu.dot_dimension_numbers<[1], [0], [0], [1], [0, 0, 1, 1], [], []>} : vector<64x256xbf16>, vector<256x8xbf16>, vector<64x8xf32> -> vector<64x8xf32>
    %c2 = arith.constant 2 : index
    %c0_21 = arith.constant 0 : index
    %c0_22 = arith.constant 0 : index
    %39 = vector.load %arg6[%c2, %c0_21, %c0_22] : memref<16x64x256xbf16, #tpu.memory_space<vmem>>, vector<1x64x256xbf16>
    %40 = vector.shape_cast %39 : vector<1x64x256xbf16> to vector<64x256xbf16>
    %cst_23 = arith.constant dense<0.000000e+00> : vector<64x8xf32>
    %41 = tpu.matmul %40, %32, %cst_23 {dimension_numbers = #tpu.dot_dimension_numbers<[1], [0], [0], [1], [0, 0, 1, 1], [], []>} : vector<64x256xbf16>, vector<256x8xbf16>, vector<64x8xf32> -> vector<64x8xf32>
    %c3 = arith.constant 3 : index
    %c0_24 = arith.constant 0 : index
    %c0_25 = arith.constant 0 : index
    %42 = vector.load %arg6[%c3, %c0_24, %c0_25] : memref<16x64x256xbf16, #tpu.memory_space<vmem>>, vector<1x64x256xbf16>
    %43 = vector.shape_cast %42 : vector<1x64x256xbf16> to vector<64x256xbf16>
    %cst_26 = arith.constant dense<0.000000e+00> : vector<64x8xf32>
    %44 = tpu.matmul %43, %32, %cst_26 {dimension_numbers = #tpu.dot_dimension_numbers<[1], [0], [0], [1], [0, 0, 1, 1], [], []>} : vector<64x256xbf16>, vector<256x8xbf16>, vector<64x8xf32> -> vector<64x8xf32>
    %c4 = arith.constant 4 : index
    %c0_27 = arith.constant 0 : index
    %c0_28 = arith.constant 0 : index
    %45 = vector.load %arg6[%c4, %c0_27, %c0_28] : memref<16x64x256xbf16, #tpu.memory_space<vmem>>, vector<1x64x256xbf16>
    %46 = vector.shape_cast %45 : vector<1x64x256xbf16> to vector<64x256xbf16>
    %cst_29 = arith.constant dense<0.000000e+00> : vector<64x8xf32>
    %47 = tpu.matmul %46, %32, %cst_29 {dimension_numbers = #tpu.dot_dimension_numbers<[1], [0], [0], [1], [0, 0, 1, 1], [], []>} : vector<64x256xbf16>, vector<256x8xbf16>, vector<64x8xf32> -> vector<64x8xf32>
    %c5 = arith.constant 5 : index
    %c0_30 = arith.constant 0 : index
    %c0_31 = arith.constant 0 : index
    %48 = vector.load %arg6[%c5, %c0_30, %c0_31] : memref<16x64x256xbf16, #tpu.memory_space<vmem>>, vector<1x64x256xbf16>
    %49 = vector.shape_cast %48 : vector<1x64x256xbf16> to vector<64x256xbf16>
    %cst_32 = arith.constant dense<0.000000e+00> : vector<64x8xf32>
    %50 = tpu.matmul %49, %32, %cst_32 {dimension_numbers = #tpu.dot_dimension_numbers<[1], [0], [0], [1], [0, 0, 1, 1], [], []>} : vector<64x256xbf16>, vector<256x8xbf16>, vector<64x8xf32> -> vector<64x8xf32>
    %c6 = arith.constant 6 : index
    %c0_33 = arith.constant 0 : index
    %c0_34 = arith.constant 0 : index
    %51 = vector.load %arg6[%c6, %c0_33, %c0_34] : memref<16x64x256xbf16, #tpu.memory_space<vmem>>, vector<1x64x256xbf16>
    %52 = vector.shape_cast %51 : vector<1x64x256xbf16> to vector<64x256xbf16>
    %cst_35 = arith.constant dense<0.000000e+00> : vector<64x8xf32>
    %53 = tpu.matmul %52, %32, %cst_35 {dimension_numbers = #tpu.dot_dimension_numbers<[1], [0], [0], [1], [0, 0, 1, 1], [], []>} : vector<64x256xbf16>, vector<256x8xbf16>, vector<64x8xf32> -> vector<64x8xf32>
    %c7 = arith.constant 7 : index
    %c0_36 = arith.constant 0 : index
    %c0_37 = arith.constant 0 : index
    %54 = vector.load %arg6[%c7, %c0_36, %c0_37] : memref<16x64x256xbf16, #tpu.memory_space<vmem>>, vector<1x64x256xbf16>
    %55 = vector.shape_cast %54 : vector<1x64x256xbf16> to vector<64x256xbf16>
    %cst_38 = arith.constant dense<0.000000e+00> : vector<64x8xf32>
    %56 = tpu.matmul %55, %32, %cst_38 {dimension_numbers = #tpu.dot_dimension_numbers<[1], [0], [0], [1], [0, 0, 1, 1], [], []>} : vector<64x256xbf16>, vector<256x8xbf16>, vector<64x8xf32> -> vector<64x8xf32>
    %c8 = arith.constant 8 : index
    %c0_39 = arith.constant 0 : index
    %c0_40 = arith.constant 0 : index
    %57 = vector.load %arg6[%c8, %c0_39, %c0_40] : memref<16x64x256xbf16, #tpu.memory_space<vmem>>, vector<1x64x256xbf16>
    %58 = vector.shape_cast %57 : vector<1x64x256xbf16> to vector<64x256xbf16>
    %cst_41 = arith.constant dense<0.000000e+00> : vector<64x8xf32>
    %59 = tpu.matmul %58, %32, %cst_41 {dimension_numbers = #tpu.dot_dimension_numbers<[1], [0], [0], [1], [0, 0, 1, 1], [], []>} : vector<64x256xbf16>, vector<256x8xbf16>, vector<64x8xf32> -> vector<64x8xf32>
    %c9 = arith.constant 9 : index
    %c0_42 = arith.constant 0 : index
    %c0_43 = arith.constant 0 : index
    %60 = vector.load %arg6[%c9, %c0_42, %c0_43] : memref<16x64x256xbf16, #tpu.memory_space<vmem>>, vector<1x64x256xbf16>
    %61 = vector.shape_cast %60 : vector<1x64x256xbf16> to vector<64x256xbf16>
    %cst_44 = arith.constant dense<0.000000e+00> : vector<64x8xf32>
    %62 = tpu.matmul %61, %32, %cst_44 {dimension_numbers = #tpu.dot_dimension_numbers<[1], [0], [0], [1], [0, 0, 1, 1], [], []>} : vector<64x256xbf16>, vector<256x8xbf16>, vector<64x8xf32> -> vector<64x8xf32>
    %c10 = arith.constant 10 : index
    %c0_45 = arith.constant 0 : index
    %c0_46 = arith.constant 0 : index
    %63 = vector.load %arg6[%c10, %c0_45, %c0_46] : memref<16x64x256xbf16, #tpu.memory_space<vmem>>, vector<1x64x256xbf16>
    %64 = vector.shape_cast %63 : vector<1x64x256xbf16> to vector<64x256xbf16>
    %cst_47 = arith.constant dense<0.000000e+00> : vector<64x8xf32>
    %65 = tpu.matmul %64, %32, %cst_47 {dimension_numbers = #tpu.dot_dimension_numbers<[1], [0], [0], [1], [0, 0, 1, 1], [], []>} : vector<64x256xbf16>, vector<256x8xbf16>, vector<64x8xf32> -> vector<64x8xf32>
    %c11 = arith.constant 11 : index
    %c0_48 = arith.constant 0 : index
    %c0_49 = arith.constant 0 : index
    %66 = vector.load %arg6[%c11, %c0_48, %c0_49] : memref<16x64x256xbf16, #tpu.memory_space<vmem>>, vector<1x64x256xbf16>
    %67 = vector.shape_cast %66 : vector<1x64x256xbf16> to vector<64x256xbf16>
    %cst_50 = arith.constant dense<0.000000e+00> : vector<64x8xf32>
    %68 = tpu.matmul %67, %32, %cst_50 {dimension_numbers = #tpu.dot_dimension_numbers<[1], [0], [0], [1], [0, 0, 1, 1], [], []>} : vector<64x256xbf16>, vector<256x8xbf16>, vector<64x8xf32> -> vector<64x8xf32>
    %c12 = arith.constant 12 : index
    %c0_51 = arith.constant 0 : index
    %c0_52 = arith.constant 0 : index
    %69 = vector.load %arg6[%c12, %c0_51, %c0_52] : memref<16x64x256xbf16, #tpu.memory_space<vmem>>, vector<1x64x256xbf16>
    %70 = vector.shape_cast %69 : vector<1x64x256xbf16> to vector<64x256xbf16>
    %cst_53 = arith.constant dense<0.000000e+00> : vector<64x8xf32>
    %71 = tpu.matmul %70, %32, %cst_53 {dimension_numbers = #tpu.dot_dimension_numbers<[1], [0], [0], [1], [0, 0, 1, 1], [], []>} : vector<64x256xbf16>, vector<256x8xbf16>, vector<64x8xf32> -> vector<64x8xf32>
    %c13 = arith.constant 13 : index
    %c0_54 = arith.constant 0 : index
    %c0_55 = arith.constant 0 : index
    %72 = vector.load %arg6[%c13, %c0_54, %c0_55] : memref<16x64x256xbf16, #tpu.memory_space<vmem>>, vector<1x64x256xbf16>
    %73 = vector.shape_cast %72 : vector<1x64x256xbf16> to vector<64x256xbf16>
    %cst_56 = arith.constant dense<0.000000e+00> : vector<64x8xf32>
    %74 = tpu.matmul %73, %32, %cst_56 {dimension_numbers = #tpu.dot_dimension_numbers<[1], [0], [0], [1], [0, 0, 1, 1], [], []>} : vector<64x256xbf16>, vector<256x8xbf16>, vector<64x8xf32> -> vector<64x8xf32>
    %c14 = arith.constant 14 : index
    %c0_57 = arith.constant 0 : index
    %c0_58 = arith.constant 0 : index
    %75 = vector.load %arg6[%c14, %c0_57, %c0_58] : memref<16x64x256xbf16, #tpu.memory_space<vmem>>, vector<1x64x256xbf16>
    %76 = vector.shape_cast %75 : vector<1x64x256xbf16> to vector<64x256xbf16>
    %cst_59 = arith.constant dense<0.000000e+00> : vector<64x8xf32>
    %77 = tpu.matmul %76, %32, %cst_59 {dimension_numbers = #tpu.dot_dimension_numbers<[1], [0], [0], [1], [0, 0, 1, 1], [], []>} : vector<64x256xbf16>, vector<256x8xbf16>, vector<64x8xf32> -> vector<64x8xf32>
    %c15 = arith.constant 15 : index
    %c0_60 = arith.constant 0 : index
    %c0_61 = arith.constant 0 : index
    %78 = vector.load %arg6[%c15, %c0_60, %c0_61] : memref<16x64x256xbf16, #tpu.memory_space<vmem>>, vector<1x64x256xbf16>
    %79 = vector.shape_cast %78 : vector<1x64x256xbf16> to vector<64x256xbf16>
    %cst_62 = arith.constant dense<0.000000e+00> : vector<64x8xf32>
    %80 = tpu.matmul %79, %32, %cst_62 {dimension_numbers = #tpu.dot_dimension_numbers<[1], [0], [0], [1], [0, 0, 1, 1], [], []>} : vector<64x256xbf16>, vector<256x8xbf16>, vector<64x8xf32> -> vector<64x8xf32>
    %81 = tpu.concatenate %35, %38, %41, %44, %47, %50, %53, %56, %59, %62, %65, %68, %71, %74, %77, %80 in 1 : vector<64x8xf32>, vector<64x8xf32>, vector<64x8xf32>, vector<64x8xf32>, vector<64x8xf32>, vector<64x8xf32>, vector<64x8xf32>, vector<64x8xf32>, vector<64x8xf32>, vector<64x8xf32>, vector<64x8xf32>, vector<64x8xf32>, vector<64x8xf32>, vector<64x8xf32>, vector<64x8xf32>, vector<64x8xf32> -> vector<64x128xf32>
    %82 = arith.truncf %81 : vector<64x128xf32> to vector<64x128xbf16>
    %c0_63 = arith.constant 0 : index
    %c0_64 = arith.constant 0 : index
    %83 = vector.load %arg3[%c0_63, %c0_64] : memref<128x16xbf16, #tpu.memory_space<vmem>>, vector<128x16xbf16>
    %cst_65 = arith.constant dense<0.000000e+00> : vector<64x16xf32>
    %84 = tpu.matmul %82, %83, %cst_65 {dimension_numbers = #tpu.dot_dimension_numbers<[1], [0], [0], [1], [0, 0, 1, 1], [], []>} : vector<64x128xbf16>, vector<128x16xbf16>, vector<64x16xf32> -> vector<64x16xf32>
    %85 = vector.extract_strided_slice %31 {offsets = [256, 0], sizes = [256, 8], strides = [1, 1]} : vector<512x8xbf16> to vector<256x8xbf16>
    %c0_66 = arith.constant 0 : index
    %c0_67 = arith.constant 0 : index
    %c0_68 = arith.constant 0 : index
    %86 = vector.load %arg6[%c0_66, %c0_67, %c0_68] : memref<16x64x256xbf16, #tpu.memory_space<vmem>>, vector<1x64x256xbf16>
    %87 = vector.shape_cast %86 : vector<1x64x256xbf16> to vector<64x256xbf16>
    %cst_69 = arith.constant dense<0.000000e+00> : vector<64x8xf32>
    %88 = tpu.matmul %87, %85, %cst_69 {dimension_numbers = #tpu.dot_dimension_numbers<[1], [0], [0], [1], [0, 0, 1, 1], [], []>} : vector<64x256xbf16>, vector<256x8xbf16>, vector<64x8xf32> -> vector<64x8xf32>
    %c1_70 = arith.constant 1 : index
    %c0_71 = arith.constant 0 : index
    %c0_72 = arith.constant 0 : index
    %89 = vector.load %arg6[%c1_70, %c0_71, %c0_72] : memref<16x64x256xbf16, #tpu.memory_space<vmem>>, vector<1x64x256xbf16>
    %90 = vector.shape_cast %89 : vector<1x64x256xbf16> to vector<64x256xbf16>
    %cst_73 = arith.constant dense<0.000000e+00> : vector<64x8xf32>
    %91 = tpu.matmul %90, %85, %cst_73 {dimension_numbers = #tpu.dot_dimension_numbers<[1], [0], [0], [1], [0, 0, 1, 1], [], []>} : vector<64x256xbf16>, vector<256x8xbf16>, vector<64x8xf32> -> vector<64x8xf32>
    %c2_74 = arith.constant 2 : index
    %c0_75 = arith.constant 0 : index
    %c0_76 = arith.constant 0 : index
    %92 = vector.load %arg6[%c2_74, %c0_75, %c0_76] : memref<16x64x256xbf16, #tpu.memory_space<vmem>>, vector<1x64x256xbf16>
    %93 = vector.shape_cast %92 : vector<1x64x256xbf16> to vector<64x256xbf16>
    %cst_77 = arith.constant dense<0.000000e+00> : vector<64x8xf32>
    %94 = tpu.matmul %93, %85, %cst_77 {dimension_numbers = #tpu.dot_dimension_numbers<[1], [0], [0], [1], [0, 0, 1, 1], [], []>} : vector<64x256xbf16>, vector<256x8xbf16>, vector<64x8xf32> -> vector<64x8xf32>
    %c3_78 = arith.constant 3 : index
    %c0_79 = arith.constant 0 : index
    %c0_80 = arith.constant 0 : index
    %95 = vector.load %arg6[%c3_78, %c0_79, %c0_80] : memref<16x64x256xbf16, #tpu.memory_space<vmem>>, vector<1x64x256xbf16>
    %96 = vector.shape_cast %95 : vector<1x64x256xbf16> to vector<64x256xbf16>
    %cst_81 = arith.constant dense<0.000000e+00> : vector<64x8xf32>
    %97 = tpu.matmul %96, %85, %cst_81 {dimension_numbers = #tpu.dot_dimension_numbers<[1], [0], [0], [1], [0, 0, 1, 1], [], []>} : vector<64x256xbf16>, vector<256x8xbf16>, vector<64x8xf32> -> vector<64x8xf32>
    %c4_82 = arith.constant 4 : index
    %c0_83 = arith.constant 0 : index
    %c0_84 = arith.constant 0 : index
    %98 = vector.load %arg6[%c4_82, %c0_83, %c0_84] : memref<16x64x256xbf16, #tpu.memory_space<vmem>>, vector<1x64x256xbf16>
    %99 = vector.shape_cast %98 : vector<1x64x256xbf16> to vector<64x256xbf16>
    %cst_85 = arith.constant dense<0.000000e+00> : vector<64x8xf32>
    %100 = tpu.matmul %99, %85, %cst_85 {dimension_numbers = #tpu.dot_dimension_numbers<[1], [0], [0], [1], [0, 0, 1, 1], [], []>} : vector<64x256xbf16>, vector<256x8xbf16>, vector<64x8xf32> -> vector<64x8xf32>
    %c5_86 = arith.constant 5 : index
    %c0_87 = arith.constant 0 : index
    %c0_88 = arith.constant 0 : index
    %101 = vector.load %arg6[%c5_86, %c0_87, %c0_88] : memref<16x64x256xbf16, #tpu.memory_space<vmem>>, vector<1x64x256xbf16>
    %102 = vector.shape_cast %101 : vector<1x64x256xbf16> to vector<64x256xbf16>
    %cst_89 = arith.constant dense<0.000000e+00> : vector<64x8xf32>
    %103 = tpu.matmul %102, %85, %cst_89 {dimension_numbers = #tpu.dot_dimension_numbers<[1], [0], [0], [1], [0, 0, 1, 1], [], []>} : vector<64x256xbf16>, vector<256x8xbf16>, vector<64x8xf32> -> vector<64x8xf32>
    %c6_90 = arith.constant 6 : index
    %c0_91 = arith.constant 0 : index
    %c0_92 = arith.constant 0 : index
    %104 = vector.load %arg6[%c6_90, %c0_91, %c0_92] : memref<16x64x256xbf16, #tpu.memory_space<vmem>>, vector<1x64x256xbf16>
    %105 = vector.shape_cast %104 : vector<1x64x256xbf16> to vector<64x256xbf16>
    %cst_93 = arith.constant dense<0.000000e+00> : vector<64x8xf32>
    %106 = tpu.matmul %105, %85, %cst_93 {dimension_numbers = #tpu.dot_dimension_numbers<[1], [0], [0], [1], [0, 0, 1, 1], [], []>} : vector<64x256xbf16>, vector<256x8xbf16>, vector<64x8xf32> -> vector<64x8xf32>
    %c7_94 = arith.constant 7 : index
    %c0_95 = arith.constant 0 : index
    %c0_96 = arith.constant 0 : index
    %107 = vector.load %arg6[%c7_94, %c0_95, %c0_96] : memref<16x64x256xbf16, #tpu.memory_space<vmem>>, vector<1x64x256xbf16>
    %108 = vector.shape_cast %107 : vector<1x64x256xbf16> to vector<64x256xbf16>
    %cst_97 = arith.constant dense<0.000000e+00> : vector<64x8xf32>
    %109 = tpu.matmul %108, %85, %cst_97 {dimension_numbers = #tpu.dot_dimension_numbers<[1], [0], [0], [1], [0, 0, 1, 1], [], []>} : vector<64x256xbf16>, vector<256x8xbf16>, vector<64x8xf32> -> vector<64x8xf32>
    %c8_98 = arith.constant 8 : index
    %c0_99 = arith.constant 0 : index
    %c0_100 = arith.constant 0 : index
    %110 = vector.load %arg6[%c8_98, %c0_99, %c0_100] : memref<16x64x256xbf16, #tpu.memory_space<vmem>>, vector<1x64x256xbf16>
    %111 = vector.shape_cast %110 : vector<1x64x256xbf16> to vector<64x256xbf16>
    %cst_101 = arith.constant dense<0.000000e+00> : vector<64x8xf32>
    %112 = tpu.matmul %111, %85, %cst_101 {dimension_numbers = #tpu.dot_dimension_numbers<[1], [0], [0], [1], [0, 0, 1, 1], [], []>} : vector<64x256xbf16>, vector<256x8xbf16>, vector<64x8xf32> -> vector<64x8xf32>
    %c9_102 = arith.constant 9 : index
    %c0_103 = arith.constant 0 : index
    %c0_104 = arith.constant 0 : index
    %113 = vector.load %arg6[%c9_102, %c0_103, %c0_104] : memref<16x64x256xbf16, #tpu.memory_space<vmem>>, vector<1x64x256xbf16>
    %114 = vector.shape_cast %113 : vector<1x64x256xbf16> to vector<64x256xbf16>
    %cst_105 = arith.constant dense<0.000000e+00> : vector<64x8xf32>
    %115 = tpu.matmul %114, %85, %cst_105 {dimension_numbers = #tpu.dot_dimension_numbers<[1], [0], [0], [1], [0, 0, 1, 1], [], []>} : vector<64x256xbf16>, vector<256x8xbf16>, vector<64x8xf32> -> vector<64x8xf32>
    %c10_106 = arith.constant 10 : index
    %c0_107 = arith.constant 0 : index
    %c0_108 = arith.constant 0 : index
    %116 = vector.load %arg6[%c10_106, %c0_107, %c0_108] : memref<16x64x256xbf16, #tpu.memory_space<vmem>>, vector<1x64x256xbf16>
    %117 = vector.shape_cast %116 : vector<1x64x256xbf16> to vector<64x256xbf16>
    %cst_109 = arith.constant dense<0.000000e+00> : vector<64x8xf32>
    %118 = tpu.matmul %117, %85, %cst_109 {dimension_numbers = #tpu.dot_dimension_numbers<[1], [0], [0], [1], [0, 0, 1, 1], [], []>} : vector<64x256xbf16>, vector<256x8xbf16>, vector<64x8xf32> -> vector<64x8xf32>
    %c11_110 = arith.constant 11 : index
    %c0_111 = arith.constant 0 : index
    %c0_112 = arith.constant 0 : index
    %119 = vector.load %arg6[%c11_110, %c0_111, %c0_112] : memref<16x64x256xbf16, #tpu.memory_space<vmem>>, vector<1x64x256xbf16>
    %120 = vector.shape_cast %119 : vector<1x64x256xbf16> to vector<64x256xbf16>
    %cst_113 = arith.constant dense<0.000000e+00> : vector<64x8xf32>
    %121 = tpu.matmul %120, %85, %cst_113 {dimension_numbers = #tpu.dot_dimension_numbers<[1], [0], [0], [1], [0, 0, 1, 1], [], []>} : vector<64x256xbf16>, vector<256x8xbf16>, vector<64x8xf32> -> vector<64x8xf32>
    %c12_114 = arith.constant 12 : index
    %c0_115 = arith.constant 0 : index
    %c0_116 = arith.constant 0 : index
    %122 = vector.load %arg6[%c12_114, %c0_115, %c0_116] : memref<16x64x256xbf16, #tpu.memory_space<vmem>>, vector<1x64x256xbf16>
    %123 = vector.shape_cast %122 : vector<1x64x256xbf16> to vector<64x256xbf16>
    %cst_117 = arith.constant dense<0.000000e+00> : vector<64x8xf32>
    %124 = tpu.matmul %123, %85, %cst_117 {dimension_numbers = #tpu.dot_dimension_numbers<[1], [0], [0], [1], [0, 0, 1, 1], [], []>} : vector<64x256xbf16>, vector<256x8xbf16>, vector<64x8xf32> -> vector<64x8xf32>
    %c13_118 = arith.constant 13 : index
    %c0_119 = arith.constant 0 : index
    %c0_120 = arith.constant 0 : index
    %125 = vector.load %arg6[%c13_118, %c0_119, %c0_120] : memref<16x64x256xbf16, #tpu.memory_space<vmem>>, vector<1x64x256xbf16>
    %126 = vector.shape_cast %125 : vector<1x64x256xbf16> to vector<64x256xbf16>
    %cst_121 = arith.constant dense<0.000000e+00> : vector<64x8xf32>
    %127 = tpu.matmul %126, %85, %cst_121 {dimension_numbers = #tpu.dot_dimension_numbers<[1], [0], [0], [1], [0, 0, 1, 1], [], []>} : vector<64x256xbf16>, vector<256x8xbf16>, vector<64x8xf32> -> vector<64x8xf32>
    %c14_122 = arith.constant 14 : index
    %c0_123 = arith.constant 0 : index
    %c0_124 = arith.constant 0 : index
    %128 = vector.load %arg6[%c14_122, %c0_123, %c0_124] : memref<16x64x256xbf16, #tpu.memory_space<vmem>>, vector<1x64x256xbf16>
    %129 = vector.shape_cast %128 : vector<1x64x256xbf16> to vector<64x256xbf16>
    %cst_125 = arith.constant dense<0.000000e+00> : vector<64x8xf32>
    %130 = tpu.matmul %129, %85, %cst_125 {dimension_numbers = #tpu.dot_dimension_numbers<[1], [0], [0], [1], [0, 0, 1, 1], [], []>} : vector<64x256xbf16>, vector<256x8xbf16>, vector<64x8xf32> -> vector<64x8xf32>
    %c15_126 = arith.constant 15 : index
    %c0_127 = arith.constant 0 : index
    %c0_128 = arith.constant 0 : index
    %131 = vector.load %arg6[%c15_126, %c0_127, %c0_128] : memref<16x64x256xbf16, #tpu.memory_space<vmem>>, vector<1x64x256xbf16>
    %132 = vector.shape_cast %131 : vector<1x64x256xbf16> to vector<64x256xbf16>
    %cst_129 = arith.constant dense<0.000000e+00> : vector<64x8xf32>
    %133 = tpu.matmul %132, %85, %cst_129 {dimension_numbers = #tpu.dot_dimension_numbers<[1], [0], [0], [1], [0, 0, 1, 1], [], []>} : vector<64x256xbf16>, vector<256x8xbf16>, vector<64x8xf32> -> vector<64x8xf32>
    %134 = tpu.concatenate %88, %91, %94, %97, %100, %103, %106, %109, %112, %115, %118, %121, %124, %127, %130, %133 in 1 : vector<64x8xf32>, vector<64x8xf32>, vector<64x8xf32>, vector<64x8xf32>, vector<64x8xf32>, vector<64x8xf32>, vector<64x8xf32>, vector<64x8xf32>, vector<64x8xf32>, vector<64x8xf32>, vector<64x8xf32>, vector<64x8xf32>, vector<64x8xf32>, vector<64x8xf32>, vector<64x8xf32>, vector<64x8xf32> -> vector<64x128xf32>
    %135 = arith.truncf %134 : vector<64x128xf32> to vector<64x128xbf16>
    %c0_130 = arith.constant 0 : index
    %c0_131 = arith.constant 0 : index
    %136 = vector.load %arg3[%c0_130, %c0_131] : memref<128x16xbf16, #tpu.memory_space<vmem>>, vector<128x16xbf16>
    %cst_132 = arith.constant dense<0.000000e+00> : vector<64x16xf32>
    %137 = tpu.matmul %135, %136, %cst_132 {dimension_numbers = #tpu.dot_dimension_numbers<[1], [0], [0], [1], [0, 0, 1, 1], [], []>} : vector<64x128xbf16>, vector<128x16xbf16>, vector<64x16xf32> -> vector<64x16xf32>
    %138 = tpu.concatenate %84, %137 in 0 : vector<64x16xf32>, vector<64x16xf32> -> vector<128x16xf32>
    %c2_133 = arith.constant 2 : index
    %c0_134 = arith.constant 0 : index
    %139 = vector.load %arg9[%c2_133, %c0_134] : memref<6x128xf32, #tpu.memory_space<vmem>>, vector<1x16xf32>
    %c3_135 = arith.constant 3 : index
    %c0_136 = arith.constant 0 : index
    %140 = vector.load %arg9[%c3_135, %c0_136] : memref<6x128xf32, #tpu.memory_space<vmem>>, vector<1x16xf32>
    %cst_137 = arith.constant dense<0.000000e+00> : vector<16xf32>
    %141 = vector.multi_reduction <add>, %138, %cst_137 [0] : vector<128x16xf32> to vector<16xf32>
    %142 = vector.shape_cast %141 : vector<16xf32> to vector<1x16xf32>
    %cst_138 = arith.constant 7.812500e-03 : f32
    %143 = vector.broadcast %cst_138 : f32 to vector<1x16xf32>
    %144 = arith.mulf %142, %143 : vector<1x16xf32>
    %145 = arith.mulf %138, %138 : vector<128x16xf32>
    %cst_139 = arith.constant dense<0.000000e+00> : vector<16xf32>
    %146 = vector.multi_reduction <add>, %145, %cst_139 [0] : vector<128x16xf32> to vector<16xf32>
    %147 = vector.shape_cast %146 : vector<16xf32> to vector<1x16xf32>
    %cst_140 = arith.constant 7.812500e-03 : f32
    %148 = vector.broadcast %cst_140 : f32 to vector<1x16xf32>
    %149 = arith.mulf %147, %148 : vector<1x16xf32>
    %150 = arith.mulf %144, %144 : vector<1x16xf32>
    %151 = arith.subf %149, %150 : vector<1x16xf32>
    %152 = vector.broadcast %144 : vector<1x16xf32> to vector<128x16xf32>
    %153 = arith.subf %138, %152 : vector<128x16xf32>
    %cst_141 = arith.constant 9.99999974E-6 : f32
    %154 = vector.broadcast %cst_141 : f32 to vector<1x16xf32>
    %155 = arith.addf %151, %154 : vector<1x16xf32>
    %156 = math.rsqrt %155 : vector<1x16xf32>
    %157 = arith.mulf %156, %139 : vector<1x16xf32>
    %158 = vector.broadcast %157 : vector<1x16xf32> to vector<128x16xf32>
    %159 = arith.mulf %153, %158 : vector<128x16xf32>
    %160 = vector.broadcast %140 : vector<1x16xf32> to vector<128x16xf32>
    %161 = arith.addf %159, %160 : vector<128x16xf32>
    %cst_142 = arith.constant 0.000000e+00 : f32
    %162 = vector.broadcast %cst_142 : f32 to vector<128x16xf32>
    %163 = arith.cmpf ogt, %161, %162 : vector<128x16xf32>
    %cst_143 = arith.constant 2.000000e-01 : f32
    %164 = vector.broadcast %cst_143 : f32 to vector<128x16xf32>
    %165 = arith.mulf %164, %161 : vector<128x16xf32>
    %166 = arith.select %163, %161, %165 : vector<128x16xi1>, vector<128x16xf32>
    %167 = arith.truncf %166 : vector<128x16xf32> to vector<128x16xbf16>
    %168 = vector.extract_strided_slice %167 {offsets = [0, 0], sizes = [64, 16], strides = [1, 1]} : vector<128x16xbf16> to vector<64x16xbf16>
    %c0_144 = arith.constant 0 : index
    %c0_145 = arith.constant 0 : index
    %c0_146 = arith.constant 0 : index
    %169 = vector.load %arg7[%c0_144, %c0_145, %c0_146] : memref<16x16x64xbf16, #tpu.memory_space<vmem>>, vector<1x16x64xbf16>
    %170 = vector.shape_cast %169 : vector<1x16x64xbf16> to vector<16x64xbf16>
    %cst_147 = arith.constant dense<0.000000e+00> : vector<16x16xf32>
    %171 = tpu.matmul %170, %168, %cst_147 {dimension_numbers = #tpu.dot_dimension_numbers<[1], [0], [0], [1], [0, 0, 1, 1], [], []>} : vector<16x64xbf16>, vector<64x16xbf16>, vector<16x16xf32> -> vector<16x16xf32>
    %c1_148 = arith.constant 1 : index
    %c0_149 = arith.constant 0 : index
    %c0_150 = arith.constant 0 : index
    %172 = vector.load %arg7[%c1_148, %c0_149, %c0_150] : memref<16x16x64xbf16, #tpu.memory_space<vmem>>, vector<1x16x64xbf16>
    %173 = vector.shape_cast %172 : vector<1x16x64xbf16> to vector<16x64xbf16>
    %cst_151 = arith.constant dense<0.000000e+00> : vector<16x16xf32>
    %174 = tpu.matmul %173, %168, %cst_151 {dimension_numbers = #tpu.dot_dimension_numbers<[1], [0], [0], [1], [0, 0, 1, 1], [], []>} : vector<16x64xbf16>, vector<64x16xbf16>, vector<16x16xf32> -> vector<16x16xf32>
    %c2_152 = arith.constant 2 : index
    %c0_153 = arith.constant 0 : index
    %c0_154 = arith.constant 0 : index
    %175 = vector.load %arg7[%c2_152, %c0_153, %c0_154] : memref<16x16x64xbf16, #tpu.memory_space<vmem>>, vector<1x16x64xbf16>
    %176 = vector.shape_cast %175 : vector<1x16x64xbf16> to vector<16x64xbf16>
    %cst_155 = arith.constant dense<0.000000e+00> : vector<16x16xf32>
    %177 = tpu.matmul %176, %168, %cst_155 {dimension_numbers = #tpu.dot_dimension_numbers<[1], [0], [0], [1], [0, 0, 1, 1], [], []>} : vector<16x64xbf16>, vector<64x16xbf16>, vector<16x16xf32> -> vector<16x16xf32>
    %c3_156 = arith.constant 3 : index
    %c0_157 = arith.constant 0 : index
    %c0_158 = arith.constant 0 : index
    %178 = vector.load %arg7[%c3_156, %c0_157, %c0_158] : memref<16x16x64xbf16, #tpu.memory_space<vmem>>, vector<1x16x64xbf16>
    %179 = vector.shape_cast %178 : vector<1x16x64xbf16> to vector<16x64xbf16>
    %cst_159 = arith.constant dense<0.000000e+00> : vector<16x16xf32>
    %180 = tpu.matmul %179, %168, %cst_159 {dimension_numbers = #tpu.dot_dimension_numbers<[1], [0], [0], [1], [0, 0, 1, 1], [], []>} : vector<16x64xbf16>, vector<64x16xbf16>, vector<16x16xf32> -> vector<16x16xf32>
    %c4_160 = arith.constant 4 : index
    %c0_161 = arith.constant 0 : index
    %c0_162 = arith.constant 0 : index
    %181 = vector.load %arg7[%c4_160, %c0_161, %c0_162] : memref<16x16x64xbf16, #tpu.memory_space<vmem>>, vector<1x16x64xbf16>
    %182 = vector.shape_cast %181 : vector<1x16x64xbf16> to vector<16x64xbf16>
    %cst_163 = arith.constant dense<0.000000e+00> : vector<16x16xf32>
    %183 = tpu.matmul %182, %168, %cst_163 {dimension_numbers = #tpu.dot_dimension_numbers<[1], [0], [0], [1], [0, 0, 1, 1], [], []>} : vector<16x64xbf16>, vector<64x16xbf16>, vector<16x16xf32> -> vector<16x16xf32>
    %c5_164 = arith.constant 5 : index
    %c0_165 = arith.constant 0 : index
    %c0_166 = arith.constant 0 : index
    %184 = vector.load %arg7[%c5_164, %c0_165, %c0_166] : memref<16x16x64xbf16, #tpu.memory_space<vmem>>, vector<1x16x64xbf16>
    %185 = vector.shape_cast %184 : vector<1x16x64xbf16> to vector<16x64xbf16>
    %cst_167 = arith.constant dense<0.000000e+00> : vector<16x16xf32>
    %186 = tpu.matmul %185, %168, %cst_167 {dimension_numbers = #tpu.dot_dimension_numbers<[1], [0], [0], [1], [0, 0, 1, 1], [], []>} : vector<16x64xbf16>, vector<64x16xbf16>, vector<16x16xf32> -> vector<16x16xf32>
    %c6_168 = arith.constant 6 : index
    %c0_169 = arith.constant 0 : index
    %c0_170 = arith.constant 0 : index
    %187 = vector.load %arg7[%c6_168, %c0_169, %c0_170] : memref<16x16x64xbf16, #tpu.memory_space<vmem>>, vector<1x16x64xbf16>
    %188 = vector.shape_cast %187 : vector<1x16x64xbf16> to vector<16x64xbf16>
    %cst_171 = arith.constant dense<0.000000e+00> : vector<16x16xf32>
    %189 = tpu.matmul %188, %168, %cst_171 {dimension_numbers = #tpu.dot_dimension_numbers<[1], [0], [0], [1], [0, 0, 1, 1], [], []>} : vector<16x64xbf16>, vector<64x16xbf16>, vector<16x16xf32> -> vector<16x16xf32>
    %c7_172 = arith.constant 7 : index
    %c0_173 = arith.constant 0 : index
    %c0_174 = arith.constant 0 : index
    %190 = vector.load %arg7[%c7_172, %c0_173, %c0_174] : memref<16x16x64xbf16, #tpu.memory_space<vmem>>, vector<1x16x64xbf16>
    %191 = vector.shape_cast %190 : vector<1x16x64xbf16> to vector<16x64xbf16>
    %cst_175 = arith.constant dense<0.000000e+00> : vector<16x16xf32>
    %192 = tpu.matmul %191, %168, %cst_175 {dimension_numbers = #tpu.dot_dimension_numbers<[1], [0], [0], [1], [0, 0, 1, 1], [], []>} : vector<16x64xbf16>, vector<64x16xbf16>, vector<16x16xf32> -> vector<16x16xf32>
    %c8_176 = arith.constant 8 : index
    %c0_177 = arith.constant 0 : index
    %c0_178 = arith.constant 0 : index
    %193 = vector.load %arg7[%c8_176, %c0_177, %c0_178] : memref<16x16x64xbf16, #tpu.memory_space<vmem>>, vector<1x16x64xbf16>
    %194 = vector.shape_cast %193 : vector<1x16x64xbf16> to vector<16x64xbf16>
    %cst_179 = arith.constant dense<0.000000e+00> : vector<16x16xf32>
    %195 = tpu.matmul %194, %168, %cst_179 {dimension_numbers = #tpu.dot_dimension_numbers<[1], [0], [0], [1], [0, 0, 1, 1], [], []>} : vector<16x64xbf16>, vector<64x16xbf16>, vector<16x16xf32> -> vector<16x16xf32>
    %c9_180 = arith.constant 9 : index
    %c0_181 = arith.constant 0 : index
    %c0_182 = arith.constant 0 : index
    %196 = vector.load %arg7[%c9_180, %c0_181, %c0_182] : memref<16x16x64xbf16, #tpu.memory_space<vmem>>, vector<1x16x64xbf16>
    %197 = vector.shape_cast %196 : vector<1x16x64xbf16> to vector<16x64xbf16>
    %cst_183 = arith.constant dense<0.000000e+00> : vector<16x16xf32>
    %198 = tpu.matmul %197, %168, %cst_183 {dimension_numbers = #tpu.dot_dimension_numbers<[1], [0], [0], [1], [0, 0, 1, 1], [], []>} : vector<16x64xbf16>, vector<64x16xbf16>, vector<16x16xf32> -> vector<16x16xf32>
    %c10_184 = arith.constant 10 : index
    %c0_185 = arith.constant 0 : index
    %c0_186 = arith.constant 0 : index
    %199 = vector.load %arg7[%c10_184, %c0_185, %c0_186] : memref<16x16x64xbf16, #tpu.memory_space<vmem>>, vector<1x16x64xbf16>
    %200 = vector.shape_cast %199 : vector<1x16x64xbf16> to vector<16x64xbf16>
    %cst_187 = arith.constant dense<0.000000e+00> : vector<16x16xf32>
    %201 = tpu.matmul %200, %168, %cst_187 {dimension_numbers = #tpu.dot_dimension_numbers<[1], [0], [0], [1], [0, 0, 1, 1], [], []>} : vector<16x64xbf16>, vector<64x16xbf16>, vector<16x16xf32> -> vector<16x16xf32>
    %c11_188 = arith.constant 11 : index
    %c0_189 = arith.constant 0 : index
    %c0_190 = arith.constant 0 : index
    %202 = vector.load %arg7[%c11_188, %c0_189, %c0_190] : memref<16x16x64xbf16, #tpu.memory_space<vmem>>, vector<1x16x64xbf16>
    %203 = vector.shape_cast %202 : vector<1x16x64xbf16> to vector<16x64xbf16>
    %cst_191 = arith.constant dense<0.000000e+00> : vector<16x16xf32>
    %204 = tpu.matmul %203, %168, %cst_191 {dimension_numbers = #tpu.dot_dimension_numbers<[1], [0], [0], [1], [0, 0, 1, 1], [], []>} : vector<16x64xbf16>, vector<64x16xbf16>, vector<16x16xf32> -> vector<16x16xf32>
    %c12_192 = arith.constant 12 : index
    %c0_193 = arith.constant 0 : index
    %c0_194 = arith.constant 0 : index
    %205 = vector.load %arg7[%c12_192, %c0_193, %c0_194] : memref<16x16x64xbf16, #tpu.memory_space<vmem>>, vector<1x16x64xbf16>
    %206 = vector.shape_cast %205 : vector<1x16x64xbf16> to vector<16x64xbf16>
    %cst_195 = arith.constant dense<0.000000e+00> : vector<16x16xf32>
    %207 = tpu.matmul %206, %168, %cst_195 {dimension_numbers = #tpu.dot_dimension_numbers<[1], [0], [0], [1], [0, 0, 1, 1], [], []>} : vector<16x64xbf16>, vector<64x16xbf16>, vector<16x16xf32> -> vector<16x16xf32>
    %c13_196 = arith.constant 13 : index
    %c0_197 = arith.constant 0 : index
    %c0_198 = arith.constant 0 : index
    %208 = vector.load %arg7[%c13_196, %c0_197, %c0_198] : memref<16x16x64xbf16, #tpu.memory_space<vmem>>, vector<1x16x64xbf16>
    %209 = vector.shape_cast %208 : vector<1x16x64xbf16> to vector<16x64xbf16>
    %cst_199 = arith.constant dense<0.000000e+00> : vector<16x16xf32>
    %210 = tpu.matmul %209, %168, %cst_199 {dimension_numbers = #tpu.dot_dimension_numbers<[1], [0], [0], [1], [0, 0, 1, 1], [], []>} : vector<16x64xbf16>, vector<64x16xbf16>, vector<16x16xf32> -> vector<16x16xf32>
    %c14_200 = arith.constant 14 : index
    %c0_201 = arith.constant 0 : index
    %c0_202 = arith.constant 0 : index
    %211 = vector.load %arg7[%c14_200, %c0_201, %c0_202] : memref<16x16x64xbf16, #tpu.memory_space<vmem>>, vector<1x16x64xbf16>
    %212 = vector.shape_cast %211 : vector<1x16x64xbf16> to vector<16x64xbf16>
    %cst_203 = arith.constant dense<0.000000e+00> : vector<16x16xf32>
    %213 = tpu.matmul %212, %168, %cst_203 {dimension_numbers = #tpu.dot_dimension_numbers<[1], [0], [0], [1], [0, 0, 1, 1], [], []>} : vector<16x64xbf16>, vector<64x16xbf16>, vector<16x16xf32> -> vector<16x16xf32>
    %c15_204 = arith.constant 15 : index
    %c0_205 = arith.constant 0 : index
    %c0_206 = arith.constant 0 : index
    %214 = vector.load %arg7[%c15_204, %c0_205, %c0_206] : memref<16x16x64xbf16, #tpu.memory_space<vmem>>, vector<1x16x64xbf16>
    %215 = vector.shape_cast %214 : vector<1x16x64xbf16> to vector<16x64xbf16>
    %cst_207 = arith.constant dense<0.000000e+00> : vector<16x16xf32>
    %216 = tpu.matmul %215, %168, %cst_207 {dimension_numbers = #tpu.dot_dimension_numbers<[1], [0], [0], [1], [0, 0, 1, 1], [], []>} : vector<16x64xbf16>, vector<64x16xbf16>, vector<16x16xf32> -> vector<16x16xf32>
    %217 = tpu.concatenate %171, %174, %177, %180, %183, %186, %189, %192, %195, %198, %201, %204, %207, %210, %213, %216 in 1 : vector<16x16xf32>, vector<16x16xf32>, vector<16x16xf32>, vector<16x16xf32>, vector<16x16xf32>, vector<16x16xf32>, vector<16x16xf32>, vector<16x16xf32>, vector<16x16xf32>, vector<16x16xf32>, vector<16x16xf32>, vector<16x16xf32>, vector<16x16xf32>, vector<16x16xf32>, vector<16x16xf32>, vector<16x16xf32> -> vector<16x256xf32>
    %218 = arith.truncf %217 : vector<16x256xf32> to vector<16x256xbf16>
    %c0_208 = arith.constant 0 : index
    %c0_209 = arith.constant 0 : index
    %219 = vector.load %arg4[%c0_208, %c0_209] : memref<256x32xbf16, #tpu.memory_space<vmem>>, vector<256x32xbf16>
    %cst_210 = arith.constant dense<0.000000e+00> : vector<16x32xf32>
    %220 = tpu.matmul %218, %219, %cst_210 {dimension_numbers = #tpu.dot_dimension_numbers<[1], [0], [0], [1], [0, 0, 1, 1], [], []>} : vector<16x256xbf16>, vector<256x32xbf16>, vector<16x32xf32> -> vector<16x32xf32>
    %221 = vector.extract_strided_slice %167 {offsets = [64, 0], sizes = [64, 16], strides = [1, 1]} : vector<128x16xbf16> to vector<64x16xbf16>
    %c0_211 = arith.constant 0 : index
    %c0_212 = arith.constant 0 : index
    %c0_213 = arith.constant 0 : index
    %222 = vector.load %arg7[%c0_211, %c0_212, %c0_213] : memref<16x16x64xbf16, #tpu.memory_space<vmem>>, vector<1x16x64xbf16>
    %223 = vector.shape_cast %222 : vector<1x16x64xbf16> to vector<16x64xbf16>
    %cst_214 = arith.constant dense<0.000000e+00> : vector<16x16xf32>
    %224 = tpu.matmul %223, %221, %cst_214 {dimension_numbers = #tpu.dot_dimension_numbers<[1], [0], [0], [1], [0, 0, 1, 1], [], []>} : vector<16x64xbf16>, vector<64x16xbf16>, vector<16x16xf32> -> vector<16x16xf32>
    %c1_215 = arith.constant 1 : index
    %c0_216 = arith.constant 0 : index
    %c0_217 = arith.constant 0 : index
    %225 = vector.load %arg7[%c1_215, %c0_216, %c0_217] : memref<16x16x64xbf16, #tpu.memory_space<vmem>>, vector<1x16x64xbf16>
    %226 = vector.shape_cast %225 : vector<1x16x64xbf16> to vector<16x64xbf16>
    %cst_218 = arith.constant dense<0.000000e+00> : vector<16x16xf32>
    %227 = tpu.matmul %226, %221, %cst_218 {dimension_numbers = #tpu.dot_dimension_numbers<[1], [0], [0], [1], [0, 0, 1, 1], [], []>} : vector<16x64xbf16>, vector<64x16xbf16>, vector<16x16xf32> -> vector<16x16xf32>
    %c2_219 = arith.constant 2 : index
    %c0_220 = arith.constant 0 : index
    %c0_221 = arith.constant 0 : index
    %228 = vector.load %arg7[%c2_219, %c0_220, %c0_221] : memref<16x16x64xbf16, #tpu.memory_space<vmem>>, vector<1x16x64xbf16>
    %229 = vector.shape_cast %228 : vector<1x16x64xbf16> to vector<16x64xbf16>
    %cst_222 = arith.constant dense<0.000000e+00> : vector<16x16xf32>
    %230 = tpu.matmul %229, %221, %cst_222 {dimension_numbers = #tpu.dot_dimension_numbers<[1], [0], [0], [1], [0, 0, 1, 1], [], []>} : vector<16x64xbf16>, vector<64x16xbf16>, vector<16x16xf32> -> vector<16x16xf32>
    %c3_223 = arith.constant 3 : index
    %c0_224 = arith.constant 0 : index
    %c0_225 = arith.constant 0 : index
    %231 = vector.load %arg7[%c3_223, %c0_224, %c0_225] : memref<16x16x64xbf16, #tpu.memory_space<vmem>>, vector<1x16x64xbf16>
    %232 = vector.shape_cast %231 : vector<1x16x64xbf16> to vector<16x64xbf16>
    %cst_226 = arith.constant dense<0.000000e+00> : vector<16x16xf32>
    %233 = tpu.matmul %232, %221, %cst_226 {dimension_numbers = #tpu.dot_dimension_numbers<[1], [0], [0], [1], [0, 0, 1, 1], [], []>} : vector<16x64xbf16>, vector<64x16xbf16>, vector<16x16xf32> -> vector<16x16xf32>
    %c4_227 = arith.constant 4 : index
    %c0_228 = arith.constant 0 : index
    %c0_229 = arith.constant 0 : index
    %234 = vector.load %arg7[%c4_227, %c0_228, %c0_229] : memref<16x16x64xbf16, #tpu.memory_space<vmem>>, vector<1x16x64xbf16>
    %235 = vector.shape_cast %234 : vector<1x16x64xbf16> to vector<16x64xbf16>
    %cst_230 = arith.constant dense<0.000000e+00> : vector<16x16xf32>
    %236 = tpu.matmul %235, %221, %cst_230 {dimension_numbers = #tpu.dot_dimension_numbers<[1], [0], [0], [1], [0, 0, 1, 1], [], []>} : vector<16x64xbf16>, vector<64x16xbf16>, vector<16x16xf32> -> vector<16x16xf32>
    %c5_231 = arith.constant 5 : index
    %c0_232 = arith.constant 0 : index
    %c0_233 = arith.constant 0 : index
    %237 = vector.load %arg7[%c5_231, %c0_232, %c0_233] : memref<16x16x64xbf16, #tpu.memory_space<vmem>>, vector<1x16x64xbf16>
    %238 = vector.shape_cast %237 : vector<1x16x64xbf16> to vector<16x64xbf16>
    %cst_234 = arith.constant dense<0.000000e+00> : vector<16x16xf32>
    %239 = tpu.matmul %238, %221, %cst_234 {dimension_numbers = #tpu.dot_dimension_numbers<[1], [0], [0], [1], [0, 0, 1, 1], [], []>} : vector<16x64xbf16>, vector<64x16xbf16>, vector<16x16xf32> -> vector<16x16xf32>
    %c6_235 = arith.constant 6 : index
    %c0_236 = arith.constant 0 : index
    %c0_237 = arith.constant 0 : index
    %240 = vector.load %arg7[%c6_235, %c0_236, %c0_237] : memref<16x16x64xbf16, #tpu.memory_space<vmem>>, vector<1x16x64xbf16>
    %241 = vector.shape_cast %240 : vector<1x16x64xbf16> to vector<16x64xbf16>
    %cst_238 = arith.constant dense<0.000000e+00> : vector<16x16xf32>
    %242 = tpu.matmul %241, %221, %cst_238 {dimension_numbers = #tpu.dot_dimension_numbers<[1], [0], [0], [1], [0, 0, 1, 1], [], []>} : vector<16x64xbf16>, vector<64x16xbf16>, vector<16x16xf32> -> vector<16x16xf32>
    %c7_239 = arith.constant 7 : index
    %c0_240 = arith.constant 0 : index
    %c0_241 = arith.constant 0 : index
    %243 = vector.load %arg7[%c7_239, %c0_240, %c0_241] : memref<16x16x64xbf16, #tpu.memory_space<vmem>>, vector<1x16x64xbf16>
    %244 = vector.shape_cast %243 : vector<1x16x64xbf16> to vector<16x64xbf16>
    %cst_242 = arith.constant dense<0.000000e+00> : vector<16x16xf32>
    %245 = tpu.matmul %244, %221, %cst_242 {dimension_numbers = #tpu.dot_dimension_numbers<[1], [0], [0], [1], [0, 0, 1, 1], [], []>} : vector<16x64xbf16>, vector<64x16xbf16>, vector<16x16xf32> -> vector<16x16xf32>
    %c8_243 = arith.constant 8 : index
    %c0_244 = arith.constant 0 : index
    %c0_245 = arith.constant 0 : index
    %246 = vector.load %arg7[%c8_243, %c0_244, %c0_245] : memref<16x16x64xbf16, #tpu.memory_space<vmem>>, vector<1x16x64xbf16>
    %247 = vector.shape_cast %246 : vector<1x16x64xbf16> to vector<16x64xbf16>
    %cst_246 = arith.constant dense<0.000000e+00> : vector<16x16xf32>
    %248 = tpu.matmul %247, %221, %cst_246 {dimension_numbers = #tpu.dot_dimension_numbers<[1], [0], [0], [1], [0, 0, 1, 1], [], []>} : vector<16x64xbf16>, vector<64x16xbf16>, vector<16x16xf32> -> vector<16x16xf32>
    %c9_247 = arith.constant 9 : index
    %c0_248 = arith.constant 0 : index
    %c0_249 = arith.constant 0 : index
    %249 = vector.load %arg7[%c9_247, %c0_248, %c0_249] : memref<16x16x64xbf16, #tpu.memory_space<vmem>>, vector<1x16x64xbf16>
    %250 = vector.shape_cast %249 : vector<1x16x64xbf16> to vector<16x64xbf16>
    %cst_250 = arith.constant dense<0.000000e+00> : vector<16x16xf32>
    %251 = tpu.matmul %250, %221, %cst_250 {dimension_numbers = #tpu.dot_dimension_numbers<[1], [0], [0], [1], [0, 0, 1, 1], [], []>} : vector<16x64xbf16>, vector<64x16xbf16>, vector<16x16xf32> -> vector<16x16xf32>
    %c10_251 = arith.constant 10 : index
    %c0_252 = arith.constant 0 : index
    %c0_253 = arith.constant 0 : index
    %252 = vector.load %arg7[%c10_251, %c0_252, %c0_253] : memref<16x16x64xbf16, #tpu.memory_space<vmem>>, vector<1x16x64xbf16>
    %253 = vector.shape_cast %252 : vector<1x16x64xbf16> to vector<16x64xbf16>
    %cst_254 = arith.constant dense<0.000000e+00> : vector<16x16xf32>
    %254 = tpu.matmul %253, %221, %cst_254 {dimension_numbers = #tpu.dot_dimension_numbers<[1], [0], [0], [1], [0, 0, 1, 1], [], []>} : vector<16x64xbf16>, vector<64x16xbf16>, vector<16x16xf32> -> vector<16x16xf32>
    %c11_255 = arith.constant 11 : index
    %c0_256 = arith.constant 0 : index
    %c0_257 = arith.constant 0 : index
    %255 = vector.load %arg7[%c11_255, %c0_256, %c0_257] : memref<16x16x64xbf16, #tpu.memory_space<vmem>>, vector<1x16x64xbf16>
    %256 = vector.shape_cast %255 : vector<1x16x64xbf16> to vector<16x64xbf16>
    %cst_258 = arith.constant dense<0.000000e+00> : vector<16x16xf32>
    %257 = tpu.matmul %256, %221, %cst_258 {dimension_numbers = #tpu.dot_dimension_numbers<[1], [0], [0], [1], [0, 0, 1, 1], [], []>} : vector<16x64xbf16>, vector<64x16xbf16>, vector<16x16xf32> -> vector<16x16xf32>
    %c12_259 = arith.constant 12 : index
    %c0_260 = arith.constant 0 : index
    %c0_261 = arith.constant 0 : index
    %258 = vector.load %arg7[%c12_259, %c0_260, %c0_261] : memref<16x16x64xbf16, #tpu.memory_space<vmem>>, vector<1x16x64xbf16>
    %259 = vector.shape_cast %258 : vector<1x16x64xbf16> to vector<16x64xbf16>
    %cst_262 = arith.constant dense<0.000000e+00> : vector<16x16xf32>
    %260 = tpu.matmul %259, %221, %cst_262 {dimension_numbers = #tpu.dot_dimension_numbers<[1], [0], [0], [1], [0, 0, 1, 1], [], []>} : vector<16x64xbf16>, vector<64x16xbf16>, vector<16x16xf32> -> vector<16x16xf32>
    %c13_263 = arith.constant 13 : index
    %c0_264 = arith.constant 0 : index
    %c0_265 = arith.constant 0 : index
    %261 = vector.load %arg7[%c13_263, %c0_264, %c0_265] : memref<16x16x64xbf16, #tpu.memory_space<vmem>>, vector<1x16x64xbf16>
    %262 = vector.shape_cast %261 : vector<1x16x64xbf16> to vector<16x64xbf16>
    %cst_266 = arith.constant dense<0.000000e+00> : vector<16x16xf32>
    %263 = tpu.matmul %262, %221, %cst_266 {dimension_numbers = #tpu.dot_dimension_numbers<[1], [0], [0], [1], [0, 0, 1, 1], [], []>} : vector<16x64xbf16>, vector<64x16xbf16>, vector<16x16xf32> -> vector<16x16xf32>
    %c14_267 = arith.constant 14 : index
    %c0_268 = arith.constant 0 : index
    %c0_269 = arith.constant 0 : index
    %264 = vector.load %arg7[%c14_267, %c0_268, %c0_269] : memref<16x16x64xbf16, #tpu.memory_space<vmem>>, vector<1x16x64xbf16>
    %265 = vector.shape_cast %264 : vector<1x16x64xbf16> to vector<16x64xbf16>
    %cst_270 = arith.constant dense<0.000000e+00> : vector<16x16xf32>
    %266 = tpu.matmul %265, %221, %cst_270 {dimension_numbers = #tpu.dot_dimension_numbers<[1], [0], [0], [1], [0, 0, 1, 1], [], []>} : vector<16x64xbf16>, vector<64x16xbf16>, vector<16x16xf32> -> vector<16x16xf32>
    %c15_271 = arith.constant 15 : index
    %c0_272 = arith.constant 0 : index
    %c0_273 = arith.constant 0 : index
    %267 = vector.load %arg7[%c15_271, %c0_272, %c0_273] : memref<16x16x64xbf16, #tpu.memory_space<vmem>>, vector<1x16x64xbf16>
    %268 = vector.shape_cast %267 : vector<1x16x64xbf16> to vector<16x64xbf16>
    %cst_274 = arith.constant dense<0.000000e+00> : vector<16x16xf32>
    %269 = tpu.matmul %268, %221, %cst_274 {dimension_numbers = #tpu.dot_dimension_numbers<[1], [0], [0], [1], [0, 0, 1, 1], [], []>} : vector<16x64xbf16>, vector<64x16xbf16>, vector<16x16xf32> -> vector<16x16xf32>
    %270 = tpu.concatenate %224, %227, %230, %233, %236, %239, %242, %245, %248, %251, %254, %257, %260, %263, %266, %269 in 1 : vector<16x16xf32>, vector<16x16xf32>, vector<16x16xf32>, vector<16x16xf32>, vector<16x16xf32>, vector<16x16xf32>, vector<16x16xf32>, vector<16x16xf32>, vector<16x16xf32>, vector<16x16xf32>, vector<16x16xf32>, vector<16x16xf32>, vector<16x16xf32>, vector<16x16xf32>, vector<16x16xf32>, vector<16x16xf32> -> vector<16x256xf32>
    %271 = arith.truncf %270 : vector<16x256xf32> to vector<16x256xbf16>
    %c0_275 = arith.constant 0 : index
    %c0_276 = arith.constant 0 : index
    %272 = vector.load %arg4[%c0_275, %c0_276] : memref<256x32xbf16, #tpu.memory_space<vmem>>, vector<256x32xbf16>
    %cst_277 = arith.constant dense<0.000000e+00> : vector<16x32xf32>
    %273 = tpu.matmul %271, %272, %cst_277 {dimension_numbers = #tpu.dot_dimension_numbers<[1], [0], [0], [1], [0, 0, 1, 1], [], []>} : vector<16x256xbf16>, vector<256x32xbf16>, vector<16x32xf32> -> vector<16x32xf32>
    %274 = tpu.concatenate %220, %273 in 0 : vector<16x32xf32>, vector<16x32xf32> -> vector<32x32xf32>
    %c4_278 = arith.constant 4 : index
    %c0_279 = arith.constant 0 : index
    %275 = vector.load %arg9[%c4_278, %c0_279] : memref<6x128xf32, #tpu.memory_space<vmem>>, vector<1x32xf32>
    %c5_280 = arith.constant 5 : index
    %c0_281 = arith.constant 0 : index
    %276 = vector.load %arg9[%c5_280, %c0_281] : memref<6x128xf32, #tpu.memory_space<vmem>>, vector<1x32xf32>
    %cst_282 = arith.constant dense<0.000000e+00> : vector<32xf32>
    %277 = vector.multi_reduction <add>, %274, %cst_282 [0] : vector<32x32xf32> to vector<32xf32>
    %278 = vector.shape_cast %277 : vector<32xf32> to vector<1x32xf32>
    %cst_283 = arith.constant 3.125000e-02 : f32
    %279 = vector.broadcast %cst_283 : f32 to vector<1x32xf32>
    %280 = arith.mulf %278, %279 : vector<1x32xf32>
    %281 = arith.mulf %274, %274 : vector<32x32xf32>
    %cst_284 = arith.constant dense<0.000000e+00> : vector<32xf32>
    %282 = vector.multi_reduction <add>, %281, %cst_284 [0] : vector<32x32xf32> to vector<32xf32>
    %283 = vector.shape_cast %282 : vector<32xf32> to vector<1x32xf32>
    %cst_285 = arith.constant 3.125000e-02 : f32
    %284 = vector.broadcast %cst_285 : f32 to vector<1x32xf32>
    %285 = arith.mulf %283, %284 : vector<1x32xf32>
    %286 = arith.mulf %280, %280 : vector<1x32xf32>
    %287 = arith.subf %285, %286 : vector<1x32xf32>
    %288 = vector.broadcast %280 : vector<1x32xf32> to vector<32x32xf32>
    %289 = arith.subf %274, %288 : vector<32x32xf32>
    %cst_286 = arith.constant 9.99999974E-6 : f32
    %290 = vector.broadcast %cst_286 : f32 to vector<1x32xf32>
    %291 = arith.addf %287, %290 : vector<1x32xf32>
    %292 = math.rsqrt %291 : vector<1x32xf32>
    %293 = arith.mulf %292, %275 : vector<1x32xf32>
    %294 = vector.broadcast %293 : vector<1x32xf32> to vector<32x32xf32>
    %295 = arith.mulf %289, %294 : vector<32x32xf32>
    %296 = vector.broadcast %276 : vector<1x32xf32> to vector<32x32xf32>
    %297 = arith.addf %295, %296 : vector<32x32xf32>
    %cst_287 = arith.constant 0.000000e+00 : f32
    %298 = vector.broadcast %cst_287 : f32 to vector<32x32xf32>
    %299 = arith.cmpf ogt, %297, %298 : vector<32x32xf32>
    %cst_288 = arith.constant 2.000000e-01 : f32
    %300 = vector.broadcast %cst_288 : f32 to vector<32x32xf32>
    %301 = arith.mulf %300, %297 : vector<32x32xf32>
    %302 = arith.select %299, %297, %301 : vector<32x32xi1>, vector<32x32xf32>
    %303 = arith.truncf %302 : vector<32x32xf32> to vector<32x32xbf16>
    %304 = vector.extract_strided_slice %303 {offsets = [0, 0], sizes = [16, 32], strides = [1, 1]} : vector<32x32xbf16> to vector<16x32xbf16>
    %c0_289 = arith.constant 0 : index
    %c0_290 = arith.constant 0 : index
    %c0_291 = arith.constant 0 : index
    %305 = vector.load %arg8[%c0_289, %c0_290, %c0_291] : memref<9x1x16xbf16, #tpu.memory_space<vmem>>, vector<1x1x16xbf16>
    %306 = vector.shape_cast %305 : vector<1x1x16xbf16> to vector<1x16xbf16>
    %cst_292 = arith.constant dense<0.000000e+00> : vector<1x32xf32>
    %307 = tpu.matmul %306, %304, %cst_292 {dimension_numbers = #tpu.dot_dimension_numbers<[1], [0], [0], [1], [0, 0, 1, 1], [], []>} : vector<1x16xbf16>, vector<16x32xbf16>, vector<1x32xf32> -> vector<1x32xf32>
    %c1_293 = arith.constant 1 : index
    %c0_294 = arith.constant 0 : index
    %c0_295 = arith.constant 0 : index
    %308 = vector.load %arg8[%c1_293, %c0_294, %c0_295] : memref<9x1x16xbf16, #tpu.memory_space<vmem>>, vector<1x1x16xbf16>
    %309 = vector.shape_cast %308 : vector<1x1x16xbf16> to vector<1x16xbf16>
    %cst_296 = arith.constant dense<0.000000e+00> : vector<1x32xf32>
    %310 = tpu.matmul %309, %304, %cst_296 {dimension_numbers = #tpu.dot_dimension_numbers<[1], [0], [0], [1], [0, 0, 1, 1], [], []>} : vector<1x16xbf16>, vector<16x32xbf16>, vector<1x32xf32> -> vector<1x32xf32>
    %c2_297 = arith.constant 2 : index
    %c0_298 = arith.constant 0 : index
    %c0_299 = arith.constant 0 : index
    %311 = vector.load %arg8[%c2_297, %c0_298, %c0_299] : memref<9x1x16xbf16, #tpu.memory_space<vmem>>, vector<1x1x16xbf16>
    %312 = vector.shape_cast %311 : vector<1x1x16xbf16> to vector<1x16xbf16>
    %cst_300 = arith.constant dense<0.000000e+00> : vector<1x32xf32>
    %313 = tpu.matmul %312, %304, %cst_300 {dimension_numbers = #tpu.dot_dimension_numbers<[1], [0], [0], [1], [0, 0, 1, 1], [], []>} : vector<1x16xbf16>, vector<16x32xbf16>, vector<1x32xf32> -> vector<1x32xf32>
    %c3_301 = arith.constant 3 : index
    %c0_302 = arith.constant 0 : index
    %c0_303 = arith.constant 0 : index
    %314 = vector.load %arg8[%c3_301, %c0_302, %c0_303] : memref<9x1x16xbf16, #tpu.memory_space<vmem>>, vector<1x1x16xbf16>
    %315 = vector.shape_cast %314 : vector<1x1x16xbf16> to vector<1x16xbf16>
    %cst_304 = arith.constant dense<0.000000e+00> : vector<1x32xf32>
    %316 = tpu.matmul %315, %304, %cst_304 {dimension_numbers = #tpu.dot_dimension_numbers<[1], [0], [0], [1], [0, 0, 1, 1], [], []>} : vector<1x16xbf16>, vector<16x32xbf16>, vector<1x32xf32> -> vector<1x32xf32>
    %c4_305 = arith.constant 4 : index
    %c0_306 = arith.constant 0 : index
    %c0_307 = arith.constant 0 : index
    %317 = vector.load %arg8[%c4_305, %c0_306, %c0_307] : memref<9x1x16xbf16, #tpu.memory_space<vmem>>, vector<1x1x16xbf16>
    %318 = vector.shape_cast %317 : vector<1x1x16xbf16> to vector<1x16xbf16>
    %cst_308 = arith.constant dense<0.000000e+00> : vector<1x32xf32>
    %319 = tpu.matmul %318, %304, %cst_308 {dimension_numbers = #tpu.dot_dimension_numbers<[1], [0], [0], [1], [0, 0, 1, 1], [], []>} : vector<1x16xbf16>, vector<16x32xbf16>, vector<1x32xf32> -> vector<1x32xf32>
    %c5_309 = arith.constant 5 : index
    %c0_310 = arith.constant 0 : index
    %c0_311 = arith.constant 0 : index
    %320 = vector.load %arg8[%c5_309, %c0_310, %c0_311] : memref<9x1x16xbf16, #tpu.memory_space<vmem>>, vector<1x1x16xbf16>
    %321 = vector.shape_cast %320 : vector<1x1x16xbf16> to vector<1x16xbf16>
    %cst_312 = arith.constant dense<0.000000e+00> : vector<1x32xf32>
    %322 = tpu.matmul %321, %304, %cst_312 {dimension_numbers = #tpu.dot_dimension_numbers<[1], [0], [0], [1], [0, 0, 1, 1], [], []>} : vector<1x16xbf16>, vector<16x32xbf16>, vector<1x32xf32> -> vector<1x32xf32>
    %c6_313 = arith.constant 6 : index
    %c0_314 = arith.constant 0 : index
    %c0_315 = arith.constant 0 : index
    %323 = vector.load %arg8[%c6_313, %c0_314, %c0_315] : memref<9x1x16xbf16, #tpu.memory_space<vmem>>, vector<1x1x16xbf16>
    %324 = vector.shape_cast %323 : vector<1x1x16xbf16> to vector<1x16xbf16>
    %cst_316 = arith.constant dense<0.000000e+00> : vector<1x32xf32>
    %325 = tpu.matmul %324, %304, %cst_316 {dimension_numbers = #tpu.dot_dimension_numbers<[1], [0], [0], [1], [0, 0, 1, 1], [], []>} : vector<1x16xbf16>, vector<16x32xbf16>, vector<1x32xf32> -> vector<1x32xf32>
    %c7_317 = arith.constant 7 : index
    %c0_318 = arith.constant 0 : index
    %c0_319 = arith.constant 0 : index
    %326 = vector.load %arg8[%c7_317, %c0_318, %c0_319] : memref<9x1x16xbf16, #tpu.memory_space<vmem>>, vector<1x1x16xbf16>
    %327 = vector.shape_cast %326 : vector<1x1x16xbf16> to vector<1x16xbf16>
    %cst_320 = arith.constant dense<0.000000e+00> : vector<1x32xf32>
    %328 = tpu.matmul %327, %304, %cst_320 {dimension_numbers = #tpu.dot_dimension_numbers<[1], [0], [0], [1], [0, 0, 1, 1], [], []>} : vector<1x16xbf16>, vector<16x32xbf16>, vector<1x32xf32> -> vector<1x32xf32>
    %c8_321 = arith.constant 8 : index
    %c0_322 = arith.constant 0 : index
    %c0_323 = arith.constant 0 : index
    %329 = vector.load %arg8[%c8_321, %c0_322, %c0_323] : memref<9x1x16xbf16, #tpu.memory_space<vmem>>, vector<1x1x16xbf16>
    %330 = vector.shape_cast %329 : vector<1x1x16xbf16> to vector<1x16xbf16>
    %cst_324 = arith.constant dense<0.000000e+00> : vector<1x32xf32>
    %331 = tpu.matmul %330, %304, %cst_324 {dimension_numbers = #tpu.dot_dimension_numbers<[1], [0], [0], [1], [0, 0, 1, 1], [], []>} : vector<1x16xbf16>, vector<16x32xbf16>, vector<1x32xf32> -> vector<1x32xf32>
    %332 = tpu.concatenate %307, %310, %313, %316, %319, %322, %325, %328, %331 in 1 : vector<1x32xf32>, vector<1x32xf32>, vector<1x32xf32>, vector<1x32xf32>, vector<1x32xf32>, vector<1x32xf32>, vector<1x32xf32>, vector<1x32xf32>, vector<1x32xf32> -> vector<1x288xf32>
    %333 = arith.truncf %332 : vector<1x288xf32> to vector<1x288xbf16>
    %c0_325 = arith.constant 0 : index
    %c0_326 = arith.constant 0 : index
    %334 = vector.load %arg5[%c0_325, %c0_326] : memref<288x16xbf16, #tpu.memory_space<vmem>>, vector<288x16xbf16>
    %cst_327 = arith.constant dense<0.000000e+00> : vector<1x16xf32>
    %335 = tpu.matmul %333, %334, %cst_327 {dimension_numbers = #tpu.dot_dimension_numbers<[1], [0], [0], [1], [0, 0, 1, 1], [], []>} : vector<1x288xbf16>, vector<288x16xbf16>, vector<1x16xf32> -> vector<1x16xf32>
    %336 = vector.extract_strided_slice %303 {offsets = [16, 0], sizes = [16, 32], strides = [1, 1]} : vector<32x32xbf16> to vector<16x32xbf16>
    %c0_328 = arith.constant 0 : index
    %c0_329 = arith.constant 0 : index
    %c0_330 = arith.constant 0 : index
    %337 = vector.load %arg8[%c0_328, %c0_329, %c0_330] : memref<9x1x16xbf16, #tpu.memory_space<vmem>>, vector<1x1x16xbf16>
    %338 = vector.shape_cast %337 : vector<1x1x16xbf16> to vector<1x16xbf16>
    %cst_331 = arith.constant dense<0.000000e+00> : vector<1x32xf32>
    %339 = tpu.matmul %338, %336, %cst_331 {dimension_numbers = #tpu.dot_dimension_numbers<[1], [0], [0], [1], [0, 0, 1, 1], [], []>} : vector<1x16xbf16>, vector<16x32xbf16>, vector<1x32xf32> -> vector<1x32xf32>
    %c1_332 = arith.constant 1 : index
    %c0_333 = arith.constant 0 : index
    %c0_334 = arith.constant 0 : index
    %340 = vector.load %arg8[%c1_332, %c0_333, %c0_334] : memref<9x1x16xbf16, #tpu.memory_space<vmem>>, vector<1x1x16xbf16>
    %341 = vector.shape_cast %340 : vector<1x1x16xbf16> to vector<1x16xbf16>
    %cst_335 = arith.constant dense<0.000000e+00> : vector<1x32xf32>
    %342 = tpu.matmul %341, %336, %cst_335 {dimension_numbers = #tpu.dot_dimension_numbers<[1], [0], [0], [1], [0, 0, 1, 1], [], []>} : vector<1x16xbf16>, vector<16x32xbf16>, vector<1x32xf32> -> vector<1x32xf32>
    %c2_336 = arith.constant 2 : index
    %c0_337 = arith.constant 0 : index
    %c0_338 = arith.constant 0 : index
    %343 = vector.load %arg8[%c2_336, %c0_337, %c0_338] : memref<9x1x16xbf16, #tpu.memory_space<vmem>>, vector<1x1x16xbf16>
    %344 = vector.shape_cast %343 : vector<1x1x16xbf16> to vector<1x16xbf16>
    %cst_339 = arith.constant dense<0.000000e+00> : vector<1x32xf32>
    %345 = tpu.matmul %344, %336, %cst_339 {dimension_numbers = #tpu.dot_dimension_numbers<[1], [0], [0], [1], [0, 0, 1, 1], [], []>} : vector<1x16xbf16>, vector<16x32xbf16>, vector<1x32xf32> -> vector<1x32xf32>
    %c3_340 = arith.constant 3 : index
    %c0_341 = arith.constant 0 : index
    %c0_342 = arith.constant 0 : index
    %346 = vector.load %arg8[%c3_340, %c0_341, %c0_342] : memref<9x1x16xbf16, #tpu.memory_space<vmem>>, vector<1x1x16xbf16>
    %347 = vector.shape_cast %346 : vector<1x1x16xbf16> to vector<1x16xbf16>
    %cst_343 = arith.constant dense<0.000000e+00> : vector<1x32xf32>
    %348 = tpu.matmul %347, %336, %cst_343 {dimension_numbers = #tpu.dot_dimension_numbers<[1], [0], [0], [1], [0, 0, 1, 1], [], []>} : vector<1x16xbf16>, vector<16x32xbf16>, vector<1x32xf32> -> vector<1x32xf32>
    %c4_344 = arith.constant 4 : index
    %c0_345 = arith.constant 0 : index
    %c0_346 = arith.constant 0 : index
    %349 = vector.load %arg8[%c4_344, %c0_345, %c0_346] : memref<9x1x16xbf16, #tpu.memory_space<vmem>>, vector<1x1x16xbf16>
    %350 = vector.shape_cast %349 : vector<1x1x16xbf16> to vector<1x16xbf16>
    %cst_347 = arith.constant dense<0.000000e+00> : vector<1x32xf32>
    %351 = tpu.matmul %350, %336, %cst_347 {dimension_numbers = #tpu.dot_dimension_numbers<[1], [0], [0], [1], [0, 0, 1, 1], [], []>} : vector<1x16xbf16>, vector<16x32xbf16>, vector<1x32xf32> -> vector<1x32xf32>
    %c5_348 = arith.constant 5 : index
    %c0_349 = arith.constant 0 : index
    %c0_350 = arith.constant 0 : index
    %352 = vector.load %arg8[%c5_348, %c0_349, %c0_350] : memref<9x1x16xbf16, #tpu.memory_space<vmem>>, vector<1x1x16xbf16>
    %353 = vector.shape_cast %352 : vector<1x1x16xbf16> to vector<1x16xbf16>
    %cst_351 = arith.constant dense<0.000000e+00> : vector<1x32xf32>
    %354 = tpu.matmul %353, %336, %cst_351 {dimension_numbers = #tpu.dot_dimension_numbers<[1], [0], [0], [1], [0, 0, 1, 1], [], []>} : vector<1x16xbf16>, vector<16x32xbf16>, vector<1x32xf32> -> vector<1x32xf32>
    %c6_352 = arith.constant 6 : index
    %c0_353 = arith.constant 0 : index
    %c0_354 = arith.constant 0 : index
    %355 = vector.load %arg8[%c6_352, %c0_353, %c0_354] : memref<9x1x16xbf16, #tpu.memory_space<vmem>>, vector<1x1x16xbf16>
    %356 = vector.shape_cast %355 : vector<1x1x16xbf16> to vector<1x16xbf16>
    %cst_355 = arith.constant dense<0.000000e+00> : vector<1x32xf32>
    %357 = tpu.matmul %356, %336, %cst_355 {dimension_numbers = #tpu.dot_dimension_numbers<[1], [0], [0], [1], [0, 0, 1, 1], [], []>} : vector<1x16xbf16>, vector<16x32xbf16>, vector<1x32xf32> -> vector<1x32xf32>
    %c7_356 = arith.constant 7 : index
    %c0_357 = arith.constant 0 : index
    %c0_358 = arith.constant 0 : index
    %358 = vector.load %arg8[%c7_356, %c0_357, %c0_358] : memref<9x1x16xbf16, #tpu.memory_space<vmem>>, vector<1x1x16xbf16>
    %359 = vector.shape_cast %358 : vector<1x1x16xbf16> to vector<1x16xbf16>
    %cst_359 = arith.constant dense<0.000000e+00> : vector<1x32xf32>
    %360 = tpu.matmul %359, %336, %cst_359 {dimension_numbers = #tpu.dot_dimension_numbers<[1], [0], [0], [1], [0, 0, 1, 1], [], []>} : vector<1x16xbf16>, vector<16x32xbf16>, vector<1x32xf32> -> vector<1x32xf32>
    %c8_360 = arith.constant 8 : index
    %c0_361 = arith.constant 0 : index
    %c0_362 = arith.constant 0 : index
    %361 = vector.load %arg8[%c8_360, %c0_361, %c0_362] : memref<9x1x16xbf16, #tpu.memory_space<vmem>>, vector<1x1x16xbf16>
    %362 = vector.shape_cast %361 : vector<1x1x16xbf16> to vector<1x16xbf16>
    %cst_363 = arith.constant dense<0.000000e+00> : vector<1x32xf32>
    %363 = tpu.matmul %362, %336, %cst_363 {dimension_numbers = #tpu.dot_dimension_numbers<[1], [0], [0], [1], [0, 0, 1, 1], [], []>} : vector<1x16xbf16>, vector<16x32xbf16>, vector<1x32xf32> -> vector<1x32xf32>
    %364 = tpu.concatenate %339, %342, %345, %348, %351, %354, %357, %360, %363 in 1 : vector<1x32xf32>, vector<1x32xf32>, vector<1x32xf32>, vector<1x32xf32>, vector<1x32xf32>, vector<1x32xf32>, vector<1x32xf32>, vector<1x32xf32>, vector<1x32xf32> -> vector<1x288xf32>
    %365 = arith.truncf %364 : vector<1x288xf32> to vector<1x288xbf16>
    %c0_364 = arith.constant 0 : index
    %c0_365 = arith.constant 0 : index
    %366 = vector.load %arg5[%c0_364, %c0_365] : memref<288x16xbf16, #tpu.memory_space<vmem>>, vector<288x16xbf16>
    %cst_366 = arith.constant dense<0.000000e+00> : vector<1x16xf32>
    %367 = tpu.matmul %365, %366, %cst_366 {dimension_numbers = #tpu.dot_dimension_numbers<[1], [0], [0], [1], [0, 0, 1, 1], [], []>} : vector<1x288xbf16>, vector<288x16xbf16>, vector<1x16xf32> -> vector<1x16xf32>
    %368 = tpu.concatenate %335, %367 in 0 : vector<1x16xf32>, vector<1x16xf32> -> vector<2x16xf32>
    %cst_367 = arith.constant 0.000000e+00 : f32
    %369 = vector.broadcast %cst_367 : f32 to vector<2x16xf32>
    %370 = arith.subf %369, %368 : vector<2x16xf32>
    %371 = math.exp %370 : vector<2x16xf32>
    %cst_368 = arith.constant 1.000000e+00 : f32
    %372 = vector.broadcast %cst_368 : f32 to vector<2x16xf32>
    %373 = arith.addf %372, %371 : vector<2x16xf32>
    %cst_369 = arith.constant 1.000000e+00 : f32
    %374 = vector.broadcast %cst_369 : f32 to vector<2x16xf32>
    %375 = arith.divf %374, %373 : vector<2x16xf32>
    %c0_370 = arith.constant 0 : index
    %c0_371 = arith.constant 0 : index
    %376 = vector.load %arg10[%c0_370, %c0_371] : memref<2x16xf32, #tpu.memory_space<vmem>>, vector<2x16xf32>
    tpu.vector_store %arg10[%c0_370, %c0_371], %375 {strides = array<i32>} : memref<2x16xf32, #tpu.memory_space<vmem>>, vector<2x16xf32>,
    return
  }
  func.func @transform_0(%arg0: i32) -> (i32, i32) {
    %c0_i32 = arith.constant 0 : i32
    %c0_i32_0 = arith.constant 0 : i32
    %c0_i32_1 = arith.constant 0 : i32
    return %c0_i32, %c0_i32_0 : i32, i32
  }
  func.func @transform_1(%arg0: i32) -> (i32, i32) {
    %c0_i32 = arith.constant 0 : i32
    %c0_i32_0 = arith.constant 0 : i32
    %c0_i32_1 = arith.constant 0 : i32
    return %c0_i32, %c0_i32_0 : i32, i32
  }
  func.func @transform_2(%arg0: i32) -> (i32, i32) {
    %c0_i32 = arith.constant 0 : i32
    %c0_i32_0 = arith.constant 0 : i32
    %c0_i32_1 = arith.constant 0 : i32
    return %c0_i32, %c0_i32_0 : i32, i32
  }
  func.func @transform_3(%arg0: i32) -> (i32, i32) {
    %c0_i32 = arith.constant 0 : i32
    %c0_i32_0 = arith.constant 0 : i32
    %c0_i32_1 = arith.constant 0 : i32
    return %c0_i32, %c0_i32_0 : i32, i32
  }
  func.func @transform_4(%arg0: i32) -> (i32, i32) {
    %c0_i32 = arith.constant 0 : i32
    %c0_i32_0 = arith.constant 0 : i32
    %c0_i32_1 = arith.constant 0 : i32
    return %c0_i32, %c0_i32_0 : i32, i32
  }
  func.func @transform_5(%arg0: i32) -> (i32, i32, i32) {
    %c0_i32 = arith.constant 0 : i32
    %c0_i32_0 = arith.constant 0 : i32
    %c0_i32_1 = arith.constant 0 : i32
    %c0_i32_2 = arith.constant 0 : i32
    return %c0_i32, %c0_i32_0, %c0_i32_1 : i32, i32, i32
  }
  func.func @transform_6(%arg0: i32) -> (i32, i32, i32) {
    %c0_i32 = arith.constant 0 : i32
    %c0_i32_0 = arith.constant 0 : i32
    %c0_i32_1 = arith.constant 0 : i32
    %c0_i32_2 = arith.constant 0 : i32
    return %c0_i32, %c0_i32_0, %c0_i32_1 : i32, i32, i32
  }
  func.func @transform_7(%arg0: i32) -> (i32, i32, i32) {
    %c0_i32 = arith.constant 0 : i32
    %c0_i32_0 = arith.constant 0 : i32
    %c0_i32_1 = arith.constant 0 : i32
    %c0_i32_2 = arith.constant 0 : i32
    return %c0_i32, %c0_i32_0, %c0_i32_1 : i32, i32, i32
  }
  func.func @transform_8(%arg0: i32) -> (i32, i32) {
    %c0_i32 = arith.constant 0 : i32
    %c0_i32_0 = arith.constant 0 : i32
    %c0_i32_1 = arith.constant 0 : i32
    return %c0_i32, %c0_i32_0 : i32, i32
  }
  func.func @transform_9(%arg0: i32) -> (i32, i32) {
    %c0_i32 = arith.constant 0 : i32
    %c0_i32_0 = arith.constant 0 : i32
    %c0_i32_1 = arith.constant 0 : i32
    return %c0_i32, %c0_i32_0 : i32, i32
  }
}

</mosaic_0001>

<llo_original>
// kernel: encoder_forward.1
$region0: #{encoder_forward.1}
  #allocation0 [shape = 'u32[]', space=smem, size = 0x4, offset = 0x4, fixed_abs, tag = 'smem constant byte address 0x4 - core index']
  #allocation1 [shape = 'u32[144,128]{1,0:T(1,128)}', space=vmem, size = 0x12000, scoped, tag = 'internal scratch']
  %s0 = inlined_call_operand.vmem [shape: bf16[512,64], index: 0, kind: input, shape index: {}]
  %s1 = inlined_call_operand.vmem [shape: bf16[64,8], index: 1, kind: input, shape index: {}]
  %s2 = inlined_call_operand.vmem [shape: bf16[128,16], index: 2, kind: input, shape index: {}]
  %s3 = inlined_call_operand.vmem [shape: bf16[256,32], index: 3, kind: input, shape index: {}]
  %s4 = inlined_call_operand.vmem [shape: bf16[288,16], index: 4, kind: input, shape index: {}]
  %s5 = inlined_call_operand.vmem [shape: bf16[16,64,256], index: 5, kind: input, shape index: {}]
  %s6 = inlined_call_operand.vmem [shape: bf16[16,16,64], index: 6, kind: input, shape index: {}]
  %s7 = inlined_call_operand.vmem [shape: bf16[9,1,16], index: 7, kind: input, shape index: {}]
  %s8 = inlined_call_operand.vmem [shape: f32[6,128], index: 8, kind: input, shape index: {}]
  %s9 = inlined_call_operand.hbm [shape: f32[2,16], index: 9, kind: output, shape index: {}]
  %s10 = sld [smem:[#allocation0]]
  $region46: #{encoder_forward.1} parent=0
    _
  %s12 = ssub.s32 1, %s10
  %s13 = scalar_select 0, %s12, %s10
  $region1: #{encoder_forward.1} parent=0
    #allocation2 [shape = 'u8[1024]{0}', space=vmem, size = 0x400, scoped, tag = 'output window, operand 0, single buffered']
    #allocation3 [shape = 's32[1]{0}', space=sflag, size = 0x4, scoped, tag = 'scoped memory for encoder_forward.1']
    %14 = vsyncpa [#allocation3], 0
    // Predicated region
    $region2: #{encoder_forward.1} parent=1 // pred_check
      _
    $region3: #{encoder_forward.1} parent=1 // pred_check_branch
      %16 = sbr.rel (0) target = $region5
    $region4: #{encoder_forward.1} parent=1 // pred_region
      _
    $region5: #{encoder_forward.1} parent=1 // pred_fallthru
      _
    // Predicated region
    $region6: #{encoder_forward.1} parent=1 // pred_check
      _
    $region7: #{encoder_forward.1} parent=1 // pred_check_branch
      %18 = sbr.rel (0) target = $region9
    $region8: #{encoder_forward.1} parent=1 // pred_region
      _
    $region9: #{encoder_forward.1} parent=1 // pred_fallthru
      _
    // Predicated region
    $region10: #{encoder_forward.1} parent=1 // pred_check
      _
    $region11: #{encoder_forward.1} parent=1 // pred_check_branch
      %20 = sbr.rel (0) target = $region13
    $region12: #{encoder_forward.1} parent=1 // pred_region
      _
    $region13: #{encoder_forward.1} parent=1 // pred_fallthru
      _
    // Predicated region
    $region14: #{encoder_forward.1} parent=1 // pred_check
      _
    $region15: #{encoder_forward.1} parent=1 // pred_check_branch
      %22 = sbr.rel (0) target = $region17
    $region16: #{encoder_forward.1} parent=1 // pred_region
      _
    $region17: #{encoder_forward.1} parent=1 // pred_fallthru
      _
    // Predicated region
    $region18: #{encoder_forward.1} parent=1 // pred_check
      _
    $region19: #{encoder_forward.1} parent=1 // pred_check_branch
      %24 = sbr.rel (0) target = $region21
    $region20: #{encoder_forward.1} parent=1 // pred_region
      _
    $region21: #{encoder_forward.1} parent=1 // pred_fallthru
      _
    // Predicated region
    $region22: #{encoder_forward.1} parent=1 // pred_check
      _
    $region23: #{encoder_forward.1} parent=1 // pred_check_branch
      %26 = sbr.rel (0) target = $region25
    $region24: #{encoder_forward.1} parent=1 // pred_region
      _
    $region25: #{encoder_forward.1} parent=1 // pred_fallthru
      _
    // Predicated region
    $region26: #{encoder_forward.1} parent=1 // pred_check
      _
    $region27: #{encoder_forward.1} parent=1 // pred_check_branch
      %28 = sbr.rel (0) target = $region29
    $region28: #{encoder_forward.1} parent=1 // pred_region
      _
    $region29: #{encoder_forward.1} parent=1 // pred_fallthru
      _
    // Predicated region
    $region30: #{encoder_forward.1} parent=1 // pred_check
      _
    $region31: #{encoder_forward.1} parent=1 // pred_check_branch
      %30 = sbr.rel (0) target = $region33
    $region32: #{encoder_forward.1} parent=1 // pred_region
      _
    $region33: #{encoder_forward.1} parent=1 // pred_fallthru
      _
    // Predicated region
    $region34: #{encoder_forward.1} parent=1 // pred_check
      _
    $region35: #{encoder_forward.1} parent=1 // pred_check_branch
      %32 = sbr.rel (0) target = $region37
    $region36: #{encoder_forward.1} parent=1 // pred_region
      _
    $region37: #{encoder_forward.1} parent=1 // pred_fallthru
      _
    %v34 = vld [vmem:[%s0] sm:$0xf]
    %v35 = vld [vmem:[%s0 + $0x4] sm:$0xf]
    %v36 = vld [vmem:[%s0 + $0x8] sm:$0xf]
    %v37 = vld [vmem:[%s0 + $0xc] sm:$0xf]
    %v38 = vld [vmem:[%s0 + $0x10] sm:$0xf]
    %v39 = vld [vmem:[%s0 + $0x14] sm:$0xf]
    %v40 = vld [vmem:[%s0 + $0x18] sm:$0xf]
    %v41 = vld [vmem:[%s0 + $0x1c] sm:$0xf]
    %v42 = vld [vmem:[%s0 + $0x20] sm:$0xf]
    %v43 = vld [vmem:[%s0 + $0x24] sm:$0xf]
    %v44 = vld [vmem:[%s0 + $0x28] sm:$0xf]
    %v45 = vld [vmem:[%s0 + $0x2c] sm:$0xf]
    %v46 = vld [vmem:[%s0 + $0x30] sm:$0xf]
    %v47 = vld [vmem:[%s0 + $0x34] sm:$0xf]
    %v48 = vld [vmem:[%s0 + $0x38] sm:$0xf]
    %v49 = vld [vmem:[%s0 + $0x3c] sm:$0xf]
    %v50 = vld [vmem:[%s0 + $0x40] sm:$0xf]
    %v51 = vld [vmem:[%s0 + $0x44] sm:$0xf]
    %v52 = vld [vmem:[%s0 + $0x48] sm:$0xf]
    %v53 = vld [vmem:[%s0 + $0x4c] sm:$0xf]
    %v54 = vld [vmem:[%s0 + $0x50] sm:$0xf]
    %v55 = vld [vmem:[%s0 + $0x54] sm:$0xf]
    %v56 = vld [vmem:[%s0 + $0x58] sm:$0xf]
    %v57 = vld [vmem:[%s0 + $0x5c] sm:$0xf]
    %v58 = vld [vmem:[%s0 + $0x60] sm:$0xf]
    %v59 = vld [vmem:[%s0 + $0x64] sm:$0xf]
    %v60 = vld [vmem:[%s0 + $0x68] sm:$0xf]
    %v61 = vld [vmem:[%s0 + $0x6c] sm:$0xf]
    %v62 = vld [vmem:[%s0 + $0x70] sm:$0xf]
    %v63 = vld [vmem:[%s0 + $0x74] sm:$0xf]
    %v64 = vld [vmem:[%s0 + $0x78] sm:$0xf]
    %v65 = vld [vmem:[%s0 + $0x7c] sm:$0xf]
    %v66 = vld [vmem:[%s0 + $0x80] sm:$0xf]
    %v67 = vld [vmem:[%s0 + $0x84] sm:$0xf]
    %v68 = vld [vmem:[%s0 + $0x88] sm:$0xf]
    %v69 = vld [vmem:[%s0 + $0x8c] sm:$0xf]
    %v70 = vld [vmem:[%s0 + $0x90] sm:$0xf]
    %v71 = vld [vmem:[%s0 + $0x94] sm:$0xf]
    %v72 = vld [vmem:[%s0 + $0x98] sm:$0xf]
    %v73 = vld [vmem:[%s0 + $0x9c] sm:$0xf]
    %v74 = vld [vmem:[%s0 + $0xa0] sm:$0xf]
    %v75 = vld [vmem:[%s0 + $0xa4] sm:$0xf]
    %v76 = vld [vmem:[%s0 + $0xa8] sm:$0xf]
    %v77 = vld [vmem:[%s0 + $0xac] sm:$0xf]
    %v78 = vld [vmem:[%s0 + $0xb0] sm:$0xf]
    %v79 = vld [vmem:[%s0 + $0xb4] sm:$0xf]
    %v80 = vld [vmem:[%s0 + $0xb8] sm:$0xf]
    %v81 = vld [vmem:[%s0 + $0xbc] sm:$0xf]
    %v82 = vld [vmem:[%s0 + $0xc0] sm:$0xf]
    %v83 = vld [vmem:[%s0 + $0xc4] sm:$0xf]
    %v84 = vld [vmem:[%s0 + $0xc8] sm:$0xf]
    %v85 = vld [vmem:[%s0 + $0xcc] sm:$0xf]
    %v86 = vld [vmem:[%s0 + $0xd0] sm:$0xf]
    %v87 = vld [vmem:[%s0 + $0xd4] sm:$0xf]
    %v88 = vld [vmem:[%s0 + $0xd8] sm:$0xf]
    %v89 = vld [vmem:[%s0 + $0xdc] sm:$0xf]
    %v90 = vld [vmem:[%s0 + $0xe0] sm:$0xf]
    %v91 = vld [vmem:[%s0 + $0xe4] sm:$0xf]
    %v92 = vld [vmem:[%s0 + $0xe8] sm:$0xf]
    %v93 = vld [vmem:[%s0 + $0xec] sm:$0xf]
    %v94 = vld [vmem:[%s0 + $0xf0] sm:$0xf]
    %v95 = vld [vmem:[%s0 + $0xf4] sm:$0xf]
    %v96 = vld [vmem:[%s0 + $0xf8] sm:$0xf]
    %v97 = vld [vmem:[%s0 + $0xfc] sm:$0xf]
    %v98 = vld [vmem:[%s1] sm:$0xf]
    %v99 = vld [vmem:[%s1 + $0x4] sm:$0xf]
    %v100 = vld [vmem:[%s1 + $0x8] sm:$0xf]
    %v101 = vld [vmem:[%s1 + $0xc] sm:$0xf]
    %v102 = vld [vmem:[%s1 + $0x10] sm:$0xf]
    %v103 = vld [vmem:[%s1 + $0x14] sm:$0xf]
    %v104 = vld [vmem:[%s1 + $0x18] sm:$0xf]
    %v105 = vld [vmem:[%s1 + $0x1c] sm:$0xf]
    %v170 = vunpack.c.l.b16 %v34
    %v171 = vunpack.c.l.b16 %v35
    %v172 = vunpack.c.l.b16 %v36
    %v173 = vunpack.c.l.b16 %v37
    %v174 = vunpack.c.l.b16 %v38
    %v175 = vunpack.c.l.b16 %v39
    %v176 = vunpack.c.l.b16 %v40
    %v177 = vunpack.c.l.b16 %v41
    %v178 = vunpack.c.l.b16 %v42
    %v179 = vunpack.c.l.b16 %v43
    %v180 = vunpack.c.l.b16 %v44
    %v181 = vunpack.c.l.b16 %v45
    %v182 = vunpack.c.l.b16 %v46
    %v183 = vunpack.c.l.b16 %v47
    %v184 = vunpack.c.l.b16 %v48
    %v185 = vunpack.c.l.b16 %v49
    %v186 = vunpack.c.l.b16 %v50
    %v187 = vunpack.c.l.b16 %v51
    %v188 = vunpack.c.l.b16 %v52
    %v189 = vunpack.c.l.b16 %v53
    %v190 = vunpack.c.l.b16 %v54
    %v191 = vunpack.c.l.b16 %v55
    %v192 = vunpack.c.l.b16 %v56
    %v193 = vunpack.c.l.b16 %v57
    %v194 = vunpack.c.l.b16 %v58
    %v195 = vunpack.c.l.b16 %v59
    %v196 = vunpack.c.l.b16 %v60
    %v197 = vunpack.c.l.b16 %v61
    %v198 = vunpack.c.l.b16 %v62
    %v199 = vunpack.c.l.b16 %v63
    %v200 = vunpack.c.l.b16 %v64
    %v201 = vunpack.c.l.b16 %v65
    %v202 = vunpack.c.l.b16 %v66
    %v203 = vunpack.c.l.b16 %v67
    %v204 = vunpack.c.l.b16 %v68
    %v205 = vunpack.c.l.b16 %v69
    %v206 = vunpack.c.l.b16 %v70
    %v207 = vunpack.c.l.b16 %v71
    %v208 = vunpack.c.l.b16 %v72
    %v209 = vunpack.c.l.b16 %v73
    %v210 = vunpack.c.l.b16 %v74
    %v211 = vunpack.c.l.b16 %v75
    %v212 = vunpack.c.l.b16 %v76
    %v213 = vunpack.c.l.b16 %v77
    %v214 = vunpack.c.l.b16 %v78
    %v215 = vunpack.c.l.b16 %v79
    %v216 = vunpack.c.l.b16 %v80
    %v217 = vunpack.c.l.b16 %v81
    %v218 = vunpack.c.l.b16 %v82
    %v219 = vunpack.c.l.b16 %v83
    %v220 = vunpack.c.l.b16 %v84
    %v221 = vunpack.c.l.b16 %v85
    %v222 = vunpack.c.l.b16 %v86
    %v223 = vunpack.c.l.b16 %v87
    %v224 = vunpack.c.l.b16 %v88
    %v225 = vunpack.c.l.b16 %v89
    %v226 = vunpack.c.l.b16 %v90
    %v227 = vunpack.c.l.b16 %v91
    %v228 = vunpack.c.l.b16 %v92
    %v229 = vunpack.c.l.b16 %v93
    %v230 = vunpack.c.l.b16 %v94
    %v231 = vunpack.c.l.b16 %v95
    %v232 = vunpack.c.l.b16 %v96
    %v233 = vunpack.c.l.b16 %v97
    %v234 = vpack.c.b16 %v171, %v170
    %v235 = vpack.c.b16 %v173, %v172
    %v236 = vpack.c.b16 %v175, %v174
    %v237 = vpack.c.b16 %v177, %v176
    %v238 = vpack.c.b16 %v179, %v178
    %v239 = vpack.c.b16 %v181, %v180
    %v240 = vpack.c.b16 %v183, %v182
    %v241 = vpack.c.b16 %v185, %v184
    %v242 = vpack.c.b16 %v187, %v186
    %v243 = vpack.c.b16 %v189, %v188
    %v244 = vpack.c.b16 %v191, %v190
    %v245 = vpack.c.b16 %v193, %v192
    %v246 = vpack.c.b16 %v195, %v194
    %v247 = vpack.c.b16 %v197, %v196
    %v248 = vpack.c.b16 %v199, %v198
    %v249 = vpack.c.b16 %v201, %v200
    %v250 = vpack.c.b16 %v203, %v202
    %v251 = vpack.c.b16 %v205, %v204
    %v252 = vpack.c.b16 %v207, %v206
    %v253 = vpack.c.b16 %v209, %v208
    %v254 = vpack.c.b16 %v211, %v210
    %v255 = vpack.c.b16 %v213, %v212
    %v256 = vpack.c.b16 %v215, %v214
    %v257 = vpack.c.b16 %v217, %v216
    %v258 = vpack.c.b16 %v219, %v218
    %v259 = vpack.c.b16 %v221, %v220
    %v260 = vpack.c.b16 %v223, %v222
    %v261 = vpack.c.b16 %v225, %v224
    %v262 = vpack.c.b16 %v227, %v226
    %v263 = vpack.c.b16 %v229, %v228
    %v264 = vpack.c.b16 %v231, %v230
    %v265 = vpack.c.b16 %v233, %v232
    %v274 = vunpack.c.l.b16 %v98
    %v275 = vunpack.c.l.b16 %v99
    %v276 = vunpack.c.l.b16 %v100
    %v277 = vunpack.c.l.b16 %v101
    %v278 = vunpack.c.l.b16 %v102
    %v279 = vunpack.c.l.b16 %v103
    %v280 = vunpack.c.l.b16 %v104
    %v281 = vunpack.c.l.b16 %v105
    %v282 = vpack.c.b16 %v275, %v274
    %v283 = vpack.c.b16 %v277, %v276
    %v284 = vpack.c.b16 %v279, %v278
    %v285 = vpack.c.b16 %v281, %v280
    %vm290 = vcmask 523264
    %v292 = vsel %vm290, %v234, 0
    %v295 = vsel %vm290, %v235, 0
    %v298 = vsel %vm290, %v236, 0
    %v301 = vsel %vm290, %v237, 0
    %v304 = vsel %vm290, %v238, 0
    %v307 = vsel %vm290, %v239, 0
    %v310 = vsel %vm290, %v240, 0
    %v313 = vsel %vm290, %v241, 0
    %v316 = vsel %vm290, %v242, 0
    %v319 = vsel %vm290, %v243, 0
    %v322 = vsel %vm290, %v244, 0
    %v325 = vsel %vm290, %v245, 0
    %v328 = vsel %vm290, %v246, 0
    %v331 = vsel %vm290, %v247, 0
    %v334 = vsel %vm290, %v248, 0
    %v337 = vsel %vm290, %v249, 0
    %v340 = vsel %vm290, %v250, 0
    %v343 = vsel %vm290, %v251, 0
    %v346 = vsel %vm290, %v252, 0
    %v349 = vsel %vm290, %v253, 0
    %v352 = vsel %vm290, %v254, 0
    %v355 = vsel %vm290, %v255, 0
    %v358 = vsel %vm290, %v256, 0
    %v361 = vsel %vm290, %v257, 0
    %v364 = vsel %vm290, %v258, 0
    %v367 = vsel %vm290, %v259, 0
    %v370 = vsel %vm290, %v260, 0
    %v373 = vsel %vm290, %v261, 0
    %v376 = vsel %vm290, %v262, 0
    %v379 = vsel %vm290, %v263, 0
    %v382 = vsel %vm290, %v264, 0
    %v385 = vsel %vm290, %v265, 0
    %387 = vmatprep.subr.bf16.mxu0 0
    %388 = vmatpush1.bf16.msra.mxu0 %v282
    %389 = vmatprep.subr.bf16.mxu0 0
    %390 = vmatpush1.bf16.msra.mxu0 %v283
    %391 = vmatprep.subr.bf16.mxu0 0
    %392 = vmatpush1.bf16.msra.mxu0 %v284
    %393 = vmatprep.subr.bf16.mxu0 0
    %394 = vmatpush1.bf16.msra.mxu0 %v285
    %395 = vmatprep.subr.bf16.mxu0 0
    %396 = vmatpush1.bf16.msra.mxu0 0
    %397 = vmatprep.subr.bf16.mxu0 0
    %398 = vmatpush1.bf16.msra.mxu0 0
    %399 = vmatprep.subr.bf16.mxu0 0
    %400 = vmatpush1.bf16.msra.mxu0 0
    %401 = vmatprep.subr.bf16.mxu0 0
    %402 = vmatpush1.bf16.msra.mxu0 0
    %403 = vmatprep.subr.bf16.mxu0 0
    %404 = vmatpush1.bf16.msra.mxu0 0
    %405 = vmatprep.subr.bf16.mxu0 0
    %406 = vmatpush1.bf16.msra.mxu0 0
    %407 = vmatprep.subr.bf16.mxu0 0
    %408 = vmatpush1.bf16.msra.mxu0 0
    %409 = vmatprep.subr.bf16.mxu0 0
    %410 = vmatpush1.bf16.msra.mxu0 0
    %411 = vmatprep.subr.bf16.mxu0 0
    %412 = vmatpush1.bf16.msra.mxu0 0
    %413 = vmatprep.subr.bf16.mxu0 0
    %414 = vmatpush1.bf16.msra.mxu0 0
    %415 = vmatprep.subr.bf16.mxu0 0
    %416 = vmatpush1.bf16.msra.mxu0 0
    %417 = vmatprep.subr.bf16.mxu0 0
    %418 = vmatpush1.bf16.msra.mxu0 0
    %419 = vmatprep.mubr.bf16.mxu0 0
    %420 = vmatmul.mubr.bf16.gmra.mrb[0].mxu0 %v292
    %v421 = vpop.f32.mrb[0].mxu0
    %v422 = vadd.f32 0.0, %v421
    %v423 = vpop.f32.mrb[0].mxu0
    %v424 = vpop.f32.mrb[0].mxu0
    %v425 = vadd.f32 0.0, %v424
    %v426 = vpop.f32.mrb[0].mxu0
    %427 = vmatprep.mubr.bf16.mxu0 0
    %428 = vmatmul.mubr.bf16.gmra.mrb[0].mxu0 %v295
    %v429 = vpop.f32.mrb[0].mxu0
    %v430 = vadd.f32 0.0, %v429
    %v431 = vpop.f32.mrb[0].mxu0
    %v432 = vpop.f32.mrb[0].mxu0
    %v433 = vadd.f32 0.0, %v432
    %v434 = vpop.f32.mrb[0].mxu0
    %435 = vmatprep.mubr.bf16.mxu0 0
    %436 = vmatmul.mubr.bf16.gmra.mrb[0].mxu0 %v298
    %v437 = vpop.f32.mrb[0].mxu0
    %v438 = vadd.f32 0.0, %v437
    %v439 = vpop.f32.mrb[0].mxu0
    %v440 = vpop.f32.mrb[0].mxu0
    %v441 = vadd.f32 0.0, %v440
    %v442 = vpop.f32.mrb[0].mxu0
    %443 = vmatprep.mubr.bf16.mxu0 0
    %444 = vmatmul.mubr.bf16.gmra.mrb[0].mxu0 %v301
    %v445 = vpop.f32.mrb[0].mxu0
    %v446 = vadd.f32 0.0, %v445
    %v447 = vpop.f32.mrb[0].mxu0
    %v448 = vpop.f32.mrb[0].mxu0
    %v449 = vadd.f32 0.0, %v448
    %v450 = vpop.f32.mrb[0].mxu0
    %451 = vmatprep.mubr.bf16.mxu0 0
    %452 = vmatmul.mubr.bf16.gmra.mrb[0].mxu0 %v304
    %v453 = vpop.f32.mrb[0].mxu0
    %v454 = vadd.f32 0.0, %v453
    %v455 = vpop.f32.mrb[0].mxu0
    %v456 = vpop.f32.mrb[0].mxu0
    %v457 = vadd.f32 0.0, %v456
    %v458 = vpop.f32.mrb[0].mxu0
    %459 = vmatprep.mubr.bf16.mxu0 0
    %460 = vmatmul.mubr.bf16.gmra.mrb[0].mxu0 %v307
    %v461 = vpop.f32.mrb[0].mxu0
    %v462 = vadd.f32 0.0, %v461
    %v463 = vpop.f32.mrb[0].mxu0
    %v464 = vpop.f32.mrb[0].mxu0
    %v465 = vadd.f32 0.0, %v464
    %v466 = vpop.f32.mrb[0].mxu0
    %467 = vmatprep.mubr.bf16.mxu0 0
    %468 = vmatmul.mubr.bf16.gmra.mrb[0].mxu0 %v310
    %v469 = vpop.f32.mrb[0].mxu0
    %v470 = vadd.f32 0.0, %v469
    %v471 = vpop.f32.mrb[0].mxu0
    %v472 = vpop.f32.mrb[0].mxu0
    %v473 = vadd.f32 0.0, %v472
    %v474 = vpop.f32.mrb[0].mxu0
    %475 = vmatprep.mubr.bf16.mxu0 0
    %476 = vmatmul.mubr.bf16.gmra.mrb[0].mxu0 %v313
    %v477 = vpop.f32.mrb[0].mxu0
    %v478 = vadd.f32 0.0, %v477
    %v479 = vpop.f32.mrb[0].mxu0
    %v480 = vpop.f32.mrb[0].mxu0
    %v481 = vadd.f32 0.0, %v480
    %v482 = vpop.f32.mrb[0].mxu0
    %483 = vmatprep.mubr.bf16.mxu0 0
    %484 = vmatmul.mubr.bf16.gmra.mrb[0].mxu0 %v316
    %v485 = vpop.f32.mrb[0].mxu0
    %v486 = vadd.f32 0.0, %v485
    %v487 = vpop.f32.mrb[0].mxu0
    %v488 = vpop.f32.mrb[0].mxu0
    %v489 = vadd.f32 0.0, %v488
    %v490 = vpop.f32.mrb[0].mxu0
    %491 = vmatprep.mubr.bf16.mxu0 0
    %492 = vmatmul.mubr.bf16.gmra.mrb[0].mxu0 %v319
    %v493 = vpop.f32.mrb[0].mxu0
    %v494 = vadd.f32 0.0, %v493
    %v495 = vpop.f32.mrb[0].mxu0
    %v496 = vpop.f32.mrb[0].mxu0
    %v497 = vadd.f32 0.0, %v496
    %v498 = vpop.f32.mrb[0].mxu0
    %499 = vmatprep.mubr.bf16.mxu0 0
    %500 = vmatmul.mubr.bf16.gmra.mrb[0].mxu0 %v322
    %v501 = vpop.f32.mrb[0].mxu0
    %v502 = vadd.f32 0.0, %v501
    %v503 = vpop.f32.mrb[0].mxu0
    %v504 = vpop.f32.mrb[0].mxu0
    %v505 = vadd.f32 0.0, %v504
    %v506 = vpop.f32.mrb[0].mxu0
    %507 = vmatprep.mubr.bf16.mxu0 0
    %508 = vmatmul.mubr.bf16.gmra.mrb[0].mxu0 %v325
    %v509 = vpop.f32.mrb[0].mxu0
    %v510 = vadd.f32 0.0, %v509
    %v511 = vpop.f32.mrb[0].mxu0
    %v512 = vpop.f32.mrb[0].mxu0
    %v513 = vadd.f32 0.0, %v512
    %v514 = vpop.f32.mrb[0].mxu0
    %515 = vmatprep.mubr.bf16.mxu0 0
    %516 = vmatmul.mubr.bf16.gmra.mrb[0].mxu0 %v328
    %v517 = vpop.f32.mrb[0].mxu0
    %v518 = vadd.f32 0.0, %v517
    %v519 = vpop.f32.mrb[0].mxu0
    %v520 = vpop.f32.mrb[0].mxu0
    %v521 = vadd.f32 0.0, %v520
    %v522 = vpop.f32.mrb[0].mxu0
    %523 = vmatprep.mubr.bf16.mxu0 0
    %524 = vmatmul.mubr.bf16.gmra.mrb[0].mxu0 %v331
    %v525 = vpop.f32.mrb[0].mxu0
    %v526 = vadd.f32 0.0, %v525
    %v527 = vpop.f32.mrb[0].mxu0
    %v528 = vpop.f32.mrb[0].mxu0
    %v529 = vadd.f32 0.0, %v528
    %v530 = vpop.f32.mrb[0].mxu0
    %531 = vmatprep.mubr.bf16.mxu0 0
    %532 = vmatmul.mubr.bf16.gmra.mrb[0].mxu0 %v334
    %v533 = vpop.f32.mrb[0].mxu0
    %v534 = vadd.f32 0.0, %v533
    %v535 = vpop.f32.mrb[0].mxu0
    %v536 = vpop.f32.mrb[0].mxu0
    %v537 = vadd.f32 0.0, %v536
    %v538 = vpop.f32.mrb[0].mxu0
    %539 = vmatprep.mubr.bf16.mxu0 0
    %540 = vmatmul.mubr.bf16.gmra.mrb[0].mxu0 %v337
    %v541 = vpop.f32.mrb[0].mxu0
    %v542 = vadd.f32 0.0, %v541
    %v543 = vpop.f32.mrb[0].mxu0
    %v544 = vpop.f32.mrb[0].mxu0
    %v545 = vadd.f32 0.0, %v544
    %v546 = vpop.f32.mrb[0].mxu0
    %547 = vmatprep.mubr.bf16.mxu0 0
    %548 = vmatmul.mubr.bf16.gmra.mrb[0].mxu0 %v340
    %v549 = vpop.f32.mrb[0].mxu0
    %v550 = vadd.f32 0.0, %v549
    %v551 = vpop.f32.mrb[0].mxu0
    %v552 = vpop.f32.mrb[0].mxu0
    %v553 = vadd.f32 0.0, %v552
    %v554 = vpop.f32.mrb[0].mxu0
    %555 = vmatprep.mubr.bf16.mxu0 0
    %556 = vmatmul.mubr.bf16.gmra.mrb[0].mxu0 %v343
    %v557 = vpop.f32.mrb[0].mxu0
    %v558 = vadd.f32 0.0, %v557
    %v559 = vpop.f32.mrb[0].mxu0
    %v560 = vpop.f32.mrb[0].mxu0
    %v561 = vadd.f32 0.0, %v560
    %v562 = vpop.f32.mrb[0].mxu0
    %563 = vmatprep.mubr.bf16.mxu0 0
    %564 = vmatmul.mubr.bf16.gmra.mrb[0].mxu0 %v346
    %v565 = vpop.f32.mrb[0].mxu0
    %v566 = vadd.f32 0.0, %v565
    %v567 = vpop.f32.mrb[0].mxu0
    %v568 = vpop.f32.mrb[0].mxu0
    %v569 = vadd.f32 0.0, %v568
    %v570 = vpop.f32.mrb[0].mxu0
    %571 = vmatprep.mubr.bf16.mxu0 0
    %572 = vmatmul.mubr.bf16.gmra.mrb[0].mxu0 %v349
    %v573 = vpop.f32.mrb[0].mxu0
    %v574 = vadd.f32 0.0, %v573
    %v575 = vpop.f32.mrb[0].mxu0
    %v576 = vpop.f32.mrb[0].mxu0
    %v577 = vadd.f32 0.0, %v576
    %v578 = vpop.f32.mrb[0].mxu0
    %579 = vmatprep.mubr.bf16.mxu0 0
    %580 = vmatmul.mubr.bf16.gmra.mrb[0].mxu0 %v352
    %v581 = vpop.f32.mrb[0].mxu0
    %v582 = vadd.f32 0.0, %v581
    %v583 = vpop.f32.mrb[0].mxu0
    %v584 = vpop.f32.mrb[0].mxu0
    %v585 = vadd.f32 0.0, %v584
    %v586 = vpop.f32.mrb[0].mxu0
    %587 = vmatprep.mubr.bf16.mxu0 0
    %588 = vmatmul.mubr.bf16.gmra.mrb[0].mxu0 %v355
    %v589 = vpop.f32.mrb[0].mxu0
    %v590 = vadd.f32 0.0, %v589
    %v591 = vpop.f32.mrb[0].mxu0
    %v592 = vpop.f32.mrb[0].mxu0
    %v593 = vadd.f32 0.0, %v592
    %v594 = vpop.f32.mrb[0].mxu0
    %595 = vmatprep.mubr.bf16.mxu0 0
    %596 = vmatmul.mubr.bf16.gmra.mrb[0].mxu0 %v358
    %v597 = vpop.f32.mrb[0].mxu0
    %v598 = vadd.f32 0.0, %v597
    %v599 = vpop.f32.mrb[0].mxu0
    %v600 = vpop.f32.mrb[0].mxu0
    %v601 = vadd.f32 0.0, %v600
    %v602 = vpop.f32.mrb[0].mxu0
    %603 = vmatprep.mubr.bf16.mxu0 0
    %604 = vmatmul.mubr.bf16.gmra.mrb[0].mxu0 %v361
    %v605 = vpop.f32.mrb[0].mxu0
    %v606 = vadd.f32 0.0, %v605
    %v607 = vpop.f32.mrb[0].mxu0
    %v608 = vpop.f32.mrb[0].mxu0
    %v609 = vadd.f32 0.0, %v608
    %v610 = vpop.f32.mrb[0].mxu0
    %611 = vmatprep.mubr.bf16.mxu0 0
    %612 = vmatmul.mubr.bf16.gmra.mrb[0].mxu0 %v364
    %v613 = vpop.f32.mrb[0].mxu0
    %v614 = vadd.f32 0.0, %v613
    %v615 = vpop.f32.mrb[0].mxu0
    %v616 = vpop.f32.mrb[0].mxu0
    %v617 = vadd.f32 0.0, %v616
    %v618 = vpop.f32.mrb[0].mxu0
    %619 = vmatprep.mubr.bf16.mxu0 0
    %620 = vmatmul.mubr.bf16.gmra.mrb[0].mxu0 %v367
    %v621 = vpop.f32.mrb[0].mxu0
    %v622 = vadd.f32 0.0, %v621
    %v623 = vpop.f32.mrb[0].mxu0
    %v624 = vpop.f32.mrb[0].mxu0
    %v625 = vadd.f32 0.0, %v624
    %v626 = vpop.f32.mrb[0].mxu0
    %627 = vmatprep.mubr.bf16.mxu0 0
    %628 = vmatmul.mubr.bf16.gmra.mrb[0].mxu0 %v370
    %v629 = vpop.f32.mrb[0].mxu0
    %v630 = vadd.f32 0.0, %v629
    %v631 = vpop.f32.mrb[0].mxu0
    %v632 = vpop.f32.mrb[0].mxu0
    %v633 = vadd.f32 0.0, %v632
    %v634 = vpop.f32.mrb[0].mxu0
    %635 = vmatprep.mubr.bf16.mxu0 0
    %636 = vmatmul.mubr.bf16.gmra.mrb[0].mxu0 %v373
    %v637 = vpop.f32.mrb[0].mxu0
    %v638 = vadd.f32 0.0, %v637
    %v639 = vpop.f32.mrb[0].mxu0
    %v640 = vpop.f32.mrb[0].mxu0
    %v641 = vadd.f32 0.0, %v640
    %v642 = vpop.f32.mrb[0].mxu0
    %643 = vmatprep.mubr.bf16.mxu0 0
    %644 = vmatmul.mubr.bf16.gmra.mrb[0].mxu0 %v376
    %v645 = vpop.f32.mrb[0].mxu0
    %v646 = vadd.f32 0.0, %v645
    %v647 = vpop.f32.mrb[0].mxu0
    %v648 = vpop.f32.mrb[0].mxu0
    %v649 = vadd.f32 0.0, %v648
    %v650 = vpop.f32.mrb[0].mxu0
    %651 = vmatprep.mubr.bf16.mxu0 0
    %652 = vmatmul.mubr.bf16.gmra.mrb[0].mxu0 %v379
    %v653 = vpop.f32.mrb[0].mxu0
    %v654 = vadd.f32 0.0, %v653
    %v655 = vpop.f32.mrb[0].mxu0
    %v656 = vpop.f32.mrb[0].mxu0
    %v657 = vadd.f32 0.0, %v656
    %v658 = vpop.f32.mrb[0].mxu0
    %659 = vmatprep.mubr.bf16.mxu0 0
    %660 = vmatmul.mubr.bf16.gmra.mrb[0].mxu0 %v382
    %v661 = vpop.f32.mrb[0].mxu0
    %v662 = vadd.f32 0.0, %v661
    %v663 = vpop.f32.mrb[0].mxu0
    %v664 = vpop.f32.mrb[0].mxu0
    %v665 = vadd.f32 0.0, %v664
    %v666 = vpop.f32.mrb[0].mxu0
    %667 = vmatprep.mubr.bf16.mxu0 0
    %668 = vmatmul.mubr.bf16.gmra.mrb[0].mxu0 %v385
    %v669 = vpop.f32.mrb[0].mxu0
    %v670 = vadd.f32 0.0, %v669
    %v671 = vpop.f32.mrb[0].mxu0
    %v672 = vpop.f32.mrb[0].mxu0
    %v673 = vadd.f32 0.0, %v672
    %v674 = vpop.f32.mrb[0].mxu0
    %675 = vdwg.mxu0
    %v676 = vld [vmem:[%s8] sm:$0x1]
    %v677 = vld [vmem:[%s8 + $0x1] sm:$0x1]
    %vm678 = vcmask 64512
    %v679 = vsel %vm678, %v422, 0.0
    %v680 = vsel %vm678, %v425, 0.0
    %v681 = vadd.f32 %v679, %v680
    %v682 = vsel %vm678, %v430, 0.0
    %v683 = vadd.f32 %v681, %v682
    %v684 = vsel %vm678, %v433, 0.0
    %v685 = vadd.f32 %v683, %v684
    %v686 = vsel %vm678, %v438, 0.0
    %v687 = vadd.f32 %v685, %v686
    %v688 = vsel %vm678, %v441, 0.0
    %v689 = vadd.f32 %v687, %v688
    %v690 = vsel %vm678, %v446, 0.0
    %v691 = vadd.f32 %v689, %v690
    %v692 = vsel %vm678, %v449, 0.0
    %v693 = vadd.f32 %v691, %v692
    %v694 = vsel %vm678, %v454, 0.0
    %v695 = vadd.f32 %v693, %v694
    %v696 = vsel %vm678, %v457, 0.0
    %v697 = vadd.f32 %v695, %v696
    %v698 = vsel %vm678, %v462, 0.0
    %v699 = vadd.f32 %v697, %v698
    %v700 = vsel %vm678, %v465, 0.0
    %v701 = vadd.f32 %v699, %v700
    %v702 = vsel %vm678, %v470, 0.0
    %v703 = vadd.f32 %v701, %v702
    %v704 = vsel %vm678, %v473, 0.0
    %v705 = vadd.f32 %v703, %v704
    %v706 = vsel %vm678, %v478, 0.0
    %v707 = vadd.f32 %v705, %v706
    %v708 = vsel %vm678, %v481, 0.0
    %v709 = vadd.f32 %v707, %v708
    %v710 = vsel %vm678, %v486, 0.0
    %v711 = vadd.f32 %v709, %v710
    %v712 = vsel %vm678, %v489, 0.0
    %v713 = vadd.f32 %v711, %v712
    %v714 = vsel %vm678, %v494, 0.0
    %v715 = vadd.f32 %v713, %v714
    %v716 = vsel %vm678, %v497, 0.0
    %v717 = vadd.f32 %v715, %v716
    %v718 = vsel %vm678, %v502, 0.0
    %v719 = vadd.f32 %v717, %v718
    %v720 = vsel %vm678, %v505, 0.0
    %v721 = vadd.f32 %v719, %v720
    %v722 = vsel %vm678, %v510, 0.0
    %v723 = vadd.f32 %v721, %v722
    %v724 = vsel %vm678, %v513, 0.0
    %v725 = vadd.f32 %v723, %v724
    %v726 = vsel %vm678, %v518, 0.0
    %v727 = vadd.f32 %v725, %v726
    %v728 = vsel %vm678, %v521, 0.0
    %v729 = vadd.f32 %v727, %v728
    %v730 = vsel %vm678, %v526, 0.0
    %v731 = vadd.f32 %v729, %v730
    %v732 = vsel %vm678, %v529, 0.0
    %v733 = vadd.f32 %v731, %v732
    %v734 = vsel %vm678, %v534, 0.0
    %v735 = vadd.f32 %v733, %v734
    %v736 = vsel %vm678, %v537, 0.0
    %v737 = vadd.f32 %v735, %v736
    %v738 = vsel %vm678, %v542, 0.0
    %v739 = vadd.f32 %v737, %v738
    %v740 = vsel %vm678, %v545, 0.0
    %v741 = vadd.f32 %v739, %v740
    %v742 = vsel %vm678, %v550, 0.0
    %v743 = vadd.f32 %v741, %v742
    %v744 = vsel %vm678, %v553, 0.0
    %v745 = vadd.f32 %v743, %v744
    %v746 = vsel %vm678, %v558, 0.0
    %v747 = vadd.f32 %v745, %v746
    %v748 = vsel %vm678, %v561, 0.0
    %v749 = vadd.f32 %v747, %v748
    %v750 = vsel %vm678, %v566, 0.0
    %v751 = vadd.f32 %v749, %v750
    %v752 = vsel %vm678, %v569, 0.0
    %v753 = vadd.f32 %v751, %v752
    %v754 = vsel %vm678, %v574, 0.0
    %v755 = vadd.f32 %v753, %v754
    %v756 = vsel %vm678, %v577, 0.0
    %v757 = vadd.f32 %v755, %v756
    %v758 = vsel %vm678, %v582, 0.0
    %v759 = vadd.f32 %v757, %v758
    %v760 = vsel %vm678, %v585, 0.0
    %v761 = vadd.f32 %v759, %v760
    %v762 = vsel %vm678, %v590, 0.0
    %v763 = vadd.f32 %v761, %v762
    %v764 = vsel %vm678, %v593, 0.0
    %v765 = vadd.f32 %v763, %v764
    %v766 = vsel %vm678, %v598, 0.0
    %v767 = vadd.f32 %v765, %v766
    %v768 = vsel %vm678, %v601, 0.0
    %v769 = vadd.f32 %v767, %v768
    %v770 = vsel %vm678, %v606, 0.0
    %v771 = vadd.f32 %v769, %v770
    %v772 = vsel %vm678, %v609, 0.0
    %v773 = vadd.f32 %v771, %v772
    %v774 = vsel %vm678, %v614, 0.0
    %v775 = vadd.f32 %v773, %v774
    %v776 = vsel %vm678, %v617, 0.0
    %v777 = vadd.f32 %v775, %v776
    %v778 = vsel %vm678, %v622, 0.0
    %v779 = vadd.f32 %v777, %v778
    %v780 = vsel %vm678, %v625, 0.0
    %v781 = vadd.f32 %v779, %v780
    %v782 = vsel %vm678, %v630, 0.0
    %v783 = vadd.f32 %v781, %v782
    %v784 = vsel %vm678, %v633, 0.0
    %v785 = vadd.f32 %v783, %v784
    %v786 = vsel %vm678, %v638, 0.0
    %v787 = vadd.f32 %v785, %v786
    %v788 = vsel %vm678, %v641, 0.0
    %v789 = vadd.f32 %v787, %v788
    %v790 = vsel %vm678, %v646, 0.0
    %v791 = vadd.f32 %v789, %v790
    %v792 = vsel %vm678, %v649, 0.0
    %v793 = vadd.f32 %v791, %v792
    %v794 = vsel %vm678, %v654, 0.0
    %v795 = vadd.f32 %v793, %v794
    %v796 = vsel %vm678, %v657, 0.0
    %v797 = vadd.f32 %v795, %v796
    %v798 = vsel %vm678, %v662, 0.0
    %v799 = vadd.f32 %v797, %v798
    %v800 = vsel %vm678, %v665, 0.0
    %v801 = vadd.f32 %v799, %v800
    %v802 = vsel %vm678, %v670, 0.0
    %v803 = vadd.f32 %v801, %v802
    %v804 = vsel %vm678, %v673, 0.0
    %v805 = vadd.f32 %v803, %v804
    %v806 = vrot.slane %v805, 4
    %v807 = vadd.f32 %v805, %v806
    %v808 = vrot.slane %v807, 2
    %v809 = vadd.f32 %v807, %v808
    %v810 = vrot.slane %v809, 1
    %v811 = vadd.f32 %v809, %v810
    %v812 = vmul.f32 %v811, 0.001953125
    %v813 = vmul.f32 %v422, %v422
    %v814 = vmul.f32 %v425, %v425
    %v815 = vmul.f32 %v430, %v430
    %v816 = vmul.f32 %v433, %v433
    %v817 = vmul.f32 %v438, %v438
    %v818 = vmul.f32 %v441, %v441
    %v819 = vmul.f32 %v446, %v446
    %v820 = vmul.f32 %v449, %v449
    %v821 = vmul.f32 %v454, %v454
    %v822 = vmul.f32 %v457, %v457
    %v823 = vmul.f32 %v462, %v462
    %v824 = vmul.f32 %v465, %v465
    %v825 = vmul.f32 %v470, %v470
    %v826 = vmul.f32 %v473, %v473
    %v827 = vmul.f32 %v478, %v478
    %v828 = vmul.f32 %v481, %v481
    %v829 = vmul.f32 %v486, %v486
    %v830 = vmul.f32 %v489, %v489
    %v831 = vmul.f32 %v494, %v494
    %v832 = vmul.f32 %v497, %v497
    %v833 = vmul.f32 %v502, %v502
    %v834 = vmul.f32 %v505, %v505
    %v835 = vmul.f32 %v510, %v510
    %v836 = vmul.f32 %v513, %v513
    %v837 = vmul.f32 %v518, %v518
    %v838 = vmul.f32 %v521, %v521
    %v839 = vmul.f32 %v526, %v526
    %v840 = vmul.f32 %v529, %v529
    %v841 = vmul.f32 %v534, %v534
    %v842 = vmul.f32 %v537, %v537
    %v843 = vmul.f32 %v542, %v542
    %v844 = vmul.f32 %v545, %v545
    %v845 = vmul.f32 %v550, %v550
    %v846 = vmul.f32 %v553, %v553
    %v847 = vmul.f32 %v558, %v558
    %v848 = vmul.f32 %v561, %v561
    %v849 = vmul.f32 %v566, %v566
    %v850 = vmul.f32 %v569, %v569
    %v851 = vmul.f32 %v574, %v574
    %v852 = vmul.f32 %v577, %v577
    %v853 = vmul.f32 %v582, %v582
    %v854 = vmul.f32 %v585, %v585
    %v855 = vmul.f32 %v590, %v590
    %v856 = vmul.f32 %v593, %v593
    %v857 = vmul.f32 %v598, %v598
    %v858 = vmul.f32 %v601, %v601
    %v859 = vmul.f32 %v606, %v606
    %v860 = vmul.f32 %v609, %v609
    %v861 = vmul.f32 %v614, %v614
    %v862 = vmul.f32 %v617, %v617
    %v863 = vmul.f32 %v622, %v622
    %v864 = vmul.f32 %v625, %v625
    %v865 = vmul.f32 %v630, %v630
    %v866 = vmul.f32 %v633, %v633
    %v867 = vmul.f32 %v638, %v638
    %v868 = vmul.f32 %v641, %v641
    %v869 = vmul.f32 %v646, %v646
    %v870 = vmul.f32 %v649, %v649
    %v871 = vmul.f32 %v654, %v654
    %v872 = vmul.f32 %v657, %v657
    %v873 = vmul.f32 %v662, %v662
    %v874 = vmul.f32 %v665, %v665
    %v875 = vmul.f32 %v670, %v670
    %v876 = vmul.f32 %v673, %v673
    %v877 = vsel %vm678, %v813, 0.0
    %v878 = vsel %vm678, %v814, 0.0
    %v879 = vadd.f32 %v877, %v878
    %v880 = vsel %vm678, %v815, 0.0
    %v881 = vadd.f32 %v879, %v880
    %v882 = vsel %vm678, %v816, 0.0
    %v883 = vadd.f32 %v881, %v882
    %v884 = vsel %vm678, %v817, 0.0
    %v885 = vadd.f32 %v883, %v884
    %v886 = vsel %vm678, %v818, 0.0
    %v887 = vadd.f32 %v885, %v886
    %v888 = vsel %vm678, %v819, 0.0
    %v889 = vadd.f32 %v887, %v888
    %v890 = vsel %vm678, %v820, 0.0
    %v891 = vadd.f32 %v889, %v890
    %v892 = vsel %vm678, %v821, 0.0
    %v893 = vadd.f32 %v891, %v892
    %v894 = vsel %vm678, %v822, 0.0
    %v895 = vadd.f32 %v893, %v894
    %v896 = vsel %vm678, %v823, 0.0
    %v897 = vadd.f32 %v895, %v896
    %v898 = vsel %vm678, %v824, 0.0
    %v899 = vadd.f32 %v897, %v898
    %v900 = vsel %vm678, %v825, 0.0
    %v901 = vadd.f32 %v899, %v900
    %v902 = vsel %vm678, %v826, 0.0
    %v903 = vadd.f32 %v901, %v902
    %v904 = vsel %vm678, %v827, 0.0
    %v905 = vadd.f32 %v903, %v904
    %v906 = vsel %vm678, %v828, 0.0
    %v907 = vadd.f32 %v905, %v906
    %v908 = vsel %vm678, %v829, 0.0
    %v909 = vadd.f32 %v907, %v908
    %v910 = vsel %vm678, %v830, 0.0
    %v911 = vadd.f32 %v909, %v910
    %v912 = vsel %vm678, %v831, 0.0
    %v913 = vadd.f32 %v911, %v912
    %v914 = vsel %vm678, %v832, 0.0
    %v915 = vadd.f32 %v913, %v914
    %v916 = vsel %vm678, %v833, 0.0
    %v917 = vadd.f32 %v915, %v916
    %v918 = vsel %vm678, %v834, 0.0
    %v919 = vadd.f32 %v917, %v918
    %v920 = vsel %vm678, %v835, 0.0
    %v921 = vadd.f32 %v919, %v920
    %v922 = vsel %vm678, %v836, 0.0
    %v923 = vadd.f32 %v921, %v922
    %v924 = vsel %vm678, %v837, 0.0
    %v925 = vadd.f32 %v923, %v924
    %v926 = vsel %vm678, %v838, 0.0
    %v927 = vadd.f32 %v925, %v926
    %v928 = vsel %vm678, %v839, 0.0
    %v929 = vadd.f32 %v927, %v928
    %v930 = vsel %vm678, %v840, 0.0
    %v931 = vadd.f32 %v929, %v930
    %v932 = vsel %vm678, %v841, 0.0
    %v933 = vadd.f32 %v931, %v932
    %v934 = vsel %vm678, %v842, 0.0
    %v935 = vadd.f32 %v933, %v934
    %v936 = vsel %vm678, %v843, 0.0
    %v937 = vadd.f32 %v935, %v936
    %v938 = vsel %vm678, %v844, 0.0
    %v939 = vadd.f32 %v937, %v938
    %v940 = vsel %vm678, %v845, 0.0
    %v941 = vadd.f32 %v939, %v940
    %v942 = vsel %vm678, %v846, 0.0
    %v943 = vadd.f32 %v941, %v942
    %v944 = vsel %vm678, %v847, 0.0
    %v945 = vadd.f32 %v943, %v944
    %v946 = vsel %vm678, %v848, 0.0
    %v947 = vadd.f32 %v945, %v946
    %v948 = vsel %vm678, %v849, 0.0
    %v949 = vadd.f32 %v947, %v948
    %v950 = vsel %vm678, %v850, 0.0
    %v951 = vadd.f32 %v949, %v950
    %v952 = vsel %vm678, %v851, 0.0
    %v953 = vadd.f32 %v951, %v952
    %v954 = vsel %vm678, %v852, 0.0
    %v955 = vadd.f32 %v953, %v954
    %v956 = vsel %vm678, %v853, 0.0
    %v957 = vadd.f32 %v955, %v956
    %v958 = vsel %vm678, %v854, 0.0
    %v959 = vadd.f32 %v957, %v958
    %v960 = vsel %vm678, %v855, 0.0
    %v961 = vadd.f32 %v959, %v960
    %v962 = vsel %vm678, %v856, 0.0
    %v963 = vadd.f32 %v961, %v962
    %v964 = vsel %vm678, %v857, 0.0
    %v965 = vadd.f32 %v963, %v964
    %v966 = vsel %vm678, %v858, 0.0
    %v967 = vadd.f32 %v965, %v966
    %v968 = vsel %vm678, %v859, 0.0
    %v969 = vadd.f32 %v967, %v968
    %v970 = vsel %vm678, %v860, 0.0
    %v971 = vadd.f32 %v969, %v970
    %v972 = vsel %vm678, %v861, 0.0
    %v973 = vadd.f32 %v971, %v972
    %v974 = vsel %vm678, %v862, 0.0
    %v975 = vadd.f32 %v973, %v974
    %v976 = vsel %vm678, %v863, 0.0
    %v977 = vadd.f32 %v975, %v976
    %v978 = vsel %vm678, %v864, 0.0
    %v979 = vadd.f32 %v977, %v978
    %v980 = vsel %vm678, %v865, 0.0
    %v981 = vadd.f32 %v979, %v980
    %v982 = vsel %vm678, %v866, 0.0
    %v983 = vadd.f32 %v981, %v982
    %v984 = vsel %vm678, %v867, 0.0
    %v985 = vadd.f32 %v983, %v984
    %v986 = vsel %vm678, %v868, 0.0
    %v987 = vadd.f32 %v985, %v986
    %v988 = vsel %vm678, %v869, 0.0
    %v989 = vadd.f32 %v987, %v988
    %v990 = vsel %vm678, %v870, 0.0
    %v991 = vadd.f32 %v989, %v990
    %v992 = vsel %vm678, %v871, 0.0
    %v993 = vadd.f32 %v991, %v992
    %v994 = vsel %vm678, %v872, 0.0
    %v995 = vadd.f32 %v993, %v994
    %v996 = vsel %vm678, %v873, 0.0
    %v997 = vadd.f32 %v995, %v996
    %v998 = vsel %vm678, %v874, 0.0
    %v999 = vadd.f32 %v997, %v998
    %v1000 = vsel %vm678, %v875, 0.0
    %v1001 = vadd.f32 %v999, %v1000
    %v1002 = vsel %vm678, %v876, 0.0
    %v1003 = vadd.f32 %v1001, %v1002
    %v1004 = vrot.slane %v1003, 4
    %v1005 = vadd.f32 %v1003, %v1004
    %v1006 = vrot.slane %v1005, 2
    %v1007 = vadd.f32 %v1005, %v1006
    %v1008 = vrot.slane %v1007, 1
    %v1009 = vadd.f32 %v1007, %v1008
    %v1010 = vmul.f32 %v1009, 0.001953125
    %v1011 = vmul.f32 %v812, %v812
    %v1012 = vsub.f32 %v1010, %v1011
    %v1013 = vsub.f32 %v422, %v812
    %v1014 = vsub.f32 %v425, %v812
    %v1015 = vsub.f32 %v430, %v812
    %v1016 = vsub.f32 %v433, %v812
    %v1017 = vsub.f32 %v438, %v812
    %v1018 = vsub.f32 %v441, %v812
    %v1019 = vsub.f32 %v446, %v812
    %v1020 = vsub.f32 %v449, %v812
    %v1021 = vsub.f32 %v454, %v812
    %v1022 = vsub.f32 %v457, %v812
    %v1023 = vsub.f32 %v462, %v812
    %v1024 = vsub.f32 %v465, %v812
    %v1025 = vsub.f32 %v470, %v812
    %v1026 = vsub.f32 %v473, %v812
    %v1027 = vsub.f32 %v478, %v812
    %v1028 = vsub.f32 %v481, %v812
    %v1029 = vsub.f32 %v486, %v812
    %v1030 = vsub.f32 %v489, %v812
    %v1031 = vsub.f32 %v494, %v812
    %v1032 = vsub.f32 %v497, %v812
    %v1033 = vsub.f32 %v502, %v812
    %v1034 = vsub.f32 %v505, %v812
    %v1035 = vsub.f32 %v510, %v812
    %v1036 = vsub.f32 %v513, %v812
    %v1037 = vsub.f32 %v518, %v812
    %v1038 = vsub.f32 %v521, %v812
    %v1039 = vsub.f32 %v526, %v812
    %v1040 = vsub.f32 %v529, %v812
    %v1041 = vsub.f32 %v534, %v812
    %v1042 = vsub.f32 %v537, %v812
    %v1043 = vsub.f32 %v542, %v812
    %v1044 = vsub.f32 %v545, %v812
    %v1045 = vsub.f32 %v550, %v812
    %v1046 = vsub.f32 %v553, %v812
    %v1047 = vsub.f32 %v558, %v812
    %v1048 = vsub.f32 %v561, %v812
    %v1049 = vsub.f32 %v566, %v812
    %v1050 = vsub.f32 %v569, %v812
    %v1051 = vsub.f32 %v574, %v812
    %v1052 = vsub.f32 %v577, %v812
    %v1053 = vsub.f32 %v582, %v812
    %v1054 = vsub.f32 %v585, %v812
    %v1055 = vsub.f32 %v590, %v812
    %v1056 = vsub.f32 %v593, %v812
    %v1057 = vsub.f32 %v598, %v812
    %v1058 = vsub.f32 %v601, %v812
    %v1059 = vsub.f32 %v606, %v812
    %v1060 = vsub.f32 %v609, %v812
    %v1061 = vsub.f32 %v614, %v812
    %v1062 = vsub.f32 %v617, %v812
    %v1063 = vsub.f32 %v622, %v812
    %v1064 = vsub.f32 %v625, %v812
    %v1065 = vsub.f32 %v630, %v812
    %v1066 = vsub.f32 %v633, %v812
    %v1067 = vsub.f32 %v638, %v812
    %v1068 = vsub.f32 %v641, %v812
    %v1069 = vsub.f32 %v646, %v812
    %v1070 = vsub.f32 %v649, %v812
    %v1071 = vsub.f32 %v654, %v812
    %v1072 = vsub.f32 %v657, %v812
    %v1073 = vsub.f32 %v662, %v812
    %v1074 = vsub.f32 %v665, %v812
    %v1075 = vsub.f32 %v670, %v812
    %v1076 = vsub.f32 %v673, %v812
    %v1077 = vadd.f32 %v1012, 1e-05
    %v1078 = vrsqrt.pop %v1077
    %v1079 = vmul.f32 %v1078, %v676
    %v1080 = vlaneseq
    %v1081 = vshrl.u32 %v1080, 7
    %v1082 = vsub.s32 0, %v1081
    %v1083 = vrot.slane %v1079, %v1082
    %v1084 = vmul.f32 %v1013, %v1083
    %v1085 = vmul.f32 %v1014, %v1083
    %v1086 = vmul.f32 %v1015, %v1083
    %v1087 = vmul.f32 %v1016, %v1083
    %v1088 = vmul.f32 %v1017, %v1083
    %v1089 = vmul.f32 %v1018, %v1083
    %v1090 = vmul.f32 %v1019, %v1083
    %v1091 = vmul.f32 %v1020, %v1083
    %v1092 = vmul.f32 %v1021, %v1083
    %v1093 = vmul.f32 %v1022, %v1083
    %v1094 = vmul.f32 %v1023, %v1083
    %v1095 = vmul.f32 %v1024, %v1083
    %v1096 = vmul.f32 %v1025, %v1083
    %v1097 = vmul.f32 %v1026, %v1083
    %v1098 = vmul.f32 %v1027, %v1083
    %v1099 = vmul.f32 %v1028, %v1083
    %v1100 = vmul.f32 %v1029, %v1083
    %v1101 = vmul.f32 %v1030, %v1083
    %v1102 = vmul.f32 %v1031, %v1083
    %v1103 = vmul.f32 %v1032, %v1083
    %v1104 = vmul.f32 %v1033, %v1083
    %v1105 = vmul.f32 %v1034, %v1083
    %v1106 = vmul.f32 %v1035, %v1083
    %v1107 = vmul.f32 %v1036, %v1083
    %v1108 = vmul.f32 %v1037, %v1083
    %v1109 = vmul.f32 %v1038, %v1083
    %v1110 = vmul.f32 %v1039, %v1083
    %v1111 = vmul.f32 %v1040, %v1083
    %v1112 = vmul.f32 %v1041, %v1083
    %v1113 = vmul.f32 %v1042, %v1083
    %v1114 = vmul.f32 %v1043, %v1083
    %v1115 = vmul.f32 %v1044, %v1083
    %v1116 = vmul.f32 %v1045, %v1083
    %v1117 = vmul.f32 %v1046, %v1083
    %v1118 = vmul.f32 %v1047, %v1083
    %v1119 = vmul.f32 %v1048, %v1083
    %v1120 = vmul.f32 %v1049, %v1083
    %v1121 = vmul.f32 %v1050, %v1083
    %v1122 = vmul.f32 %v1051, %v1083
    %v1123 = vmul.f32 %v1052, %v1083
    %v1124 = vmul.f32 %v1053, %v1083
    %v1125 = vmul.f32 %v1054, %v1083
    %v1126 = vmul.f32 %v1055, %v1083
    %v1127 = vmul.f32 %v1056, %v1083
    %v1128 = vmul.f32 %v1057, %v1083
    %v1129 = vmul.f32 %v1058, %v1083
    %v1130 = vmul.f32 %v1059, %v1083
    %v1131 = vmul.f32 %v1060, %v1083
    %v1132 = vmul.f32 %v1061, %v1083
    %v1133 = vmul.f32 %v1062, %v1083
    %v1134 = vmul.f32 %v1063, %v1083
    %v1135 = vmul.f32 %v1064, %v1083
    %v1136 = vmul.f32 %v1065, %v1083
    %v1137 = vmul.f32 %v1066, %v1083
    %v1138 = vmul.f32 %v1067, %v1083
    %v1139 = vmul.f32 %v1068, %v1083
    %v1140 = vmul.f32 %v1069, %v1083
    %v1141 = vmul.f32 %v1070, %v1083
    %v1142 = vmul.f32 %v1071, %v1083
    %v1143 = vmul.f32 %v1072, %v1083
    %v1144 = vmul.f32 %v1073, %v1083
    %v1145 = vmul.f32 %v1074, %v1083
    %v1146 = vmul.f32 %v1075, %v1083
    %v1147 = vmul.f32 %v1076, %v1083
    %v1148 = vlaneseq
    %v1149 = vshrl.u32 %v1148, 7
    %v1150 = vsub.s32 0, %v1149
    %v1151 = vrot.slane %v677, %v1150
    %v1152 = vadd.f32 %v1084, %v1151
    %v1153 = vadd.f32 %v1085, %v1151
    %v1154 = vadd.f32 %v1086, %v1151
    %v1155 = vadd.f32 %v1087, %v1151
    %v1156 = vadd.f32 %v1088, %v1151
    %v1157 = vadd.f32 %v1089, %v1151
    %v1158 = vadd.f32 %v1090, %v1151
    %v1159 = vadd.f32 %v1091, %v1151
    %v1160 = vadd.f32 %v1092, %v1151
    %v1161 = vadd.f32 %v1093, %v1151
    %v1162 = vadd.f32 %v1094, %v1151
    %v1163 = vadd.f32 %v1095, %v1151
    %v1164 = vadd.f32 %v1096, %v1151
    %v1165 = vadd.f32 %v1097, %v1151
    %v1166 = vadd.f32 %v1098, %v1151
    %v1167 = vadd.f32 %v1099, %v1151
    %v1168 = vadd.f32 %v1100, %v1151
    %v1169 = vadd.f32 %v1101, %v1151
    %v1170 = vadd.f32 %v1102, %v1151
    %v1171 = vadd.f32 %v1103, %v1151
    %v1172 = vadd.f32 %v1104, %v1151
    %v1173 = vadd.f32 %v1105, %v1151
    %v1174 = vadd.f32 %v1106, %v1151
    %v1175 = vadd.f32 %v1107, %v1151
    %v1176 = vadd.f32 %v1108, %v1151
    %v1177 = vadd.f32 %v1109, %v1151
    %v1178 = vadd.f32 %v1110, %v1151
    %v1179 = vadd.f32 %v1111, %v1151
    %v1180 = vadd.f32 %v1112, %v1151
    %v1181 = vadd.f32 %v1113, %v1151
    %v1182 = vadd.f32 %v1114, %v1151
    %v1183 = vadd.f32 %v1115, %v1151
    %v1184 = vadd.f32 %v1116, %v1151
    %v1185 = vadd.f32 %v1117, %v1151
    %v1186 = vadd.f32 %v1118, %v1151
    %v1187 = vadd.f32 %v1119, %v1151
    %v1188 = vadd.f32 %v1120, %v1151
    %v1189 = vadd.f32 %v1121, %v1151
    %v1190 = vadd.f32 %v1122, %v1151
    %v1191 = vadd.f32 %v1123, %v1151
    %v1192 = vadd.f32 %v1124, %v1151
    %v1193 = vadd.f32 %v1125, %v1151
    %v1194 = vadd.f32 %v1126, %v1151
    %v1195 = vadd.f32 %v1127, %v1151
    %v1196 = vadd.f32 %v1128, %v1151
    %v1197 = vadd.f32 %v1129, %v1151
    %v1198 = vadd.f32 %v1130, %v1151
    %v1199 = vadd.f32 %v1131, %v1151
    %v1200 = vadd.f32 %v1132, %v1151
    %v1201 = vadd.f32 %v1133, %v1151
    %v1202 = vadd.f32 %v1134, %v1151
    %v1203 = vadd.f32 %v1135, %v1151
    %v1204 = vadd.f32 %v1136, %v1151
    %v1205 = vadd.f32 %v1137, %v1151
    %v1206 = vadd.f32 %v1138, %v1151
    %v1207 = vadd.f32 %v1139, %v1151
    %v1208 = vadd.f32 %v1140, %v1151
    %v1209 = vadd.f32 %v1141, %v1151
    %v1210 = vadd.f32 %v1142, %v1151
    %v1211 = vadd.f32 %v1143, %v1151
    %v1212 = vadd.f32 %v1144, %v1151
    %v1213 = vadd.f32 %v1145, %v1151
    %v1214 = vadd.f32 %v1146, %v1151
    %v1215 = vadd.f32 %v1147, %v1151
    %vm1216 = vcmp.gt.f32.partialorder %v1152, 0.0
    %vm1217 = vcmp.gt.f32.partialorder %v1153, 0.0
    %vm1218 = vcmp.gt.f32.partialorder %v1154, 0.0
    %vm1219 = vcmp.gt.f32.partialorder %v1155, 0.0
    %vm1220 = vcmp.gt.f32.partialorder %v1156, 0.0
    %vm1221 = vcmp.gt.f32.partialorder %v1157, 0.0
    %vm1222 = vcmp.gt.f32.partialorder %v1158, 0.0
    %vm1223 = vcmp.gt.f32.partialorder %v1159, 0.0
    %vm1224 = vcmp.gt.f32.partialorder %v1160, 0.0
    %vm1225 = vcmp.gt.f32.partialorder %v1161, 0.0
    %vm1226 = vcmp.gt.f32.partialorder %v1162, 0.0
    %vm1227 = vcmp.gt.f32.partialorder %v1163, 0.0
    %vm1228 = vcmp.gt.f32.partialorder %v1164, 0.0
    %vm1229 = vcmp.gt.f32.partialorder %v1165, 0.0
    %vm1230 = vcmp.gt.f32.partialorder %v1166, 0.0
    %vm1231 = vcmp.gt.f32.partialorder %v1167, 0.0
    %vm1232 = vcmp.gt.f32.partialorder %v1168, 0.0
    %vm1233 = vcmp.gt.f32.partialorder %v1169, 0.0
    %vm1234 = vcmp.gt.f32.partialorder %v1170, 0.0
    %vm1235 = vcmp.gt.f32.partialorder %v1171, 0.0
    %vm1236 = vcmp.gt.f32.partialorder %v1172, 0.0
    %vm1237 = vcmp.gt.f32.partialorder %v1173, 0.0
    %vm1238 = vcmp.gt.f32.partialorder %v1174, 0.0
    %vm1239 = vcmp.gt.f32.partialorder %v1175, 0.0
    %vm1240 = vcmp.gt.f32.partialorder %v1176, 0.0
    %vm1241 = vcmp.gt.f32.partialorder %v1177, 0.0
    %vm1242 = vcmp.gt.f32.partialorder %v1178, 0.0
    %vm1243 = vcmp.gt.f32.partialorder %v1179, 0.0
    %vm1244 = vcmp.gt.f32.partialorder %v1180, 0.0
    %vm1245 = vcmp.gt.f32.partialorder %v1181, 0.0
    %vm1246 = vcmp.gt.f32.partialorder %v1182, 0.0
    %vm1247 = vcmp.gt.f32.partialorder %v1183, 0.0
    %vm1248 = vcmp.gt.f32.partialorder %v1184, 0.0
    %vm1249 = vcmp.gt.f32.partialorder %v1185, 0.0
    %vm1250 = vcmp.gt.f32.partialorder %v1186, 0.0
    %vm1251 = vcmp.gt.f32.partialorder %v1187, 0.0
    %vm1252 = vcmp.gt.f32.partialorder %v1188, 0.0
    %vm1253 = vcmp.gt.f32.partialorder %v1189, 0.0
    %vm1254 = vcmp.gt.f32.partialorder %v1190, 0.0
    %vm1255 = vcmp.gt.f32.partialorder %v1191, 0.0
    %vm1256 = vcmp.gt.f32.partialorder %v1192, 0.0
    %vm1257 = vcmp.gt.f32.partialorder %v1193, 0.0
    %vm1258 = vcmp.gt.f32.partialorder %v1194, 0.0
    %vm1259 = vcmp.gt.f32.partialorder %v1195, 0.0
    %vm1260 = vcmp.gt.f32.partialorder %v1196, 0.0
    %vm1261 = vcmp.gt.f32.partialorder %v1197, 0.0
    %vm1262 = vcmp.gt.f32.partialorder %v1198, 0.0
    %vm1263 = vcmp.gt.f32.partialorder %v1199, 0.0
    %vm1264 = vcmp.gt.f32.partialorder %v1200, 0.0
    %vm1265 = vcmp.gt.f32.partialorder %v1201, 0.0
    %vm1266 = vcmp.gt.f32.partialorder %v1202, 0.0
    %vm1267 = vcmp.gt.f32.partialorder %v1203, 0.0
    %vm1268 = vcmp.gt.f32.partialorder %v1204, 0.0
    %vm1269 = vcmp.gt.f32.partialorder %v1205, 0.0
    %vm1270 = vcmp.gt.f32.partialorder %v1206, 0.0
    %vm1271 = vcmp.gt.f32.partialorder %v1207, 0.0
    %vm1272 = vcmp.gt.f32.partialorder %v1208, 0.0
    %vm1273 = vcmp.gt.f32.partialorder %v1209, 0.0
    %vm1274 = vcmp.gt.f32.partialorder %v1210, 0.0
    %vm1275 = vcmp.gt.f32.partialorder %v1211, 0.0
    %vm1276 = vcmp.gt.f32.partialorder %v1212, 0.0
    %vm1277 = vcmp.gt.f32.partialorder %v1213, 0.0
    %vm1278 = vcmp.gt.f32.partialorder %v1214, 0.0
    %vm1279 = vcmp.gt.f32.partialorder %v1215, 0.0
    %v1280 = vmul.f32 %v1152, 0.2
    %v1281 = vmul.f32 %v1153, 0.2
    %v1282 = vmul.f32 %v1154, 0.2
    %v1283 = vmul.f32 %v1155, 0.2
    %v1284 = vmul.f32 %v1156, 0.2
    %v1285 = vmul.f32 %v1157, 0.2
    %v1286 = vmul.f32 %v1158, 0.2
    %v1287 = vmul.f32 %v1159, 0.2
    %v1288 = vmul.f32 %v1160, 0.2
    %v1289 = vmul.f32 %v1161, 0.2
    %v1290 = vmul.f32 %v1162, 0.2
    %v1291 = vmul.f32 %v1163, 0.2
    %v1292 = vmul.f32 %v1164, 0.2
    %v1293 = vmul.f32 %v1165, 0.2
    %v1294 = vmul.f32 %v1166, 0.2
    %v1295 = vmul.f32 %v1167, 0.2
    %v1296 = vmul.f32 %v1168, 0.2
    %v1297 = vmul.f32 %v1169, 0.2
    %v1298 = vmul.f32 %v1170, 0.2
    %v1299 = vmul.f32 %v1171, 0.2
    %v1300 = vmul.f32 %v1172, 0.2
    %v1301 = vmul.f32 %v1173, 0.2
    %v1302 = vmul.f32 %v1174, 0.2
    %v1303 = vmul.f32 %v1175, 0.2
    %v1304 = vmul.f32 %v1176, 0.2
    %v1305 = vmul.f32 %v1177, 0.2
    %v1306 = vmul.f32 %v1178, 0.2
    %v1307 = vmul.f32 %v1179, 0.2
    %v1308 = vmul.f32 %v1180, 0.2
    %v1309 = vmul.f32 %v1181, 0.2
    %v1310 = vmul.f32 %v1182, 0.2
    %v1311 = vmul.f32 %v1183, 0.2
    %v1312 = vmul.f32 %v1184, 0.2
    %v1313 = vmul.f32 %v1185, 0.2
    %v1314 = vmul.f32 %v1186, 0.2
    %v1315 = vmul.f32 %v1187, 0.2
    %v1316 = vmul.f32 %v1188, 0.2
    %v1317 = vmul.f32 %v1189, 0.2
    %v1318 = vmul.f32 %v1190, 0.2
    %v1319 = vmul.f32 %v1191, 0.2
    %v1320 = vmul.f32 %v1192, 0.2
    %v1321 = vmul.f32 %v1193, 0.2
    %v1322 = vmul.f32 %v1194, 0.2
    %v1323 = vmul.f32 %v1195, 0.2
    %v1324 = vmul.f32 %v1196, 0.2
    %v1325 = vmul.f32 %v1197, 0.2
    %v1326 = vmul.f32 %v1198, 0.2
    %v1327 = vmul.f32 %v1199, 0.2
    %v1328 = vmul.f32 %v1200, 0.2
    %v1329 = vmul.f32 %v1201, 0.2
    %v1330 = vmul.f32 %v1202, 0.2
    %v1331 = vmul.f32 %v1203, 0.2
    %v1332 = vmul.f32 %v1204, 0.2
    %v1333 = vmul.f32 %v1205, 0.2
    %v1334 = vmul.f32 %v1206, 0.2
    %v1335 = vmul.f32 %v1207, 0.2
    %v1336 = vmul.f32 %v1208, 0.2
    %v1337 = vmul.f32 %v1209, 0.2
    %v1338 = vmul.f32 %v1210, 0.2
    %v1339 = vmul.f32 %v1211, 0.2
    %v1340 = vmul.f32 %v1212, 0.2
    %v1341 = vmul.f32 %v1213, 0.2
    %v1342 = vmul.f32 %v1214, 0.2
    %v1343 = vmul.f32 %v1215, 0.2
    %v1344 = vsel %vm1216, %v1152, %v1280
    %v1345 = vsel %vm1217, %v1153, %v1281
    %v1346 = vsel %vm1218, %v1154, %v1282
    %v1347 = vsel %vm1219, %v1155, %v1283
    %v1348 = vsel %vm1220, %v1156, %v1284
    %v1349 = vsel %vm1221, %v1157, %v1285
    %v1350 = vsel %vm1222, %v1158, %v1286
    %v1351 = vsel %vm1223, %v1159, %v1287
    %v1352 = vsel %vm1224, %v1160, %v1288
    %v1353 = vsel %vm1225, %v1161, %v1289
    %v1354 = vsel %vm1226, %v1162, %v1290
    %v1355 = vsel %vm1227, %v1163, %v1291
    %v1356 = vsel %vm1228, %v1164, %v1292
    %v1357 = vsel %vm1229, %v1165, %v1293
    %v1358 = vsel %vm1230, %v1166, %v1294
    %v1359 = vsel %vm1231, %v1167, %v1295
    %v1360 = vsel %vm1232, %v1168, %v1296
    %v1361 = vsel %vm1233, %v1169, %v1297
    %v1362 = vsel %vm1234, %v1170, %v1298
    %v1363 = vsel %vm1235, %v1171, %v1299
    %v1364 = vsel %vm1236, %v1172, %v1300
    %v1365 = vsel %vm1237, %v1173, %v1301
    %v1366 = vsel %vm1238, %v1174, %v1302
    %v1367 = vsel %vm1239, %v1175, %v1303
    %v1368 = vsel %vm1240, %v1176, %v1304
    %v1369 = vsel %vm1241, %v1177, %v1305
    %v1370 = vsel %vm1242, %v1178, %v1306
    %v1371 = vsel %vm1243, %v1179, %v1307
    %v1372 = vsel %vm1244, %v1180, %v1308
    %v1373 = vsel %vm1245, %v1181, %v1309
    %v1374 = vsel %vm1246, %v1182, %v1310
    %v1375 = vsel %vm1247, %v1183, %v1311
    %v1376 = vsel %vm1248, %v1184, %v1312
    %v1377 = vsel %vm1249, %v1185, %v1313
    %v1378 = vsel %vm1250, %v1186, %v1314
    %v1379 = vsel %vm1251, %v1187, %v1315
    %v1380 = vsel %vm1252, %v1188, %v1316
    %v1381 = vsel %vm1253, %v1189, %v1317
    %v1382 = vsel %vm1254, %v1190, %v1318
    %v1383 = vsel %vm1255, %v1191, %v1319
    %v1384 = vsel %vm1256, %v1192, %v1320
    %v1385 = vsel %vm1257, %v1193, %v1321
    %v1386 = vsel %vm1258, %v1194, %v1322
    %v1387 = vsel %vm1259, %v1195, %v1323
    %v1388 = vsel %vm1260, %v1196, %v1324
    %v1389 = vsel %vm1261, %v1197, %v1325
    %v1390 = vsel %vm1262, %v1198, %v1326
    %v1391 = vsel %vm1263, %v1199, %v1327
    %v1392 = vsel %vm1264, %v1200, %v1328
    %v1393 = vsel %vm1265, %v1201, %v1329
    %v1394 = vsel %vm1266, %v1202, %v1330
    %v1395 = vsel %vm1267, %v1203, %v1331
    %v1396 = vsel %vm1268, %v1204, %v1332
    %v1397 = vsel %vm1269, %v1205, %v1333
    %v1398 = vsel %vm1270, %v1206, %v1334
    %v1399 = vsel %vm1271, %v1207, %v1335
    %v1400 = vsel %vm1272, %v1208, %v1336
    %v1401 = vsel %vm1273, %v1209, %v1337
    %v1402 = vsel %vm1274, %v1210, %v1338
    %v1403 = vsel %vm1275, %v1211, %v1339
    %v1404 = vsel %vm1276, %v1212, %v1340
    %v1405 = vsel %vm1277, %v1213, %v1341
    %v1406 = vsel %vm1278, %v1214, %v1342
    %v1407 = vsel %vm1279, %v1215, %v1343
    %v1408 = vpack.c.bf16 %v1345, %v1344
    %v1409 = vpack.c.bf16 %v1347, %v1346
    %v1410 = vpack.c.bf16 %v1349, %v1348
    %v1411 = vpack.c.bf16 %v1351, %v1350
    %v1412 = vpack.c.bf16 %v1353, %v1352
    %v1413 = vpack.c.bf16 %v1355, %v1354
    %v1414 = vpack.c.bf16 %v1357, %v1356
    %v1415 = vpack.c.bf16 %v1359, %v1358
    %v1416 = vpack.c.bf16 %v1361, %v1360
    %v1417 = vpack.c.bf16 %v1363, %v1362
    %v1418 = vpack.c.bf16 %v1365, %v1364
    %v1419 = vpack.c.bf16 %v1367, %v1366
    %v1420 = vpack.c.bf16 %v1369, %v1368
    %v1421 = vpack.c.bf16 %v1371, %v1370
    %v1422 = vpack.c.bf16 %v1373, %v1372
    %v1423 = vpack.c.bf16 %v1375, %v1374
    %v1424 = vpack.c.bf16 %v1377, %v1376
    %v1425 = vpack.c.bf16 %v1379, %v1378
    %v1426 = vpack.c.bf16 %v1381, %v1380
    %v1427 = vpack.c.bf16 %v1383, %v1382
    %v1428 = vpack.c.bf16 %v1385, %v1384
    %v1429 = vpack.c.bf16 %v1387, %v1386
    %v1430 = vpack.c.bf16 %v1389, %v1388
    %v1431 = vpack.c.bf16 %v1391, %v1390
    %v1432 = vpack.c.bf16 %v1393, %v1392
    %v1433 = vpack.c.bf16 %v1395, %v1394
    %v1434 = vpack.c.bf16 %v1397, %v1396
    %v1435 = vpack.c.bf16 %v1399, %v1398
    %v1436 = vpack.c.bf16 %v1401, %v1400
    %v1437 = vpack.c.bf16 %v1403, %v1402
    %v1438 = vpack.c.bf16 %v1405, %v1404
    %v1439 = vpack.c.bf16 %v1407, %v1406
    %v1440 = vld [vmem:[%s5] sm:$0xff]
    %v1441 = vld [vmem:[%s5 + $0x8] sm:$0xff]
    %v1442 = vld [vmem:[%s5 + $0x10] sm:$0xff]
    %v1443 = vld [vmem:[%s5 + $0x18] sm:$0xff]
    %v1444 = vld [vmem:[%s5 + $0x20] sm:$0xff]
    %v1445 = vld [vmem:[%s5 + $0x28] sm:$0xff]
    %v1446 = vld [vmem:[%s5 + $0x30] sm:$0xff]
    %v1447 = vld [vmem:[%s5 + $0x38] sm:$0xff]
    %v1456 = vunpack.c.l.b16 %v1440
    %v1457 = vunpack.c.h.b16 %v1440
    %v1458 = vunpack.c.l.b16 %v1441
    %v1459 = vunpack.c.h.b16 %v1441
    %v1460 = vunpack.c.l.b16 %v1442
    %v1461 = vunpack.c.h.b16 %v1442
    %v1462 = vunpack.c.l.b16 %v1443
    %v1463 = vunpack.c.h.b16 %v1443
    %v1464 = vunpack.c.l.b16 %v1444
    %v1465 = vunpack.c.h.b16 %v1444
    %v1466 = vunpack.c.l.b16 %v1445
    %v1467 = vunpack.c.h.b16 %v1445
    %v1468 = vunpack.c.l.b16 %v1446
    %v1469 = vunpack.c.h.b16 %v1446
    %v1470 = vunpack.c.l.b16 %v1447
    %v1471 = vunpack.c.h.b16 %v1447
    %v1472 = vpack.c.b16 %v1458, %v1456
    %v1473 = vpack.c.b16 %v1459, %v1457
    %v1474 = vpack.c.b16 %v1462, %v1460
    %v1475 = vpack.c.b16 %v1463, %v1461
    %v1476 = vpack.c.b16 %v1466, %v1464
    %v1477 = vpack.c.b16 %v1467, %v1465
    %v1478 = vpack.c.b16 %v1470, %v1468
    %v1479 = vpack.c.b16 %v1471, %v1469
    %1488 = vmatprep.subr.bf16.mxu0 0
    %1489 = vmatpush1.bf16.msra.mxu0 %v1408
    %1490 = vmatprep.subr.bf16.mxu0 0
    %1491 = vmatpush1.bf16.msra.mxu0 %v1409
    %1492 = vmatprep.subr.bf16.mxu0 0
    %1493 = vmatpush1.bf16.msra.mxu0 %v1410
    %1494 = vmatprep.subr.bf16.mxu0 0
    %1495 = vmatpush1.bf16.msra.mxu0 %v1411
    %1496 = vmatprep.subr.bf16.mxu0 0
    %1497 = vmatpush1.bf16.msra.mxu0 %v1412
    %1498 = vmatprep.subr.bf16.mxu0 0
    %1499 = vmatpush1.bf16.msra.mxu0 %v1413
    %1500 = vmatprep.subr.bf16.mxu0 0
    %1501 = vmatpush1.bf16.msra.mxu0 %v1414
    %1502 = vmatprep.subr.bf16.mxu0 0
    %1503 = vmatpush1.bf16.msra.mxu0 %v1415
    %1504 = vmatprep.subr.bf16.mxu0 0
    %1505 = vmatpush1.bf16.msra.mxu0 %v1416
    %1506 = vmatprep.subr.bf16.mxu0 0
    %1507 = vmatpush1.bf16.msra.mxu0 %v1417
    %1508 = vmatprep.subr.bf16.mxu0 0
    %1509 = vmatpush1.bf16.msra.mxu0 %v1418
    %1510 = vmatprep.subr.bf16.mxu0 0
    %1511 = vmatpush1.bf16.msra.mxu0 %v1419
    %1512 = vmatprep.subr.bf16.mxu0 0
    %1513 = vmatpush1.bf16.msra.mxu0 %v1420
    %1514 = vmatprep.subr.bf16.mxu0 0
    %1515 = vmatpush1.bf16.msra.mxu0 %v1421
    %1516 = vmatprep.subr.bf16.mxu0 0
    %1517 = vmatpush1.bf16.msra.mxu0 %v1422
    %1518 = vmatprep.subr.bf16.mxu0 0
    %1519 = vmatpush1.bf16.msra.mxu0 %v1423
    %1520 = vmatprep.mubr.bf16.mxu0 %v1473
    %1521 = vmatmul.mubr.bf16.gmra.mrb[0].mxu0 %v1472
    %v1522 = vpop.f32.mrb[0].mxu0
    %v1523 = vadd.f32 0.0, %v1522
    %v1524 = vpop.f32.mrb[0].mxu0
    %v1525 = vpop.f32.mrb[0].mxu0
    %v1526 = vadd.f32 0.0, %v1525
    %v1527 = vpop.f32.mrb[0].mxu0
    %1528 = vmatprep.mubr.bf16.mxu0 %v1475
    %1529 = vmatmul.mubr.bf16.gmra.mrb[0].mxu0 %v1474
    %v1530 = vpop.f32.mrb[0].mxu0
    %v1531 = vadd.f32 0.0, %v1530
    %v1532 = vpop.f32.mrb[0].mxu0
    %v1533 = vpop.f32.mrb[0].mxu0
    %v1534 = vadd.f32 0.0, %v1533
    %v1535 = vpop.f32.mrb[0].mxu0
    %1536 = vmatprep.mubr.bf16.mxu0 %v1477
    %1537 = vmatmul.mubr.bf16.gmra.mrb[0].mxu0 %v1476
    %v1538 = vpop.f32.mrb[0].mxu0
    %v1539 = vadd.f32 0.0, %v1538
    %v1540 = vpop.f32.mrb[0].mxu0
    %v1541 = vpop.f32.mrb[0].mxu0
    %v1542 = vadd.f32 0.0, %v1541
    %v1543 = vpop.f32.mrb[0].mxu0
    %1544 = vmatprep.mubr.bf16.mxu0 %v1479
    %1545 = vmatmul.mubr.bf16.gmra.mrb[0].mxu0 %v1478
    %v1546 = vpop.f32.mrb[0].mxu0
    %v1547 = vadd.f32 0.0, %v1546
    %v1548 = vpop.f32.mrb[0].mxu0
    %v1549 = vpop.f32.mrb[0].mxu0
    %v1550 = vadd.f32 0.0, %v1549
    %v1551 = vpop.f32.mrb[0].mxu0
    %1552 = vdwg.mxu0
    %s1553 = scalar_lea.vmem %s5, 64
    %v1554 = vld [vmem:[%s1553] sm:$0xff]
    %v1555 = vld [vmem:[%s1553 + $0x8] sm:$0xff]
    %v1556 = vld [vmem:[%s1553 + $0x10] sm:$0xff]
    %v1557 = vld [vmem:[%s1553 + $0x18] sm:$0xff]
    %v1558 = vld [vmem:[%s1553 + $0x20] sm:$0xff]
    %v1559 = vld [vmem:[%s1553 + $0x28] sm:$0xff]
    %v1560 = vld [vmem:[%s1553 + $0x30] sm:$0xff]
    %v1561 = vld [vmem:[%s1553 + $0x38] sm:$0xff]
    %v1570 = vunpack.c.l.b16 %v1554
    %v1571 = vunpack.c.h.b16 %v1554
    %v1572 = vunpack.c.l.b16 %v1555
    %v1573 = vunpack.c.h.b16 %v1555
    %v1574 = vunpack.c.l.b16 %v1556
    %v1575 = vunpack.c.h.b16 %v1556
    %v1576 = vunpack.c.l.b16 %v1557
    %v1577 = vunpack.c.h.b16 %v1557
    %v1578 = vunpack.c.l.b16 %v1558
    %v1579 = vunpack.c.h.b16 %v1558
    %v1580 = vunpack.c.l.b16 %v1559
    %v1581 = vunpack.c.h.b16 %v1559
    %v1582 = vunpack.c.l.b16 %v1560
    %v1583 = vunpack.c.h.b16 %v1560
    %v1584 = vunpack.c.l.b16 %v1561
    %v1585 = vunpack.c.h.b16 %v1561
    %v1586 = vpack.c.b16 %v1572, %v1570
    %v1587 = vpack.c.b16 %v1573, %v1571
    %v1588 = vpack.c.b16 %v1576, %v1574
    %v1589 = vpack.c.b16 %v1577, %v1575
    %v1590 = vpack.c.b16 %v1580, %v1578
    %v1591 = vpack.c.b16 %v1581, %v1579
    %v1592 = vpack.c.b16 %v1584, %v1582
    %v1593 = vpack.c.b16 %v1585, %v1583
    %1602 = vmatprep.subr.bf16.mxu0 0
    %1603 = vmatpush1.bf16.msra.mxu0 %v1408
    %1604 = vmatprep.subr.bf16.mxu0 0
    %1605 = vmatpush1.bf16.msra.mxu0 %v1409
    %1606 = vmatprep.subr.bf16.mxu0 0
    %1607 = vmatpush1.bf16.msra.mxu0 %v1410
    %1608 = vmatprep.subr.bf16.mxu0 0
    %1609 = vmatpush1.bf16.msra.mxu0 %v1411
    %1610 = vmatprep.subr.bf16.mxu0 0
    %1611 = vmatpush1.bf16.msra.mxu0 %v1412
    %1612 = vmatprep.subr.bf16.mxu0 0
    %1613 = vmatpush1.bf16.msra.mxu0 %v1413
    %1614 = vmatprep.subr.bf16.mxu0 0
    %1615 = vmatpush1.bf16.msra.mxu0 %v1414
    %1616 = vmatprep.subr.bf16.mxu0 0
    %1617 = vmatpush1.bf16.msra.mxu0 %v1415
    %1618 = vmatprep.subr.bf16.mxu0 0
    %1619 = vmatpush1.bf16.msra.mxu0 %v1416
    %1620 = vmatprep.subr.bf16.mxu0 0
    %1621 = vmatpush1.bf16.msra.mxu0 %v1417
    %1622 = vmatprep.subr.bf16.mxu0 0
    %1623 = vmatpush1.bf16.msra.mxu0 %v1418
    %1624 = vmatprep.subr.bf16.mxu0 0
    %1625 = vmatpush1.bf16.msra.mxu0 %v1419
    %1626 = vmatprep.subr.bf16.mxu0 0
    %1627 = vmatpush1.bf16.msra.mxu0 %v1420
    %1628 = vmatprep.subr.bf16.mxu0 0
    %1629 = vmatpush1.bf16.msra.mxu0 %v1421
    %1630 = vmatprep.subr.bf16.mxu0 0
    %1631 = vmatpush1.bf16.msra.mxu0 %v1422
    %1632 = vmatprep.subr.bf16.mxu0 0
    %1633 = vmatpush1.bf16.msra.mxu0 %v1423
    %1634 = vmatprep.mubr.bf16.mxu0 %v1587
    %1635 = vmatmul.mubr.bf16.gmra.mrb[0].mxu0 %v1586
    %v1636 = vpop.f32.mrb[0].mxu0
    %v1637 = vadd.f32 0.0, %v1636
    %v1638 = vpop.f32.mrb[0].mxu0
    %v1639 = vpop.f32.mrb[0].mxu0
    %v1640 = vadd.f32 0.0, %v1639
    %v1641 = vpop.f32.mrb[0].mxu0
    %1642 = vmatprep.mubr.bf16.mxu0 %v1589
    %1643 = vmatmul.mubr.bf16.gmra.mrb[0].mxu0 %v1588
    %v1644 = vpop.f32.mrb[0].mxu0
    %v1645 = vadd.f32 0.0, %v1644
    %v1646 = vpop.f32.mrb[0].mxu0
    %v1647 = vpop.f32.mrb[0].mxu0
    %v1648 = vadd.f32 0.0, %v1647
    %v1649 = vpop.f32.mrb[0].mxu0
    %1650 = vmatprep.mubr.bf16.mxu0 %v1591
    %1651 = vmatmul.mubr.bf16.gmra.mrb[0].mxu0 %v1590
    %v1652 = vpop.f32.mrb[0].mxu0
    %v1653 = vadd.f32 0.0, %v1652
    %v1654 = vpop.f32.mrb[0].mxu0
    %v1655 = vpop.f32.mrb[0].mxu0
    %v1656 = vadd.f32 0.0, %v1655
    %v1657 = vpop.f32.mrb[0].mxu0
    %1658 = vmatprep.mubr.bf16.mxu0 %v1593
    %1659 = vmatmul.mubr.bf16.gmra.mrb[0].mxu0 %v1592
    %v1660 = vpop.f32.mrb[0].mxu0
    %v1661 = vadd.f32 0.0, %v1660
    %v1662 = vpop.f32.mrb[0].mxu0
    %v1663 = vpop.f32.mrb[0].mxu0
    %v1664 = vadd.f32 0.0, %v1663
    %v1665 = vpop.f32.mrb[0].mxu0
    %1666 = vdwg.mxu0
    %s1667 = scalar_lea.vmem %s5, 128
    %v1668 = vld [vmem:[%s1667] sm:$0xff]
    %v1669 = vld [vmem:[%s1667 + $0x8] sm:$0xff]
    %v1670 = vld [vmem:[%s1667 + $0x10] sm:$0xff]
    %v1671 = vld [vmem:[%s1667 + $0x18] sm:$0xff]
    %v1672 = vld [vmem:[%s1667 + $0x20] sm:$0xff]
    %v1673 = vld [vmem:[%s1667 + $0x28] sm:$0xff]
    %v1674 = vld [vmem:[%s1667 + $0x30] sm:$0xff]
    %v1675 = vld [vmem:[%s1667 + $0x38] sm:$0xff]
    %v1684 = vunpack.c.l.b16 %v1668
    %v1685 = vunpack.c.h.b16 %v1668
    %v1686 = vunpack.c.l.b16 %v1669
    %v1687 = vunpack.c.h.b16 %v1669
    %v1688 = vunpack.c.l.b16 %v1670
    %v1689 = vunpack.c.h.b16 %v1670
    %v1690 = vunpack.c.l.b16 %v1671
    %v1691 = vunpack.c.h.b16 %v1671
    %v1692 = vunpack.c.l.b16 %v1672
    %v1693 = vunpack.c.h.b16 %v1672
    %v1694 = vunpack.c.l.b16 %v1673
    %v1695 = vunpack.c.h.b16 %v1673
    %v1696 = vunpack.c.l.b16 %v1674
    %v1697 = vunpack.c.h.b16 %v1674
    %v1698 = vunpack.c.l.b16 %v1675
    %v1699 = vunpack.c.h.b16 %v1675
    %v1700 = vpack.c.b16 %v1686, %v1684
    %v1701 = vpack.c.b16 %v1687, %v1685
    %v1702 = vpack.c.b16 %v1690, %v1688
    %v1703 = vpack.c.b16 %v1691, %v1689
    %v1704 = vpack.c.b16 %v1694, %v1692
    %v1705 = vpack.c.b16 %v1695, %v1693
    %v1706 = vpack.c.b16 %v1698, %v1696
    %v1707 = vpack.c.b16 %v1699, %v1697
    %1716 = vmatprep.subr.bf16.mxu0 0
    %1717 = vmatpush1.bf16.msra.mxu0 %v1408
    %1718 = vmatprep.subr.bf16.mxu0 0
    %1719 = vmatpush1.bf16.msra.mxu0 %v1409
    %1720 = vmatprep.subr.bf16.mxu0 0
    %1721 = vmatpush1.bf16.msra.mxu0 %v1410
    %1722 = vmatprep.subr.bf16.mxu0 0
    %1723 = vmatpush1.bf16.msra.mxu0 %v1411
    %1724 = vmatprep.subr.bf16.mxu0 0
    %1725 = vmatpush1.bf16.msra.mxu0 %v1412
    %1726 = vmatprep.subr.bf16.mxu0 0
    %1727 = vmatpush1.bf16.msra.mxu0 %v1413
    %1728 = vmatprep.subr.bf16.mxu0 0
    %1729 = vmatpush1.bf16.msra.mxu0 %v1414
    %1730 = vmatprep.subr.bf16.mxu0 0
    %1731 = vmatpush1.bf16.msra.mxu0 %v1415
    %1732 = vmatprep.subr.bf16.mxu0 0
    %1733 = vmatpush1.bf16.msra.mxu0 %v1416
    %1734 = vmatprep.subr.bf16.mxu0 0
    %1735 = vmatpush1.bf16.msra.mxu0 %v1417
    %1736 = vmatprep.subr.bf16.mxu0 0
    %1737 = vmatpush1.bf16.msra.mxu0 %v1418
    %1738 = vmatprep.subr.bf16.mxu0 0
    %1739 = vmatpush1.bf16.msra.mxu0 %v1419
    %1740 = vmatprep.subr.bf16.mxu0 0
    %1741 = vmatpush1.bf16.msra.mxu0 %v1420
    %1742 = vmatprep.subr.bf16.mxu0 0
    %1743 = vmatpush1.bf16.msra.mxu0 %v1421
    %1744 = vmatprep.subr.bf16.mxu0 0
    %1745 = vmatpush1.bf16.msra.mxu0 %v1422
    %1746 = vmatprep.subr.bf16.mxu0 0
    %1747 = vmatpush1.bf16.msra.mxu0 %v1423
    %1748 = vmatprep.mubr.bf16.mxu0 %v1701
    %1749 = vmatmul.mubr.bf16.gmra.mrb[0].mxu0 %v1700
    %v1750 = vpop.f32.mrb[0].mxu0
    %v1751 = vadd.f32 0.0, %v1750
    %v1752 = vpop.f32.mrb[0].mxu0
    %v1753 = vpop.f32.mrb[0].mxu0
    %v1754 = vadd.f32 0.0, %v1753
    %v1755 = vpop.f32.mrb[0].mxu0
    %1756 = vmatprep.mubr.bf16.mxu0 %v1703
    %1757 = vmatmul.mubr.bf16.gmra.mrb[0].mxu0 %v1702
    %v1758 = vpop.f32.mrb[0].mxu0
    %v1759 = vadd.f32 0.0, %v1758
    %v1760 = vpop.f32.mrb[0].mxu0
    %v1761 = vpop.f32.mrb[0].mxu0
    %v1762 = vadd.f32 0.0, %v1761
    %v1763 = vpop.f32.mrb[0].mxu0
    %1764 = vmatprep.mubr.bf16.mxu0 %v1705
    %1765 = vmatmul.mubr.bf16.gmra.mrb[0].mxu0 %v1704
    %v1766 = vpop.f32.mrb[0].mxu0
    %v1767 = vadd.f32 0.0, %v1766
    %v1768 = vpop.f32.mrb[0].mxu0
    %v1769 = vpop.f32.mrb[0].mxu0
    %v1770 = vadd.f32 0.0, %v1769
    %v1771 = vpop.f32.mrb[0].mxu0
    %1772 = vmatprep.mubr.bf16.mxu0 %v1707
    %1773 = vmatmul.mubr.bf16.gmra.mrb[0].mxu0 %v1706
    %v1774 = vpop.f32.mrb[0].mxu0
    %v1775 = vadd.f32 0.0, %v1774
    %v1776 = vpop.f32.mrb[0].mxu0
    %v1777 = vpop.f32.mrb[0].mxu0
    %v1778 = vadd.f32 0.0, %v1777
    %v1779 = vpop.f32.mrb[0].mxu0
    %1780 = vdwg.mxu0
    %s1781 = scalar_lea.vmem %s5, 192
    %v1782 = vld [vmem:[%s1781] sm:$0xff]
    %v1783 = vld [vmem:[%s1781 + $0x8] sm:$0xff]
    %v1784 = vld [vmem:[%s1781 + $0x10] sm:$0xff]
    %v1785 = vld [vmem:[%s1781 + $0x18] sm:$0xff]
    %v1786 = vld [vmem:[%s1781 + $0x20] sm:$0xff]
    %v1787 = vld [vmem:[%s1781 + $0x28] sm:$0xff]
    %v1788 = vld [vmem:[%s1781 + $0x30] sm:$0xff]
    %v1789 = vld [vmem:[%s1781 + $0x38] sm:$0xff]
    %v1798 = vunpack.c.l.b16 %v1782
    %v1799 = vunpack.c.h.b16 %v1782
    %v1800 = vunpack.c.l.b16 %v1783
    %v1801 = vunpack.c.h.b16 %v1783
    %v1802 = vunpack.c.l.b16 %v1784
    %v1803 = vunpack.c.h.b16 %v1784
    %v1804 = vunpack.c.l.b16 %v1785
    %v1805 = vunpack.c.h.b16 %v1785
    %v1806 = vunpack.c.l.b16 %v1786
    %v1807 = vunpack.c.h.b16 %v1786
    %v1808 = vunpack.c.l.b16 %v1787
    %v1809 = vunpack.c.h.b16 %v1787
    %v1810 = vunpack.c.l.b16 %v1788
    %v1811 = vunpack.c.h.b16 %v1788
    %v1812 = vunpack.c.l.b16 %v1789
    %v1813 = vunpack.c.h.b16 %v1789
    %v1814 = vpack.c.b16 %v1800, %v1798
    %v1815 = vpack.c.b16 %v1801, %v1799
    %v1816 = vpack.c.b16 %v1804, %v1802
    %v1817 = vpack.c.b16 %v1805, %v1803
    %v1818 = vpack.c.b16 %v1808, %v1806
    %v1819 = vpack.c.b16 %v1809, %v1807
    %v1820 = vpack.c.b16 %v1812, %v1810
    %v1821 = vpack.c.b16 %v1813, %v1811
    %1830 = vmatprep.subr.bf16.mxu0 0
    %1831 = vmatpush1.bf16.msra.mxu0 %v1408
    %1832 = vmatprep.subr.bf16.mxu0 0
    %1833 = vmatpush1.bf16.msra.mxu0 %v1409
    %1834 = vmatprep.subr.bf16.mxu0 0
    %1835 = vmatpush1.bf16.msra.mxu0 %v1410
    %1836 = vmatprep.subr.bf16.mxu0 0
    %1837 = vmatpush1.bf16.msra.mxu0 %v1411
    %1838 = vmatprep.subr.bf16.mxu0 0
    %1839 = vmatpush1.bf16.msra.mxu0 %v1412
    %1840 = vmatprep.subr.bf16.mxu0 0
    %1841 = vmatpush1.bf16.msra.mxu0 %v1413
    %1842 = vmatprep.subr.bf16.mxu0 0
    %1843 = vmatpush1.bf16.msra.mxu0 %v1414
    %1844 = vmatprep.subr.bf16.mxu0 0
    %1845 = vmatpush1.bf16.msra.mxu0 %v1415
    %1846 = vmatprep.subr.bf16.mxu0 0
    %1847 = vmatpush1.bf16.msra.mxu0 %v1416
    %1848 = vmatprep.subr.bf16.mxu0 0
    %1849 = vmatpush1.bf16.msra.mxu0 %v1417
    %1850 = vmatprep.subr.bf16.mxu0 0
    %1851 = vmatpush1.bf16.msra.mxu0 %v1418
    %1852 = vmatprep.subr.bf16.mxu0 0
    %1853 = vmatpush1.bf16.msra.mxu0 %v1419
    %1854 = vmatprep.subr.bf16.mxu0 0
    %1855 = vmatpush1.bf16.msra.mxu0 %v1420
    %1856 = vmatprep.subr.bf16.mxu0 0
    %1857 = vmatpush1.bf16.msra.mxu0 %v1421
    %1858 = vmatprep.subr.bf16.mxu0 0
    %1859 = vmatpush1.bf16.msra.mxu0 %v1422
    %1860 = vmatprep.subr.bf16.mxu0 0
    %1861 = vmatpush1.bf16.msra.mxu0 %v1423
    %1862 = vmatprep.mubr.bf16.mxu0 %v1815
    %1863 = vmatmul.mubr.bf16.gmra.mrb[0].mxu0 %v1814
    %v1864 = vpop.f32.mrb[0].mxu0
    %v1865 = vadd.f32 0.0, %v1864
    %v1866 = vpop.f32.mrb[0].mxu0
    %v1867 = vpop.f32.mrb[0].mxu0
    %v1868 = vadd.f32 0.0, %v1867
    %v1869 = vpop.f32.mrb[0].mxu0
    %1870 = vmatprep.mubr.bf16.mxu0 %v1817
    %1871 = vmatmul.mubr.bf16.gmra.mrb[0].mxu0 %v1816
    %v1872 = vpop.f32.mrb[0].mxu0
    %v1873 = vadd.f32 0.0, %v1872
    %v1874 = vpop.f32.mrb[0].mxu0
    %v1875 = vpop.f32.mrb[0].mxu0
    %v1876 = vadd.f32 0.0, %v1875
    %v1877 = vpop.f32.mrb[0].mxu0
    %1878 = vmatprep.mubr.bf16.mxu0 %v1819
    %1879 = vmatmul.mubr.bf16.gmra.mrb[0].mxu0 %v1818
    %v1880 = vpop.f32.mrb[0].mxu0
    %v1881 = vadd.f32 0.0, %v1880
    %v1882 = vpop.f32.mrb[0].mxu0
    %v1883 = vpop.f32.mrb[0].mxu0
    %v1884 = vadd.f32 0.0, %v1883
    %v1885 = vpop.f32.mrb[0].mxu0
    %1886 = vmatprep.mubr.bf16.mxu0 %v1821
    %1887 = vmatmul.mubr.bf16.gmra.mrb[0].mxu0 %v1820
    %v1888 = vpop.f32.mrb[0].mxu0
    %v1889 = vadd.f32 0.0, %v1888
    %v1890 = vpop.f32.mrb[0].mxu0
    %v1891 = vpop.f32.mrb[0].mxu0
    %v1892 = vadd.f32 0.0, %v1891
    %v1893 = vpop.f32.mrb[0].mxu0
    %1894 = vdwg.mxu0
    %s1895 = scalar_lea.vmem %s5, 256
    %v1896 = vld [vmem:[%s1895] sm:$0xff]
    %v1897 = vld [vmem:[%s1895 + $0x8] sm:$0xff]
    %v1898 = vld [vmem:[%s1895 + $0x10] sm:$0xff]
    %v1899 = vld [vmem:[%s1895 + $0x18] sm:$0xff]
    %v1900 = vld [vmem:[%s1895 + $0x20] sm:$0xff]
    %v1901 = vld [vmem:[%s1895 + $0x28] sm:$0xff]
    %v1902 = vld [vmem:[%s1895 + $0x30] sm:$0xff]
    %v1903 = vld [vmem:[%s1895 + $0x38] sm:$0xff]
    %v1912 = vunpack.c.l.b16 %v1896
    %v1913 = vunpack.c.h.b16 %v1896
    %v1914 = vunpack.c.l.b16 %v1897
    %v1915 = vunpack.c.h.b16 %v1897
    %v1916 = vunpack.c.l.b16 %v1898
    %v1917 = vunpack.c.h.b16 %v1898
    %v1918 = vunpack.c.l.b16 %v1899
    %v1919 = vunpack.c.h.b16 %v1899
    %v1920 = vunpack.c.l.b16 %v1900
    %v1921 = vunpack.c.h.b16 %v1900
    %v1922 = vunpack.c.l.b16 %v1901
    %v1923 = vunpack.c.h.b16 %v1901
    %v1924 = vunpack.c.l.b16 %v1902
    %v1925 = vunpack.c.h.b16 %v1902
    %v1926 = vunpack.c.l.b16 %v1903
    %v1927 = vunpack.c.h.b16 %v1903
    %v1928 = vpack.c.b16 %v1914, %v1912
    %v1929 = vpack.c.b16 %v1915, %v1913
    %v1930 = vpack.c.b16 %v1918, %v1916
    %v1931 = vpack.c.b16 %v1919, %v1917
    %v1932 = vpack.c.b16 %v1922, %v1920
    %v1933 = vpack.c.b16 %v1923, %v1921
    %v1934 = vpack.c.b16 %v1926, %v1924
    %v1935 = vpack.c.b16 %v1927, %v1925
    %1944 = vmatprep.subr.bf16.mxu0 0
    %1945 = vmatpush1.bf16.msra.mxu0 %v1408
    %1946 = vmatprep.subr.bf16.mxu0 0
    %1947 = vmatpush1.bf16.msra.mxu0 %v1409
    %1948 = vmatprep.subr.bf16.mxu0 0
    %1949 = vmatpush1.bf16.msra.mxu0 %v1410
    %1950 = vmatprep.subr.bf16.mxu0 0
    %1951 = vmatpush1.bf16.msra.mxu0 %v1411
    %1952 = vmatprep.subr.bf16.mxu0 0
    %1953 = vmatpush1.bf16.msra.mxu0 %v1412
    %1954 = vmatprep.subr.bf16.mxu0 0
    %1955 = vmatpush1.bf16.msra.mxu0 %v1413
    %1956 = vmatprep.subr.bf16.mxu0 0
    %1957 = vmatpush1.bf16.msra.mxu0 %v1414
    %1958 = vmatprep.subr.bf16.mxu0 0
    %1959 = vmatpush1.bf16.msra.mxu0 %v1415
    %1960 = vmatprep.subr.bf16.mxu0 0
    %1961 = vmatpush1.bf16.msra.mxu0 %v1416
    %1962 = vmatprep.subr.bf16.mxu0 0
    %1963 = vmatpush1.bf16.msra.mxu0 %v1417
    %1964 = vmatprep.subr.bf16.mxu0 0
    %1965 = vmatpush1.bf16.msra.mxu0 %v1418
    %1966 = vmatprep.subr.bf16.mxu0 0
    %1967 = vmatpush1.bf16.msra.mxu0 %v1419
    %1968 = vmatprep.subr.bf16.mxu0 0
    %1969 = vmatpush1.bf16.msra.mxu0 %v1420
    %1970 = vmatprep.subr.bf16.mxu0 0
    %1971 = vmatpush1.bf16.msra.mxu0 %v1421
    %1972 = vmatprep.subr.bf16.mxu0 0
    %1973 = vmatpush1.bf16.msra.mxu0 %v1422
    %1974 = vmatprep.subr.bf16.mxu0 0
    %1975 = vmatpush1.bf16.msra.mxu0 %v1423
    %1976 = vmatprep.mubr.bf16.mxu0 %v1929
    %1977 = vmatmul.mubr.bf16.gmra.mrb[0].mxu0 %v1928
    %v1978 = vpop.f32.mrb[0].mxu0
    %v1979 = vadd.f32 0.0, %v1978
    %v1980 = vpop.f32.mrb[0].mxu0
    %v1981 = vpop.f32.mrb[0].mxu0
    %v1982 = vadd.f32 0.0, %v1981
    %v1983 = vpop.f32.mrb[0].mxu0
    %1984 = vmatprep.mubr.bf16.mxu0 %v1931
    %1985 = vmatmul.mubr.bf16.gmra.mrb[0].mxu0 %v1930
    %v1986 = vpop.f32.mrb[0].mxu0
    %v1987 = vadd.f32 0.0, %v1986
    %v1988 = vpop.f32.mrb[0].mxu0
    %v1989 = vpop.f32.mrb[0].mxu0
    %v1990 = vadd.f32 0.0, %v1989
    %v1991 = vpop.f32.mrb[0].mxu0
    %1992 = vmatprep.mubr.bf16.mxu0 %v1933
    %1993 = vmatmul.mubr.bf16.gmra.mrb[0].mxu0 %v1932
    %v1994 = vpop.f32.mrb[0].mxu0
    %v1995 = vadd.f32 0.0, %v1994
    %v1996 = vpop.f32.mrb[0].mxu0
    %v1997 = vpop.f32.mrb[0].mxu0
    %v1998 = vadd.f32 0.0, %v1997
    %v1999 = vpop.f32.mrb[0].mxu0
    %2000 = vmatprep.mubr.bf16.mxu0 %v1935
    %2001 = vmatmul.mubr.bf16.gmra.mrb[0].mxu0 %v1934
    %v2002 = vpop.f32.mrb[0].mxu0
    %v2003 = vadd.f32 0.0, %v2002
    %v2004 = vpop.f32.mrb[0].mxu0
    %v2005 = vpop.f32.mrb[0].mxu0
    %v2006 = vadd.f32 0.0, %v2005
    %v2007 = vpop.f32.mrb[0].mxu0
    %2008 = vdwg.mxu0
    %s2009 = scalar_lea.vmem %s5, 320
    %v2010 = vld [vmem:[%s2009] sm:$0xff]
    %v2011 = vld [vmem:[%s2009 + $0x8] sm:$0xff]
    %v2012 = vld [vmem:[%s2009 + $0x10] sm:$0xff]
    %v2013 = vld [vmem:[%s2009 + $0x18] sm:$0xff]
    %v2014 = vld [vmem:[%s2009 + $0x20] sm:$0xff]
    %v2015 = vld [vmem:[%s2009 + $0x28] sm:$0xff]
    %v2016 = vld [vmem:[%s2009 + $0x30] sm:$0xff]
    %v2017 = vld [vmem:[%s2009 + $0x38] sm:$0xff]
    %v2026 = vunpack.c.l.b16 %v2010
    %v2027 = vunpack.c.h.b16 %v2010
    %v2028 = vunpack.c.l.b16 %v2011
    %v2029 = vunpack.c.h.b16 %v2011
    %v2030 = vunpack.c.l.b16 %v2012
    %v2031 = vunpack.c.h.b16 %v2012
    %v2032 = vunpack.c.l.b16 %v2013
    %v2033 = vunpack.c.h.b16 %v2013
    %v2034 = vunpack.c.l.b16 %v2014
    %v2035 = vunpack.c.h.b16 %v2014
    %v2036 = vunpack.c.l.b16 %v2015
    %v2037 = vunpack.c.h.b16 %v2015
    %v2038 = vunpack.c.l.b16 %v2016
    %v2039 = vunpack.c.h.b16 %v2016
    %v2040 = vunpack.c.l.b16 %v2017
    %v2041 = vunpack.c.h.b16 %v2017
    %v2042 = vpack.c.b16 %v2028, %v2026
    %v2043 = vpack.c.b16 %v2029, %v2027
    %v2044 = vpack.c.b16 %v2032, %v2030
    %v2045 = vpack.c.b16 %v2033, %v2031
    %v2046 = vpack.c.b16 %v2036, %v2034
    %v2047 = vpack.c.b16 %v2037, %v2035
    %v2048 = vpack.c.b16 %v2040, %v2038
    %v2049 = vpack.c.b16 %v2041, %v2039
    %2058 = vmatprep.subr.bf16.mxu0 0
    %2059 = vmatpush1.bf16.msra.mxu0 %v1408
    %2060 = vmatprep.subr.bf16.mxu0 0
    %2061 = vmatpush1.bf16.msra.mxu0 %v1409
    %2062 = vmatprep.subr.bf16.mxu0 0
    %2063 = vmatpush1.bf16.msra.mxu0 %v1410
    %2064 = vmatprep.subr.bf16.mxu0 0
    %2065 = vmatpush1.bf16.msra.mxu0 %v1411
    %2066 = vmatprep.subr.bf16.mxu0 0
    %2067 = vmatpush1.bf16.msra.mxu0 %v1412
    %2068 = vmatprep.subr.bf16.mxu0 0
    %2069 = vmatpush1.bf16.msra.mxu0 %v1413
    %2070 = vmatprep.subr.bf16.mxu0 0
    %2071 = vmatpush1.bf16.msra.mxu0 %v1414
    %2072 = vmatprep.subr.bf16.mxu0 0
    %2073 = vmatpush1.bf16.msra.mxu0 %v1415
    %2074 = vmatprep.subr.bf16.mxu0 0
    %2075 = vmatpush1.bf16.msra.mxu0 %v1416
    %2076 = vmatprep.subr.bf16.mxu0 0
    %2077 = vmatpush1.bf16.msra.mxu0 %v1417
    %2078 = vmatprep.subr.bf16.mxu0 0
    %2079 = vmatpush1.bf16.msra.mxu0 %v1418
    %2080 = vmatprep.subr.bf16.mxu0 0
    %2081 = vmatpush1.bf16.msra.mxu0 %v1419
    %2082 = vmatprep.subr.bf16.mxu0 0
    %2083 = vmatpush1.bf16.msra.mxu0 %v1420
    %2084 = vmatprep.subr.bf16.mxu0 0
    %2085 = vmatpush1.bf16.msra.mxu0 %v1421
    %2086 = vmatprep.subr.bf16.mxu0 0
    %2087 = vmatpush1.bf16.msra.mxu0 %v1422
    %2088 = vmatprep.subr.bf16.mxu0 0
    %2089 = vmatpush1.bf16.msra.mxu0 %v1423
    %2090 = vmatprep.mubr.bf16.mxu0 %v2043
    %2091 = vmatmul.mubr.bf16.gmra.mrb[0].mxu0 %v2042
    %v2092 = vpop.f32.mrb[0].mxu0
    %v2093 = vadd.f32 0.0, %v2092
    %v2094 = vpop.f32.mrb[0].mxu0
    %v2095 = vpop.f32.mrb[0].mxu0
    %v2096 = vadd.f32 0.0, %v2095
    %v2097 = vpop.f32.mrb[0].mxu0
    %2098 = vmatprep.mubr.bf16.mxu0 %v2045
    %2099 = vmatmul.mubr.bf16.gmra.mrb[0].mxu0 %v2044
    %v2100 = vpop.f32.mrb[0].mxu0
    %v2101 = vadd.f32 0.0, %v2100
    %v2102 = vpop.f32.mrb[0].mxu0
    %v2103 = vpop.f32.mrb[0].mxu0
    %v2104 = vadd.f32 0.0, %v2103
    %v2105 = vpop.f32.mrb[0].mxu0
    %2106 = vmatprep.mubr.bf16.mxu0 %v2047
    %2107 = vmatmul.mubr.bf16.gmra.mrb[0].mxu0 %v2046
    %v2108 = vpop.f32.mrb[0].mxu0
    %v2109 = vadd.f32 0.0, %v2108
    %v2110 = vpop.f32.mrb[0].mxu0
    %v2111 = vpop.f32.mrb[0].mxu0
    %v2112 = vadd.f32 0.0, %v2111
    %v2113 = vpop.f32.mrb[0].mxu0
    %2114 = vmatprep.mubr.bf16.mxu0 %v2049
    %2115 = vmatmul.mubr.bf16.gmra.mrb[0].mxu0 %v2048
    %v2116 = vpop.f32.mrb[0].mxu0
    %v2117 = vadd.f32 0.0, %v2116
    %v2118 = vpop.f32.mrb[0].mxu0
    %v2119 = vpop.f32.mrb[0].mxu0
    %v2120 = vadd.f32 0.0, %v2119
    %v2121 = vpop.f32.mrb[0].mxu0
    %2122 = vdwg.mxu0
    %s2123 = scalar_lea.vmem %s5, 384
    %v2124 = vld [vmem:[%s2123] sm:$0xff]
    %v2125 = vld [vmem:[%s2123 + $0x8] sm:$0xff]
    %v2126 = vld [vmem:[%s2123 + $0x10] sm:$0xff]
    %v2127 = vld [vmem:[%s2123 + $0x18] sm:$0xff]
    %v2128 = vld [vmem:[%s2123 + $0x20] sm:$0xff]
    %v2129 = vld [vmem:[%s2123 + $0x28] sm:$0xff]
    %v2130 = vld [vmem:[%s2123 + $0x30] sm:$0xff]
    %v2131 = vld [vmem:[%s2123 + $0x38] sm:$0xff]
    %v2140 = vunpack.c.l.b16 %v2124
    %v2141 = vunpack.c.h.b16 %v2124
    %v2142 = vunpack.c.l.b16 %v2125
    %v2143 = vunpack.c.h.b16 %v2125
    %v2144 = vunpack.c.l.b16 %v2126
    %v2145 = vunpack.c.h.b16 %v2126
    %v2146 = vunpack.c.l.b16 %v2127
    %v2147 = vunpack.c.h.b16 %v2127
    %v2148 = vunpack.c.l.b16 %v2128
    %v2149 = vunpack.c.h.b16 %v2128
    %v2150 = vunpack.c.l.b16 %v2129
    %v2151 = vunpack.c.h.b16 %v2129
    %v2152 = vunpack.c.l.b16 %v2130
    %v2153 = vunpack.c.h.b16 %v2130
    %v2154 = vunpack.c.l.b16 %v2131
    %v2155 = vunpack.c.h.b16 %v2131
    %v2156 = vpack.c.b16 %v2142, %v2140
    %v2157 = vpack.c.b16 %v2143, %v2141
    %v2158 = vpack.c.b16 %v2146, %v2144
    %v2159 = vpack.c.b16 %v2147, %v2145
    %v2160 = vpack.c.b16 %v2150, %v2148
    %v2161 = vpack.c.b16 %v2151, %v2149
    %v2162 = vpack.c.b16 %v2154, %v2152
    %v2163 = vpack.c.b16 %v2155, %v2153
    %2172 = vmatprep.subr.bf16.mxu0 0
    %2173 = vmatpush1.bf16.msra.mxu0 %v1408
    %2174 = vmatprep.subr.bf16.mxu0 0
    %2175 = vmatpush1.bf16.msra.mxu0 %v1409
    %2176 = vmatprep.subr.bf16.mxu0 0
    %2177 = vmatpush1.bf16.msra.mxu0 %v1410
    %2178 = vmatprep.subr.bf16.mxu0 0
    %2179 = vmatpush1.bf16.msra.mxu0 %v1411
    %2180 = vmatprep.subr.bf16.mxu0 0
    %2181 = vmatpush1.bf16.msra.mxu0 %v1412
    %2182 = vmatprep.subr.bf16.mxu0 0
    %2183 = vmatpush1.bf16.msra.mxu0 %v1413
    %2184 = vmatprep.subr.bf16.mxu0 0
    %2185 = vmatpush1.bf16.msra.mxu0 %v1414
    %2186 = vmatprep.subr.bf16.mxu0 0
    %2187 = vmatpush1.bf16.msra.mxu0 %v1415
    %2188 = vmatprep.subr.bf16.mxu0 0
    %2189 = vmatpush1.bf16.msra.mxu0 %v1416
    %2190 = vmatprep.subr.bf16.mxu0 0
    %2191 = vmatpush1.bf16.msra.mxu0 %v1417
    %2192 = vmatprep.subr.bf16.mxu0 0
    %2193 = vmatpush1.bf16.msra.mxu0 %v1418
    %2194 = vmatprep.subr.bf16.mxu0 0
    %2195 = vmatpush1.bf16.msra.mxu0 %v1419
    %2196 = vmatprep.subr.bf16.mxu0 0
    %2197 = vmatpush1.bf16.msra.mxu0 %v1420
    %2198 = vmatprep.subr.bf16.mxu0 0
    %2199 = vmatpush1.bf16.msra.mxu0 %v1421
    %2200 = vmatprep.subr.bf16.mxu0 0
    %2201 = vmatpush1.bf16.msra.mxu0 %v1422
    %2202 = vmatprep.subr.bf16.mxu0 0
    %2203 = vmatpush1.bf16.msra.mxu0 %v1423
    %2204 = vmatprep.mubr.bf16.mxu0 %v2157
    %2205 = vmatmul.mubr.bf16.gmra.mrb[0].mxu0 %v2156
    %v2206 = vpop.f32.mrb[0].mxu0
    %v2207 = vadd.f32 0.0, %v2206
    %v2208 = vpop.f32.mrb[0].mxu0
    %v2209 = vpop.f32.mrb[0].mxu0
    %v2210 = vadd.f32 0.0, %v2209
    %v2211 = vpop.f32.mrb[0].mxu0
    %2212 = vmatprep.mubr.bf16.mxu0 %v2159
    %2213 = vmatmul.mubr.bf16.gmra.mrb[0].mxu0 %v2158
    %v2214 = vpop.f32.mrb[0].mxu0
    %v2215 = vadd.f32 0.0, %v2214
    %v2216 = vpop.f32.mrb[0].mxu0
    %v2217 = vpop.f32.mrb[0].mxu0
    %v2218 = vadd.f32 0.0, %v2217
    %v2219 = vpop.f32.mrb[0].mxu0
    %2220 = vmatprep.mubr.bf16.mxu0 %v2161
    %2221 = vmatmul.mubr.bf16.gmra.mrb[0].mxu0 %v2160
    %v2222 = vpop.f32.mrb[0].mxu0
    %v2223 = vadd.f32 0.0, %v2222
    %v2224 = vpop.f32.mrb[0].mxu0
    %v2225 = vpop.f32.mrb[0].mxu0
    %v2226 = vadd.f32 0.0, %v2225
    %v2227 = vpop.f32.mrb[0].mxu0
    %2228 = vmatprep.mubr.bf16.mxu0 %v2163
    %2229 = vmatmul.mubr.bf16.gmra.mrb[0].mxu0 %v2162
    %v2230 = vpop.f32.mrb[0].mxu0
    %v2231 = vadd.f32 0.0, %v2230
    %v2232 = vpop.f32.mrb[0].mxu0
    %v2233 = vpop.f32.mrb[0].mxu0
    %v2234 = vadd.f32 0.0, %v2233
    %v2235 = vpop.f32.mrb[0].mxu0
    %2236 = vdwg.mxu0
    %s2237 = scalar_lea.vmem %s5, 448
    %v2238 = vld [vmem:[%s2237] sm:$0xff]
    %v2239 = vld [vmem:[%s2237 + $0x8] sm:$0xff]
    %v2240 = vld [vmem:[%s2237 + $0x10] sm:$0xff]
    %v2241 = vld [vmem:[%s2237 + $0x18] sm:$0xff]
    %v2242 = vld [vmem:[%s2237 + $0x20] sm:$0xff]
    %v2243 = vld [vmem:[%s2237 + $0x28] sm:$0xff]
    %v2244 = vld [vmem:[%s2237 + $0x30] sm:$0xff]
    %v2245 = vld [vmem:[%s2237 + $0x38] sm:$0xff]
    %v2254 = vunpack.c.l.b16 %v2238
    %v2255 = vunpack.c.h.b16 %v2238
    %v2256 = vunpack.c.l.b16 %v2239
    %v2257 = vunpack.c.h.b16 %v2239
    %v2258 = vunpack.c.l.b16 %v2240
    %v2259 = vunpack.c.h.b16 %v2240
    %v2260 = vunpack.c.l.b16 %v2241
    %v2261 = vunpack.c.h.b16 %v2241
    %v2262 = vunpack.c.l.b16 %v2242
    %v2263 = vunpack.c.h.b16 %v2242
    %v2264 = vunpack.c.l.b16 %v2243
    %v2265 = vunpack.c.h.b16 %v2243
    %v2266 = vunpack.c.l.b16 %v2244
    %v2267 = vunpack.c.h.b16 %v2244
    %v2268 = vunpack.c.l.b16 %v2245
    %v2269 = vunpack.c.h.b16 %v2245
    %v2270 = vpack.c.b16 %v2256, %v2254
    %v2271 = vpack.c.b16 %v2257, %v2255
    %v2272 = vpack.c.b16 %v2260, %v2258
    %v2273 = vpack.c.b16 %v2261, %v2259
    %v2274 = vpack.c.b16 %v2264, %v2262
    %v2275 = vpack.c.b16 %v2265, %v2263
    %v2276 = vpack.c.b16 %v2268, %v2266
    %v2277 = vpack.c.b16 %v2269, %v2267
    %2286 = vmatprep.subr.bf16.mxu0 0
    %2287 = vmatpush1.bf16.msra.mxu0 %v1408
    %2288 = vmatprep.subr.bf16.mxu0 0
    %2289 = vmatpush1.bf16.msra.mxu0 %v1409
    %2290 = vmatprep.subr.bf16.mxu0 0
    %2291 = vmatpush1.bf16.msra.mxu0 %v1410
    %2292 = vmatprep.subr.bf16.mxu0 0
    %2293 = vmatpush1.bf16.msra.mxu0 %v1411
    %2294 = vmatprep.subr.bf16.mxu0 0
    %2295 = vmatpush1.bf16.msra.mxu0 %v1412
    %2296 = vmatprep.subr.bf16.mxu0 0
    %2297 = vmatpush1.bf16.msra.mxu0 %v1413
    %2298 = vmatprep.subr.bf16.mxu0 0
    %2299 = vmatpush1.bf16.msra.mxu0 %v1414
    %2300 = vmatprep.subr.bf16.mxu0 0
    %2301 = vmatpush1.bf16.msra.mxu0 %v1415
    %2302 = vmatprep.subr.bf16.mxu0 0
    %2303 = vmatpush1.bf16.msra.mxu0 %v1416
    %2304 = vmatprep.subr.bf16.mxu0 0
    %2305 = vmatpush1.bf16.msra.mxu0 %v1417
    %2306 = vmatprep.subr.bf16.mxu0 0
    %2307 = vmatpush1.bf16.msra.mxu0 %v1418
    %2308 = vmatprep.subr.bf16.mxu0 0
    %2309 = vmatpush1.bf16.msra.mxu0 %v1419
    %2310 = vmatprep.subr.bf16.mxu0 0
    %2311 = vmatpush1.bf16.msra.mxu0 %v1420
    %2312 = vmatprep.subr.bf16.mxu0 0
    %2313 = vmatpush1.bf16.msra.mxu0 %v1421
    %2314 = vmatprep.subr.bf16.mxu0 0
    %2315 = vmatpush1.bf16.msra.mxu0 %v1422
    %2316 = vmatprep.subr.bf16.mxu0 0
    %2317 = vmatpush1.bf16.msra.mxu0 %v1423
    %2318 = vmatprep.mubr.bf16.mxu0 %v2271
    %2319 = vmatmul.mubr.bf16.gmra.mrb[0].mxu0 %v2270
    %v2320 = vpop.f32.mrb[0].mxu0
    %v2321 = vadd.f32 0.0, %v2320
    %v2322 = vpop.f32.mrb[0].mxu0
    %v2323 = vpop.f32.mrb[0].mxu0
    %v2324 = vadd.f32 0.0, %v2323
    %v2325 = vpop.f32.mrb[0].mxu0
    %2326 = vmatprep.mubr.bf16.mxu0 %v2273
    %2327 = vmatmul.mubr.bf16.gmra.mrb[0].mxu0 %v2272
    %v2328 = vpop.f32.mrb[0].mxu0
    %v2329 = vadd.f32 0.0, %v2328
    %v2330 = vpop.f32.mrb[0].mxu0
    %v2331 = vpop.f32.mrb[0].mxu0
    %v2332 = vadd.f32 0.0, %v2331
    %v2333 = vpop.f32.mrb[0].mxu0
    %2334 = vmatprep.mubr.bf16.mxu0 %v2275
    %2335 = vmatmul.mubr.bf16.gmra.mrb[0].mxu0 %v2274
    %v2336 = vpop.f32.mrb[0].mxu0
    %v2337 = vadd.f32 0.0, %v2336
    %v2338 = vpop.f32.mrb[0].mxu0
    %v2339 = vpop.f32.mrb[0].mxu0
    %v2340 = vadd.f32 0.0, %v2339
    %v2341 = vpop.f32.mrb[0].mxu0
    %2342 = vmatprep.mubr.bf16.mxu0 %v2277
    %2343 = vmatmul.mubr.bf16.gmra.mrb[0].mxu0 %v2276
    %v2344 = vpop.f32.mrb[0].mxu0
    %v2345 = vadd.f32 0.0, %v2344
    %v2346 = vpop.f32.mrb[0].mxu0
    %v2347 = vpop.f32.mrb[0].mxu0
    %v2348 = vadd.f32 0.0, %v2347
    %v2349 = vpop.f32.mrb[0].mxu0
    %2350 = vdwg.mxu0
    %s2351 = scalar_lea.vmem %s5, 512
    %v2352 = vld [vmem:[%s2351] sm:$0xff]
    %v2353 = vld [vmem:[%s2351 + $0x8] sm:$0xff]
    %v2354 = vld [vmem:[%s2351 + $0x10] sm:$0xff]
    %v2355 = vld [vmem:[%s2351 + $0x18] sm:$0xff]
    %v2356 = vld [vmem:[%s2351 + $0x20] sm:$0xff]
    %v2357 = vld [vmem:[%s2351 + $0x28] sm:$0xff]
    %v2358 = vld [vmem:[%s2351 + $0x30] sm:$0xff]
    %v2359 = vld [vmem:[%s2351 + $0x38] sm:$0xff]
    %v2368 = vunpack.c.l.b16 %v2352
    %v2369 = vunpack.c.h.b16 %v2352
    %v2370 = vunpack.c.l.b16 %v2353
    %v2371 = vunpack.c.h.b16 %v2353
    %v2372 = vunpack.c.l.b16 %v2354
    %v2373 = vunpack.c.h.b16 %v2354
    %v2374 = vunpack.c.l.b16 %v2355
    %v2375 = vunpack.c.h.b16 %v2355
    %v2376 = vunpack.c.l.b16 %v2356
    %v2377 = vunpack.c.h.b16 %v2356
    %v2378 = vunpack.c.l.b16 %v2357
    %v2379 = vunpack.c.h.b16 %v2357
    %v2380 = vunpack.c.l.b16 %v2358
    %v2381 = vunpack.c.h.b16 %v2358
    %v2382 = vunpack.c.l.b16 %v2359
    %v2383 = vunpack.c.h.b16 %v2359
    %v2384 = vpack.c.b16 %v2370, %v2368
    %v2385 = vpack.c.b16 %v2371, %v2369
    %v2386 = vpack.c.b16 %v2374, %v2372
    %v2387 = vpack.c.b16 %v2375, %v2373
    %v2388 = vpack.c.b16 %v2378, %v2376
    %v2389 = vpack.c.b16 %v2379, %v2377
    %v2390 = vpack.c.b16 %v2382, %v2380
    %v2391 = vpack.c.b16 %v2383, %v2381
    %2400 = vmatprep.subr.bf16.mxu0 0
    %2401 = vmatpush1.bf16.msra.mxu0 %v1408
    %2402 = vmatprep.subr.bf16.mxu0 0
    %2403 = vmatpush1.bf16.msra.mxu0 %v1409
    %2404 = vmatprep.subr.bf16.mxu0 0
    %2405 = vmatpush1.bf16.msra.mxu0 %v1410
    %2406 = vmatprep.subr.bf16.mxu0 0
    %2407 = vmatpush1.bf16.msra.mxu0 %v1411
    %2408 = vmatprep.subr.bf16.mxu0 0
    %2409 = vmatpush1.bf16.msra.mxu0 %v1412
    %2410 = vmatprep.subr.bf16.mxu0 0
    %2411 = vmatpush1.bf16.msra.mxu0 %v1413
    %2412 = vmatprep.subr.bf16.mxu0 0
    %2413 = vmatpush1.bf16.msra.mxu0 %v1414
    %2414 = vmatprep.subr.bf16.mxu0 0
    %2415 = vmatpush1.bf16.msra.mxu0 %v1415
    %2416 = vmatprep.subr.bf16.mxu0 0
    %2417 = vmatpush1.bf16.msra.mxu0 %v1416
    %2418 = vmatprep.subr.bf16.mxu0 0
    %2419 = vmatpush1.bf16.msra.mxu0 %v1417
    %2420 = vmatprep.subr.bf16.mxu0 0
    %2421 = vmatpush1.bf16.msra.mxu0 %v1418
    %2422 = vmatprep.subr.bf16.mxu0 0
    %2423 = vmatpush1.bf16.msra.mxu0 %v1419
    %2424 = vmatprep.subr.bf16.mxu0 0
    %2425 = vmatpush1.bf16.msra.mxu0 %v1420
    %2426 = vmatprep.subr.bf16.mxu0 0
    %2427 = vmatpush1.bf16.msra.mxu0 %v1421
    %2428 = vmatprep.subr.bf16.mxu0 0
    %2429 = vmatpush1.bf16.msra.mxu0 %v1422
    %2430 = vmatprep.subr.bf16.mxu0 0
    %2431 = vmatpush1.bf16.msra.mxu0 %v1423
    %2432 = vmatprep.mubr.bf16.mxu0 %v2385
    %2433 = vmatmul.mubr.bf16.gmra.mrb[0].mxu0 %v2384
    %v2434 = vpop.f32.mrb[0].mxu0
    %v2435 = vadd.f32 0.0, %v2434
    %v2436 = vpop.f32.mrb[0].mxu0
    %v2437 = vpop.f32.mrb[0].mxu0
    %v2438 = vadd.f32 0.0, %v2437
    %v2439 = vpop.f32.mrb[0].mxu0
    %2440 = vmatprep.mubr.bf16.mxu0 %v2387
    %2441 = vmatmul.mubr.bf16.gmra.mrb[0].mxu0 %v2386
    %v2442 = vpop.f32.mrb[0].mxu0
    %v2443 = vadd.f32 0.0, %v2442
    %v2444 = vpop.f32.mrb[0].mxu0
    %v2445 = vpop.f32.mrb[0].mxu0
    %v2446 = vadd.f32 0.0, %v2445
    %v2447 = vpop.f32.mrb[0].mxu0
    %2448 = vmatprep.mubr.bf16.mxu0 %v2389
    %2449 = vmatmul.mubr.bf16.gmra.mrb[0].mxu0 %v2388
    %v2450 = vpop.f32.mrb[0].mxu0
    %v2451 = vadd.f32 0.0, %v2450
    %v2452 = vpop.f32.mrb[0].mxu0
    %v2453 = vpop.f32.mrb[0].mxu0
    %v2454 = vadd.f32 0.0, %v2453
    %v2455 = vpop.f32.mrb[0].mxu0
    %2456 = vmatprep.mubr.bf16.mxu0 %v2391
    %2457 = vmatmul.mubr.bf16.gmra.mrb[0].mxu0 %v2390
    %v2458 = vpop.f32.mrb[0].mxu0
    %v2459 = vadd.f32 0.0, %v2458
    %v2460 = vpop.f32.mrb[0].mxu0
    %v2461 = vpop.f32.mrb[0].mxu0
    %v2462 = vadd.f32 0.0, %v2461
    %v2463 = vpop.f32.mrb[0].mxu0
    %2464 = vdwg.mxu0
    %s2465 = scalar_lea.vmem %s5, 576
    %v2466 = vld [vmem:[%s2465] sm:$0xff]
    %v2467 = vld [vmem:[%s2465 + $0x8] sm:$0xff]
    %v2468 = vld [vmem:[%s2465 + $0x10] sm:$0xff]
    %v2469 = vld [vmem:[%s2465 + $0x18] sm:$0xff]
    %v2470 = vld [vmem:[%s2465 + $0x20] sm:$0xff]
    %v2471 = vld [vmem:[%s2465 + $0x28] sm:$0xff]
    %v2472 = vld [vmem:[%s2465 + $0x30] sm:$0xff]
    %v2473 = vld [vmem:[%s2465 + $0x38] sm:$0xff]
    %v2482 = vunpack.c.l.b16 %v2466
    %v2483 = vunpack.c.h.b16 %v2466
    %v2484 = vunpack.c.l.b16 %v2467
    %v2485 = vunpack.c.h.b16 %v2467
    %v2486 = vunpack.c.l.b16 %v2468
    %v2487 = vunpack.c.h.b16 %v2468
    %v2488 = vunpack.c.l.b16 %v2469
    %v2489 = vunpack.c.h.b16 %v2469
    %v2490 = vunpack.c.l.b16 %v2470
    %v2491 = vunpack.c.h.b16 %v2470
    %v2492 = vunpack.c.l.b16 %v2471
    %v2493 = vunpack.c.h.b16 %v2471
    %v2494 = vunpack.c.l.b16 %v2472
    %v2495 = vunpack.c.h.b16 %v2472
    %v2496 = vunpack.c.l.b16 %v2473
    %v2497 = vunpack.c.h.b16 %v2473
    %v2498 = vpack.c.b16 %v2484, %v2482
    %v2499 = vpack.c.b16 %v2485, %v2483
    %v2500 = vpack.c.b16 %v2488, %v2486
    %v2501 = vpack.c.b16 %v2489, %v2487
    %v2502 = vpack.c.b16 %v2492, %v2490
    %v2503 = vpack.c.b16 %v2493, %v2491
    %v2504 = vpack.c.b16 %v2496, %v2494
    %v2505 = vpack.c.b16 %v2497, %v2495
    %2514 = vmatprep.subr.bf16.mxu0 0
    %2515 = vmatpush1.bf16.msra.mxu0 %v1408
    %2516 = vmatprep.subr.bf16.mxu0 0
    %2517 = vmatpush1.bf16.msra.mxu0 %v1409
    %2518 = vmatprep.subr.bf16.mxu0 0
    %2519 = vmatpush1.bf16.msra.mxu0 %v1410
    %2520 = vmatprep.subr.bf16.mxu0 0
    %2521 = vmatpush1.bf16.msra.mxu0 %v1411
    %2522 = vmatprep.subr.bf16.mxu0 0
    %2523 = vmatpush1.bf16.msra.mxu0 %v1412
    %2524 = vmatprep.subr.bf16.mxu0 0
    %2525 = vmatpush1.bf16.msra.mxu0 %v1413
    %2526 = vmatprep.subr.bf16.mxu0 0
    %2527 = vmatpush1.bf16.msra.mxu0 %v1414
    %2528 = vmatprep.subr.bf16.mxu0 0
    %2529 = vmatpush1.bf16.msra.mxu0 %v1415
    %2530 = vmatprep.subr.bf16.mxu0 0
    %2531 = vmatpush1.bf16.msra.mxu0 %v1416
    %2532 = vmatprep.subr.bf16.mxu0 0
    %2533 = vmatpush1.bf16.msra.mxu0 %v1417
    %2534 = vmatprep.subr.bf16.mxu0 0
    %2535 = vmatpush1.bf16.msra.mxu0 %v1418
    %2536 = vmatprep.subr.bf16.mxu0 0
    %2537 = vmatpush1.bf16.msra.mxu0 %v1419
    %2538 = vmatprep.subr.bf16.mxu0 0
    %2539 = vmatpush1.bf16.msra.mxu0 %v1420
    %2540 = vmatprep.subr.bf16.mxu0 0
    %2541 = vmatpush1.bf16.msra.mxu0 %v1421
    %2542 = vmatprep.subr.bf16.mxu0 0
    %2543 = vmatpush1.bf16.msra.mxu0 %v1422
    %2544 = vmatprep.subr.bf16.mxu0 0
    %2545 = vmatpush1.bf16.msra.mxu0 %v1423
    %2546 = vmatprep.mubr.bf16.mxu0 %v2499
    %2547 = vmatmul.mubr.bf16.gmra.mrb[0].mxu0 %v2498
    %v2548 = vpop.f32.mrb[0].mxu0
    %v2549 = vadd.f32 0.0, %v2548
    %v2550 = vpop.f32.mrb[0].mxu0
    %v2551 = vpop.f32.mrb[0].mxu0
    %v2552 = vadd.f32 0.0, %v2551
    %v2553 = vpop.f32.mrb[0].mxu0
    %2554 = vmatprep.mubr.bf16.mxu0 %v2501
    %2555 = vmatmul.mubr.bf16.gmra.mrb[0].mxu0 %v2500
    %v2556 = vpop.f32.mrb[0].mxu0
    %v2557 = vadd.f32 0.0, %v2556
    %v2558 = vpop.f32.mrb[0].mxu0
    %v2559 = vpop.f32.mrb[0].mxu0
    %v2560 = vadd.f32 0.0, %v2559
    %v2561 = vpop.f32.mrb[0].mxu0
    %2562 = vmatprep.mubr.bf16.mxu0 %v2503
    %2563 = vmatmul.mubr.bf16.gmra.mrb[0].mxu0 %v2502
    %v2564 = vpop.f32.mrb[0].mxu0
    %v2565 = vadd.f32 0.0, %v2564
    %v2566 = vpop.f32.mrb[0].mxu0
    %v2567 = vpop.f32.mrb[0].mxu0
    %v2568 = vadd.f32 0.0, %v2567
    %v2569 = vpop.f32.mrb[0].mxu0
    %2570 = vmatprep.mubr.bf16.mxu0 %v2505
    %2571 = vmatmul.mubr.bf16.gmra.mrb[0].mxu0 %v2504
    %v2572 = vpop.f32.mrb[0].mxu0
    %v2573 = vadd.f32 0.0, %v2572
    %v2574 = vpop.f32.mrb[0].mxu0
    %v2575 = vpop.f32.mrb[0].mxu0
    %v2576 = vadd.f32 0.0, %v2575
    %v2577 = vpop.f32.mrb[0].mxu0
    %2578 = vdwg.mxu0
    %s2579 = scalar_lea.vmem %s5, 640
    %v2580 = vld [vmem:[%s2579] sm:$0xff]
    %v2581 = vld [vmem:[%s2579 + $0x8] sm:$0xff]
    %v2582 = vld [vmem:[%s2579 + $0x10] sm:$0xff]
    %v2583 = vld [vmem:[%s2579 + $0x18] sm:$0xff]
    %v2584 = vld [vmem:[%s2579 + $0x20] sm:$0xff]
    %v2585 = vld [vmem:[%s2579 + $0x28] sm:$0xff]
    %v2586 = vld [vmem:[%s2579 + $0x30] sm:$0xff]
    %v2587 = vld [vmem:[%s2579 + $0x38] sm:$0xff]
    %v2596 = vunpack.c.l.b16 %v2580
    %v2597 = vunpack.c.h.b16 %v2580
    %v2598 = vunpack.c.l.b16 %v2581
    %v2599 = vunpack.c.h.b16 %v2581
    %v2600 = vunpack.c.l.b16 %v2582
    %v2601 = vunpack.c.h.b16 %v2582
    %v2602 = vunpack.c.l.b16 %v2583
    %v2603 = vunpack.c.h.b16 %v2583
    %v2604 = vunpack.c.l.b16 %v2584
    %v2605 = vunpack.c.h.b16 %v2584
    %v2606 = vunpack.c.l.b16 %v2585
    %v2607 = vunpack.c.h.b16 %v2585
    %v2608 = vunpack.c.l.b16 %v2586
    %v2609 = vunpack.c.h.b16 %v2586
    %v2610 = vunpack.c.l.b16 %v2587
    %v2611 = vunpack.c.h.b16 %v2587
    %v2612 = vpack.c.b16 %v2598, %v2596
    %v2613 = vpack.c.b16 %v2599, %v2597
    %v2614 = vpack.c.b16 %v2602, %v2600
    %v2615 = vpack.c.b16 %v2603, %v2601
    %v2616 = vpack.c.b16 %v2606, %v2604
    %v2617 = vpack.c.b16 %v2607, %v2605
    %v2618 = vpack.c.b16 %v2610, %v2608
    %v2619 = vpack.c.b16 %v2611, %v2609
    %2628 = vmatprep.subr.bf16.mxu0 0
    %2629 = vmatpush1.bf16.msra.mxu0 %v1408
    %2630 = vmatprep.subr.bf16.mxu0 0
    %2631 = vmatpush1.bf16.msra.mxu0 %v1409
    %2632 = vmatprep.subr.bf16.mxu0 0
    %2633 = vmatpush1.bf16.msra.mxu0 %v1410
    %2634 = vmatprep.subr.bf16.mxu0 0
    %2635 = vmatpush1.bf16.msra.mxu0 %v1411
    %2636 = vmatprep.subr.bf16.mxu0 0
    %2637 = vmatpush1.bf16.msra.mxu0 %v1412
    %2638 = vmatprep.subr.bf16.mxu0 0
    %2639 = vmatpush1.bf16.msra.mxu0 %v1413
    %2640 = vmatprep.subr.bf16.mxu0 0
    %2641 = vmatpush1.bf16.msra.mxu0 %v1414
    %2642 = vmatprep.subr.bf16.mxu0 0
    %2643 = vmatpush1.bf16.msra.mxu0 %v1415
    %2644 = vmatprep.subr.bf16.mxu0 0
    %2645 = vmatpush1.bf16.msra.mxu0 %v1416
    %2646 = vmatprep.subr.bf16.mxu0 0
    %2647 = vmatpush1.bf16.msra.mxu0 %v1417
    %2648 = vmatprep.subr.bf16.mxu0 0
    %2649 = vmatpush1.bf16.msra.mxu0 %v1418
    %2650 = vmatprep.subr.bf16.mxu0 0
    %2651 = vmatpush1.bf16.msra.mxu0 %v1419
    %2652 = vmatprep.subr.bf16.mxu0 0
    %2653 = vmatpush1.bf16.msra.mxu0 %v1420
    %2654 = vmatprep.subr.bf16.mxu0 0
    %2655 = vmatpush1.bf16.msra.mxu0 %v1421
    %2656 = vmatprep.subr.bf16.mxu0 0
    %2657 = vmatpush1.bf16.msra.mxu0 %v1422
    %2658 = vmatprep.subr.bf16.mxu0 0
    %2659 = vmatpush1.bf16.msra.mxu0 %v1423
    %2660 = vmatprep.mubr.bf16.mxu0 %v2613
    %2661 = vmatmul.mubr.bf16.gmra.mrb[0].mxu0 %v2612
    %v2662 = vpop.f32.mrb[0].mxu0
    %v2663 = vadd.f32 0.0, %v2662
    %v2664 = vpop.f32.mrb[0].mxu0
    %v2665 = vpop.f32.mrb[0].mxu0
    %v2666 = vadd.f32 0.0, %v2665
    %v2667 = vpop.f32.mrb[0].mxu0
    %2668 = vmatprep.mubr.bf16.mxu0 %v2615
    %2669 = vmatmul.mubr.bf16.gmra.mrb[0].mxu0 %v2614
    %v2670 = vpop.f32.mrb[0].mxu0
    %v2671 = vadd.f32 0.0, %v2670
    %v2672 = vpop.f32.mrb[0].mxu0
    %v2673 = vpop.f32.mrb[0].mxu0
    %v2674 = vadd.f32 0.0, %v2673
    %v2675 = vpop.f32.mrb[0].mxu0
    %2676 = vmatprep.mubr.bf16.mxu0 %v2617
    %2677 = vmatmul.mubr.bf16.gmra.mrb[0].mxu0 %v2616
    %v2678 = vpop.f32.mrb[0].mxu0
    %v2679 = vadd.f32 0.0, %v2678
    %v2680 = vpop.f32.mrb[0].mxu0
    %v2681 = vpop.f32.mrb[0].mxu0
    %v2682 = vadd.f32 0.0, %v2681
    %v2683 = vpop.f32.mrb[0].mxu0
    %2684 = vmatprep.mubr.bf16.mxu0 %v2619
    %2685 = vmatmul.mubr.bf16.gmra.mrb[0].mxu0 %v2618
    %v2686 = vpop.f32.mrb[0].mxu0
    %v2687 = vadd.f32 0.0, %v2686
    %v2688 = vpop.f32.mrb[0].mxu0
    %v2689 = vpop.f32.mrb[0].mxu0
    %v2690 = vadd.f32 0.0, %v2689
    %v2691 = vpop.f32.mrb[0].mxu0
    %2692 = vdwg.mxu0
    %s2693 = scalar_lea.vmem %s5, 704
    %v2694 = vld [vmem:[%s2693] sm:$0xff]
    %v2695 = vld [vmem:[%s2693 + $0x8] sm:$0xff]
    %v2696 = vld [vmem:[%s2693 + $0x10] sm:$0xff]
    %v2697 = vld [vmem:[%s2693 + $0x18] sm:$0xff]
    %v2698 = vld [vmem:[%s2693 + $0x20] sm:$0xff]
    %v2699 = vld [vmem:[%s2693 + $0x28] sm:$0xff]
    %v2700 = vld [vmem:[%s2693 + $0x30] sm:$0xff]
    %v2701 = vld [vmem:[%s2693 + $0x38] sm:$0xff]
    %v2710 = vunpack.c.l.b16 %v2694
    %v2711 = vunpack.c.h.b16 %v2694
    %v2712 = vunpack.c.l.b16 %v2695
    %v2713 = vunpack.c.h.b16 %v2695
    %v2714 = vunpack.c.l.b16 %v2696
    %v2715 = vunpack.c.h.b16 %v2696
    %v2716 = vunpack.c.l.b16 %v2697
    %v2717 = vunpack.c.h.b16 %v2697
    %v2718 = vunpack.c.l.b16 %v2698
    %v2719 = vunpack.c.h.b16 %v2698
    %v2720 = vunpack.c.l.b16 %v2699
    %v2721 = vunpack.c.h.b16 %v2699
    %v2722 = vunpack.c.l.b16 %v2700
    %v2723 = vunpack.c.h.b16 %v2700
    %v2724 = vunpack.c.l.b16 %v2701
    %v2725 = vunpack.c.h.b16 %v2701
    %v2726 = vpack.c.b16 %v2712, %v2710
    %v2727 = vpack.c.b16 %v2713, %v2711
    %v2728 = vpack.c.b16 %v2716, %v2714
    %v2729 = vpack.c.b16 %v2717, %v2715
    %v2730 = vpack.c.b16 %v2720, %v2718
    %v2731 = vpack.c.b16 %v2721, %v2719
    %v2732 = vpack.c.b16 %v2724, %v2722
    %v2733 = vpack.c.b16 %v2725, %v2723
    %2742 = vmatprep.subr.bf16.mxu0 0
    %2743 = vmatpush1.bf16.msra.mxu0 %v1408
    %2744 = vmatprep.subr.bf16.mxu0 0
    %2745 = vmatpush1.bf16.msra.mxu0 %v1409
    %2746 = vmatprep.subr.bf16.mxu0 0
    %2747 = vmatpush1.bf16.msra.mxu0 %v1410
    %2748 = vmatprep.subr.bf16.mxu0 0
    %2749 = vmatpush1.bf16.msra.mxu0 %v1411
    %2750 = vmatprep.subr.bf16.mxu0 0
    %2751 = vmatpush1.bf16.msra.mxu0 %v1412
    %2752 = vmatprep.subr.bf16.mxu0 0
    %2753 = vmatpush1.bf16.msra.mxu0 %v1413
    %2754 = vmatprep.subr.bf16.mxu0 0
    %2755 = vmatpush1.bf16.msra.mxu0 %v1414
    %2756 = vmatprep.subr.bf16.mxu0 0
    %2757 = vmatpush1.bf16.msra.mxu0 %v1415
    %2758 = vmatprep.subr.bf16.mxu0 0
    %2759 = vmatpush1.bf16.msra.mxu0 %v1416
    %2760 = vmatprep.subr.bf16.mxu0 0
    %2761 = vmatpush1.bf16.msra.mxu0 %v1417
    %2762 = vmatprep.subr.bf16.mxu0 0
    %2763 = vmatpush1.bf16.msra.mxu0 %v1418
    %2764 = vmatprep.subr.bf16.mxu0 0
    %2765 = vmatpush1.bf16.msra.mxu0 %v1419
    %2766 = vmatprep.subr.bf16.mxu0 0
    %2767 = vmatpush1.bf16.msra.mxu0 %v1420
    %2768 = vmatprep.subr.bf16.mxu0 0
    %2769 = vmatpush1.bf16.msra.mxu0 %v1421
    %2770 = vmatprep.subr.bf16.mxu0 0
    %2771 = vmatpush1.bf16.msra.mxu0 %v1422
    %2772 = vmatprep.subr.bf16.mxu0 0
    %2773 = vmatpush1.bf16.msra.mxu0 %v1423
    %2774 = vmatprep.mubr.bf16.mxu0 %v2727
    %2775 = vmatmul.mubr.bf16.gmra.mrb[0].mxu0 %v2726
    %v2776 = vpop.f32.mrb[0].mxu0
    %v2777 = vadd.f32 0.0, %v2776
    %v2778 = vpop.f32.mrb[0].mxu0
    %v2779 = vpop.f32.mrb[0].mxu0
    %v2780 = vadd.f32 0.0, %v2779
    %v2781 = vpop.f32.mrb[0].mxu0
    %2782 = vmatprep.mubr.bf16.mxu0 %v2729
    %2783 = vmatmul.mubr.bf16.gmra.mrb[0].mxu0 %v2728
    %v2784 = vpop.f32.mrb[0].mxu0
    %v2785 = vadd.f32 0.0, %v2784
    %v2786 = vpop.f32.mrb[0].mxu0
    %v2787 = vpop.f32.mrb[0].mxu0
    %v2788 = vadd.f32 0.0, %v2787
    %v2789 = vpop.f32.mrb[0].mxu0
    %2790 = vmatprep.mubr.bf16.mxu0 %v2731
    %2791 = vmatmul.mubr.bf16.gmra.mrb[0].mxu0 %v2730
    %v2792 = vpop.f32.mrb[0].mxu0
    %v2793 = vadd.f32 0.0, %v2792
    %v2794 = vpop.f32.mrb[0].mxu0
    %v2795 = vpop.f32.mrb[0].mxu0
    %v2796 = vadd.f32 0.0, %v2795
    %v2797 = vpop.f32.mrb[0].mxu0
    %2798 = vmatprep.mubr.bf16.mxu0 %v2733
    %2799 = vmatmul.mubr.bf16.gmra.mrb[0].mxu0 %v2732
    %v2800 = vpop.f32.mrb[0].mxu0
    %v2801 = vadd.f32 0.0, %v2800
    %v2802 = vpop.f32.mrb[0].mxu0
    %v2803 = vpop.f32.mrb[0].mxu0
    %v2804 = vadd.f32 0.0, %v2803
    %v2805 = vpop.f32.mrb[0].mxu0
    %2806 = vdwg.mxu0
    %s2807 = scalar_lea.vmem %s5, 768
    %v2808 = vld [vmem:[%s2807] sm:$0xff]
    %v2809 = vld [vmem:[%s2807 + $0x8] sm:$0xff]
    %v2810 = vld [vmem:[%s2807 + $0x10] sm:$0xff]
    %v2811 = vld [vmem:[%s2807 + $0x18] sm:$0xff]
    %v2812 = vld [vmem:[%s2807 + $0x20] sm:$0xff]
    %v2813 = vld [vmem:[%s2807 + $0x28] sm:$0xff]
    %v2814 = vld [vmem:[%s2807 + $0x30] sm:$0xff]
    %v2815 = vld [vmem:[%s2807 + $0x38] sm:$0xff]
    %v2824 = vunpack.c.l.b16 %v2808
    %v2825 = vunpack.c.h.b16 %v2808
    %v2826 = vunpack.c.l.b16 %v2809
    %v2827 = vunpack.c.h.b16 %v2809
    %v2828 = vunpack.c.l.b16 %v2810
    %v2829 = vunpack.c.h.b16 %v2810
    %v2830 = vunpack.c.l.b16 %v2811
    %v2831 = vunpack.c.h.b16 %v2811
    %v2832 = vunpack.c.l.b16 %v2812
    %v2833 = vunpack.c.h.b16 %v2812
    %v2834 = vunpack.c.l.b16 %v2813
    %v2835 = vunpack.c.h.b16 %v2813
    %v2836 = vunpack.c.l.b16 %v2814
    %v2837 = vunpack.c.h.b16 %v2814
    %v2838 = vunpack.c.l.b16 %v2815
    %v2839 = vunpack.c.h.b16 %v2815
    %v2840 = vpack.c.b16 %v2826, %v2824
    %v2841 = vpack.c.b16 %v2827, %v2825
    %v2842 = vpack.c.b16 %v2830, %v2828
    %v2843 = vpack.c.b16 %v2831, %v2829
    %v2844 = vpack.c.b16 %v2834, %v2832
    %v2845 = vpack.c.b16 %v2835, %v2833
    %v2846 = vpack.c.b16 %v2838, %v2836
    %v2847 = vpack.c.b16 %v2839, %v2837
    %2856 = vmatprep.subr.bf16.mxu0 0
    %2857 = vmatpush1.bf16.msra.mxu0 %v1408
    %2858 = vmatprep.subr.bf16.mxu0 0
    %2859 = vmatpush1.bf16.msra.mxu0 %v1409
    %2860 = vmatprep.subr.bf16.mxu0 0
    %2861 = vmatpush1.bf16.msra.mxu0 %v1410
    %2862 = vmatprep.subr.bf16.mxu0 0
    %2863 = vmatpush1.bf16.msra.mxu0 %v1411
    %2864 = vmatprep.subr.bf16.mxu0 0
    %2865 = vmatpush1.bf16.msra.mxu0 %v1412
    %2866 = vmatprep.subr.bf16.mxu0 0
    %2867 = vmatpush1.bf16.msra.mxu0 %v1413
    %2868 = vmatprep.subr.bf16.mxu0 0
    %2869 = vmatpush1.bf16.msra.mxu0 %v1414
    %2870 = vmatprep.subr.bf16.mxu0 0
    %2871 = vmatpush1.bf16.msra.mxu0 %v1415
    %2872 = vmatprep.subr.bf16.mxu0 0
    %2873 = vmatpush1.bf16.msra.mxu0 %v1416
    %2874 = vmatprep.subr.bf16.mxu0 0
    %2875 = vmatpush1.bf16.msra.mxu0 %v1417
    %2876 = vmatprep.subr.bf16.mxu0 0
    %2877 = vmatpush1.bf16.msra.mxu0 %v1418
    %2878 = vmatprep.subr.bf16.mxu0 0
    %2879 = vmatpush1.bf16.msra.mxu0 %v1419
    %2880 = vmatprep.subr.bf16.mxu0 0
    %2881 = vmatpush1.bf16.msra.mxu0 %v1420
    %2882 = vmatprep.subr.bf16.mxu0 0
    %2883 = vmatpush1.bf16.msra.mxu0 %v1421
    %2884 = vmatprep.subr.bf16.mxu0 0
    %2885 = vmatpush1.bf16.msra.mxu0 %v1422
    %2886 = vmatprep.subr.bf16.mxu0 0
    %2887 = vmatpush1.bf16.msra.mxu0 %v1423
    %2888 = vmatprep.mubr.bf16.mxu0 %v2841
    %2889 = vmatmul.mubr.bf16.gmra.mrb[0].mxu0 %v2840
    %v2890 = vpop.f32.mrb[0].mxu0
    %v2891 = vadd.f32 0.0, %v2890
    %v2892 = vpop.f32.mrb[0].mxu0
    %v2893 = vpop.f32.mrb[0].mxu0
    %v2894 = vadd.f32 0.0, %v2893
    %v2895 = vpop.f32.mrb[0].mxu0
    %2896 = vmatprep.mubr.bf16.mxu0 %v2843
    %2897 = vmatmul.mubr.bf16.gmra.mrb[0].mxu0 %v2842
    %v2898 = vpop.f32.mrb[0].mxu0
    %v2899 = vadd.f32 0.0, %v2898
    %v2900 = vpop.f32.mrb[0].mxu0
    %v2901 = vpop.f32.mrb[0].mxu0
    %v2902 = vadd.f32 0.0, %v2901
    %v2903 = vpop.f32.mrb[0].mxu0
    %2904 = vmatprep.mubr.bf16.mxu0 %v2845
    %2905 = vmatmul.mubr.bf16.gmra.mrb[0].mxu0 %v2844
    %v2906 = vpop.f32.mrb[0].mxu0
    %v2907 = vadd.f32 0.0, %v2906
    %v2908 = vpop.f32.mrb[0].mxu0
    %v2909 = vpop.f32.mrb[0].mxu0
    %v2910 = vadd.f32 0.0, %v2909
    %v2911 = vpop.f32.mrb[0].mxu0
    %2912 = vmatprep.mubr.bf16.mxu0 %v2847
    %2913 = vmatmul.mubr.bf16.gmra.mrb[0].mxu0 %v2846
    %v2914 = vpop.f32.mrb[0].mxu0
    %v2915 = vadd.f32 0.0, %v2914
    %v2916 = vpop.f32.mrb[0].mxu0
    %v2917 = vpop.f32.mrb[0].mxu0
    %v2918 = vadd.f32 0.0, %v2917
    %v2919 = vpop.f32.mrb[0].mxu0
    %2920 = vdwg.mxu0
    %s2921 = scalar_lea.vmem %s5, 832
    %v2922 = vld [vmem:[%s2921] sm:$0xff]
    %v2923 = vld [vmem:[%s2921 + $0x8] sm:$0xff]
    %v2924 = vld [vmem:[%s2921 + $0x10] sm:$0xff]
    %v2925 = vld [vmem:[%s2921 + $0x18] sm:$0xff]
    %v2926 = vld [vmem:[%s2921 + $0x20] sm:$0xff]
    %v2927 = vld [vmem:[%s2921 + $0x28] sm:$0xff]
    %v2928 = vld [vmem:[%s2921 + $0x30] sm:$0xff]
    %v2929 = vld [vmem:[%s2921 + $0x38] sm:$0xff]
    %v2938 = vunpack.c.l.b16 %v2922
    %v2939 = vunpack.c.h.b16 %v2922
    %v2940 = vunpack.c.l.b16 %v2923
    %v2941 = vunpack.c.h.b16 %v2923
    %v2942 = vunpack.c.l.b16 %v2924
    %v2943 = vunpack.c.h.b16 %v2924
    %v2944 = vunpack.c.l.b16 %v2925
    %v2945 = vunpack.c.h.b16 %v2925
    %v2946 = vunpack.c.l.b16 %v2926
    %v2947 = vunpack.c.h.b16 %v2926
    %v2948 = vunpack.c.l.b16 %v2927
    %v2949 = vunpack.c.h.b16 %v2927
    %v2950 = vunpack.c.l.b16 %v2928
    %v2951 = vunpack.c.h.b16 %v2928
    %v2952 = vunpack.c.l.b16 %v2929
    %v2953 = vunpack.c.h.b16 %v2929
    %v2954 = vpack.c.b16 %v2940, %v2938
    %v2955 = vpack.c.b16 %v2941, %v2939
    %v2956 = vpack.c.b16 %v2944, %v2942
    %v2957 = vpack.c.b16 %v2945, %v2943
    %v2958 = vpack.c.b16 %v2948, %v2946
    %v2959 = vpack.c.b16 %v2949, %v2947
    %v2960 = vpack.c.b16 %v2952, %v2950
    %v2961 = vpack.c.b16 %v2953, %v2951
    %2970 = vmatprep.subr.bf16.mxu0 0
    %2971 = vmatpush1.bf16.msra.mxu0 %v1408
    %2972 = vmatprep.subr.bf16.mxu0 0
    %2973 = vmatpush1.bf16.msra.mxu0 %v1409
    %2974 = vmatprep.subr.bf16.mxu0 0
    %2975 = vmatpush1.bf16.msra.mxu0 %v1410
    %2976 = vmatprep.subr.bf16.mxu0 0
    %2977 = vmatpush1.bf16.msra.mxu0 %v1411
    %2978 = vmatprep.subr.bf16.mxu0 0
    %2979 = vmatpush1.bf16.msra.mxu0 %v1412
    %2980 = vmatprep.subr.bf16.mxu0 0
    %2981 = vmatpush1.bf16.msra.mxu0 %v1413
    %2982 = vmatprep.subr.bf16.mxu0 0
    %2983 = vmatpush1.bf16.msra.mxu0 %v1414
    %2984 = vmatprep.subr.bf16.mxu0 0
    %2985 = vmatpush1.bf16.msra.mxu0 %v1415
    %2986 = vmatprep.subr.bf16.mxu0 0
    %2987 = vmatpush1.bf16.msra.mxu0 %v1416
    %2988 = vmatprep.subr.bf16.mxu0 0
    %2989 = vmatpush1.bf16.msra.mxu0 %v1417
    %2990 = vmatprep.subr.bf16.mxu0 0
    %2991 = vmatpush1.bf16.msra.mxu0 %v1418
    %2992 = vmatprep.subr.bf16.mxu0 0
    %2993 = vmatpush1.bf16.msra.mxu0 %v1419
    %2994 = vmatprep.subr.bf16.mxu0 0
    %2995 = vmatpush1.bf16.msra.mxu0 %v1420
    %2996 = vmatprep.subr.bf16.mxu0 0
    %2997 = vmatpush1.bf16.msra.mxu0 %v1421
    %2998 = vmatprep.subr.bf16.mxu0 0
    %2999 = vmatpush1.bf16.msra.mxu0 %v1422
    %3000 = vmatprep.subr.bf16.mxu0 0
    %3001 = vmatpush1.bf16.msra.mxu0 %v1423
    %3002 = vmatprep.mubr.bf16.mxu0 %v2955
    %3003 = vmatmul.mubr.bf16.gmra.mrb[0].mxu0 %v2954
    %v3004 = vpop.f32.mrb[0].mxu0
    %v3005 = vadd.f32 0.0, %v3004
    %v3006 = vpop.f32.mrb[0].mxu0
    %v3007 = vpop.f32.mrb[0].mxu0
    %v3008 = vadd.f32 0.0, %v3007
    %v3009 = vpop.f32.mrb[0].mxu0
    %3010 = vmatprep.mubr.bf16.mxu0 %v2957
    %3011 = vmatmul.mubr.bf16.gmra.mrb[0].mxu0 %v2956
    %v3012 = vpop.f32.mrb[0].mxu0
    %v3013 = vadd.f32 0.0, %v3012
    %v3014 = vpop.f32.mrb[0].mxu0
    %v3015 = vpop.f32.mrb[0].mxu0
    %v3016 = vadd.f32 0.0, %v3015
    %v3017 = vpop.f32.mrb[0].mxu0
    %3018 = vmatprep.mubr.bf16.mxu0 %v2959
    %3019 = vmatmul.mubr.bf16.gmra.mrb[0].mxu0 %v2958
    %v3020 = vpop.f32.mrb[0].mxu0
    %v3021 = vadd.f32 0.0, %v3020
    %v3022 = vpop.f32.mrb[0].mxu0
    %v3023 = vpop.f32.mrb[0].mxu0
    %v3024 = vadd.f32 0.0, %v3023
    %v3025 = vpop.f32.mrb[0].mxu0
    %3026 = vmatprep.mubr.bf16.mxu0 %v2961
    %3027 = vmatmul.mubr.bf16.gmra.mrb[0].mxu0 %v2960
    %v3028 = vpop.f32.mrb[0].mxu0
    %v3029 = vadd.f32 0.0, %v3028
    %v3030 = vpop.f32.mrb[0].mxu0
    %v3031 = vpop.f32.mrb[0].mxu0
    %v3032 = vadd.f32 0.0, %v3031
    %v3033 = vpop.f32.mrb[0].mxu0
    %3034 = vdwg.mxu0
    %s3035 = scalar_lea.vmem %s5, 896
    %v3036 = vld [vmem:[%s3035] sm:$0xff]
    %v3037 = vld [vmem:[%s3035 + $0x8] sm:$0xff]
    %v3038 = vld [vmem:[%s3035 + $0x10] sm:$0xff]
    %v3039 = vld [vmem:[%s3035 + $0x18] sm:$0xff]
    %v3040 = vld [vmem:[%s3035 + $0x20] sm:$0xff]
    %v3041 = vld [vmem:[%s3035 + $0x28] sm:$0xff]
    %v3042 = vld [vmem:[%s3035 + $0x30] sm:$0xff]
    %v3043 = vld [vmem:[%s3035 + $0x38] sm:$0xff]
    %v3052 = vunpack.c.l.b16 %v3036
    %v3053 = vunpack.c.h.b16 %v3036
    %v3054 = vunpack.c.l.b16 %v3037
    %v3055 = vunpack.c.h.b16 %v3037
    %v3056 = vunpack.c.l.b16 %v3038
    %v3057 = vunpack.c.h.b16 %v3038
    %v3058 = vunpack.c.l.b16 %v3039
    %v3059 = vunpack.c.h.b16 %v3039
    %v3060 = vunpack.c.l.b16 %v3040
    %v3061 = vunpack.c.h.b16 %v3040
    %v3062 = vunpack.c.l.b16 %v3041
    %v3063 = vunpack.c.h.b16 %v3041
    %v3064 = vunpack.c.l.b16 %v3042
    %v3065 = vunpack.c.h.b16 %v3042
    %v3066 = vunpack.c.l.b16 %v3043
    %v3067 = vunpack.c.h.b16 %v3043
    %v3068 = vpack.c.b16 %v3054, %v3052
    %v3069 = vpack.c.b16 %v3055, %v3053
    %v3070 = vpack.c.b16 %v3058, %v3056
    %v3071 = vpack.c.b16 %v3059, %v3057
    %v3072 = vpack.c.b16 %v3062, %v3060
    %v3073 = vpack.c.b16 %v3063, %v3061
    %v3074 = vpack.c.b16 %v3066, %v3064
    %v3075 = vpack.c.b16 %v3067, %v3065
    %3084 = vmatprep.subr.bf16.mxu0 0
    %3085 = vmatpush1.bf16.msra.mxu0 %v1408
    %3086 = vmatprep.subr.bf16.mxu0 0
    %3087 = vmatpush1.bf16.msra.mxu0 %v1409
    %3088 = vmatprep.subr.bf16.mxu0 0
    %3089 = vmatpush1.bf16.msra.mxu0 %v1410
    %3090 = vmatprep.subr.bf16.mxu0 0
    %3091 = vmatpush1.bf16.msra.mxu0 %v1411
    %3092 = vmatprep.subr.bf16.mxu0 0
    %3093 = vmatpush1.bf16.msra.mxu0 %v1412
    %3094 = vmatprep.subr.bf16.mxu0 0
    %3095 = vmatpush1.bf16.msra.mxu0 %v1413
    %3096 = vmatprep.subr.bf16.mxu0 0
    %3097 = vmatpush1.bf16.msra.mxu0 %v1414
    %3098 = vmatprep.subr.bf16.mxu0 0
    %3099 = vmatpush1.bf16.msra.mxu0 %v1415
    %3100 = vmatprep.subr.bf16.mxu0 0
    %3101 = vmatpush1.bf16.msra.mxu0 %v1416
    %3102 = vmatprep.subr.bf16.mxu0 0
    %3103 = vmatpush1.bf16.msra.mxu0 %v1417
    %3104 = vmatprep.subr.bf16.mxu0 0
    %3105 = vmatpush1.bf16.msra.mxu0 %v1418
    %3106 = vmatprep.subr.bf16.mxu0 0
    %3107 = vmatpush1.bf16.msra.mxu0 %v1419
    %3108 = vmatprep.subr.bf16.mxu0 0
    %3109 = vmatpush1.bf16.msra.mxu0 %v1420
    %3110 = vmatprep.subr.bf16.mxu0 0
    %3111 = vmatpush1.bf16.msra.mxu0 %v1421
    %3112 = vmatprep.subr.bf16.mxu0 0
    %3113 = vmatpush1.bf16.msra.mxu0 %v1422
    %3114 = vmatprep.subr.bf16.mxu0 0
    %3115 = vmatpush1.bf16.msra.mxu0 %v1423
    %3116 = vmatprep.mubr.bf16.mxu0 %v3069
    %3117 = vmatmul.mubr.bf16.gmra.mrb[0].mxu0 %v3068
    %v3118 = vpop.f32.mrb[0].mxu0
    %v3119 = vadd.f32 0.0, %v3118
    %v3120 = vpop.f32.mrb[0].mxu0
    %v3121 = vpop.f32.mrb[0].mxu0
    %v3122 = vadd.f32 0.0, %v3121
    %v3123 = vpop.f32.mrb[0].mxu0
    %3124 = vmatprep.mubr.bf16.mxu0 %v3071
    %3125 = vmatmul.mubr.bf16.gmra.mrb[0].mxu0 %v3070
    %v3126 = vpop.f32.mrb[0].mxu0
    %v3127 = vadd.f32 0.0, %v3126
    %v3128 = vpop.f32.mrb[0].mxu0
    %v3129 = vpop.f32.mrb[0].mxu0
    %v3130 = vadd.f32 0.0, %v3129
    %v3131 = vpop.f32.mrb[0].mxu0
    %3132 = vmatprep.mubr.bf16.mxu0 %v3073
    %3133 = vmatmul.mubr.bf16.gmra.mrb[0].mxu0 %v3072
    %v3134 = vpop.f32.mrb[0].mxu0
    %v3135 = vadd.f32 0.0, %v3134
    %v3136 = vpop.f32.mrb[0].mxu0
    %v3137 = vpop.f32.mrb[0].mxu0
    %v3138 = vadd.f32 0.0, %v3137
    %v3139 = vpop.f32.mrb[0].mxu0
    %3140 = vmatprep.mubr.bf16.mxu0 %v3075
    %3141 = vmatmul.mubr.bf16.gmra.mrb[0].mxu0 %v3074
    %v3142 = vpop.f32.mrb[0].mxu0
    %v3143 = vadd.f32 0.0, %v3142
    %v3144 = vpop.f32.mrb[0].mxu0
    %v3145 = vpop.f32.mrb[0].mxu0
    %v3146 = vadd.f32 0.0, %v3145
    %v3147 = vpop.f32.mrb[0].mxu0
    %3148 = vdwg.mxu0
    %s3149 = scalar_lea.vmem %s5, 960
    %v3150 = vld [vmem:[%s3149] sm:$0xff]
    %v3151 = vld [vmem:[%s3149 + $0x8] sm:$0xff]
    %v3152 = vld [vmem:[%s3149 + $0x10] sm:$0xff]
    %v3153 = vld [vmem:[%s3149 + $0x18] sm:$0xff]
    %v3154 = vld [vmem:[%s3149 + $0x20] sm:$0xff]
    %v3155 = vld [vmem:[%s3149 + $0x28] sm:$0xff]
    %v3156 = vld [vmem:[%s3149 + $0x30] sm:$0xff]
    %v3157 = vld [vmem:[%s3149 + $0x38] sm:$0xff]
    %v3166 = vunpack.c.l.b16 %v3150
    %v3167 = vunpack.c.h.b16 %v3150
    %v3168 = vunpack.c.l.b16 %v3151
    %v3169 = vunpack.c.h.b16 %v3151
    %v3170 = vunpack.c.l.b16 %v3152
    %v3171 = vunpack.c.h.b16 %v3152
    %v3172 = vunpack.c.l.b16 %v3153
    %v3173 = vunpack.c.h.b16 %v3153
    %v3174 = vunpack.c.l.b16 %v3154
    %v3175 = vunpack.c.h.b16 %v3154
    %v3176 = vunpack.c.l.b16 %v3155
    %v3177 = vunpack.c.h.b16 %v3155
    %v3178 = vunpack.c.l.b16 %v3156
    %v3179 = vunpack.c.h.b16 %v3156
    %v3180 = vunpack.c.l.b16 %v3157
    %v3181 = vunpack.c.h.b16 %v3157
    %v3182 = vpack.c.b16 %v3168, %v3166
    %v3183 = vpack.c.b16 %v3169, %v3167
    %v3184 = vpack.c.b16 %v3172, %v3170
    %v3185 = vpack.c.b16 %v3173, %v3171
    %v3186 = vpack.c.b16 %v3176, %v3174
    %v3187 = vpack.c.b16 %v3177, %v3175
    %v3188 = vpack.c.b16 %v3180, %v3178
    %v3189 = vpack.c.b16 %v3181, %v3179
    %3198 = vmatprep.subr.bf16.mxu0 0
    %3199 = vmatpush1.bf16.msra.mxu0 %v1408
    %3200 = vmatprep.subr.bf16.mxu0 0
    %3201 = vmatpush1.bf16.msra.mxu0 %v1409
    %3202 = vmatprep.subr.bf16.mxu0 0
    %3203 = vmatpush1.bf16.msra.mxu0 %v1410
    %3204 = vmatprep.subr.bf16.mxu0 0
    %3205 = vmatpush1.bf16.msra.mxu0 %v1411
    %3206 = vmatprep.subr.bf16.mxu0 0
    %3207 = vmatpush1.bf16.msra.mxu0 %v1412
    %3208 = vmatprep.subr.bf16.mxu0 0
    %3209 = vmatpush1.bf16.msra.mxu0 %v1413
    %3210 = vmatprep.subr.bf16.mxu0 0
    %3211 = vmatpush1.bf16.msra.mxu0 %v1414
    %3212 = vmatprep.subr.bf16.mxu0 0
    %3213 = vmatpush1.bf16.msra.mxu0 %v1415
    %3214 = vmatprep.subr.bf16.mxu0 0
    %3215 = vmatpush1.bf16.msra.mxu0 %v1416
    %3216 = vmatprep.subr.bf16.mxu0 0
    %3217 = vmatpush1.bf16.msra.mxu0 %v1417
    %3218 = vmatprep.subr.bf16.mxu0 0
    %3219 = vmatpush1.bf16.msra.mxu0 %v1418
    %3220 = vmatprep.subr.bf16.mxu0 0
    %3221 = vmatpush1.bf16.msra.mxu0 %v1419
    %3222 = vmatprep.subr.bf16.mxu0 0
    %3223 = vmatpush1.bf16.msra.mxu0 %v1420
    %3224 = vmatprep.subr.bf16.mxu0 0
    %3225 = vmatpush1.bf16.msra.mxu0 %v1421
    %3226 = vmatprep.subr.bf16.mxu0 0
    %3227 = vmatpush1.bf16.msra.mxu0 %v1422
    %3228 = vmatprep.subr.bf16.mxu0 0
    %3229 = vmatpush1.bf16.msra.mxu0 %v1423
    %3230 = vmatprep.mubr.bf16.mxu0 %v3183
    %3231 = vmatmul.mubr.bf16.gmra.mrb[0].mxu0 %v3182
    %v3232 = vpop.f32.mrb[0].mxu0
    %v3233 = vadd.f32 0.0, %v3232
    %v3234 = vpop.f32.mrb[0].mxu0
    %v3235 = vpop.f32.mrb[0].mxu0
    %v3236 = vadd.f32 0.0, %v3235
    %v3237 = vpop.f32.mrb[0].mxu0
    %3238 = vmatprep.mubr.bf16.mxu0 %v3185
    %3239 = vmatmul.mubr.bf16.gmra.mrb[0].mxu0 %v3184
    %v3240 = vpop.f32.mrb[0].mxu0
    %v3241 = vadd.f32 0.0, %v3240
    %v3242 = vpop.f32.mrb[0].mxu0
    %v3243 = vpop.f32.mrb[0].mxu0
    %v3244 = vadd.f32 0.0, %v3243
    %v3245 = vpop.f32.mrb[0].mxu0
    %3246 = vmatprep.mubr.bf16.mxu0 %v3187
    %3247 = vmatmul.mubr.bf16.gmra.mrb[0].mxu0 %v3186
    %v3248 = vpop.f32.mrb[0].mxu0
    %v3249 = vadd.f32 0.0, %v3248
    %v3250 = vpop.f32.mrb[0].mxu0
    %v3251 = vpop.f32.mrb[0].mxu0
    %v3252 = vadd.f32 0.0, %v3251
    %v3253 = vpop.f32.mrb[0].mxu0
    %3254 = vmatprep.mubr.bf16.mxu0 %v3189
    %3255 = vmatmul.mubr.bf16.gmra.mrb[0].mxu0 %v3188
    %v3256 = vpop.f32.mrb[0].mxu0
    %v3257 = vadd.f32 0.0, %v3256
    %v3258 = vpop.f32.mrb[0].mxu0
    %v3259 = vpop.f32.mrb[0].mxu0
    %v3260 = vadd.f32 0.0, %v3259
    %v3261 = vpop.f32.mrb[0].mxu0
    %3262 = vdwg.mxu0
    %3271 = vrot.lane.b32.xlu0 %v1637, 8
    %v3272 = vpop.permute.xlu0 %3271
    %3273 = vrot.lane.b32.xlu0 %v1640, 8
    %v3274 = vpop.permute.xlu0 %3273
    %3275 = vrot.lane.b32.xlu0 %v1645, 8
    %v3276 = vpop.permute.xlu0 %3275
    %3277 = vrot.lane.b32.xlu0 %v1648, 8
    %v3278 = vpop.permute.xlu0 %3277
    %3279 = vrot.lane.b32.xlu0 %v1653, 8
    %v3280 = vpop.permute.xlu0 %3279
    %3281 = vrot.lane.b32.xlu0 %v1656, 8
    %v3282 = vpop.permute.xlu0 %3281
    %3283 = vrot.lane.b32.xlu0 %v1661, 8
    %v3284 = vpop.permute.xlu0 %3283
    %3285 = vrot.lane.b32.xlu0 %v1664, 8
    %v3286 = vpop.permute.xlu0 %3285
    %3303 = vrot.lane.b32.xlu0 %v1751, 16
    %v3304 = vpop.permute.xlu0 %3303
    %3305 = vrot.lane.b32.xlu0 %v1754, 16
    %v3306 = vpop.permute.xlu0 %3305
    %3307 = vrot.lane.b32.xlu0 %v1759, 16
    %v3308 = vpop.permute.xlu0 %3307
    %3309 = vrot.lane.b32.xlu0 %v1762, 16
    %v3310 = vpop.permute.xlu0 %3309
    %3311 = vrot.lane.b32.xlu0 %v1767, 16
    %v3312 = vpop.permute.xlu0 %3311
    %3313 = vrot.lane.b32.xlu0 %v1770, 16
    %v3314 = vpop.permute.xlu0 %3313
    %3315 = vrot.lane.b32.xlu0 %v1775, 16
    %v3316 = vpop.permute.xlu0 %3315
    %3317 = vrot.lane.b32.xlu0 %v1778, 16
    %v3318 = vpop.permute.xlu0 %3317
    %3335 = vrot.lane.b32.xlu0 %v1865, 24
    %v3336 = vpop.permute.xlu0 %3335
    %3337 = vrot.lane.b32.xlu0 %v1868, 24
    %v3338 = vpop.permute.xlu0 %3337
    %3339 = vrot.lane.b32.xlu0 %v1873, 24
    %v3340 = vpop.permute.xlu0 %3339
    %3341 = vrot.lane.b32.xlu0 %v1876, 24
    %v3342 = vpop.permute.xlu0 %3341
    %3343 = vrot.lane.b32.xlu0 %v1881, 24
    %v3344 = vpop.permute.xlu0 %3343
    %3345 = vrot.lane.b32.xlu0 %v1884, 24
    %v3346 = vpop.permute.xlu0 %3345
    %3347 = vrot.lane.b32.xlu0 %v1889, 24
    %v3348 = vpop.permute.xlu0 %3347
    %3349 = vrot.lane.b32.xlu0 %v1892, 24
    %v3350 = vpop.permute.xlu0 %3349
    %3367 = vrot.lane.b32.xlu0 %v1979, 32
    %v3368 = vpop.permute.xlu0 %3367
    %3369 = vrot.lane.b32.xlu0 %v1982, 32
    %v3370 = vpop.permute.xlu0 %3369
    %3371 = vrot.lane.b32.xlu0 %v1987, 32
    %v3372 = vpop.permute.xlu0 %3371
    %3373 = vrot.lane.b32.xlu0 %v1990, 32
    %v3374 = vpop.permute.xlu0 %3373
    %3375 = vrot.lane.b32.xlu0 %v1995, 32
    %v3376 = vpop.permute.xlu0 %3375
    %3377 = vrot.lane.b32.xlu0 %v1998, 32
    %v3378 = vpop.permute.xlu0 %3377
    %3379 = vrot.lane.b32.xlu0 %v2003, 32
    %v3380 = vpop.permute.xlu0 %3379
    %3381 = vrot.lane.b32.xlu0 %v2006, 32
    %v3382 = vpop.permute.xlu0 %3381
    %3399 = vrot.lane.b32.xlu0 %v2093, 40
    %v3400 = vpop.permute.xlu0 %3399
    %3401 = vrot.lane.b32.xlu0 %v2096, 40
    %v3402 = vpop.permute.xlu0 %3401
    %3403 = vrot.lane.b32.xlu0 %v2101, 40
    %v3404 = vpop.permute.xlu0 %3403
    %3405 = vrot.lane.b32.xlu0 %v2104, 40
    %v3406 = vpop.permute.xlu0 %3405
    %3407 = vrot.lane.b32.xlu0 %v2109, 40
    %v3408 = vpop.permute.xlu0 %3407
    %3409 = vrot.lane.b32.xlu0 %v2112, 40
    %v3410 = vpop.permute.xlu0 %3409
    %3411 = vrot.lane.b32.xlu0 %v2117, 40
    %v3412 = vpop.permute.xlu0 %3411
    %3413 = vrot.lane.b32.xlu0 %v2120, 40
    %v3414 = vpop.permute.xlu0 %3413
    %3431 = vrot.lane.b32.xlu0 %v2207, 48
    %v3432 = vpop.permute.xlu0 %3431
    %3433 = vrot.lane.b32.xlu0 %v2210, 48
    %v3434 = vpop.permute.xlu0 %3433
    %3435 = vrot.lane.b32.xlu0 %v2215, 48
    %v3436 = vpop.permute.xlu0 %3435
    %3437 = vrot.lane.b32.xlu0 %v2218, 48
    %v3438 = vpop.permute.xlu0 %3437
    %3439 = vrot.lane.b32.xlu0 %v2223, 48
    %v3440 = vpop.permute.xlu0 %3439
    %3441 = vrot.lane.b32.xlu0 %v2226, 48
    %v3442 = vpop.permute.xlu0 %3441
    %3443 = vrot.lane.b32.xlu0 %v2231, 48
    %v3444 = vpop.permute.xlu0 %3443
    %3445 = vrot.lane.b32.xlu0 %v2234, 48
    %v3446 = vpop.permute.xlu0 %3445
    %3463 = vrot.lane.b32.xlu0 %v2321, 56
    %v3464 = vpop.permute.xlu0 %3463
    %3465 = vrot.lane.b32.xlu0 %v2324, 56
    %v3466 = vpop.permute.xlu0 %3465
    %3467 = vrot.lane.b32.xlu0 %v2329, 56
    %v3468 = vpop.permute.xlu0 %3467
    %3469 = vrot.lane.b32.xlu0 %v2332, 56
    %v3470 = vpop.permute.xlu0 %3469
    %3471 = vrot.lane.b32.xlu0 %v2337, 56
    %v3472 = vpop.permute.xlu0 %3471
    %3473 = vrot.lane.b32.xlu0 %v2340, 56
    %v3474 = vpop.permute.xlu0 %3473
    %3475 = vrot.lane.b32.xlu0 %v2345, 56
    %v3476 = vpop.permute.xlu0 %3475
    %3477 = vrot.lane.b32.xlu0 %v2348, 56
    %v3478 = vpop.permute.xlu0 %3477
    %3495 = vrot.lane.b32.xlu0 %v2435, 64
    %v3496 = vpop.permute.xlu0 %3495
    %3497 = vrot.lane.b32.xlu0 %v2438, 64
    %v3498 = vpop.permute.xlu0 %3497
    %3499 = vrot.lane.b32.xlu0 %v2443, 64
    %v3500 = vpop.permute.xlu0 %3499
    %3501 = vrot.lane.b32.xlu0 %v2446, 64
    %v3502 = vpop.permute.xlu0 %3501
    %3503 = vrot.lane.b32.xlu0 %v2451, 64
    %v3504 = vpop.permute.xlu0 %3503
    %3505 = vrot.lane.b32.xlu0 %v2454, 64
    %v3506 = vpop.permute.xlu0 %3505
    %3507 = vrot.lane.b32.xlu0 %v2459, 64
    %v3508 = vpop.permute.xlu0 %3507
    %3509 = vrot.lane.b32.xlu0 %v2462, 64
    %v3510 = vpop.permute.xlu0 %3509
    %3527 = vrot.lane.b32.xlu0 %v2549, 72
    %v3528 = vpop.permute.xlu0 %3527
    %3529 = vrot.lane.b32.xlu0 %v2552, 72
    %v3530 = vpop.permute.xlu0 %3529
    %3531 = vrot.lane.b32.xlu0 %v2557, 72
    %v3532 = vpop.permute.xlu0 %3531
    %3533 = vrot.lane.b32.xlu0 %v2560, 72
    %v3534 = vpop.permute.xlu0 %3533
    %3535 = vrot.lane.b32.xlu0 %v2565, 72
    %v3536 = vpop.permute.xlu0 %3535
    %3537 = vrot.lane.b32.xlu0 %v2568, 72
    %v3538 = vpop.permute.xlu0 %3537
    %3539 = vrot.lane.b32.xlu0 %v2573, 72
    %v3540 = vpop.permute.xlu0 %3539
    %3541 = vrot.lane.b32.xlu0 %v2576, 72
    %v3542 = vpop.permute.xlu0 %3541
    %3559 = vrot.lane.b32.xlu0 %v2663, 80
    %v3560 = vpop.permute.xlu0 %3559
    %3561 = vrot.lane.b32.xlu0 %v2666, 80
    %v3562 = vpop.permute.xlu0 %3561
    %3563 = vrot.lane.b32.xlu0 %v2671, 80
    %v3564 = vpop.permute.xlu0 %3563
    %3565 = vrot.lane.b32.xlu0 %v2674, 80
    %v3566 = vpop.permute.xlu0 %3565
    %3567 = vrot.lane.b32.xlu0 %v2679, 80
    %v3568 = vpop.permute.xlu0 %3567
    %3569 = vrot.lane.b32.xlu0 %v2682, 80
    %v3570 = vpop.permute.xlu0 %3569
    %3571 = vrot.lane.b32.xlu0 %v2687, 80
    %v3572 = vpop.permute.xlu0 %3571
    %3573 = vrot.lane.b32.xlu0 %v2690, 80
    %v3574 = vpop.permute.xlu0 %3573
    %3591 = vrot.lane.b32.xlu0 %v2777, 88
    %v3592 = vpop.permute.xlu0 %3591
    %3593 = vrot.lane.b32.xlu0 %v2780, 88
    %v3594 = vpop.permute.xlu0 %3593
    %3595 = vrot.lane.b32.xlu0 %v2785, 88
    %v3596 = vpop.permute.xlu0 %3595
    %3597 = vrot.lane.b32.xlu0 %v2788, 88
    %v3598 = vpop.permute.xlu0 %3597
    %3599 = vrot.lane.b32.xlu0 %v2793, 88
    %v3600 = vpop.permute.xlu0 %3599
    %3601 = vrot.lane.b32.xlu0 %v2796, 88
    %v3602 = vpop.permute.xlu0 %3601
    %3603 = vrot.lane.b32.xlu0 %v2801, 88
    %v3604 = vpop.permute.xlu0 %3603
    %3605 = vrot.lane.b32.xlu0 %v2804, 88
    %v3606 = vpop.permute.xlu0 %3605
    %3623 = vrot.lane.b32.xlu0 %v2891, 96
    %v3624 = vpop.permute.xlu0 %3623
    %3625 = vrot.lane.b32.xlu0 %v2894, 96
    %v3626 = vpop.permute.xlu0 %3625
    %3627 = vrot.lane.b32.xlu0 %v2899, 96
    %v3628 = vpop.permute.xlu0 %3627
    %3629 = vrot.lane.b32.xlu0 %v2902, 96
    %v3630 = vpop.permute.xlu0 %3629
    %3631 = vrot.lane.b32.xlu0 %v2907, 96
    %v3632 = vpop.permute.xlu0 %3631
    %3633 = vrot.lane.b32.xlu0 %v2910, 96
    %v3634 = vpop.permute.xlu0 %3633
    %3635 = vrot.lane.b32.xlu0 %v2915, 96
    %v3636 = vpop.permute.xlu0 %3635
    %3637 = vrot.lane.b32.xlu0 %v2918, 96
    %v3638 = vpop.permute.xlu0 %3637
    %3655 = vrot.lane.b32.xlu0 %v3005, 104
    %v3656 = vpop.permute.xlu0 %3655
    %3657 = vrot.lane.b32.xlu0 %v3008, 104
    %v3658 = vpop.permute.xlu0 %3657
    %3659 = vrot.lane.b32.xlu0 %v3013, 104
    %v3660 = vpop.permute.xlu0 %3659
    %3661 = vrot.lane.b32.xlu0 %v3016, 104
    %v3662 = vpop.permute.xlu0 %3661
    %3663 = vrot.lane.b32.xlu0 %v3021, 104
    %v3664 = vpop.permute.xlu0 %3663
    %3665 = vrot.lane.b32.xlu0 %v3024, 104
    %v3666 = vpop.permute.xlu0 %3665
    %3667 = vrot.lane.b32.xlu0 %v3029, 104
    %v3668 = vpop.permute.xlu0 %3667
    %3669 = vrot.lane.b32.xlu0 %v3032, 104
    %v3670 = vpop.permute.xlu0 %3669
    %3687 = vrot.lane.b32.xlu0 %v3119, 112
    %v3688 = vpop.permute.xlu0 %3687
    %3689 = vrot.lane.b32.xlu0 %v3122, 112
    %v3690 = vpop.permute.xlu0 %3689
    %3691 = vrot.lane.b32.xlu0 %v3127, 112
    %v3692 = vpop.permute.xlu0 %3691
    %3693 = vrot.lane.b32.xlu0 %v3130, 112
    %v3694 = vpop.permute.xlu0 %3693
    %3695 = vrot.lane.b32.xlu0 %v3135, 112
    %v3696 = vpop.permute.xlu0 %3695
    %3697 = vrot.lane.b32.xlu0 %v3138, 112
    %v3698 = vpop.permute.xlu0 %3697
    %3699 = vrot.lane.b32.xlu0 %v3143, 112
    %v3700 = vpop.permute.xlu0 %3699
    %3701 = vrot.lane.b32.xlu0 %v3146, 112
    %v3702 = vpop.permute.xlu0 %3701
    %3719 = vrot.lane.b32.xlu0 %v3233, 120
    %v3720 = vpop.permute.xlu0 %3719
    %3721 = vrot.lane.b32.xlu0 %v3236, 120
    %v3722 = vpop.permute.xlu0 %3721
    %3723 = vrot.lane.b32.xlu0 %v3241, 120
    %v3724 = vpop.permute.xlu0 %3723
    %3725 = vrot.lane.b32.xlu0 %v3244, 120
    %v3726 = vpop.permute.xlu0 %3725
    %3727 = vrot.lane.b32.xlu0 %v3249, 120
    %v3728 = vpop.permute.xlu0 %3727
    %3729 = vrot.lane.b32.xlu0 %v3252, 120
    %v3730 = vpop.permute.xlu0 %3729
    %3731 = vrot.lane.b32.xlu0 %v3257, 120
    %v3732 = vpop.permute.xlu0 %3731
    %3733 = vrot.lane.b32.xlu0 %v3260, 120
    %v3734 = vpop.permute.xlu0 %3733
    %v3743 = vsel %vm678, %v1523, %v3272
    %v3744 = vsel %vm678, %v1526, %v3274
    %v3745 = vsel %vm678, %v1531, %v3276
    %v3746 = vsel %vm678, %v1534, %v3278
    %v3747 = vsel %vm678, %v1539, %v3280
    %v3748 = vsel %vm678, %v1542, %v3282
    %v3749 = vsel %vm678, %v1547, %v3284
    %v3750 = vsel %vm678, %v1550, %v3286
    %vm3751 = vcmask 130048
    %v3752 = vsel %vm3751, %v3743, %v3304
    %v3753 = vsel %vm3751, %v3744, %v3306
    %v3754 = vsel %vm3751, %v3745, %v3308
    %v3755 = vsel %vm3751, %v3746, %v3310
    %v3756 = vsel %vm3751, %v3747, %v3312
    %v3757 = vsel %vm3751, %v3748, %v3314
    %v3758 = vsel %vm3751, %v3749, %v3316
    %v3759 = vsel %vm3751, %v3750, %v3318
    %vm3760 = vcmask 195584
    %v3761 = vsel %vm3760, %v3752, %v3336
    %v3762 = vsel %vm3760, %v3753, %v3338
    %v3763 = vsel %vm3760, %v3754, %v3340
    %v3764 = vsel %vm3760, %v3755, %v3342
    %v3765 = vsel %vm3760, %v3756, %v3344
    %v3766 = vsel %vm3760, %v3757, %v3346
    %v3767 = vsel %vm3760, %v3758, %v3348
    %v3768 = vsel %vm3760, %v3759, %v3350
    %vm3769 = vcmask 261120
    %v3770 = vsel %vm3769, %v3761, %v3368
    %v3771 = vsel %vm3769, %v3762, %v3370
    %v3772 = vsel %vm3769, %v3763, %v3372
    %v3773 = vsel %vm3769, %v3764, %v3374
    %v3774 = vsel %vm3769, %v3765, %v3376
    %v3775 = vsel %vm3769, %v3766, %v3378
    %v3776 = vsel %vm3769, %v3767, %v3380
    %v3777 = vsel %vm3769, %v3768, %v3382
    %vm3778 = vcmask 326656
    %v3779 = vsel %vm3778, %v3770, %v3400
    %v3780 = vsel %vm3778, %v3771, %v3402
    %v3781 = vsel %vm3778, %v3772, %v3404
    %v3782 = vsel %vm3778, %v3773, %v3406
    %v3783 = vsel %vm3778, %v3774, %v3408
    %v3784 = vsel %vm3778, %v3775, %v3410
    %v3785 = vsel %vm3778, %v3776, %v3412
    %v3786 = vsel %vm3778, %v3777, %v3414
    %vm3787 = vcmask 392192
    %v3788 = vsel %vm3787, %v3779, %v3432
    %v3789 = vsel %vm3787, %v3780, %v3434
    %v3790 = vsel %vm3787, %v3781, %v3436
    %v3791 = vsel %vm3787, %v3782, %v3438
    %v3792 = vsel %vm3787, %v3783, %v3440
    %v3793 = vsel %vm3787, %v3784, %v3442
    %v3794 = vsel %vm3787, %v3785, %v3444
    %v3795 = vsel %vm3787, %v3786, %v3446
    %vm3796 = vcmask 457728
    %v3797 = vsel %vm3796, %v3788, %v3464
    %v3798 = vsel %vm3796, %v3789, %v3466
    %v3799 = vsel %vm3796, %v3790, %v3468
    %v3800 = vsel %vm3796, %v3791, %v3470
    %v3801 = vsel %vm3796, %v3792, %v3472
    %v3802 = vsel %vm3796, %v3793, %v3474
    %v3803 = vsel %vm3796, %v3794, %v3476
    %v3804 = vsel %vm3796, %v3795, %v3478
    %v3805 = vsel %vm290, %v3797, %v3496
    %v3806 = vsel %vm290, %v3798, %v3498
    %v3807 = vsel %vm290, %v3799, %v3500
    %v3808 = vsel %vm290, %v3800, %v3502
    %v3809 = vsel %vm290, %v3801, %v3504
    %v3810 = vsel %vm290, %v3802, %v3506
    %v3811 = vsel %vm290, %v3803, %v3508
    %v3812 = vsel %vm290, %v3804, %v3510
    %vm3813 = vcmask 588800
    %v3814 = vsel %vm3813, %v3805, %v3528
    %v3815 = vsel %vm3813, %v3806, %v3530
    %v3816 = vsel %vm3813, %v3807, %v3532
    %v3817 = vsel %vm3813, %v3808, %v3534
    %v3818 = vsel %vm3813, %v3809, %v3536
    %v3819 = vsel %vm3813, %v3810, %v3538
    %v3820 = vsel %vm3813, %v3811, %v3540
    %v3821 = vsel %vm3813, %v3812, %v3542
    %vm3822 = vcmask 654336
    %v3823 = vsel %vm3822, %v3814, %v3560
    %v3824 = vsel %vm3822, %v3815, %v3562
    %v3825 = vsel %vm3822, %v3816, %v3564
    %v3826 = vsel %vm3822, %v3817, %v3566
    %v3827 = vsel %vm3822, %v3818, %v3568
    %v3828 = vsel %vm3822, %v3819, %v3570
    %v3829 = vsel %vm3822, %v3820, %v3572
    %v3830 = vsel %vm3822, %v3821, %v3574
    %vm3831 = vcmask 719872
    %v3832 = vsel %vm3831, %v3823, %v3592
    %v3833 = vsel %vm3831, %v3824, %v3594
    %v3834 = vsel %vm3831, %v3825, %v3596
    %v3835 = vsel %vm3831, %v3826, %v3598
    %v3836 = vsel %vm3831, %v3827, %v3600
    %v3837 = vsel %vm3831, %v3828, %v3602
    %v3838 = vsel %vm3831, %v3829, %v3604
    %v3839 = vsel %vm3831, %v3830, %v3606
    %vm3840 = vcmask 785408
    %v3841 = vsel %vm3840, %v3832, %v3624
    %v3842 = vsel %vm3840, %v3833, %v3626
    %v3843 = vsel %vm3840, %v3834, %v3628
    %v3844 = vsel %vm3840, %v3835, %v3630
    %v3845 = vsel %vm3840, %v3836, %v3632
    %v3846 = vsel %vm3840, %v3837, %v3634
    %v3847 = vsel %vm3840, %v3838, %v3636
    %v3848 = vsel %vm3840, %v3839, %v3638
    %vm3849 = vcmask 850944
    %v3850 = vsel %vm3849, %v3841, %v3656
    %v3851 = vsel %vm3849, %v3842, %v3658
    %v3852 = vsel %vm3849, %v3843, %v3660
    %v3853 = vsel %vm3849, %v3844, %v3662
    %v3854 = vsel %vm3849, %v3845, %v3664
    %v3855 = vsel %vm3849, %v3846, %v3666
    %v3856 = vsel %vm3849, %v3847, %v3668
    %v3857 = vsel %vm3849, %v3848, %v3670
    %vm3858 = vcmask 916480
    %v3859 = vsel %vm3858, %v3850, %v3688
    %v3860 = vsel %vm3858, %v3851, %v3690
    %v3861 = vsel %vm3858, %v3852, %v3692
    %v3862 = vsel %vm3858, %v3853, %v3694
    %v3863 = vsel %vm3858, %v3854, %v3696
    %v3864 = vsel %vm3858, %v3855, %v3698
    %v3865 = vsel %vm3858, %v3856, %v3700
    %v3866 = vsel %vm3858, %v3857, %v3702
    %vm3867 = vcmask 982016
    %v3868 = vsel %vm3867, %v3859, %v3720
    %v3869 = vsel %vm3867, %v3860, %v3722
    %v3870 = vsel %vm3867, %v3861, %v3724
    %v3871 = vsel %vm3867, %v3862, %v3726
    %v3872 = vsel %vm3867, %v3863, %v3728
    %v3873 = vsel %vm3867, %v3864, %v3730
    %v3874 = vsel %vm3867, %v3865, %v3732
    %v3875 = vsel %vm3867, %v3866, %v3734
    %v3876 = vpack.c.bf16 %v3869, %v3868
    %v3877 = vpack.c.bf16 %v3871, %v3870
    %v3878 = vpack.c.bf16 %v3873, %v3872
    %v3879 = vpack.c.bf16 %v3875, %v3874
    %v3880 = vld [vmem:[%s2] sm:$0xf]
    %v3881 = vld [vmem:[%s2 + $0x4] sm:$0xf]
    %v3882 = vld [vmem:[%s2 + $0x8] sm:$0xf]
    %v3883 = vld [vmem:[%s2 + $0xc] sm:$0xf]
    %v3884 = vld [vmem:[%s2 + $0x10] sm:$0xf]
    %v3885 = vld [vmem:[%s2 + $0x14] sm:$0xf]
    %v3886 = vld [vmem:[%s2 + $0x18] sm:$0xf]
    %v3887 = vld [vmem:[%s2 + $0x1c] sm:$0xf]
    %v3888 = vld [vmem:[%s2 + $0x20] sm:$0xf]
    %v3889 = vld [vmem:[%s2 + $0x24] sm:$0xf]
    %v3890 = vld [vmem:[%s2 + $0x28] sm:$0xf]
    %v3891 = vld [vmem:[%s2 + $0x2c] sm:$0xf]
    %v3892 = vld [vmem:[%s2 + $0x30] sm:$0xf]
    %v3893 = vld [vmem:[%s2 + $0x34] sm:$0xf]
    %v3894 = vld [vmem:[%s2 + $0x38] sm:$0xf]
    %v3895 = vld [vmem:[%s2 + $0x3c] sm:$0xf]
    %v3912 = vunpack.c.l.b16 %v3880
    %v3913 = vunpack.c.l.b16 %v3881
    %v3914 = vunpack.c.l.b16 %v3882
    %v3915 = vunpack.c.l.b16 %v3883
    %v3916 = vunpack.c.l.b16 %v3884
    %v3917 = vunpack.c.l.b16 %v3885
    %v3918 = vunpack.c.l.b16 %v3886
    %v3919 = vunpack.c.l.b16 %v3887
    %v3920 = vunpack.c.l.b16 %v3888
    %v3921 = vunpack.c.l.b16 %v3889
    %v3922 = vunpack.c.l.b16 %v3890
    %v3923 = vunpack.c.l.b16 %v3891
    %v3924 = vunpack.c.l.b16 %v3892
    %v3925 = vunpack.c.l.b16 %v3893
    %v3926 = vunpack.c.l.b16 %v3894
    %v3927 = vunpack.c.l.b16 %v3895
    %v3928 = vpack.c.b16 %v3913, %v3912
    %v3929 = vpack.c.b16 %v3915, %v3914
    %v3930 = vpack.c.b16 %v3917, %v3916
    %v3931 = vpack.c.b16 %v3919, %v3918
    %v3932 = vpack.c.b16 %v3921, %v3920
    %v3933 = vpack.c.b16 %v3923, %v3922
    %v3934 = vpack.c.b16 %v3925, %v3924
    %v3935 = vpack.c.b16 %v3927, %v3926
    %3944 = vmatprep.subr.bf16.mxu0 0
    %3945 = vmatpush1.bf16.msra.mxu0 %v3928
    %3946 = vmatprep.subr.bf16.mxu0 0
    %3947 = vmatpush1.bf16.msra.mxu0 %v3929
    %3948 = vmatprep.subr.bf16.mxu0 0
    %3949 = vmatpush1.bf16.msra.mxu0 %v3930
    %3950 = vmatprep.subr.bf16.mxu0 0
    %3951 = vmatpush1.bf16.msra.mxu0 %v3931
    %3952 = vmatprep.subr.bf16.mxu0 0
    %3953 = vmatpush1.bf16.msra.mxu0 %v3932
    %3954 = vmatprep.subr.bf16.mxu0 0
    %3955 = vmatpush1.bf16.msra.mxu0 %v3933
    %3956 = vmatprep.subr.bf16.mxu0 0
    %3957 = vmatpush1.bf16.msra.mxu0 %v3934
    %3958 = vmatprep.subr.bf16.mxu0 0
    %3959 = vmatpush1.bf16.msra.mxu0 %v3935
    %3960 = vmatprep.subr.bf16.mxu0 0
    %3961 = vmatpush1.bf16.msra.mxu0 0
    %3962 = vmatprep.subr.bf16.mxu0 0
    %3963 = vmatpush1.bf16.msra.mxu0 0
    %3964 = vmatprep.subr.bf16.mxu0 0
    %3965 = vmatpush1.bf16.msra.mxu0 0
    %3966 = vmatprep.subr.bf16.mxu0 0
    %3967 = vmatpush1.bf16.msra.mxu0 0
    %3968 = vmatprep.subr.bf16.mxu0 0
    %3969 = vmatpush1.bf16.msra.mxu0 0
    %3970 = vmatprep.subr.bf16.mxu0 0
    %3971 = vmatpush1.bf16.msra.mxu0 0
    %3972 = vmatprep.subr.bf16.mxu0 0
    %3973 = vmatpush1.bf16.msra.mxu0 0
    %3974 = vmatprep.subr.bf16.mxu0 0
    %3975 = vmatpush1.bf16.msra.mxu0 0
    %3976 = vmatprep.mubr.bf16.mxu0 0
    %3977 = vmatmul.mubr.bf16.gmra.mrb[0].mxu0 %v3876
    %v3978 = vpop.f32.mrb[0].mxu0
    %v3979 = vadd.f32 0.0, %v3978
    %v3980 = vpop.f32.mrb[0].mxu0
    %v3981 = vpop.f32.mrb[0].mxu0
    %v3982 = vadd.f32 0.0, %v3981
    %v3983 = vpop.f32.mrb[0].mxu0
    %3984 = vmatprep.mubr.bf16.mxu0 0
    %3985 = vmatmul.mubr.bf16.gmra.mrb[0].mxu0 %v3877
    %v3986 = vpop.f32.mrb[0].mxu0
    %v3987 = vadd.f32 0.0, %v3986
    %v3988 = vpop.f32.mrb[0].mxu0
    %v3989 = vpop.f32.mrb[0].mxu0
    %v3990 = vadd.f32 0.0, %v3989
    %v3991 = vpop.f32.mrb[0].mxu0
    %3992 = vmatprep.mubr.bf16.mxu0 0
    %3993 = vmatmul.mubr.bf16.gmra.mrb[0].mxu0 %v3878
    %v3994 = vpop.f32.mrb[0].mxu0
    %v3995 = vadd.f32 0.0, %v3994
    %v3996 = vpop.f32.mrb[0].mxu0
    %v3997 = vpop.f32.mrb[0].mxu0
    %v3998 = vadd.f32 0.0, %v3997
    %v3999 = vpop.f32.mrb[0].mxu0
    %4000 = vmatprep.mubr.bf16.mxu0 0
    %4001 = vmatmul.mubr.bf16.gmra.mrb[0].mxu0 %v3879
    %v4002 = vpop.f32.mrb[0].mxu0
    %v4003 = vadd.f32 0.0, %v4002
    %v4004 = vpop.f32.mrb[0].mxu0
    %v4005 = vpop.f32.mrb[0].mxu0
    %v4006 = vadd.f32 0.0, %v4005
    %v4007 = vpop.f32.mrb[0].mxu0
    %4008 = vdwg.mxu0
    %4009 = vmatprep.subr.bf16.mxu0 0
    %4010 = vmatpush1.bf16.msra.mxu0 %v1424
    %4011 = vmatprep.subr.bf16.mxu0 0
    %4012 = vmatpush1.bf16.msra.mxu0 %v1425
    %4013 = vmatprep.subr.bf16.mxu0 0
    %4014 = vmatpush1.bf16.msra.mxu0 %v1426
    %4015 = vmatprep.subr.bf16.mxu0 0
    %4016 = vmatpush1.bf16.msra.mxu0 %v1427
    %4017 = vmatprep.subr.bf16.mxu0 0
    %4018 = vmatpush1.bf16.msra.mxu0 %v1428
    %4019 = vmatprep.subr.bf16.mxu0 0
    %4020 = vmatpush1.bf16.msra.mxu0 %v1429
    %4021 = vmatprep.subr.bf16.mxu0 0
    %4022 = vmatpush1.bf16.msra.mxu0 %v1430
    %4023 = vmatprep.subr.bf16.mxu0 0
    %4024 = vmatpush1.bf16.msra.mxu0 %v1431
    %4025 = vmatprep.subr.bf16.mxu0 0
    %4026 = vmatpush1.bf16.msra.mxu0 %v1432
    %4027 = vmatprep.subr.bf16.mxu0 0
    %4028 = vmatpush1.bf16.msra.mxu0 %v1433
    %4029 = vmatprep.subr.bf16.mxu0 0
    %4030 = vmatpush1.bf16.msra.mxu0 %v1434
    %4031 = vmatprep.subr.bf16.mxu0 0
    %4032 = vmatpush1.bf16.msra.mxu0 %v1435
    %4033 = vmatprep.subr.bf16.mxu0 0
    %4034 = vmatpush1.bf16.msra.mxu0 %v1436
    %4035 = vmatprep.subr.bf16.mxu0 0
    %4036 = vmatpush1.bf16.msra.mxu0 %v1437
    %4037 = vmatprep.subr.bf16.mxu0 0
    %4038 = vmatpush1.bf16.msra.mxu0 %v1438
    %4039 = vmatprep.subr.bf16.mxu0 0
    %4040 = vmatpush1.bf16.msra.mxu0 %v1439
    %4041 = vmatprep.mubr.bf16.mxu0 %v1473
    %4042 = vmatmul.mubr.bf16.gmra.mrb[0].mxu0 %v1472
    %v4043 = vpop.f32.mrb[0].mxu0
    %v4044 = vadd.f32 0.0, %v4043
    %v4045 = vpop.f32.mrb[0].mxu0
    %v4046 = vpop.f32.mrb[0].mxu0
    %v4047 = vadd.f32 0.0, %v4046
    %v4048 = vpop.f32.mrb[0].mxu0
    %4049 = vmatprep.mubr.bf16.mxu0 %v1475
    %4050 = vmatmul.mubr.bf16.gmra.mrb[0].mxu0 %v1474
    %v4051 = vpop.f32.mrb[0].mxu0
    %v4052 = vadd.f32 0.0, %v4051
    %v4053 = vpop.f32.mrb[0].mxu0
    %v4054 = vpop.f32.mrb[0].mxu0
    %v4055 = vadd.f32 0.0, %v4054
    %v4056 = vpop.f32.mrb[0].mxu0
    %4057 = vmatprep.mubr.bf16.mxu0 %v1477
    %4058 = vmatmul.mubr.bf16.gmra.mrb[0].mxu0 %v1476
    %v4059 = vpop.f32.mrb[0].mxu0
    %v4060 = vadd.f32 0.0, %v4059
    %v4061 = vpop.f32.mrb[0].mxu0
    %v4062 = vpop.f32.mrb[0].mxu0
    %v4063 = vadd.f32 0.0, %v4062
    %v4064 = vpop.f32.mrb[0].mxu0
    %4065 = vmatprep.mubr.bf16.mxu0 %v1479
    %4066 = vmatmul.mubr.bf16.gmra.mrb[0].mxu0 %v1478
    %v4067 = vpop.f32.mrb[0].mxu0
    %v4068 = vadd.f32 0.0, %v4067
    %v4069 = vpop.f32.mrb[0].mxu0
    %v4070 = vpop.f32.mrb[0].mxu0
    %v4071 = vadd.f32 0.0, %v4070
    %v4072 = vpop.f32.mrb[0].mxu0
    %4073 = vdwg.mxu0
    %4074 = vmatprep.subr.bf16.mxu0 0
    %4075 = vmatpush1.bf16.msra.mxu0 %v1424
    %4076 = vmatprep.subr.bf16.mxu0 0
    %4077 = vmatpush1.bf16.msra.mxu0 %v1425
    %4078 = vmatprep.subr.bf16.mxu0 0
    %4079 = vmatpush1.bf16.msra.mxu0 %v1426
    %4080 = vmatprep.subr.bf16.mxu0 0
    %4081 = vmatpush1.bf16.msra.mxu0 %v1427
    %4082 = vmatprep.subr.bf16.mxu0 0
    %4083 = vmatpush1.bf16.msra.mxu0 %v1428
    %4084 = vmatprep.subr.bf16.mxu0 0
    %4085 = vmatpush1.bf16.msra.mxu0 %v1429
    %4086 = vmatprep.subr.bf16.mxu0 0
    %4087 = vmatpush1.bf16.msra.mxu0 %v1430
    %4088 = vmatprep.subr.bf16.mxu0 0
    %4089 = vmatpush1.bf16.msra.mxu0 %v1431
    %4090 = vmatprep.subr.bf16.mxu0 0
    %4091 = vmatpush1.bf16.msra.mxu0 %v1432
    %4092 = vmatprep.subr.bf16.mxu0 0
    %4093 = vmatpush1.bf16.msra.mxu0 %v1433
    %4094 = vmatprep.subr.bf16.mxu0 0
    %4095 = vmatpush1.bf16.msra.mxu0 %v1434
    %4096 = vmatprep.subr.bf16.mxu0 0
    %4097 = vmatpush1.bf16.msra.mxu0 %v1435
    %4098 = vmatprep.subr.bf16.mxu0 0
    %4099 = vmatpush1.bf16.msra.mxu0 %v1436
    %4100 = vmatprep.subr.bf16.mxu0 0
    %4101 = vmatpush1.bf16.msra.mxu0 %v1437
    %4102 = vmatprep.subr.bf16.mxu0 0
    %4103 = vmatpush1.bf16.msra.mxu0 %v1438
    %4104 = vmatprep.subr.bf16.mxu0 0
    %4105 = vmatpush1.bf16.msra.mxu0 %v1439
    %4106 = vmatprep.mubr.bf16.mxu0 %v1587
    %4107 = vmatmul.mubr.bf16.gmra.mrb[0].mxu0 %v1586
    %v4108 = vpop.f32.mrb[0].mxu0
    %v4109 = vadd.f32 0.0, %v4108
    %v4110 = vpop.f32.mrb[0].mxu0
    %v4111 = vpop.f32.mrb[0].mxu0
    %v4112 = vadd.f32 0.0, %v4111
    %v4113 = vpop.f32.mrb[0].mxu0
    %4114 = vmatprep.mubr.bf16.mxu0 %v1589
    %4115 = vmatmul.mubr.bf16.gmra.mrb[0].mxu0 %v1588
    %v4116 = vpop.f32.mrb[0].mxu0
    %v4117 = vadd.f32 0.0, %v4116
    %v4118 = vpop.f32.mrb[0].mxu0
    %v4119 = vpop.f32.mrb[0].mxu0
    %v4120 = vadd.f32 0.0, %v4119
    %v4121 = vpop.f32.mrb[0].mxu0
    %4122 = vmatprep.mubr.bf16.mxu0 %v1591
    %4123 = vmatmul.mubr.bf16.gmra.mrb[0].mxu0 %v1590
    %v4124 = vpop.f32.mrb[0].mxu0
    %v4125 = vadd.f32 0.0, %v4124
    %v4126 = vpop.f32.mrb[0].mxu0
    %v4127 = vpop.f32.mrb[0].mxu0
    %v4128 = vadd.f32 0.0, %v4127
    %v4129 = vpop.f32.mrb[0].mxu0
    %4130 = vmatprep.mubr.bf16.mxu0 %v1593
    %4131 = vmatmul.mubr.bf16.gmra.mrb[0].mxu0 %v1592
    %v4132 = vpop.f32.mrb[0].mxu0
    %v4133 = vadd.f32 0.0, %v4132
    %v4134 = vpop.f32.mrb[0].mxu0
    %v4135 = vpop.f32.mrb[0].mxu0
    %v4136 = vadd.f32 0.0, %v4135
    %v4137 = vpop.f32.mrb[0].mxu0
    %4138 = vdwg.mxu0
    %4139 = vmatprep.subr.bf16.mxu0 0
    %4140 = vmatpush1.bf16.msra.mxu0 %v1424
    %4141 = vmatprep.subr.bf16.mxu0 0
    %4142 = vmatpush1.bf16.msra.mxu0 %v1425
    %4143 = vmatprep.subr.bf16.mxu0 0
    %4144 = vmatpush1.bf16.msra.mxu0 %v1426
    %4145 = vmatprep.subr.bf16.mxu0 0
    %4146 = vmatpush1.bf16.msra.mxu0 %v1427
    %4147 = vmatprep.subr.bf16.mxu0 0
    %4148 = vmatpush1.bf16.msra.mxu0 %v1428
    %4149 = vmatprep.subr.bf16.mxu0 0
    %4150 = vmatpush1.bf16.msra.mxu0 %v1429
    %4151 = vmatprep.subr.bf16.mxu0 0
    %4152 = vmatpush1.bf16.msra.mxu0 %v1430
    %4153 = vmatprep.subr.bf16.mxu0 0
    %4154 = vmatpush1.bf16.msra.mxu0 %v1431
    %4155 = vmatprep.subr.bf16.mxu0 0
    %4156 = vmatpush1.bf16.msra.mxu0 %v1432
    %4157 = vmatprep.subr.bf16.mxu0 0
    %4158 = vmatpush1.bf16.msra.mxu0 %v1433
    %4159 = vmatprep.subr.bf16.mxu0 0
    %4160 = vmatpush1.bf16.msra.mxu0 %v1434
    %4161 = vmatprep.subr.bf16.mxu0 0
    %4162 = vmatpush1.bf16.msra.mxu0 %v1435
    %4163 = vmatprep.subr.bf16.mxu0 0
    %4164 = vmatpush1.bf16.msra.mxu0 %v1436
    %4165 = vmatprep.subr.bf16.mxu0 0
    %4166 = vmatpush1.bf16.msra.mxu0 %v1437
    %4167 = vmatprep.subr.bf16.mxu0 0
    %4168 = vmatpush1.bf16.msra.mxu0 %v1438
    %4169 = vmatprep.subr.bf16.mxu0 0
    %4170 = vmatpush1.bf16.msra.mxu0 %v1439
    %4171 = vmatprep.mubr.bf16.mxu0 %v1701
    %4172 = vmatmul.mubr.bf16.gmra.mrb[0].mxu0 %v1700
    %v4173 = vpop.f32.mrb[0].mxu0
    %v4174 = vadd.f32 0.0, %v4173
    %v4175 = vpop.f32.mrb[0].mxu0
    %v4176 = vpop.f32.mrb[0].mxu0
    %v4177 = vadd.f32 0.0, %v4176
    %v4178 = vpop.f32.mrb[0].mxu0
    %4179 = vmatprep.mubr.bf16.mxu0 %v1703
    %4180 = vmatmul.mubr.bf16.gmra.mrb[0].mxu0 %v1702
    %v4181 = vpop.f32.mrb[0].mxu0
    %v4182 = vadd.f32 0.0, %v4181
    %v4183 = vpop.f32.mrb[0].mxu0
    %v4184 = vpop.f32.mrb[0].mxu0
    %v4185 = vadd.f32 0.0, %v4184
    %v4186 = vpop.f32.mrb[0].mxu0
    %4187 = vmatprep.mubr.bf16.mxu0 %v1705
    %4188 = vmatmul.mubr.bf16.gmra.mrb[0].mxu0 %v1704
    %v4189 = vpop.f32.mrb[0].mxu0
    %v4190 = vadd.f32 0.0, %v4189
    %v4191 = vpop.f32.mrb[0].mxu0
    %v4192 = vpop.f32.mrb[0].mxu0
    %v4193 = vadd.f32 0.0, %v4192
    %v4194 = vpop.f32.mrb[0].mxu0
    %4195 = vmatprep.mubr.bf16.mxu0 %v1707
    %4196 = vmatmul.mubr.bf16.gmra.mrb[0].mxu0 %v1706
    %v4197 = vpop.f32.mrb[0].mxu0
    %v4198 = vadd.f32 0.0, %v4197
    %v4199 = vpop.f32.mrb[0].mxu0
    %v4200 = vpop.f32.mrb[0].mxu0
    %v4201 = vadd.f32 0.0, %v4200
    %v4202 = vpop.f32.mrb[0].mxu0
    %4203 = vdwg.mxu0
    %4204 = vmatprep.subr.bf16.mxu0 0
    %4205 = vmatpush1.bf16.msra.mxu0 %v1424
    %4206 = vmatprep.subr.bf16.mxu0 0
    %4207 = vmatpush1.bf16.msra.mxu0 %v1425
    %4208 = vmatprep.subr.bf16.mxu0 0
    %4209 = vmatpush1.bf16.msra.mxu0 %v1426
    %4210 = vmatprep.subr.bf16.mxu0 0
    %4211 = vmatpush1.bf16.msra.mxu0 %v1427
    %4212 = vmatprep.subr.bf16.mxu0 0
    %4213 = vmatpush1.bf16.msra.mxu0 %v1428
    %4214 = vmatprep.subr.bf16.mxu0 0
    %4215 = vmatpush1.bf16.msra.mxu0 %v1429
    %4216 = vmatprep.subr.bf16.mxu0 0
    %4217 = vmatpush1.bf16.msra.mxu0 %v1430
    %4218 = vmatprep.subr.bf16.mxu0 0
    %4219 = vmatpush1.bf16.msra.mxu0 %v1431
    %4220 = vmatprep.subr.bf16.mxu0 0
    %4221 = vmatpush1.bf16.msra.mxu0 %v1432
    %4222 = vmatprep.subr.bf16.mxu0 0
    %4223 = vmatpush1.bf16.msra.mxu0 %v1433
    %4224 = vmatprep.subr.bf16.mxu0 0
    %4225 = vmatpush1.bf16.msra.mxu0 %v1434
    %4226 = vmatprep.subr.bf16.mxu0 0
    %4227 = vmatpush1.bf16.msra.mxu0 %v1435
    %4228 = vmatprep.subr.bf16.mxu0 0
    %4229 = vmatpush1.bf16.msra.mxu0 %v1436
    %4230 = vmatprep.subr.bf16.mxu0 0
    %4231 = vmatpush1.bf16.msra.mxu0 %v1437
    %4232 = vmatprep.subr.bf16.mxu0 0
    %4233 = vmatpush1.bf16.msra.mxu0 %v1438
    %4234 = vmatprep.subr.bf16.mxu0 0
    %4235 = vmatpush1.bf16.msra.mxu0 %v1439
    %4236 = vmatprep.mubr.bf16.mxu0 %v1815
    %4237 = vmatmul.mubr.bf16.gmra.mrb[0].mxu0 %v1814
    %v4238 = vpop.f32.mrb[0].mxu0
    %v4239 = vadd.f32 0.0, %v4238
    %v4240 = vpop.f32.mrb[0].mxu0
    %v4241 = vpop.f32.mrb[0].mxu0
    %v4242 = vadd.f32 0.0, %v4241
    %v4243 = vpop.f32.mrb[0].mxu0
    %4244 = vmatprep.mubr.bf16.mxu0 %v1817
    %4245 = vmatmul.mubr.bf16.gmra.mrb[0].mxu0 %v1816
    %v4246 = vpop.f32.mrb[0].mxu0
    %v4247 = vadd.f32 0.0, %v4246
    %v4248 = vpop.f32.mrb[0].mxu0
    %v4249 = vpop.f32.mrb[0].mxu0
    %v4250 = vadd.f32 0.0, %v4249
    %v4251 = vpop.f32.mrb[0].mxu0
    %4252 = vmatprep.mubr.bf16.mxu0 %v1819
    %4253 = vmatmul.mubr.bf16.gmra.mrb[0].mxu0 %v1818
    %v4254 = vpop.f32.mrb[0].mxu0
    %v4255 = vadd.f32 0.0, %v4254
    %v4256 = vpop.f32.mrb[0].mxu0
    %v4257 = vpop.f32.mrb[0].mxu0
    %v4258 = vadd.f32 0.0, %v4257
    %v4259 = vpop.f32.mrb[0].mxu0
    %4260 = vmatprep.mubr.bf16.mxu0 %v1821
    %4261 = vmatmul.mubr.bf16.gmra.mrb[0].mxu0 %v1820
    %v4262 = vpop.f32.mrb[0].mxu0
    %v4263 = vadd.f32 0.0, %v4262
    %v4264 = vpop.f32.mrb[0].mxu0
    %v4265 = vpop.f32.mrb[0].mxu0
    %v4266 = vadd.f32 0.0, %v4265
    %v4267 = vpop.f32.mrb[0].mxu0
    %4268 = vdwg.mxu0
    %4269 = vmatprep.subr.bf16.mxu0 0
    %4270 = vmatpush1.bf16.msra.mxu0 %v1424
    %4271 = vmatprep.subr.bf16.mxu0 0
    %4272 = vmatpush1.bf16.msra.mxu0 %v1425
    %4273 = vmatprep.subr.bf16.mxu0 0
    %4274 = vmatpush1.bf16.msra.mxu0 %v1426
    %4275 = vmatprep.subr.bf16.mxu0 0
    %4276 = vmatpush1.bf16.msra.mxu0 %v1427
    %4277 = vmatprep.subr.bf16.mxu0 0
    %4278 = vmatpush1.bf16.msra.mxu0 %v1428
    %4279 = vmatprep.subr.bf16.mxu0 0
    %4280 = vmatpush1.bf16.msra.mxu0 %v1429
    %4281 = vmatprep.subr.bf16.mxu0 0
    %4282 = vmatpush1.bf16.msra.mxu0 %v1430
    %4283 = vmatprep.subr.bf16.mxu0 0
    %4284 = vmatpush1.bf16.msra.mxu0 %v1431
    %4285 = vmatprep.subr.bf16.mxu0 0
    %4286 = vmatpush1.bf16.msra.mxu0 %v1432
    %4287 = vmatprep.subr.bf16.mxu0 0
    %4288 = vmatpush1.bf16.msra.mxu0 %v1433
    %4289 = vmatprep.subr.bf16.mxu0 0
    %4290 = vmatpush1.bf16.msra.mxu0 %v1434
    %4291 = vmatprep.subr.bf16.mxu0 0
    %4292 = vmatpush1.bf16.msra.mxu0 %v1435
    %4293 = vmatprep.subr.bf16.mxu0 0
    %4294 = vmatpush1.bf16.msra.mxu0 %v1436
    %4295 = vmatprep.subr.bf16.mxu0 0
    %4296 = vmatpush1.bf16.msra.mxu0 %v1437
    %4297 = vmatprep.subr.bf16.mxu0 0
    %4298 = vmatpush1.bf16.msra.mxu0 %v1438
    %4299 = vmatprep.subr.bf16.mxu0 0
    %4300 = vmatpush1.bf16.msra.mxu0 %v1439
    %4301 = vmatprep.mubr.bf16.mxu0 %v1929
    %4302 = vmatmul.mubr.bf16.gmra.mrb[0].mxu0 %v1928
    %v4303 = vpop.f32.mrb[0].mxu0
    %v4304 = vadd.f32 0.0, %v4303
    %v4305 = vpop.f32.mrb[0].mxu0
    %v4306 = vpop.f32.mrb[0].mxu0
    %v4307 = vadd.f32 0.0, %v4306
    %v4308 = vpop.f32.mrb[0].mxu0
    %4309 = vmatprep.mubr.bf16.mxu0 %v1931
    %4310 = vmatmul.mubr.bf16.gmra.mrb[0].mxu0 %v1930
    %v4311 = vpop.f32.mrb[0].mxu0
    %v4312 = vadd.f32 0.0, %v4311
    %v4313 = vpop.f32.mrb[0].mxu0
    %v4314 = vpop.f32.mrb[0].mxu0
    %v4315 = vadd.f32 0.0, %v4314
    %v4316 = vpop.f32.mrb[0].mxu0
    %4317 = vmatprep.mubr.bf16.mxu0 %v1933
    %4318 = vmatmul.mubr.bf16.gmra.mrb[0].mxu0 %v1932
    %v4319 = vpop.f32.mrb[0].mxu0
    %v4320 = vadd.f32 0.0, %v4319
    %v4321 = vpop.f32.mrb[0].mxu0
    %v4322 = vpop.f32.mrb[0].mxu0
    %v4323 = vadd.f32 0.0, %v4322
    %v4324 = vpop.f32.mrb[0].mxu0
    %4325 = vmatprep.mubr.bf16.mxu0 %v1935
    %4326 = vmatmul.mubr.bf16.gmra.mrb[0].mxu0 %v1934
    %v4327 = vpop.f32.mrb[0].mxu0
    %v4328 = vadd.f32 0.0, %v4327
    %v4329 = vpop.f32.mrb[0].mxu0
    %v4330 = vpop.f32.mrb[0].mxu0
    %v4331 = vadd.f32 0.0, %v4330
    %v4332 = vpop.f32.mrb[0].mxu0
    %4333 = vdwg.mxu0
    %4334 = vmatprep.subr.bf16.mxu0 0
    %4335 = vmatpush1.bf16.msra.mxu0 %v1424
    %4336 = vmatprep.subr.bf16.mxu0 0
    %4337 = vmatpush1.bf16.msra.mxu0 %v1425
    %4338 = vmatprep.subr.bf16.mxu0 0
    %4339 = vmatpush1.bf16.msra.mxu0 %v1426
    %4340 = vmatprep.subr.bf16.mxu0 0
    %4341 = vmatpush1.bf16.msra.mxu0 %v1427
    %4342 = vmatprep.subr.bf16.mxu0 0
    %4343 = vmatpush1.bf16.msra.mxu0 %v1428
    %4344 = vmatprep.subr.bf16.mxu0 0
    %4345 = vmatpush1.bf16.msra.mxu0 %v1429
    %4346 = vmatprep.subr.bf16.mxu0 0
    %4347 = vmatpush1.bf16.msra.mxu0 %v1430
    %4348 = vmatprep.subr.bf16.mxu0 0
    %4349 = vmatpush1.bf16.msra.mxu0 %v1431
    %4350 = vmatprep.subr.bf16.mxu0 0
    %4351 = vmatpush1.bf16.msra.mxu0 %v1432
    %4352 = vmatprep.subr.bf16.mxu0 0
    %4353 = vmatpush1.bf16.msra.mxu0 %v1433
    %4354 = vmatprep.subr.bf16.mxu0 0
    %4355 = vmatpush1.bf16.msra.mxu0 %v1434
    %4356 = vmatprep.subr.bf16.mxu0 0
    %4357 = vmatpush1.bf16.msra.mxu0 %v1435
    %4358 = vmatprep.subr.bf16.mxu0 0
    %4359 = vmatpush1.bf16.msra.mxu0 %v1436
    %4360 = vmatprep.subr.bf16.mxu0 0
    %4361 = vmatpush1.bf16.msra.mxu0 %v1437
    %4362 = vmatprep.subr.bf16.mxu0 0
    %4363 = vmatpush1.bf16.msra.mxu0 %v1438
    %4364 = vmatprep.subr.bf16.mxu0 0
    %4365 = vmatpush1.bf16.msra.mxu0 %v1439
    %4366 = vmatprep.mubr.bf16.mxu0 %v2043
    %4367 = vmatmul.mubr.bf16.gmra.mrb[0].mxu0 %v2042
    %v4368 = vpop.f32.mrb[0].mxu0
    %v4369 = vadd.f32 0.0, %v4368
    %v4370 = vpop.f32.mrb[0].mxu0
    %v4371 = vpop.f32.mrb[0].mxu0
    %v4372 = vadd.f32 0.0, %v4371
    %v4373 = vpop.f32.mrb[0].mxu0
    %4374 = vmatprep.mubr.bf16.mxu0 %v2045
    %4375 = vmatmul.mubr.bf16.gmra.mrb[0].mxu0 %v2044
    %v4376 = vpop.f32.mrb[0].mxu0
    %v4377 = vadd.f32 0.0, %v4376
    %v4378 = vpop.f32.mrb[0].mxu0
    %v4379 = vpop.f32.mrb[0].mxu0
    %v4380 = vadd.f32 0.0, %v4379
    %v4381 = vpop.f32.mrb[0].mxu0
    %4382 = vmatprep.mubr.bf16.mxu0 %v2047
    %4383 = vmatmul.mubr.bf16.gmra.mrb[0].mxu0 %v2046
    %v4384 = vpop.f32.mrb[0].mxu0
    %v4385 = vadd.f32 0.0, %v4384
    %v4386 = vpop.f32.mrb[0].mxu0
    %v4387 = vpop.f32.mrb[0].mxu0
    %v4388 = vadd.f32 0.0, %v4387
    %v4389 = vpop.f32.mrb[0].mxu0
    %4390 = vmatprep.mubr.bf16.mxu0 %v2049
    %4391 = vmatmul.mubr.bf16.gmra.mrb[0].mxu0 %v2048
    %v4392 = vpop.f32.mrb[0].mxu0
    %v4393 = vadd.f32 0.0, %v4392
    %v4394 = vpop.f32.mrb[0].mxu0
    %v4395 = vpop.f32.mrb[0].mxu0
    %v4396 = vadd.f32 0.0, %v4395
    %v4397 = vpop.f32.mrb[0].mxu0
    %4398 = vdwg.mxu0
    %4399 = vmatprep.subr.bf16.mxu0 0
    %4400 = vmatpush1.bf16.msra.mxu0 %v1424
    %4401 = vmatprep.subr.bf16.mxu0 0
    %4402 = vmatpush1.bf16.msra.mxu0 %v1425
    %4403 = vmatprep.subr.bf16.mxu0 0
    %4404 = vmatpush1.bf16.msra.mxu0 %v1426
    %4405 = vmatprep.subr.bf16.mxu0 0
    %4406 = vmatpush1.bf16.msra.mxu0 %v1427
    %4407 = vmatprep.subr.bf16.mxu0 0
    %4408 = vmatpush1.bf16.msra.mxu0 %v1428
    %4409 = vmatprep.subr.bf16.mxu0 0
    %4410 = vmatpush1.bf16.msra.mxu0 %v1429
    %4411 = vmatprep.subr.bf16.mxu0 0
    %4412 = vmatpush1.bf16.msra.mxu0 %v1430
    %4413 = vmatprep.subr.bf16.mxu0 0
    %4414 = vmatpush1.bf16.msra.mxu0 %v1431
    %4415 = vmatprep.subr.bf16.mxu0 0
    %4416 = vmatpush1.bf16.msra.mxu0 %v1432
    %4417 = vmatprep.subr.bf16.mxu0 0
    %4418 = vmatpush1.bf16.msra.mxu0 %v1433
    %4419 = vmatprep.subr.bf16.mxu0 0
    %4420 = vmatpush1.bf16.msra.mxu0 %v1434
    %4421 = vmatprep.subr.bf16.mxu0 0
    %4422 = vmatpush1.bf16.msra.mxu0 %v1435
    %4423 = vmatprep.subr.bf16.mxu0 0
    %4424 = vmatpush1.bf16.msra.mxu0 %v1436
    %4425 = vmatprep.subr.bf16.mxu0 0
    %4426 = vmatpush1.bf16.msra.mxu0 %v1437
    %4427 = vmatprep.subr.bf16.mxu0 0
    %4428 = vmatpush1.bf16.msra.mxu0 %v1438
    %4429 = vmatprep.subr.bf16.mxu0 0
    %4430 = vmatpush1.bf16.msra.mxu0 %v1439
    %4431 = vmatprep.mubr.bf16.mxu0 %v2157
    %4432 = vmatmul.mubr.bf16.gmra.mrb[0].mxu0 %v2156
    %v4433 = vpop.f32.mrb[0].mxu0
    %v4434 = vadd.f32 0.0, %v4433
    %v4435 = vpop.f32.mrb[0].mxu0
    %v4436 = vpop.f32.mrb[0].mxu0
    %v4437 = vadd.f32 0.0, %v4436
    %v4438 = vpop.f32.mrb[0].mxu0
    %4439 = vmatprep.mubr.bf16.mxu0 %v2159
    %4440 = vmatmul.mubr.bf16.gmra.mrb[0].mxu0 %v2158
    %v4441 = vpop.f32.mrb[0].mxu0
    %v4442 = vadd.f32 0.0, %v4441
    %v4443 = vpop.f32.mrb[0].mxu0
    %v4444 = vpop.f32.mrb[0].mxu0
    %v4445 = vadd.f32 0.0, %v4444
    %v4446 = vpop.f32.mrb[0].mxu0
    %4447 = vmatprep.mubr.bf16.mxu0 %v2161
    %4448 = vmatmul.mubr.bf16.gmra.mrb[0].mxu0 %v2160
    %v4449 = vpop.f32.mrb[0].mxu0
    %v4450 = vadd.f32 0.0, %v4449
    %v4451 = vpop.f32.mrb[0].mxu0
    %v4452 = vpop.f32.mrb[0].mxu0
    %v4453 = vadd.f32 0.0, %v4452
    %v4454 = vpop.f32.mrb[0].mxu0
    %4455 = vmatprep.mubr.bf16.mxu0 %v2163
    %4456 = vmatmul.mubr.bf16.gmra.mrb[0].mxu0 %v2162
    %v4457 = vpop.f32.mrb[0].mxu0
    %v4458 = vadd.f32 0.0, %v4457
    %v4459 = vpop.f32.mrb[0].mxu0
    %v4460 = vpop.f32.mrb[0].mxu0
    %v4461 = vadd.f32 0.0, %v4460
    %v4462 = vpop.f32.mrb[0].mxu0
    %4463 = vdwg.mxu0
    %4464 = vmatprep.subr.bf16.mxu0 0
    %4465 = vmatpush1.bf16.msra.mxu0 %v1424
    %4466 = vmatprep.subr.bf16.mxu0 0
    %4467 = vmatpush1.bf16.msra.mxu0 %v1425
    %4468 = vmatprep.subr.bf16.mxu0 0
    %4469 = vmatpush1.bf16.msra.mxu0 %v1426
    %4470 = vmatprep.subr.bf16.mxu0 0
    %4471 = vmatpush1.bf16.msra.mxu0 %v1427
    %4472 = vmatprep.subr.bf16.mxu0 0
    %4473 = vmatpush1.bf16.msra.mxu0 %v1428
    %4474 = vmatprep.subr.bf16.mxu0 0
    %4475 = vmatpush1.bf16.msra.mxu0 %v1429
    %4476 = vmatprep.subr.bf16.mxu0 0
    %4477 = vmatpush1.bf16.msra.mxu0 %v1430
    %4478 = vmatprep.subr.bf16.mxu0 0
    %4479 = vmatpush1.bf16.msra.mxu0 %v1431
    %4480 = vmatprep.subr.bf16.mxu0 0
    %4481 = vmatpush1.bf16.msra.mxu0 %v1432
    %4482 = vmatprep.subr.bf16.mxu0 0
    %4483 = vmatpush1.bf16.msra.mxu0 %v1433
    %4484 = vmatprep.subr.bf16.mxu0 0
    %4485 = vmatpush1.bf16.msra.mxu0 %v1434
    %4486 = vmatprep.subr.bf16.mxu0 0
    %4487 = vmatpush1.bf16.msra.mxu0 %v1435
    %4488 = vmatprep.subr.bf16.mxu0 0
    %4489 = vmatpush1.bf16.msra.mxu0 %v1436
    %4490 = vmatprep.subr.bf16.mxu0 0
    %4491 = vmatpush1.bf16.msra.mxu0 %v1437
    %4492 = vmatprep.subr.bf16.mxu0 0
    %4493 = vmatpush1.bf16.msra.mxu0 %v1438
    %4494 = vmatprep.subr.bf16.mxu0 0
    %4495 = vmatpush1.bf16.msra.mxu0 %v1439
    %4496 = vmatprep.mubr.bf16.mxu0 %v2271
    %4497 = vmatmul.mubr.bf16.gmra.mrb[0].mxu0 %v2270
    %v4498 = vpop.f32.mrb[0].mxu0
    %v4499 = vadd.f32 0.0, %v4498
    %v4500 = vpop.f32.mrb[0].mxu0
    %v4501 = vpop.f32.mrb[0].mxu0
    %v4502 = vadd.f32 0.0, %v4501
    %v4503 = vpop.f32.mrb[0].mxu0
    %4504 = vmatprep.mubr.bf16.mxu0 %v2273
    %4505 = vmatmul.mubr.bf16.gmra.mrb[0].mxu0 %v2272
    %v4506 = vpop.f32.mrb[0].mxu0
    %v4507 = vadd.f32 0.0, %v4506
    %v4508 = vpop.f32.mrb[0].mxu0
    %v4509 = vpop.f32.mrb[0].mxu0
    %v4510 = vadd.f32 0.0, %v4509
    %v4511 = vpop.f32.mrb[0].mxu0
    %4512 = vmatprep.mubr.bf16.mxu0 %v2275
    %4513 = vmatmul.mubr.bf16.gmra.mrb[0].mxu0 %v2274
    %v4514 = vpop.f32.mrb[0].mxu0
    %v4515 = vadd.f32 0.0, %v4514
    %v4516 = vpop.f32.mrb[0].mxu0
    %v4517 = vpop.f32.mrb[0].mxu0
    %v4518 = vadd.f32 0.0, %v4517
    %v4519 = vpop.f32.mrb[0].mxu0
    %4520 = vmatprep.mubr.bf16.mxu0 %v2277
    %4521 = vmatmul.mubr.bf16.gmra.mrb[0].mxu0 %v2276
    %v4522 = vpop.f32.mrb[0].mxu0
    %v4523 = vadd.f32 0.0, %v4522
    %v4524 = vpop.f32.mrb[0].mxu0
    %v4525 = vpop.f32.mrb[0].mxu0
    %v4526 = vadd.f32 0.0, %v4525
    %v4527 = vpop.f32.mrb[0].mxu0
    %4528 = vdwg.mxu0
    %4529 = vmatprep.subr.bf16.mxu0 0
    %4530 = vmatpush1.bf16.msra.mxu0 %v1424
    %4531 = vmatprep.subr.bf16.mxu0 0
    %4532 = vmatpush1.bf16.msra.mxu0 %v1425
    %4533 = vmatprep.subr.bf16.mxu0 0
    %4534 = vmatpush1.bf16.msra.mxu0 %v1426
    %4535 = vmatprep.subr.bf16.mxu0 0
    %4536 = vmatpush1.bf16.msra.mxu0 %v1427
    %4537 = vmatprep.subr.bf16.mxu0 0
    %4538 = vmatpush1.bf16.msra.mxu0 %v1428
    %4539 = vmatprep.subr.bf16.mxu0 0
    %4540 = vmatpush1.bf16.msra.mxu0 %v1429
    %4541 = vmatprep.subr.bf16.mxu0 0
    %4542 = vmatpush1.bf16.msra.mxu0 %v1430
    %4543 = vmatprep.subr.bf16.mxu0 0
    %4544 = vmatpush1.bf16.msra.mxu0 %v1431
    %4545 = vmatprep.subr.bf16.mxu0 0
    %4546 = vmatpush1.bf16.msra.mxu0 %v1432
    %4547 = vmatprep.subr.bf16.mxu0 0
    %4548 = vmatpush1.bf16.msra.mxu0 %v1433
    %4549 = vmatprep.subr.bf16.mxu0 0
    %4550 = vmatpush1.bf16.msra.mxu0 %v1434
    %4551 = vmatprep.subr.bf16.mxu0 0
    %4552 = vmatpush1.bf16.msra.mxu0 %v1435
    %4553 = vmatprep.subr.bf16.mxu0 0
    %4554 = vmatpush1.bf16.msra.mxu0 %v1436
    %4555 = vmatprep.subr.bf16.mxu0 0
    %4556 = vmatpush1.bf16.msra.mxu0 %v1437
    %4557 = vmatprep.subr.bf16.mxu0 0
    %4558 = vmatpush1.bf16.msra.mxu0 %v1438
    %4559 = vmatprep.subr.bf16.mxu0 0
    %4560 = vmatpush1.bf16.msra.mxu0 %v1439
    %4561 = vmatprep.mubr.bf16.mxu0 %v2385
    %4562 = vmatmul.mubr.bf16.gmra.mrb[0].mxu0 %v2384
    %v4563 = vpop.f32.mrb[0].mxu0
    %v4564 = vadd.f32 0.0, %v4563
    %v4565 = vpop.f32.mrb[0].mxu0
    %v4566 = vpop.f32.mrb[0].mxu0
    %v4567 = vadd.f32 0.0, %v4566
    %v4568 = vpop.f32.mrb[0].mxu0
    %4569 = vmatprep.mubr.bf16.mxu0 %v2387
    %4570 = vmatmul.mubr.bf16.gmra.mrb[0].mxu0 %v2386
    %v4571 = vpop.f32.mrb[0].mxu0
    %v4572 = vadd.f32 0.0, %v4571
    %v4573 = vpop.f32.mrb[0].mxu0
    %v4574 = vpop.f32.mrb[0].mxu0
    %v4575 = vadd.f32 0.0, %v4574
    %v4576 = vpop.f32.mrb[0].mxu0
    %4577 = vmatprep.mubr.bf16.mxu0 %v2389
    %4578 = vmatmul.mubr.bf16.gmra.mrb[0].mxu0 %v2388
    %v4579 = vpop.f32.mrb[0].mxu0
    %v4580 = vadd.f32 0.0, %v4579
    %v4581 = vpop.f32.mrb[0].mxu0
    %v4582 = vpop.f32.mrb[0].mxu0
    %v4583 = vadd.f32 0.0, %v4582
    %v4584 = vpop.f32.mrb[0].mxu0
    %4585 = vmatprep.mubr.bf16.mxu0 %v2391
    %4586 = vmatmul.mubr.bf16.gmra.mrb[0].mxu0 %v2390
    %v4587 = vpop.f32.mrb[0].mxu0
    %v4588 = vadd.f32 0.0, %v4587
    %v4589 = vpop.f32.mrb[0].mxu0
    %v4590 = vpop.f32.mrb[0].mxu0
    %v4591 = vadd.f32 0.0, %v4590
    %v4592 = vpop.f32.mrb[0].mxu0
    %4593 = vdwg.mxu0
    %4594 = vmatprep.subr.bf16.mxu0 0
    %4595 = vmatpush1.bf16.msra.mxu0 %v1424
    %4596 = vmatprep.subr.bf16.mxu0 0
    %4597 = vmatpush1.bf16.msra.mxu0 %v1425
    %4598 = vmatprep.subr.bf16.mxu0 0
    %4599 = vmatpush1.bf16.msra.mxu0 %v1426
    %4600 = vmatprep.subr.bf16.mxu0 0
    %4601 = vmatpush1.bf16.msra.mxu0 %v1427
    %4602 = vmatprep.subr.bf16.mxu0 0
    %4603 = vmatpush1.bf16.msra.mxu0 %v1428
    %4604 = vmatprep.subr.bf16.mxu0 0
    %4605 = vmatpush1.bf16.msra.mxu0 %v1429
    %4606 = vmatprep.subr.bf16.mxu0 0
    %4607 = vmatpush1.bf16.msra.mxu0 %v1430
    %4608 = vmatprep.subr.bf16.mxu0 0
    %4609 = vmatpush1.bf16.msra.mxu0 %v1431
    %4610 = vmatprep.subr.bf16.mxu0 0
    %4611 = vmatpush1.bf16.msra.mxu0 %v1432
    %4612 = vmatprep.subr.bf16.mxu0 0
    %4613 = vmatpush1.bf16.msra.mxu0 %v1433
    %4614 = vmatprep.subr.bf16.mxu0 0
    %4615 = vmatpush1.bf16.msra.mxu0 %v1434
    %4616 = vmatprep.subr.bf16.mxu0 0
    %4617 = vmatpush1.bf16.msra.mxu0 %v1435
    %4618 = vmatprep.subr.bf16.mxu0 0
    %4619 = vmatpush1.bf16.msra.mxu0 %v1436
    %4620 = vmatprep.subr.bf16.mxu0 0
    %4621 = vmatpush1.bf16.msra.mxu0 %v1437
    %4622 = vmatprep.subr.bf16.mxu0 0
    %4623 = vmatpush1.bf16.msra.mxu0 %v1438
    %4624 = vmatprep.subr.bf16.mxu0 0
    %4625 = vmatpush1.bf16.msra.mxu0 %v1439
    %4626 = vmatprep.mubr.bf16.mxu0 %v2499
    %4627 = vmatmul.mubr.bf16.gmra.mrb[0].mxu0 %v2498
    %v4628 = vpop.f32.mrb[0].mxu0
    %v4629 = vadd.f32 0.0, %v4628
    %v4630 = vpop.f32.mrb[0].mxu0
    %v4631 = vpop.f32.mrb[0].mxu0
    %v4632 = vadd.f32 0.0, %v4631
    %v4633 = vpop.f32.mrb[0].mxu0
    %4634 = vmatprep.mubr.bf16.mxu0 %v2501
    %4635 = vmatmul.mubr.bf16.gmra.mrb[0].mxu0 %v2500
    %v4636 = vpop.f32.mrb[0].mxu0
    %v4637 = vadd.f32 0.0, %v4636
    %v4638 = vpop.f32.mrb[0].mxu0
    %v4639 = vpop.f32.mrb[0].mxu0
    %v4640 = vadd.f32 0.0, %v4639
    %v4641 = vpop.f32.mrb[0].mxu0
    %4642 = vmatprep.mubr.bf16.mxu0 %v2503
    %4643 = vmatmul.mubr.bf16.gmra.mrb[0].mxu0 %v2502
    %v4644 = vpop.f32.mrb[0].mxu0
    %v4645 = vadd.f32 0.0, %v4644
    %v4646 = vpop.f32.mrb[0].mxu0
    %v4647 = vpop.f32.mrb[0].mxu0
    %v4648 = vadd.f32 0.0, %v4647
    %v4649 = vpop.f32.mrb[0].mxu0
    %4650 = vmatprep.mubr.bf16.mxu0 %v2505
    %4651 = vmatmul.mubr.bf16.gmra.mrb[0].mxu0 %v2504
    %v4652 = vpop.f32.mrb[0].mxu0
    %v4653 = vadd.f32 0.0, %v4652
    %v4654 = vpop.f32.mrb[0].mxu0
    %v4655 = vpop.f32.mrb[0].mxu0
    %v4656 = vadd.f32 0.0, %v4655
    %v4657 = vpop.f32.mrb[0].mxu0
    %4658 = vdwg.mxu0
    %4659 = vmatprep.subr.bf16.mxu0 0
    %4660 = vmatpush1.bf16.msra.mxu0 %v1424
    %4661 = vmatprep.subr.bf16.mxu0 0
    %4662 = vmatpush1.bf16.msra.mxu0 %v1425
    %4663 = vmatprep.subr.bf16.mxu0 0
    %4664 = vmatpush1.bf16.msra.mxu0 %v1426
    %4665 = vmatprep.subr.bf16.mxu0 0
    %4666 = vmatpush1.bf16.msra.mxu0 %v1427
    %4667 = vmatprep.subr.bf16.mxu0 0
    %4668 = vmatpush1.bf16.msra.mxu0 %v1428
    %4669 = vmatprep.subr.bf16.mxu0 0
    %4670 = vmatpush1.bf16.msra.mxu0 %v1429
    %4671 = vmatprep.subr.bf16.mxu0 0
    %4672 = vmatpush1.bf16.msra.mxu0 %v1430
    %4673 = vmatprep.subr.bf16.mxu0 0
    %4674 = vmatpush1.bf16.msra.mxu0 %v1431
    %4675 = vmatprep.subr.bf16.mxu0 0
    %4676 = vmatpush1.bf16.msra.mxu0 %v1432
    %4677 = vmatprep.subr.bf16.mxu0 0
    %4678 = vmatpush1.bf16.msra.mxu0 %v1433
    %4679 = vmatprep.subr.bf16.mxu0 0
    %4680 = vmatpush1.bf16.msra.mxu0 %v1434
    %4681 = vmatprep.subr.bf16.mxu0 0
    %4682 = vmatpush1.bf16.msra.mxu0 %v1435
    %4683 = vmatprep.subr.bf16.mxu0 0
    %4684 = vmatpush1.bf16.msra.mxu0 %v1436
    %4685 = vmatprep.subr.bf16.mxu0 0
    %4686 = vmatpush1.bf16.msra.mxu0 %v1437
    %4687 = vmatprep.subr.bf16.mxu0 0
    %4688 = vmatpush1.bf16.msra.mxu0 %v1438
    %4689 = vmatprep.subr.bf16.mxu0 0
    %4690 = vmatpush1.bf16.msra.mxu0 %v1439
    %4691 = vmatprep.mubr.bf16.mxu0 %v2613
    %4692 = vmatmul.mubr.bf16.gmra.mrb[0].mxu0 %v2612
    %v4693 = vpop.f32.mrb[0].mxu0
    %v4694 = vadd.f32 0.0, %v4693
    %v4695 = vpop.f32.mrb[0].mxu0
    %v4696 = vpop.f32.mrb[0].mxu0
    %v4697 = vadd.f32 0.0, %v4696
    %v4698 = vpop.f32.mrb[0].mxu0
    %4699 = vmatprep.mubr.bf16.mxu0 %v2615
    %4700 = vmatmul.mubr.bf16.gmra.mrb[0].mxu0 %v2614
    %v4701 = vpop.f32.mrb[0].mxu0
    %v4702 = vadd.f32 0.0, %v4701
    %v4703 = vpop.f32.mrb[0].mxu0
    %v4704 = vpop.f32.mrb[0].mxu0
    %v4705 = vadd.f32 0.0, %v4704
    %v4706 = vpop.f32.mrb[0].mxu0
    %4707 = vmatprep.mubr.bf16.mxu0 %v2617
    %4708 = vmatmul.mubr.bf16.gmra.mrb[0].mxu0 %v2616
    %v4709 = vpop.f32.mrb[0].mxu0
    %v4710 = vadd.f32 0.0, %v4709
    %v4711 = vpop.f32.mrb[0].mxu0
    %v4712 = vpop.f32.mrb[0].mxu0
    %v4713 = vadd.f32 0.0, %v4712
    %v4714 = vpop.f32.mrb[0].mxu0
    %4715 = vmatprep.mubr.bf16.mxu0 %v2619
    %4716 = vmatmul.mubr.bf16.gmra.mrb[0].mxu0 %v2618
    %v4717 = vpop.f32.mrb[0].mxu0
    %v4718 = vadd.f32 0.0, %v4717
    %v4719 = vpop.f32.mrb[0].mxu0
    %v4720 = vpop.f32.mrb[0].mxu0
    %v4721 = vadd.f32 0.0, %v4720
    %v4722 = vpop.f32.mrb[0].mxu0
    %4723 = vdwg.mxu0
    %4724 = vmatprep.subr.bf16.mxu0 0
    %4725 = vmatpush1.bf16.msra.mxu0 %v1424
    %4726 = vmatprep.subr.bf16.mxu0 0
    %4727 = vmatpush1.bf16.msra.mxu0 %v1425
    %4728 = vmatprep.subr.bf16.mxu0 0
    %4729 = vmatpush1.bf16.msra.mxu0 %v1426
    %4730 = vmatprep.subr.bf16.mxu0 0
    %4731 = vmatpush1.bf16.msra.mxu0 %v1427
    %4732 = vmatprep.subr.bf16.mxu0 0
    %4733 = vmatpush1.bf16.msra.mxu0 %v1428
    %4734 = vmatprep.subr.bf16.mxu0 0
    %4735 = vmatpush1.bf16.msra.mxu0 %v1429
    %4736 = vmatprep.subr.bf16.mxu0 0
    %4737 = vmatpush1.bf16.msra.mxu0 %v1430
    %4738 = vmatprep.subr.bf16.mxu0 0
    %4739 = vmatpush1.bf16.msra.mxu0 %v1431
    %4740 = vmatprep.subr.bf16.mxu0 0
    %4741 = vmatpush1.bf16.msra.mxu0 %v1432
    %4742 = vmatprep.subr.bf16.mxu0 0
    %4743 = vmatpush1.bf16.msra.mxu0 %v1433
    %4744 = vmatprep.subr.bf16.mxu0 0
    %4745 = vmatpush1.bf16.msra.mxu0 %v1434
    %4746 = vmatprep.subr.bf16.mxu0 0
    %4747 = vmatpush1.bf16.msra.mxu0 %v1435
    %4748 = vmatprep.subr.bf16.mxu0 0
    %4749 = vmatpush1.bf16.msra.mxu0 %v1436
    %4750 = vmatprep.subr.bf16.mxu0 0
    %4751 = vmatpush1.bf16.msra.mxu0 %v1437
    %4752 = vmatprep.subr.bf16.mxu0 0
    %4753 = vmatpush1.bf16.msra.mxu0 %v1438
    %4754 = vmatprep.subr.bf16.mxu0 0
    %4755 = vmatpush1.bf16.msra.mxu0 %v1439
    %4756 = vmatprep.mubr.bf16.mxu0 %v2727
    %4757 = vmatmul.mubr.bf16.gmra.mrb[0].mxu0 %v2726
    %v4758 = vpop.f32.mrb[0].mxu0
    %v4759 = vadd.f32 0.0, %v4758
    %v4760 = vpop.f32.mrb[0].mxu0
    %v4761 = vpop.f32.mrb[0].mxu0
    %v4762 = vadd.f32 0.0, %v4761
    %v4763 = vpop.f32.mrb[0].mxu0
    %4764 = vmatprep.mubr.bf16.mxu0 %v2729
    %4765 = vmatmul.mubr.bf16.gmra.mrb[0].mxu0 %v2728
    %v4766 = vpop.f32.mrb[0].mxu0
    %v4767 = vadd.f32 0.0, %v4766
    %v4768 = vpop.f32.mrb[0].mxu0
    %v4769 = vpop.f32.mrb[0].mxu0
    %v4770 = vadd.f32 0.0, %v4769
    %v4771 = vpop.f32.mrb[0].mxu0
    %4772 = vmatprep.mubr.bf16.mxu0 %v2731
    %4773 = vmatmul.mubr.bf16.gmra.mrb[0].mxu0 %v2730
    %v4774 = vpop.f32.mrb[0].mxu0
    %v4775 = vadd.f32 0.0, %v4774
    %v4776 = vpop.f32.mrb[0].mxu0
    %v4777 = vpop.f32.mrb[0].mxu0
    %v4778 = vadd.f32 0.0, %v4777
    %v4779 = vpop.f32.mrb[0].mxu0
    %4780 = vmatprep.mubr.bf16.mxu0 %v2733
    %4781 = vmatmul.mubr.bf16.gmra.mrb[0].mxu0 %v2732
    %v4782 = vpop.f32.mrb[0].mxu0
    %v4783 = vadd.f32 0.0, %v4782
    %v4784 = vpop.f32.mrb[0].mxu0
    %v4785 = vpop.f32.mrb[0].mxu0
    %v4786 = vadd.f32 0.0, %v4785
    %v4787 = vpop.f32.mrb[0].mxu0
    %4788 = vdwg.mxu0
    %4789 = vmatprep.subr.bf16.mxu0 0
    %4790 = vmatpush1.bf16.msra.mxu0 %v1424
    %4791 = vmatprep.subr.bf16.mxu0 0
    %4792 = vmatpush1.bf16.msra.mxu0 %v1425
    %4793 = vmatprep.subr.bf16.mxu0 0
    %4794 = vmatpush1.bf16.msra.mxu0 %v1426
    %4795 = vmatprep.subr.bf16.mxu0 0
    %4796 = vmatpush1.bf16.msra.mxu0 %v1427
    %4797 = vmatprep.subr.bf16.mxu0 0
    %4798 = vmatpush1.bf16.msra.mxu0 %v1428
    %4799 = vmatprep.subr.bf16.mxu0 0
    %4800 = vmatpush1.bf16.msra.mxu0 %v1429
    %4801 = vmatprep.subr.bf16.mxu0 0
    %4802 = vmatpush1.bf16.msra.mxu0 %v1430
    %4803 = vmatprep.subr.bf16.mxu0 0
    %4804 = vmatpush1.bf16.msra.mxu0 %v1431
    %4805 = vmatprep.subr.bf16.mxu0 0
    %4806 = vmatpush1.bf16.msra.mxu0 %v1432
    %4807 = vmatprep.subr.bf16.mxu0 0
    %4808 = vmatpush1.bf16.msra.mxu0 %v1433
    %4809 = vmatprep.subr.bf16.mxu0 0
    %4810 = vmatpush1.bf16.msra.mxu0 %v1434
    %4811 = vmatprep.subr.bf16.mxu0 0
    %4812 = vmatpush1.bf16.msra.mxu0 %v1435
    %4813 = vmatprep.subr.bf16.mxu0 0
    %4814 = vmatpush1.bf16.msra.mxu0 %v1436
    %4815 = vmatprep.subr.bf16.mxu0 0
    %4816 = vmatpush1.bf16.msra.mxu0 %v1437
    %4817 = vmatprep.subr.bf16.mxu0 0
    %4818 = vmatpush1.bf16.msra.mxu0 %v1438
    %4819 = vmatprep.subr.bf16.mxu0 0
    %4820 = vmatpush1.bf16.msra.mxu0 %v1439
    %4821 = vmatprep.mubr.bf16.mxu0 %v2841
    %4822 = vmatmul.mubr.bf16.gmra.mrb[0].mxu0 %v2840
    %v4823 = vpop.f32.mrb[0].mxu0
    %v4824 = vadd.f32 0.0, %v4823
    %v4825 = vpop.f32.mrb[0].mxu0
    %v4826 = vpop.f32.mrb[0].mxu0
    %v4827 = vadd.f32 0.0, %v4826
    %v4828 = vpop.f32.mrb[0].mxu0
    %4829 = vmatprep.mubr.bf16.mxu0 %v2843
    %4830 = vmatmul.mubr.bf16.gmra.mrb[0].mxu0 %v2842
    %v4831 = vpop.f32.mrb[0].mxu0
    %v4832 = vadd.f32 0.0, %v4831
    %v4833 = vpop.f32.mrb[0].mxu0
    %v4834 = vpop.f32.mrb[0].mxu0
    %v4835 = vadd.f32 0.0, %v4834
    %v4836 = vpop.f32.mrb[0].mxu0
    %4837 = vmatprep.mubr.bf16.mxu0 %v2845
    %4838 = vmatmul.mubr.bf16.gmra.mrb[0].mxu0 %v2844
    %v4839 = vpop.f32.mrb[0].mxu0
    %v4840 = vadd.f32 0.0, %v4839
    %v4841 = vpop.f32.mrb[0].mxu0
    %v4842 = vpop.f32.mrb[0].mxu0
    %v4843 = vadd.f32 0.0, %v4842
    %v4844 = vpop.f32.mrb[0].mxu0
    %4845 = vmatprep.mubr.bf16.mxu0 %v2847
    %4846 = vmatmul.mubr.bf16.gmra.mrb[0].mxu0 %v2846
    %v4847 = vpop.f32.mrb[0].mxu0
    %v4848 = vadd.f32 0.0, %v4847
    %v4849 = vpop.f32.mrb[0].mxu0
    %v4850 = vpop.f32.mrb[0].mxu0
    %v4851 = vadd.f32 0.0, %v4850
    %v4852 = vpop.f32.mrb[0].mxu0
    %4853 = vdwg.mxu0
    %4854 = vmatprep.subr.bf16.mxu0 0
    %4855 = vmatpush1.bf16.msra.mxu0 %v1424
    %4856 = vmatprep.subr.bf16.mxu0 0
    %4857 = vmatpush1.bf16.msra.mxu0 %v1425
    %4858 = vmatprep.subr.bf16.mxu0 0
    %4859 = vmatpush1.bf16.msra.mxu0 %v1426
    %4860 = vmatprep.subr.bf16.mxu0 0
    %4861 = vmatpush1.bf16.msra.mxu0 %v1427
    %4862 = vmatprep.subr.bf16.mxu0 0
    %4863 = vmatpush1.bf16.msra.mxu0 %v1428
    %4864 = vmatprep.subr.bf16.mxu0 0
    %4865 = vmatpush1.bf16.msra.mxu0 %v1429
    %4866 = vmatprep.subr.bf16.mxu0 0
    %4867 = vmatpush1.bf16.msra.mxu0 %v1430
    %4868 = vmatprep.subr.bf16.mxu0 0
    %4869 = vmatpush1.bf16.msra.mxu0 %v1431
    %4870 = vmatprep.subr.bf16.mxu0 0
    %4871 = vmatpush1.bf16.msra.mxu0 %v1432
    %4872 = vmatprep.subr.bf16.mxu0 0
    %4873 = vmatpush1.bf16.msra.mxu0 %v1433
    %4874 = vmatprep.subr.bf16.mxu0 0
    %4875 = vmatpush1.bf16.msra.mxu0 %v1434
    %4876 = vmatprep.subr.bf16.mxu0 0
    %4877 = vmatpush1.bf16.msra.mxu0 %v1435
    %4878 = vmatprep.subr.bf16.mxu0 0
    %4879 = vmatpush1.bf16.msra.mxu0 %v1436
    %4880 = vmatprep.subr.bf16.mxu0 0
    %4881 = vmatpush1.bf16.msra.mxu0 %v1437
    %4882 = vmatprep.subr.bf16.mxu0 0
    %4883 = vmatpush1.bf16.msra.mxu0 %v1438
    %4884 = vmatprep.subr.bf16.mxu0 0
    %4885 = vmatpush1.bf16.msra.mxu0 %v1439
    %4886 = vmatprep.mubr.bf16.mxu0 %v2955
    %4887 = vmatmul.mubr.bf16.gmra.mrb[0].mxu0 %v2954
    %v4888 = vpop.f32.mrb[0].mxu0
    %v4889 = vadd.f32 0.0, %v4888
    %v4890 = vpop.f32.mrb[0].mxu0
    %v4891 = vpop.f32.mrb[0].mxu0
    %v4892 = vadd.f32 0.0, %v4891
    %v4893 = vpop.f32.mrb[0].mxu0
    %4894 = vmatprep.mubr.bf16.mxu0 %v2957
    %4895 = vmatmul.mubr.bf16.gmra.mrb[0].mxu0 %v2956
    %v4896 = vpop.f32.mrb[0].mxu0
    %v4897 = vadd.f32 0.0, %v4896
    %v4898 = vpop.f32.mrb[0].mxu0
    %v4899 = vpop.f32.mrb[0].mxu0
    %v4900 = vadd.f32 0.0, %v4899
    %v4901 = vpop.f32.mrb[0].mxu0
    %4902 = vmatprep.mubr.bf16.mxu0 %v2959
    %4903 = vmatmul.mubr.bf16.gmra.mrb[0].mxu0 %v2958
    %v4904 = vpop.f32.mrb[0].mxu0
    %v4905 = vadd.f32 0.0, %v4904
    %v4906 = vpop.f32.mrb[0].mxu0
    %v4907 = vpop.f32.mrb[0].mxu0
    %v4908 = vadd.f32 0.0, %v4907
    %v4909 = vpop.f32.mrb[0].mxu0
    %4910 = vmatprep.mubr.bf16.mxu0 %v2961
    %4911 = vmatmul.mubr.bf16.gmra.mrb[0].mxu0 %v2960
    %v4912 = vpop.f32.mrb[0].mxu0
    %v4913 = vadd.f32 0.0, %v4912
    %v4914 = vpop.f32.mrb[0].mxu0
    %v4915 = vpop.f32.mrb[0].mxu0
    %v4916 = vadd.f32 0.0, %v4915
    %v4917 = vpop.f32.mrb[0].mxu0
    %4918 = vdwg.mxu0
    %4919 = vmatprep.subr.bf16.mxu0 0
    %4920 = vmatpush1.bf16.msra.mxu0 %v1424
    %4921 = vmatprep.subr.bf16.mxu0 0
    %4922 = vmatpush1.bf16.msra.mxu0 %v1425
    %4923 = vmatprep.subr.bf16.mxu0 0
    %4924 = vmatpush1.bf16.msra.mxu0 %v1426
    %4925 = vmatprep.subr.bf16.mxu0 0
    %4926 = vmatpush1.bf16.msra.mxu0 %v1427
    %4927 = vmatprep.subr.bf16.mxu0 0
    %4928 = vmatpush1.bf16.msra.mxu0 %v1428
    %4929 = vmatprep.subr.bf16.mxu0 0
    %4930 = vmatpush1.bf16.msra.mxu0 %v1429
    %4931 = vmatprep.subr.bf16.mxu0 0
    %4932 = vmatpush1.bf16.msra.mxu0 %v1430
    %4933 = vmatprep.subr.bf16.mxu0 0
    %4934 = vmatpush1.bf16.msra.mxu0 %v1431
    %4935 = vmatprep.subr.bf16.mxu0 0
    %4936 = vmatpush1.bf16.msra.mxu0 %v1432
    %4937 = vmatprep.subr.bf16.mxu0 0
    %4938 = vmatpush1.bf16.msra.mxu0 %v1433
    %4939 = vmatprep.subr.bf16.mxu0 0
    %4940 = vmatpush1.bf16.msra.mxu0 %v1434
    %4941 = vmatprep.subr.bf16.mxu0 0
    %4942 = vmatpush1.bf16.msra.mxu0 %v1435
    %4943 = vmatprep.subr.bf16.mxu0 0
    %4944 = vmatpush1.bf16.msra.mxu0 %v1436
    %4945 = vmatprep.subr.bf16.mxu0 0
    %4946 = vmatpush1.bf16.msra.mxu0 %v1437
    %4947 = vmatprep.subr.bf16.mxu0 0
    %4948 = vmatpush1.bf16.msra.mxu0 %v1438
    %4949 = vmatprep.subr.bf16.mxu0 0
    %4950 = vmatpush1.bf16.msra.mxu0 %v1439
    %4951 = vmatprep.mubr.bf16.mxu0 %v3069
    %4952 = vmatmul.mubr.bf16.gmra.mrb[0].mxu0 %v3068
    %v4953 = vpop.f32.mrb[0].mxu0
    %v4954 = vadd.f32 0.0, %v4953
    %v4955 = vpop.f32.mrb[0].mxu0
    %v4956 = vpop.f32.mrb[0].mxu0
    %v4957 = vadd.f32 0.0, %v4956
    %v4958 = vpop.f32.mrb[0].mxu0
    %4959 = vmatprep.mubr.bf16.mxu0 %v3071
    %4960 = vmatmul.mubr.bf16.gmra.mrb[0].mxu0 %v3070
    %v4961 = vpop.f32.mrb[0].mxu0
    %v4962 = vadd.f32 0.0, %v4961
    %v4963 = vpop.f32.mrb[0].mxu0
    %v4964 = vpop.f32.mrb[0].mxu0
    %v4965 = vadd.f32 0.0, %v4964
    %v4966 = vpop.f32.mrb[0].mxu0
    %4967 = vmatprep.mubr.bf16.mxu0 %v3073
    %4968 = vmatmul.mubr.bf16.gmra.mrb[0].mxu0 %v3072
    %v4969 = vpop.f32.mrb[0].mxu0
    %v4970 = vadd.f32 0.0, %v4969
    %v4971 = vpop.f32.mrb[0].mxu0
    %v4972 = vpop.f32.mrb[0].mxu0
    %v4973 = vadd.f32 0.0, %v4972
    %v4974 = vpop.f32.mrb[0].mxu0
    %4975 = vmatprep.mubr.bf16.mxu0 %v3075
    %4976 = vmatmul.mubr.bf16.gmra.mrb[0].mxu0 %v3074
    %v4977 = vpop.f32.mrb[0].mxu0
    %v4978 = vadd.f32 0.0, %v4977
    %v4979 = vpop.f32.mrb[0].mxu0
    %v4980 = vpop.f32.mrb[0].mxu0
    %v4981 = vadd.f32 0.0, %v4980
    %v4982 = vpop.f32.mrb[0].mxu0
    %4983 = vdwg.mxu0
    %4984 = vmatprep.subr.bf16.mxu0 0
    %4985 = vmatpush1.bf16.msra.mxu0 %v1424
    %4986 = vmatprep.subr.bf16.mxu0 0
    %4987 = vmatpush1.bf16.msra.mxu0 %v1425
    %4988 = vmatprep.subr.bf16.mxu0 0
    %4989 = vmatpush1.bf16.msra.mxu0 %v1426
    %4990 = vmatprep.subr.bf16.mxu0 0
    %4991 = vmatpush1.bf16.msra.mxu0 %v1427
    %4992 = vmatprep.subr.bf16.mxu0 0
    %4993 = vmatpush1.bf16.msra.mxu0 %v1428
    %4994 = vmatprep.subr.bf16.mxu0 0
    %4995 = vmatpush1.bf16.msra.mxu0 %v1429
    %4996 = vmatprep.subr.bf16.mxu0 0
    %4997 = vmatpush1.bf16.msra.mxu0 %v1430
    %4998 = vmatprep.subr.bf16.mxu0 0
    %4999 = vmatpush1.bf16.msra.mxu0 %v1431
    %5000 = vmatprep.subr.bf16.mxu0 0
    %5001 = vmatpush1.bf16.msra.mxu0 %v1432
    %5002 = vmatprep.subr.bf16.mxu0 0
    %5003 = vmatpush1.bf16.msra.mxu0 %v1433
    %5004 = vmatprep.subr.bf16.mxu0 0
    %5005 = vmatpush1.bf16.msra.mxu0 %v1434
    %5006 = vmatprep.subr.bf16.mxu0 0
    %5007 = vmatpush1.bf16.msra.mxu0 %v1435
    %5008 = vmatprep.subr.bf16.mxu0 0
    %5009 = vmatpush1.bf16.msra.mxu0 %v1436
    %5010 = vmatprep.subr.bf16.mxu0 0
    %5011 = vmatpush1.bf16.msra.mxu0 %v1437
    %5012 = vmatprep.subr.bf16.mxu0 0
    %5013 = vmatpush1.bf16.msra.mxu0 %v1438
    %5014 = vmatprep.subr.bf16.mxu0 0
    %5015 = vmatpush1.bf16.msra.mxu0 %v1439
    %5016 = vmatprep.mubr.bf16.mxu0 %v3183
    %5017 = vmatmul.mubr.bf16.gmra.mrb[0].mxu0 %v3182
    %v5018 = vpop.f32.mrb[0].mxu0
    %v5019 = vadd.f32 0.0, %v5018
    %v5020 = vpop.f32.mrb[0].mxu0
    %v5021 = vpop.f32.mrb[0].mxu0
    %v5022 = vadd.f32 0.0, %v5021
    %v5023 = vpop.f32.mrb[0].mxu0
    %5024 = vmatprep.mubr.bf16.mxu0 %v3185
    %5025 = vmatmul.mubr.bf16.gmra.mrb[0].mxu0 %v3184
    %v5026 = vpop.f32.mrb[0].mxu0
    %v5027 = vadd.f32 0.0, %v5026
    %v5028 = vpop.f32.mrb[0].mxu0
    %v5029 = vpop.f32.mrb[0].mxu0
    %v5030 = vadd.f32 0.0, %v5029
    %v5031 = vpop.f32.mrb[0].mxu0
    %5032 = vmatprep.mubr.bf16.mxu0 %v3187
    %5033 = vmatmul.mubr.bf16.gmra.mrb[0].mxu0 %v3186
    %v5034 = vpop.f32.mrb[0].mxu0
    %v5035 = vadd.f32 0.0, %v5034
    %v5036 = vpop.f32.mrb[0].mxu0
    %v5037 = vpop.f32.mrb[0].mxu0
    %v5038 = vadd.f32 0.0, %v5037
    %v5039 = vpop.f32.mrb[0].mxu0
    %5040 = vmatprep.mubr.bf16.mxu0 %v3189
    %5041 = vmatmul.mubr.bf16.gmra.mrb[0].mxu0 %v3188
    %v5042 = vpop.f32.mrb[0].mxu0
    %v5043 = vadd.f32 0.0, %v5042
    %v5044 = vpop.f32.mrb[0].mxu0
    %v5045 = vpop.f32.mrb[0].mxu0
    %v5046 = vadd.f32 0.0, %v5045
    %v5047 = vpop.f32.mrb[0].mxu0
    %5048 = vdwg.mxu0
    %5057 = vrot.lane.b32.xlu0 %v4109, 8
    %v5058 = vpop.permute.xlu0 %5057
    %5059 = vrot.lane.b32.xlu0 %v4112, 8
    %v5060 = vpop.permute.xlu0 %5059
    %5061 = vrot.lane.b32.xlu0 %v4117, 8
    %v5062 = vpop.permute.xlu0 %5061
    %5063 = vrot.lane.b32.xlu0 %v4120, 8
    %v5064 = vpop.permute.xlu0 %5063
    %5065 = vrot.lane.b32.xlu0 %v4125, 8
    %v5066 = vpop.permute.xlu0 %5065
    %5067 = vrot.lane.b32.xlu0 %v4128, 8
    %v5068 = vpop.permute.xlu0 %5067
    %5069 = vrot.lane.b32.xlu0 %v4133, 8
    %v5070 = vpop.permute.xlu0 %5069
    %5071 = vrot.lane.b32.xlu0 %v4136, 8
    %v5072 = vpop.permute.xlu0 %5071
    %5089 = vrot.lane.b32.xlu0 %v4174, 16
    %v5090 = vpop.permute.xlu0 %5089
    %5091 = vrot.lane.b32.xlu0 %v4177, 16
    %v5092 = vpop.permute.xlu0 %5091
    %5093 = vrot.lane.b32.xlu0 %v4182, 16
    %v5094 = vpop.permute.xlu0 %5093
    %5095 = vrot.lane.b32.xlu0 %v4185, 16
    %v5096 = vpop.permute.xlu0 %5095
    %5097 = vrot.lane.b32.xlu0 %v4190, 16
    %v5098 = vpop.permute.xlu0 %5097
    %5099 = vrot.lane.b32.xlu0 %v4193, 16
    %v5100 = vpop.permute.xlu0 %5099
    %5101 = vrot.lane.b32.xlu0 %v4198, 16
    %v5102 = vpop.permute.xlu0 %5101
    %5103 = vrot.lane.b32.xlu0 %v4201, 16
    %v5104 = vpop.permute.xlu0 %5103
    %5121 = vrot.lane.b32.xlu0 %v4239, 24
    %v5122 = vpop.permute.xlu0 %5121
    %5123 = vrot.lane.b32.xlu0 %v4242, 24
    %v5124 = vpop.permute.xlu0 %5123
    %5125 = vrot.lane.b32.xlu0 %v4247, 24
    %v5126 = vpop.permute.xlu0 %5125
    %5127 = vrot.lane.b32.xlu0 %v4250, 24
    %v5128 = vpop.permute.xlu0 %5127
    %5129 = vrot.lane.b32.xlu0 %v4255, 24
    %v5130 = vpop.permute.xlu0 %5129
    %5131 = vrot.lane.b32.xlu0 %v4258, 24
    %v5132 = vpop.permute.xlu0 %5131
    %5133 = vrot.lane.b32.xlu0 %v4263, 24
    %v5134 = vpop.permute.xlu0 %5133
    %5135 = vrot.lane.b32.xlu0 %v4266, 24
    %v5136 = vpop.permute.xlu0 %5135
    %5153 = vrot.lane.b32.xlu0 %v4304, 32
    %v5154 = vpop.permute.xlu0 %5153
    %5155 = vrot.lane.b32.xlu0 %v4307, 32
    %v5156 = vpop.permute.xlu0 %5155
    %5157 = vrot.lane.b32.xlu0 %v4312, 32
    %v5158 = vpop.permute.xlu0 %5157
    %5159 = vrot.lane.b32.xlu0 %v4315, 32
    %v5160 = vpop.permute.xlu0 %5159
    %5161 = vrot.lane.b32.xlu0 %v4320, 32
    %v5162 = vpop.permute.xlu0 %5161
    %5163 = vrot.lane.b32.xlu0 %v4323, 32
    %v5164 = vpop.permute.xlu0 %5163
    %5165 = vrot.lane.b32.xlu0 %v4328, 32
    %v5166 = vpop.permute.xlu0 %5165
    %5167 = vrot.lane.b32.xlu0 %v4331, 32
    %v5168 = vpop.permute.xlu0 %5167
    %5185 = vrot.lane.b32.xlu0 %v4369, 40
    %v5186 = vpop.permute.xlu0 %5185
    %5187 = vrot.lane.b32.xlu0 %v4372, 40
    %v5188 = vpop.permute.xlu0 %5187
    %5189 = vrot.lane.b32.xlu0 %v4377, 40
    %v5190 = vpop.permute.xlu0 %5189
    %5191 = vrot.lane.b32.xlu0 %v4380, 40
    %v5192 = vpop.permute.xlu0 %5191
    %5193 = vrot.lane.b32.xlu0 %v4385, 40
    %v5194 = vpop.permute.xlu0 %5193
    %5195 = vrot.lane.b32.xlu0 %v4388, 40
    %v5196 = vpop.permute.xlu0 %5195
    %5197 = vrot.lane.b32.xlu0 %v4393, 40
    %v5198 = vpop.permute.xlu0 %5197
    %5199 = vrot.lane.b32.xlu0 %v4396, 40
    %v5200 = vpop.permute.xlu0 %5199
    %5217 = vrot.lane.b32.xlu0 %v4434, 48
    %v5218 = vpop.permute.xlu0 %5217
    %5219 = vrot.lane.b32.xlu0 %v4437, 48
    %v5220 = vpop.permute.xlu0 %5219
    %5221 = vrot.lane.b32.xlu0 %v4442, 48
    %v5222 = vpop.permute.xlu0 %5221
    %5223 = vrot.lane.b32.xlu0 %v4445, 48
    %v5224 = vpop.permute.xlu0 %5223
    %5225 = vrot.lane.b32.xlu0 %v4450, 48
    %v5226 = vpop.permute.xlu0 %5225
    %5227 = vrot.lane.b32.xlu0 %v4453, 48
    %v5228 = vpop.permute.xlu0 %5227
    %5229 = vrot.lane.b32.xlu0 %v4458, 48
    %v5230 = vpop.permute.xlu0 %5229
    %5231 = vrot.lane.b32.xlu0 %v4461, 48
    %v5232 = vpop.permute.xlu0 %5231
    %5249 = vrot.lane.b32.xlu0 %v4499, 56
    %v5250 = vpop.permute.xlu0 %5249
    %5251 = vrot.lane.b32.xlu0 %v4502, 56
    %v5252 = vpop.permute.xlu0 %5251
    %5253 = vrot.lane.b32.xlu0 %v4507, 56
    %v5254 = vpop.permute.xlu0 %5253
    %5255 = vrot.lane.b32.xlu0 %v4510, 56
    %v5256 = vpop.permute.xlu0 %5255
    %5257 = vrot.lane.b32.xlu0 %v4515, 56
    %v5258 = vpop.permute.xlu0 %5257
    %5259 = vrot.lane.b32.xlu0 %v4518, 56
    %v5260 = vpop.permute.xlu0 %5259
    %5261 = vrot.lane.b32.xlu0 %v4523, 56
    %v5262 = vpop.permute.xlu0 %5261
    %5263 = vrot.lane.b32.xlu0 %v4526, 56
    %v5264 = vpop.permute.xlu0 %5263
    %5281 = vrot.lane.b32.xlu0 %v4564, 64
    %v5282 = vpop.permute.xlu0 %5281
    %5283 = vrot.lane.b32.xlu0 %v4567, 64
    %v5284 = vpop.permute.xlu0 %5283
    %5285 = vrot.lane.b32.xlu0 %v4572, 64
    %v5286 = vpop.permute.xlu0 %5285
    %5287 = vrot.lane.b32.xlu0 %v4575, 64
    %v5288 = vpop.permute.xlu0 %5287
    %5289 = vrot.lane.b32.xlu0 %v4580, 64
    %v5290 = vpop.permute.xlu0 %5289
    %5291 = vrot.lane.b32.xlu0 %v4583, 64
    %v5292 = vpop.permute.xlu0 %5291
    %5293 = vrot.lane.b32.xlu0 %v4588, 64
    %v5294 = vpop.permute.xlu0 %5293
    %5295 = vrot.lane.b32.xlu0 %v4591, 64
    %v5296 = vpop.permute.xlu0 %5295
    %5313 = vrot.lane.b32.xlu0 %v4629, 72
    %v5314 = vpop.permute.xlu0 %5313
    %5315 = vrot.lane.b32.xlu0 %v4632, 72
    %v5316 = vpop.permute.xlu0 %5315
    %5317 = vrot.lane.b32.xlu0 %v4637, 72
    %v5318 = vpop.permute.xlu0 %5317
    %5319 = vrot.lane.b32.xlu0 %v4640, 72
    %v5320 = vpop.permute.xlu0 %5319
    %5321 = vrot.lane.b32.xlu0 %v4645, 72
    %v5322 = vpop.permute.xlu0 %5321
    %5323 = vrot.lane.b32.xlu0 %v4648, 72
    %v5324 = vpop.permute.xlu0 %5323
    %5325 = vrot.lane.b32.xlu0 %v4653, 72
    %v5326 = vpop.permute.xlu0 %5325
    %5327 = vrot.lane.b32.xlu0 %v4656, 72
    %v5328 = vpop.permute.xlu0 %5327
    %5345 = vrot.lane.b32.xlu0 %v4694, 80
    %v5346 = vpop.permute.xlu0 %5345
    %5347 = vrot.lane.b32.xlu0 %v4697, 80
    %v5348 = vpop.permute.xlu0 %5347
    %5349 = vrot.lane.b32.xlu0 %v4702, 80
    %v5350 = vpop.permute.xlu0 %5349
    %5351 = vrot.lane.b32.xlu0 %v4705, 80
    %v5352 = vpop.permute.xlu0 %5351
    %5353 = vrot.lane.b32.xlu0 %v4710, 80
    %v5354 = vpop.permute.xlu0 %5353
    %5355 = vrot.lane.b32.xlu0 %v4713, 80
    %v5356 = vpop.permute.xlu0 %5355
    %5357 = vrot.lane.b32.xlu0 %v4718, 80
    %v5358 = vpop.permute.xlu0 %5357
    %5359 = vrot.lane.b32.xlu0 %v4721, 80
    %v5360 = vpop.permute.xlu0 %5359
    %5377 = vrot.lane.b32.xlu0 %v4759, 88
    %v5378 = vpop.permute.xlu0 %5377
    %5379 = vrot.lane.b32.xlu0 %v4762, 88
    %v5380 = vpop.permute.xlu0 %5379
    %5381 = vrot.lane.b32.xlu0 %v4767, 88
    %v5382 = vpop.permute.xlu0 %5381
    %5383 = vrot.lane.b32.xlu0 %v4770, 88
    %v5384 = vpop.permute.xlu0 %5383
    %5385 = vrot.lane.b32.xlu0 %v4775, 88
    %v5386 = vpop.permute.xlu0 %5385
    %5387 = vrot.lane.b32.xlu0 %v4778, 88
    %v5388 = vpop.permute.xlu0 %5387
    %5389 = vrot.lane.b32.xlu0 %v4783, 88
    %v5390 = vpop.permute.xlu0 %5389
    %5391 = vrot.lane.b32.xlu0 %v4786, 88
    %v5392 = vpop.permute.xlu0 %5391
    %5409 = vrot.lane.b32.xlu0 %v4824, 96
    %v5410 = vpop.permute.xlu0 %5409
    %5411 = vrot.lane.b32.xlu0 %v4827, 96
    %v5412 = vpop.permute.xlu0 %5411
    %5413 = vrot.lane.b32.xlu0 %v4832, 96
    %v5414 = vpop.permute.xlu0 %5413
    %5415 = vrot.lane.b32.xlu0 %v4835, 96
    %v5416 = vpop.permute.xlu0 %5415
    %5417 = vrot.lane.b32.xlu0 %v4840, 96
    %v5418 = vpop.permute.xlu0 %5417
    %5419 = vrot.lane.b32.xlu0 %v4843, 96
    %v5420 = vpop.permute.xlu0 %5419
    %5421 = vrot.lane.b32.xlu0 %v4848, 96
    %v5422 = vpop.permute.xlu0 %5421
    %5423 = vrot.lane.b32.xlu0 %v4851, 96
    %v5424 = vpop.permute.xlu0 %5423
    %5441 = vrot.lane.b32.xlu0 %v4889, 104
    %v5442 = vpop.permute.xlu0 %5441
    %5443 = vrot.lane.b32.xlu0 %v4892, 104
    %v5444 = vpop.permute.xlu0 %5443
    %5445 = vrot.lane.b32.xlu0 %v4897, 104
    %v5446 = vpop.permute.xlu0 %5445
    %5447 = vrot.lane.b32.xlu0 %v4900, 104
    %v5448 = vpop.permute.xlu0 %5447
    %5449 = vrot.lane.b32.xlu0 %v4905, 104
    %v5450 = vpop.permute.xlu0 %5449
    %5451 = vrot.lane.b32.xlu0 %v4908, 104
    %v5452 = vpop.permute.xlu0 %5451
    %5453 = vrot.lane.b32.xlu0 %v4913, 104
    %v5454 = vpop.permute.xlu0 %5453
    %5455 = vrot.lane.b32.xlu0 %v4916, 104
    %v5456 = vpop.permute.xlu0 %5455
    %5473 = vrot.lane.b32.xlu0 %v4954, 112
    %v5474 = vpop.permute.xlu0 %5473
    %5475 = vrot.lane.b32.xlu0 %v4957, 112
    %v5476 = vpop.permute.xlu0 %5475
    %5477 = vrot.lane.b32.xlu0 %v4962, 112
    %v5478 = vpop.permute.xlu0 %5477
    %5479 = vrot.lane.b32.xlu0 %v4965, 112
    %v5480 = vpop.permute.xlu0 %5479
    %5481 = vrot.lane.b32.xlu0 %v4970, 112
    %v5482 = vpop.permute.xlu0 %5481
    %5483 = vrot.lane.b32.xlu0 %v4973, 112
    %v5484 = vpop.permute.xlu0 %5483
    %5485 = vrot.lane.b32.xlu0 %v4978, 112
    %v5486 = vpop.permute.xlu0 %5485
    %5487 = vrot.lane.b32.xlu0 %v4981, 112
    %v5488 = vpop.permute.xlu0 %5487
    %5505 = vrot.lane.b32.xlu0 %v5019, 120
    %v5506 = vpop.permute.xlu0 %5505
    %5507 = vrot.lane.b32.xlu0 %v5022, 120
    %v5508 = vpop.permute.xlu0 %5507
    %5509 = vrot.lane.b32.xlu0 %v5027, 120
    %v5510 = vpop.permute.xlu0 %5509
    %5511 = vrot.lane.b32.xlu0 %v5030, 120
    %v5512 = vpop.permute.xlu0 %5511
    %5513 = vrot.lane.b32.xlu0 %v5035, 120
    %v5514 = vpop.permute.xlu0 %5513
    %5515 = vrot.lane.b32.xlu0 %v5038, 120
    %v5516 = vpop.permute.xlu0 %5515
    %5517 = vrot.lane.b32.xlu0 %v5043, 120
    %v5518 = vpop.permute.xlu0 %5517
    %5519 = vrot.lane.b32.xlu0 %v5046, 120
    %v5520 = vpop.permute.xlu0 %5519
    %v5529 = vsel %vm678, %v4044, %v5058
    %v5530 = vsel %vm678, %v4047, %v5060
    %v5531 = vsel %vm678, %v4052, %v5062
    %v5532 = vsel %vm678, %v4055, %v5064
    %v5533 = vsel %vm678, %v4060, %v5066
    %v5534 = vsel %vm678, %v4063, %v5068
    %v5535 = vsel %vm678, %v4068, %v5070
    %v5536 = vsel %vm678, %v4071, %v5072
    %v5537 = vsel %vm3751, %v5529, %v5090
    %v5538 = vsel %vm3751, %v5530, %v5092
    %v5539 = vsel %vm3751, %v5531, %v5094
    %v5540 = vsel %vm3751, %v5532, %v5096
    %v5541 = vsel %vm3751, %v5533, %v5098
    %v5542 = vsel %vm3751, %v5534, %v5100
    %v5543 = vsel %vm3751, %v5535, %v5102
    %v5544 = vsel %vm3751, %v5536, %v5104
    %v5545 = vsel %vm3760, %v5537, %v5122
    %v5546 = vsel %vm3760, %v5538, %v5124
    %v5547 = vsel %vm3760, %v5539, %v5126
    %v5548 = vsel %vm3760, %v5540, %v5128
    %v5549 = vsel %vm3760, %v5541, %v5130
    %v5550 = vsel %vm3760, %v5542, %v5132
    %v5551 = vsel %vm3760, %v5543, %v5134
    %v5552 = vsel %vm3760, %v5544, %v5136
    %v5553 = vsel %vm3769, %v5545, %v5154
    %v5554 = vsel %vm3769, %v5546, %v5156
    %v5555 = vsel %vm3769, %v5547, %v5158
    %v5556 = vsel %vm3769, %v5548, %v5160
    %v5557 = vsel %vm3769, %v5549, %v5162
    %v5558 = vsel %vm3769, %v5550, %v5164
    %v5559 = vsel %vm3769, %v5551, %v5166
    %v5560 = vsel %vm3769, %v5552, %v5168
    %v5561 = vsel %vm3778, %v5553, %v5186
    %v5562 = vsel %vm3778, %v5554, %v5188
    %v5563 = vsel %vm3778, %v5555, %v5190
    %v5564 = vsel %vm3778, %v5556, %v5192
    %v5565 = vsel %vm3778, %v5557, %v5194
    %v5566 = vsel %vm3778, %v5558, %v5196
    %v5567 = vsel %vm3778, %v5559, %v5198
    %v5568 = vsel %vm3778, %v5560, %v5200
    %v5569 = vsel %vm3787, %v5561, %v5218
    %v5570 = vsel %vm3787, %v5562, %v5220
    %v5571 = vsel %vm3787, %v5563, %v5222
    %v5572 = vsel %vm3787, %v5564, %v5224
    %v5573 = vsel %vm3787, %v5565, %v5226
    %v5574 = vsel %vm3787, %v5566, %v5228
    %v5575 = vsel %vm3787, %v5567, %v5230
    %v5576 = vsel %vm3787, %v5568, %v5232
    %v5577 = vsel %vm3796, %v5569, %v5250
    %v5578 = vsel %vm3796, %v5570, %v5252
    %v5579 = vsel %vm3796, %v5571, %v5254
    %v5580 = vsel %vm3796, %v5572, %v5256
    %v5581 = vsel %vm3796, %v5573, %v5258
    %v5582 = vsel %vm3796, %v5574, %v5260
    %v5583 = vsel %vm3796, %v5575, %v5262
    %v5584 = vsel %vm3796, %v5576, %v5264
    %v5585 = vsel %vm290, %v5577, %v5282
    %v5586 = vsel %vm290, %v5578, %v5284
    %v5587 = vsel %vm290, %v5579, %v5286
    %v5588 = vsel %vm290, %v5580, %v5288
    %v5589 = vsel %vm290, %v5581, %v5290
    %v5590 = vsel %vm290, %v5582, %v5292
    %v5591 = vsel %vm290, %v5583, %v5294
    %v5592 = vsel %vm290, %v5584, %v5296
    %v5593 = vsel %vm3813, %v5585, %v5314
    %v5594 = vsel %vm3813, %v5586, %v5316
    %v5595 = vsel %vm3813, %v5587, %v5318
    %v5596 = vsel %vm3813, %v5588, %v5320
    %v5597 = vsel %vm3813, %v5589, %v5322
    %v5598 = vsel %vm3813, %v5590, %v5324
    %v5599 = vsel %vm3813, %v5591, %v5326
    %v5600 = vsel %vm3813, %v5592, %v5328
    %v5601 = vsel %vm3822, %v5593, %v5346
    %v5602 = vsel %vm3822, %v5594, %v5348
    %v5603 = vsel %vm3822, %v5595, %v5350
    %v5604 = vsel %vm3822, %v5596, %v5352
    %v5605 = vsel %vm3822, %v5597, %v5354
    %v5606 = vsel %vm3822, %v5598, %v5356
    %v5607 = vsel %vm3822, %v5599, %v5358
    %v5608 = vsel %vm3822, %v5600, %v5360
    %v5609 = vsel %vm3831, %v5601, %v5378
    %v5610 = vsel %vm3831, %v5602, %v5380
    %v5611 = vsel %vm3831, %v5603, %v5382
    %v5612 = vsel %vm3831, %v5604, %v5384
    %v5613 = vsel %vm3831, %v5605, %v5386
    %v5614 = vsel %vm3831, %v5606, %v5388
    %v5615 = vsel %vm3831, %v5607, %v5390
    %v5616 = vsel %vm3831, %v5608, %v5392
    %v5617 = vsel %vm3840, %v5609, %v5410
    %v5618 = vsel %vm3840, %v5610, %v5412
    %v5619 = vsel %vm3840, %v5611, %v5414
    %v5620 = vsel %vm3840, %v5612, %v5416
    %v5621 = vsel %vm3840, %v5613, %v5418
    %v5622 = vsel %vm3840, %v5614, %v5420
    %v5623 = vsel %vm3840, %v5615, %v5422
    %v5624 = vsel %vm3840, %v5616, %v5424
    %v5625 = vsel %vm3849, %v5617, %v5442
    %v5626 = vsel %vm3849, %v5618, %v5444
    %v5627 = vsel %vm3849, %v5619, %v5446
    %v5628 = vsel %vm3849, %v5620, %v5448
    %v5629 = vsel %vm3849, %v5621, %v5450
    %v5630 = vsel %vm3849, %v5622, %v5452
    %v5631 = vsel %vm3849, %v5623, %v5454
    %v5632 = vsel %vm3849, %v5624, %v5456
    %v5633 = vsel %vm3858, %v5625, %v5474
    %v5634 = vsel %vm3858, %v5626, %v5476
    %v5635 = vsel %vm3858, %v5627, %v5478
    %v5636 = vsel %vm3858, %v5628, %v5480
    %v5637 = vsel %vm3858, %v5629, %v5482
    %v5638 = vsel %vm3858, %v5630, %v5484
    %v5639 = vsel %vm3858, %v5631, %v5486
    %v5640 = vsel %vm3858, %v5632, %v5488
    %v5641 = vsel %vm3867, %v5633, %v5506
    %v5642 = vsel %vm3867, %v5634, %v5508
    %v5643 = vsel %vm3867, %v5635, %v5510
    %v5644 = vsel %vm3867, %v5636, %v5512
    %v5645 = vsel %vm3867, %v5637, %v5514
    %v5646 = vsel %vm3867, %v5638, %v5516
    %v5647 = vsel %vm3867, %v5639, %v5518
    %v5648 = vsel %vm3867, %v5640, %v5520
    %v5649 = vpack.c.bf16 %v5642, %v5641
    %v5650 = vpack.c.bf16 %v5644, %v5643
    %v5651 = vpack.c.bf16 %v5646, %v5645
    %v5652 = vpack.c.bf16 %v5648, %v5647
    %5653 = vmatprep.subr.bf16.mxu0 0
    %5654 = vmatpush1.bf16.msra.mxu0 %v3928
    %5655 = vmatprep.subr.bf16.mxu0 0
    %5656 = vmatpush1.bf16.msra.mxu0 %v3929
    %5657 = vmatprep.subr.bf16.mxu0 0
    %5658 = vmatpush1.bf16.msra.mxu0 %v3930
    %5659 = vmatprep.subr.bf16.mxu0 0
    %5660 = vmatpush1.bf16.msra.mxu0 %v3931
    %5661 = vmatprep.subr.bf16.mxu0 0
    %5662 = vmatpush1.bf16.msra.mxu0 %v3932
    %5663 = vmatprep.subr.bf16.mxu0 0
    %5664 = vmatpush1.bf16.msra.mxu0 %v3933
    %5665 = vmatprep.subr.bf16.mxu0 0
    %5666 = vmatpush1.bf16.msra.mxu0 %v3934
    %5667 = vmatprep.subr.bf16.mxu0 0
    %5668 = vmatpush1.bf16.msra.mxu0 %v3935
    %5669 = vmatprep.subr.bf16.mxu0 0
    %5670 = vmatpush1.bf16.msra.mxu0 0
    %5671 = vmatprep.subr.bf16.mxu0 0
    %5672 = vmatpush1.bf16.msra.mxu0 0
    %5673 = vmatprep.subr.bf16.mxu0 0
    %5674 = vmatpush1.bf16.msra.mxu0 0
    %5675 = vmatprep.subr.bf16.mxu0 0
    %5676 = vmatpush1.bf16.msra.mxu0 0
    %5677 = vmatprep.subr.bf16.mxu0 0
    %5678 = vmatpush1.bf16.msra.mxu0 0
    %5679 = vmatprep.subr.bf16.mxu0 0
    %5680 = vmatpush1.bf16.msra.mxu0 0
    %5681 = vmatprep.subr.bf16.mxu0 0
    %5682 = vmatpush1.bf16.msra.mxu0 0
    %5683 = vmatprep.subr.bf16.mxu0 0
    %5684 = vmatpush1.bf16.msra.mxu0 0
    %5685 = vmatprep.mubr.bf16.mxu0 0
    %5686 = vmatmul.mubr.bf16.gmra.mrb[0].mxu0 %v5649
    %v5687 = vpop.f32.mrb[0].mxu0
    %v5688 = vadd.f32 0.0, %v5687
    %v5689 = vpop.f32.mrb[0].mxu0
    %v5690 = vpop.f32.mrb[0].mxu0
    %v5691 = vadd.f32 0.0, %v5690
    %v5692 = vpop.f32.mrb[0].mxu0
    %5693 = vmatprep.mubr.bf16.mxu0 0
    %5694 = vmatmul.mubr.bf16.gmra.mrb[0].mxu0 %v5650
    %v5695 = vpop.f32.mrb[0].mxu0
    %v5696 = vadd.f32 0.0, %v5695
    %v5697 = vpop.f32.mrb[0].mxu0
    %v5698 = vpop.f32.mrb[0].mxu0
    %v5699 = vadd.f32 0.0, %v5698
    %v5700 = vpop.f32.mrb[0].mxu0
    %5701 = vmatprep.mubr.bf16.mxu0 0
    %5702 = vmatmul.mubr.bf16.gmra.mrb[0].mxu0 %v5651
    %v5703 = vpop.f32.mrb[0].mxu0
    %v5704 = vadd.f32 0.0, %v5703
    %v5705 = vpop.f32.mrb[0].mxu0
    %v5706 = vpop.f32.mrb[0].mxu0
    %v5707 = vadd.f32 0.0, %v5706
    %v5708 = vpop.f32.mrb[0].mxu0
    %5709 = vmatprep.mubr.bf16.mxu0 0
    %5710 = vmatmul.mubr.bf16.gmra.mrb[0].mxu0 %v5652
    %v5711 = vpop.f32.mrb[0].mxu0
    %v5712 = vadd.f32 0.0, %v5711
    %v5713 = vpop.f32.mrb[0].mxu0
    %v5714 = vpop.f32.mrb[0].mxu0
    %v5715 = vadd.f32 0.0, %v5714
    %v5716 = vpop.f32.mrb[0].mxu0
    %5717 = vdwg.mxu0
    %v5718 = vld [vmem:[%s8 + $0x2] sm:$0x1]
    %v5719 = vld [vmem:[%s8 + $0x3] sm:$0x1]
    %v5720 = vsel %vm3751, %v3979, 0.0
    %v5721 = vsel %vm3751, %v3982, 0.0
    %v5722 = vadd.f32 %v5720, %v5721
    %v5723 = vsel %vm3751, %v3987, 0.0
    %v5724 = vadd.f32 %v5722, %v5723
    %v5725 = vsel %vm3751, %v3990, 0.0
    %v5726 = vadd.f32 %v5724, %v5725
    %v5727 = vsel %vm3751, %v3995, 0.0
    %v5728 = vadd.f32 %v5726, %v5727
    %v5729 = vsel %vm3751, %v3998, 0.0
    %v5730 = vadd.f32 %v5728, %v5729
    %v5731 = vsel %vm3751, %v4003, 0.0
    %v5732 = vadd.f32 %v5730, %v5731
    %v5733 = vsel %vm3751, %v4006, 0.0
    %v5734 = vadd.f32 %v5732, %v5733
    %v5735 = vsel %vm3751, %v5688, 0.0
    %v5736 = vadd.f32 %v5734, %v5735
    %v5737 = vsel %vm3751, %v5691, 0.0
    %v5738 = vadd.f32 %v5736, %v5737
    %v5739 = vsel %vm3751, %v5696, 0.0
    %v5740 = vadd.f32 %v5738, %v5739
    %v5741 = vsel %vm3751, %v5699, 0.0
    %v5742 = vadd.f32 %v5740, %v5741
    %v5743 = vsel %vm3751, %v5704, 0.0
    %v5744 = vadd.f32 %v5742, %v5743
    %v5745 = vsel %vm3751, %v5707, 0.0
    %v5746 = vadd.f32 %v5744, %v5745
    %v5747 = vsel %vm3751, %v5712, 0.0
    %v5748 = vadd.f32 %v5746, %v5747
    %v5749 = vsel %vm3751, %v5715, 0.0
    %v5750 = vadd.f32 %v5748, %v5749
    %v5751 = vrot.slane %v5750, 4
    %v5752 = vadd.f32 %v5750, %v5751
    %v5753 = vrot.slane %v5752, 2
    %v5754 = vadd.f32 %v5752, %v5753
    %v5755 = vrot.slane %v5754, 1
    %v5756 = vadd.f32 %v5754, %v5755
    %v5757 = vmul.f32 %v5756, 0.0078125
    %v5758 = vmul.f32 %v3979, %v3979
    %v5759 = vmul.f32 %v3982, %v3982
    %v5760 = vmul.f32 %v3987, %v3987
    %v5761 = vmul.f32 %v3990, %v3990
    %v5762 = vmul.f32 %v3995, %v3995
    %v5763 = vmul.f32 %v3998, %v3998
    %v5764 = vmul.f32 %v4003, %v4003
    %v5765 = vmul.f32 %v4006, %v4006
    %v5766 = vmul.f32 %v5688, %v5688
    %v5767 = vmul.f32 %v5691, %v5691
    %v5768 = vmul.f32 %v5696, %v5696
    %v5769 = vmul.f32 %v5699, %v5699
    %v5770 = vmul.f32 %v5704, %v5704
    %v5771 = vmul.f32 %v5707, %v5707
    %v5772 = vmul.f32 %v5712, %v5712
    %v5773 = vmul.f32 %v5715, %v5715
    %v5774 = vsel %vm3751, %v5758, 0.0
    %v5775 = vsel %vm3751, %v5759, 0.0
    %v5776 = vadd.f32 %v5774, %v5775
    %v5777 = vsel %vm3751, %v5760, 0.0
    %v5778 = vadd.f32 %v5776, %v5777
    %v5779 = vsel %vm3751, %v5761, 0.0
    %v5780 = vadd.f32 %v5778, %v5779
    %v5781 = vsel %vm3751, %v5762, 0.0
    %v5782 = vadd.f32 %v5780, %v5781
    %v5783 = vsel %vm3751, %v5763, 0.0
    %v5784 = vadd.f32 %v5782, %v5783
    %v5785 = vsel %vm3751, %v5764, 0.0
    %v5786 = vadd.f32 %v5784, %v5785
    %v5787 = vsel %vm3751, %v5765, 0.0
    %v5788 = vadd.f32 %v5786, %v5787
    %v5789 = vsel %vm3751, %v5766, 0.0
    %v5790 = vadd.f32 %v5788, %v5789
    %v5791 = vsel %vm3751, %v5767, 0.0
    %v5792 = vadd.f32 %v5790, %v5791
    %v5793 = vsel %vm3751, %v5768, 0.0
    %v5794 = vadd.f32 %v5792, %v5793
    %v5795 = vsel %vm3751, %v5769, 0.0
    %v5796 = vadd.f32 %v5794, %v5795
    %v5797 = vsel %vm3751, %v5770, 0.0
    %v5798 = vadd.f32 %v5796, %v5797
    %v5799 = vsel %vm3751, %v5771, 0.0
    %v5800 = vadd.f32 %v5798, %v5799
    %v5801 = vsel %vm3751, %v5772, 0.0
    %v5802 = vadd.f32 %v5800, %v5801
    %v5803 = vsel %vm3751, %v5773, 0.0
    %v5804 = vadd.f32 %v5802, %v5803
    %v5805 = vrot.slane %v5804, 4
    %v5806 = vadd.f32 %v5804, %v5805
    %v5807 = vrot.slane %v5806, 2
    %v5808 = vadd.f32 %v5806, %v5807
    %v5809 = vrot.slane %v5808, 1
    %v5810 = vadd.f32 %v5808, %v5809
    %v5811 = vmul.f32 %v5810, 0.0078125
    %v5812 = vmul.f32 %v5757, %v5757
    %v5813 = vsub.f32 %v5811, %v5812
    %v5814 = vsub.f32 %v3979, %v5757
    %v5815 = vsub.f32 %v3982, %v5757
    %v5816 = vsub.f32 %v3987, %v5757
    %v5817 = vsub.f32 %v3990, %v5757
    %v5818 = vsub.f32 %v3995, %v5757
    %v5819 = vsub.f32 %v3998, %v5757
    %v5820 = vsub.f32 %v4003, %v5757
    %v5821 = vsub.f32 %v4006, %v5757
    %v5822 = vsub.f32 %v5688, %v5757
    %v5823 = vsub.f32 %v5691, %v5757
    %v5824 = vsub.f32 %v5696, %v5757
    %v5825 = vsub.f32 %v5699, %v5757
    %v5826 = vsub.f32 %v5704, %v5757
    %v5827 = vsub.f32 %v5707, %v5757
    %v5828 = vsub.f32 %v5712, %v5757
    %v5829 = vsub.f32 %v5715, %v5757
    %v5830 = vadd.f32 %v5813, 1e-05
    %v5831 = vrsqrt.pop %v5830
    %v5832 = vmul.f32 %v5831, %v5718
    %v5833 = vlaneseq
    %v5834 = vshrl.u32 %v5833, 7
    %v5835 = vsub.s32 0, %v5834
    %v5836 = vrot.slane %v5832, %v5835
    %v5837 = vmul.f32 %v5814, %v5836
    %v5838 = vmul.f32 %v5815, %v5836
    %v5839 = vmul.f32 %v5816, %v5836
    %v5840 = vmul.f32 %v5817, %v5836
    %v5841 = vmul.f32 %v5818, %v5836
    %v5842 = vmul.f32 %v5819, %v5836
    %v5843 = vmul.f32 %v5820, %v5836
    %v5844 = vmul.f32 %v5821, %v5836
    %v5845 = vmul.f32 %v5822, %v5836
    %v5846 = vmul.f32 %v5823, %v5836
    %v5847 = vmul.f32 %v5824, %v5836
    %v5848 = vmul.f32 %v5825, %v5836
    %v5849 = vmul.f32 %v5826, %v5836
    %v5850 = vmul.f32 %v5827, %v5836
    %v5851 = vmul.f32 %v5828, %v5836
    %v5852 = vmul.f32 %v5829, %v5836
    %v5853 = vlaneseq
    %v5854 = vshrl.u32 %v5853, 7
    %v5855 = vsub.s32 0, %v5854
    %v5856 = vrot.slane %v5719, %v5855
    %v5857 = vadd.f32 %v5837, %v5856
    %v5858 = vadd.f32 %v5838, %v5856
    %v5859 = vadd.f32 %v5839, %v5856
    %v5860 = vadd.f32 %v5840, %v5856
    %v5861 = vadd.f32 %v5841, %v5856
    %v5862 = vadd.f32 %v5842, %v5856
    %v5863 = vadd.f32 %v5843, %v5856
    %v5864 = vadd.f32 %v5844, %v5856
    %v5865 = vadd.f32 %v5845, %v5856
    %v5866 = vadd.f32 %v5846, %v5856
    %v5867 = vadd.f32 %v5847, %v5856
    %v5868 = vadd.f32 %v5848, %v5856
    %v5869 = vadd.f32 %v5849, %v5856
    %v5870 = vadd.f32 %v5850, %v5856
    %v5871 = vadd.f32 %v5851, %v5856
    %v5872 = vadd.f32 %v5852, %v5856
    %vm5873 = vcmp.gt.f32.partialorder %v5857, 0.0
    %vm5874 = vcmp.gt.f32.partialorder %v5858, 0.0
    %vm5875 = vcmp.gt.f32.partialorder %v5859, 0.0
    %vm5876 = vcmp.gt.f32.partialorder %v5860, 0.0
    %vm5877 = vcmp.gt.f32.partialorder %v5861, 0.0
    %vm5878 = vcmp.gt.f32.partialorder %v5862, 0.0
    %vm5879 = vcmp.gt.f32.partialorder %v5863, 0.0
    %vm5880 = vcmp.gt.f32.partialorder %v5864, 0.0
    %vm5881 = vcmp.gt.f32.partialorder %v5865, 0.0
    %vm5882 = vcmp.gt.f32.partialorder %v5866, 0.0
    %vm5883 = vcmp.gt.f32.partialorder %v5867, 0.0
    %vm5884 = vcmp.gt.f32.partialorder %v5868, 0.0
    %vm5885 = vcmp.gt.f32.partialorder %v5869, 0.0
    %vm5886 = vcmp.gt.f32.partialorder %v5870, 0.0
    %vm5887 = vcmp.gt.f32.partialorder %v5871, 0.0
    %vm5888 = vcmp.gt.f32.partialorder %v5872, 0.0
    %v5889 = vmul.f32 %v5857, 0.2
    %v5890 = vmul.f32 %v5858, 0.2
    %v5891 = vmul.f32 %v5859, 0.2
    %v5892 = vmul.f32 %v5860, 0.2
    %v5893 = vmul.f32 %v5861, 0.2
    %v5894 = vmul.f32 %v5862, 0.2
    %v5895 = vmul.f32 %v5863, 0.2
    %v5896 = vmul.f32 %v5864, 0.2
    %v5897 = vmul.f32 %v5865, 0.2
    %v5898 = vmul.f32 %v5866, 0.2
    %v5899 = vmul.f32 %v5867, 0.2
    %v5900 = vmul.f32 %v5868, 0.2
    %v5901 = vmul.f32 %v5869, 0.2
    %v5902 = vmul.f32 %v5870, 0.2
    %v5903 = vmul.f32 %v5871, 0.2
    %v5904 = vmul.f32 %v5872, 0.2
    %v5905 = vsel %vm5873, %v5857, %v5889
    %v5906 = vsel %vm5874, %v5858, %v5890
    %v5907 = vsel %vm5875, %v5859, %v5891
    %v5908 = vsel %vm5876, %v5860, %v5892
    %v5909 = vsel %vm5877, %v5861, %v5893
    %v5910 = vsel %vm5878, %v5862, %v5894
    %v5911 = vsel %vm5879, %v5863, %v5895
    %v5912 = vsel %vm5880, %v5864, %v5896
    %v5913 = vsel %vm5881, %v5865, %v5897
    %v5914 = vsel %vm5882, %v5866, %v5898
    %v5915 = vsel %vm5883, %v5867, %v5899
    %v5916 = vsel %vm5884, %v5868, %v5900
    %v5917 = vsel %vm5885, %v5869, %v5901
    %v5918 = vsel %vm5886, %v5870, %v5902
    %v5919 = vsel %vm5887, %v5871, %v5903
    %v5920 = vsel %vm5888, %v5872, %v5904
    %v5921 = vpack.c.bf16 %v5906, %v5905
    %v5922 = vpack.c.bf16 %v5908, %v5907
    %v5923 = vpack.c.bf16 %v5910, %v5909
    %v5924 = vpack.c.bf16 %v5912, %v5911
    %v5925 = vpack.c.bf16 %v5914, %v5913
    %v5926 = vpack.c.bf16 %v5916, %v5915
    %v5927 = vpack.c.bf16 %v5918, %v5917
    %v5928 = vpack.c.bf16 %v5920, %v5919
    %v5929 = vld [vmem:[%s6] sm:$0xf]
    %v5930 = vld [vmem:[%s6 + $0x4] sm:$0xf]
    %v5933 = vunpack.c.l.b16 %v5929
    %v5934 = vunpack.c.l.b16 %v5930
    %v5935 = vpack.c.b16 %v5934, %v5933
    %v5937 = vsel %vm290, %v5935, 0
    %5939 = vmatprep.subr.bf16.mxu0 0
    %5940 = vmatpush1.bf16.msra.mxu0 %v5921
    %5941 = vmatprep.subr.bf16.mxu0 0
    %5942 = vmatpush1.bf16.msra.mxu0 %v5922
    %5943 = vmatprep.subr.bf16.mxu0 0
    %5944 = vmatpush1.bf16.msra.mxu0 %v5923
    %5945 = vmatprep.subr.bf16.mxu0 0
    %5946 = vmatpush1.bf16.msra.mxu0 %v5924
    %5947 = vmatprep.subr.bf16.mxu0 0
    %5948 = vmatpush1.bf16.msra.mxu0 0
    %5949 = vmatprep.subr.bf16.mxu0 0
    %5950 = vmatpush1.bf16.msra.mxu0 0
    %5951 = vmatprep.subr.bf16.mxu0 0
    %5952 = vmatpush1.bf16.msra.mxu0 0
    %5953 = vmatprep.subr.bf16.mxu0 0
    %5954 = vmatpush1.bf16.msra.mxu0 0
    %5955 = vmatprep.subr.bf16.mxu0 0
    %5956 = vmatpush1.bf16.msra.mxu0 0
    %5957 = vmatprep.subr.bf16.mxu0 0
    %5958 = vmatpush1.bf16.msra.mxu0 0
    %5959 = vmatprep.subr.bf16.mxu0 0
    %5960 = vmatpush1.bf16.msra.mxu0 0
    %5961 = vmatprep.subr.bf16.mxu0 0
    %5962 = vmatpush1.bf16.msra.mxu0 0
    %5963 = vmatprep.subr.bf16.mxu0 0
    %5964 = vmatpush1.bf16.msra.mxu0 0
    %5965 = vmatprep.subr.bf16.mxu0 0
    %5966 = vmatpush1.bf16.msra.mxu0 0
    %5967 = vmatprep.subr.bf16.mxu0 0
    %5968 = vmatpush1.bf16.msra.mxu0 0
    %5969 = vmatprep.subr.bf16.mxu0 0
    %5970 = vmatpush1.bf16.msra.mxu0 0
    %5971 = vmatprep.mubr.bf16.mxu0 0
    %5972 = vmatmul.mubr.bf16.gmra.mrb[0].mxu0 %v5937
    %v5973 = vpop.f32.mrb[0].mxu0
    %v5974 = vadd.f32 0.0, %v5973
    %v5975 = vpop.f32.mrb[0].mxu0
    %v5976 = vpop.f32.mrb[0].mxu0
    %v5977 = vadd.f32 0.0, %v5976
    %v5978 = vpop.f32.mrb[0].mxu0
    %5979 = vdwg.mxu0
    %s5980 = scalar_lea.vmem %s6, 8
    %v5981 = vld [vmem:[%s5980] sm:$0xf]
    %v5982 = vld [vmem:[%s5980 + $0x4] sm:$0xf]
    %v5985 = vunpack.c.l.b16 %v5981
    %v5986 = vunpack.c.l.b16 %v5982
    %v5987 = vpack.c.b16 %v5986, %v5985
    %v5989 = vsel %vm290, %v5987, 0
    %5991 = vmatprep.subr.bf16.mxu0 0
    %5992 = vmatpush1.bf16.msra.mxu0 %v5921
    %5993 = vmatprep.subr.bf16.mxu0 0
    %5994 = vmatpush1.bf16.msra.mxu0 %v5922
    %5995 = vmatprep.subr.bf16.mxu0 0
    %5996 = vmatpush1.bf16.msra.mxu0 %v5923
    %5997 = vmatprep.subr.bf16.mxu0 0
    %5998 = vmatpush1.bf16.msra.mxu0 %v5924
    %5999 = vmatprep.subr.bf16.mxu0 0
    %6000 = vmatpush1.bf16.msra.mxu0 0
    %6001 = vmatprep.subr.bf16.mxu0 0
    %6002 = vmatpush1.bf16.msra.mxu0 0
    %6003 = vmatprep.subr.bf16.mxu0 0
    %6004 = vmatpush1.bf16.msra.mxu0 0
    %6005 = vmatprep.subr.bf16.mxu0 0
    %6006 = vmatpush1.bf16.msra.mxu0 0
    %6007 = vmatprep.subr.bf16.mxu0 0
    %6008 = vmatpush1.bf16.msra.mxu0 0
    %6009 = vmatprep.subr.bf16.mxu0 0
    %6010 = vmatpush1.bf16.msra.mxu0 0
    %6011 = vmatprep.subr.bf16.mxu0 0
    %6012 = vmatpush1.bf16.msra.mxu0 0
    %6013 = vmatprep.subr.bf16.mxu0 0
    %6014 = vmatpush1.bf16.msra.mxu0 0
    %6015 = vmatprep.subr.bf16.mxu0 0
    %6016 = vmatpush1.bf16.msra.mxu0 0
    %6017 = vmatprep.subr.bf16.mxu0 0
    %6018 = vmatpush1.bf16.msra.mxu0 0
    %6019 = vmatprep.subr.bf16.mxu0 0
    %6020 = vmatpush1.bf16.msra.mxu0 0
    %6021 = vmatprep.subr.bf16.mxu0 0
    %6022 = vmatpush1.bf16.msra.mxu0 0
    %6023 = vmatprep.mubr.bf16.mxu0 0
    %6024 = vmatmul.mubr.bf16.gmra.mrb[0].mxu0 %v5989
    %v6025 = vpop.f32.mrb[0].mxu0
    %v6026 = vadd.f32 0.0, %v6025
    %v6027 = vpop.f32.mrb[0].mxu0
    %v6028 = vpop.f32.mrb[0].mxu0
    %v6029 = vadd.f32 0.0, %v6028
    %v6030 = vpop.f32.mrb[0].mxu0
    %6031 = vdwg.mxu0
    %s6032 = scalar_lea.vmem %s6, 16
    %v6033 = vld [vmem:[%s6032] sm:$0xf]
    %v6034 = vld [vmem:[%s6032 + $0x4] sm:$0xf]
    %v6037 = vunpack.c.l.b16 %v6033
    %v6038 = vunpack.c.l.b16 %v6034
    %v6039 = vpack.c.b16 %v6038, %v6037
    %v6041 = vsel %vm290, %v6039, 0
    %6043 = vmatprep.subr.bf16.mxu0 0
    %6044 = vmatpush1.bf16.msra.mxu0 %v5921
    %6045 = vmatprep.subr.bf16.mxu0 0
    %6046 = vmatpush1.bf16.msra.mxu0 %v5922
    %6047 = vmatprep.subr.bf16.mxu0 0
    %6048 = vmatpush1.bf16.msra.mxu0 %v5923
    %6049 = vmatprep.subr.bf16.mxu0 0
    %6050 = vmatpush1.bf16.msra.mxu0 %v5924
    %6051 = vmatprep.subr.bf16.mxu0 0
    %6052 = vmatpush1.bf16.msra.mxu0 0
    %6053 = vmatprep.subr.bf16.mxu0 0
    %6054 = vmatpush1.bf16.msra.mxu0 0
    %6055 = vmatprep.subr.bf16.mxu0 0
    %6056 = vmatpush1.bf16.msra.mxu0 0
    %6057 = vmatprep.subr.bf16.mxu0 0
    %6058 = vmatpush1.bf16.msra.mxu0 0
    %6059 = vmatprep.subr.bf16.mxu0 0
    %6060 = vmatpush1.bf16.msra.mxu0 0
    %6061 = vmatprep.subr.bf16.mxu0 0
    %6062 = vmatpush1.bf16.msra.mxu0 0
    %6063 = vmatprep.subr.bf16.mxu0 0
    %6064 = vmatpush1.bf16.msra.mxu0 0
    %6065 = vmatprep.subr.bf16.mxu0 0
    %6066 = vmatpush1.bf16.msra.mxu0 0
    %6067 = vmatprep.subr.bf16.mxu0 0
    %6068 = vmatpush1.bf16.msra.mxu0 0
    %6069 = vmatprep.subr.bf16.mxu0 0
    %6070 = vmatpush1.bf16.msra.mxu0 0
    %6071 = vmatprep.subr.bf16.mxu0 0
    %6072 = vmatpush1.bf16.msra.mxu0 0
    %6073 = vmatprep.subr.bf16.mxu0 0
    %6074 = vmatpush1.bf16.msra.mxu0 0
    %6075 = vmatprep.mubr.bf16.mxu0 0
    %6076 = vmatmul.mubr.bf16.gmra.mrb[0].mxu0 %v6041
    %v6077 = vpop.f32.mrb[0].mxu0
    %v6078 = vadd.f32 0.0, %v6077
    %v6079 = vpop.f32.mrb[0].mxu0
    %v6080 = vpop.f32.mrb[0].mxu0
    %v6081 = vadd.f32 0.0, %v6080
    %v6082 = vpop.f32.mrb[0].mxu0
    %6083 = vdwg.mxu0
    %s6084 = scalar_lea.vmem %s6, 24
    %v6085 = vld [vmem:[%s6084] sm:$0xf]
    %v6086 = vld [vmem:[%s6084 + $0x4] sm:$0xf]
    %v6089 = vunpack.c.l.b16 %v6085
    %v6090 = vunpack.c.l.b16 %v6086
    %v6091 = vpack.c.b16 %v6090, %v6089
    %v6093 = vsel %vm290, %v6091, 0
    %6095 = vmatprep.subr.bf16.mxu0 0
    %6096 = vmatpush1.bf16.msra.mxu0 %v5921
    %6097 = vmatprep.subr.bf16.mxu0 0
    %6098 = vmatpush1.bf16.msra.mxu0 %v5922
    %6099 = vmatprep.subr.bf16.mxu0 0
    %6100 = vmatpush1.bf16.msra.mxu0 %v5923
    %6101 = vmatprep.subr.bf16.mxu0 0
    %6102 = vmatpush1.bf16.msra.mxu0 %v5924
    %6103 = vmatprep.subr.bf16.mxu0 0
    %6104 = vmatpush1.bf16.msra.mxu0 0
    %6105 = vmatprep.subr.bf16.mxu0 0
    %6106 = vmatpush1.bf16.msra.mxu0 0
    %6107 = vmatprep.subr.bf16.mxu0 0
    %6108 = vmatpush1.bf16.msra.mxu0 0
    %6109 = vmatprep.subr.bf16.mxu0 0
    %6110 = vmatpush1.bf16.msra.mxu0 0
    %6111 = vmatprep.subr.bf16.mxu0 0
    %6112 = vmatpush1.bf16.msra.mxu0 0
    %6113 = vmatprep.subr.bf16.mxu0 0
    %6114 = vmatpush1.bf16.msra.mxu0 0
    %6115 = vmatprep.subr.bf16.mxu0 0
    %6116 = vmatpush1.bf16.msra.mxu0 0
    %6117 = vmatprep.subr.bf16.mxu0 0
    %6118 = vmatpush1.bf16.msra.mxu0 0
    %6119 = vmatprep.subr.bf16.mxu0 0
    %6120 = vmatpush1.bf16.msra.mxu0 0
    %6121 = vmatprep.subr.bf16.mxu0 0
    %6122 = vmatpush1.bf16.msra.mxu0 0
    %6123 = vmatprep.subr.bf16.mxu0 0
    %6124 = vmatpush1.bf16.msra.mxu0 0
    %6125 = vmatprep.subr.bf16.mxu0 0
    %6126 = vmatpush1.bf16.msra.mxu0 0
    %6127 = vmatprep.mubr.bf16.mxu0 0
    %6128 = vmatmul.mubr.bf16.gmra.mrb[0].mxu0 %v6093
    %v6129 = vpop.f32.mrb[0].mxu0
    %v6130 = vadd.f32 0.0, %v6129
    %v6131 = vpop.f32.mrb[0].mxu0
    %v6132 = vpop.f32.mrb[0].mxu0
    %v6133 = vadd.f32 0.0, %v6132
    %v6134 = vpop.f32.mrb[0].mxu0
    %6135 = vdwg.mxu0
    %s6136 = scalar_lea.vmem %s6, 32
    %v6137 = vld [vmem:[%s6136] sm:$0xf]
    %v6138 = vld [vmem:[%s6136 + $0x4] sm:$0xf]
    %v6141 = vunpack.c.l.b16 %v6137
    %v6142 = vunpack.c.l.b16 %v6138
    %v6143 = vpack.c.b16 %v6142, %v6141
    %v6145 = vsel %vm290, %v6143, 0
    %6147 = vmatprep.subr.bf16.mxu0 0
    %6148 = vmatpush1.bf16.msra.mxu0 %v5921
    %6149 = vmatprep.subr.bf16.mxu0 0
    %6150 = vmatpush1.bf16.msra.mxu0 %v5922
    %6151 = vmatprep.subr.bf16.mxu0 0
    %6152 = vmatpush1.bf16.msra.mxu0 %v5923
    %6153 = vmatprep.subr.bf16.mxu0 0
    %6154 = vmatpush1.bf16.msra.mxu0 %v5924
    %6155 = vmatprep.subr.bf16.mxu0 0
    %6156 = vmatpush1.bf16.msra.mxu0 0
    %6157 = vmatprep.subr.bf16.mxu0 0
    %6158 = vmatpush1.bf16.msra.mxu0 0
    %6159 = vmatprep.subr.bf16.mxu0 0
    %6160 = vmatpush1.bf16.msra.mxu0 0
    %6161 = vmatprep.subr.bf16.mxu0 0
    %6162 = vmatpush1.bf16.msra.mxu0 0
    %6163 = vmatprep.subr.bf16.mxu0 0
    %6164 = vmatpush1.bf16.msra.mxu0 0
    %6165 = vmatprep.subr.bf16.mxu0 0
    %6166 = vmatpush1.bf16.msra.mxu0 0
    %6167 = vmatprep.subr.bf16.mxu0 0
    %6168 = vmatpush1.bf16.msra.mxu0 0
    %6169 = vmatprep.subr.bf16.mxu0 0
    %6170 = vmatpush1.bf16.msra.mxu0 0
    %6171 = vmatprep.subr.bf16.mxu0 0
    %6172 = vmatpush1.bf16.msra.mxu0 0
    %6173 = vmatprep.subr.bf16.mxu0 0
    %6174 = vmatpush1.bf16.msra.mxu0 0
    %6175 = vmatprep.subr.bf16.mxu0 0
    %6176 = vmatpush1.bf16.msra.mxu0 0
    %6177 = vmatprep.subr.bf16.mxu0 0
    %6178 = vmatpush1.bf16.msra.mxu0 0
    %6179 = vmatprep.mubr.bf16.mxu0 0
    %6180 = vmatmul.mubr.bf16.gmra.mrb[0].mxu0 %v6145
    %v6181 = vpop.f32.mrb[0].mxu0
    %v6182 = vadd.f32 0.0, %v6181
    %v6183 = vpop.f32.mrb[0].mxu0
    %v6184 = vpop.f32.mrb[0].mxu0
    %v6185 = vadd.f32 0.0, %v6184
    %v6186 = vpop.f32.mrb[0].mxu0
    %6187 = vdwg.mxu0
    %s6188 = scalar_lea.vmem %s6, 40
    %v6189 = vld [vmem:[%s6188] sm:$0xf]
    %v6190 = vld [vmem:[%s6188 + $0x4] sm:$0xf]
    %v6193 = vunpack.c.l.b16 %v6189
    %v6194 = vunpack.c.l.b16 %v6190
    %v6195 = vpack.c.b16 %v6194, %v6193
    %v6197 = vsel %vm290, %v6195, 0
    %6199 = vmatprep.subr.bf16.mxu0 0
    %6200 = vmatpush1.bf16.msra.mxu0 %v5921
    %6201 = vmatprep.subr.bf16.mxu0 0
    %6202 = vmatpush1.bf16.msra.mxu0 %v5922
    %6203 = vmatprep.subr.bf16.mxu0 0
    %6204 = vmatpush1.bf16.msra.mxu0 %v5923
    %6205 = vmatprep.subr.bf16.mxu0 0
    %6206 = vmatpush1.bf16.msra.mxu0 %v5924
    %6207 = vmatprep.subr.bf16.mxu0 0
    %6208 = vmatpush1.bf16.msra.mxu0 0
    %6209 = vmatprep.subr.bf16.mxu0 0
    %6210 = vmatpush1.bf16.msra.mxu0 0
    %6211 = vmatprep.subr.bf16.mxu0 0
    %6212 = vmatpush1.bf16.msra.mxu0 0
    %6213 = vmatprep.subr.bf16.mxu0 0
    %6214 = vmatpush1.bf16.msra.mxu0 0
    %6215 = vmatprep.subr.bf16.mxu0 0
    %6216 = vmatpush1.bf16.msra.mxu0 0
    %6217 = vmatprep.subr.bf16.mxu0 0
    %6218 = vmatpush1.bf16.msra.mxu0 0
    %6219 = vmatprep.subr.bf16.mxu0 0
    %6220 = vmatpush1.bf16.msra.mxu0 0
    %6221 = vmatprep.subr.bf16.mxu0 0
    %6222 = vmatpush1.bf16.msra.mxu0 0
    %6223 = vmatprep.subr.bf16.mxu0 0
    %6224 = vmatpush1.bf16.msra.mxu0 0
    %6225 = vmatprep.subr.bf16.mxu0 0
    %6226 = vmatpush1.bf16.msra.mxu0 0
    %6227 = vmatprep.subr.bf16.mxu0 0
    %6228 = vmatpush1.bf16.msra.mxu0 0
    %6229 = vmatprep.subr.bf16.mxu0 0
    %6230 = vmatpush1.bf16.msra.mxu0 0
    %6231 = vmatprep.mubr.bf16.mxu0 0
    %6232 = vmatmul.mubr.bf16.gmra.mrb[0].mxu0 %v6197
    %v6233 = vpop.f32.mrb[0].mxu0
    %v6234 = vadd.f32 0.0, %v6233
    %v6235 = vpop.f32.mrb[0].mxu0
    %v6236 = vpop.f32.mrb[0].mxu0
    %v6237 = vadd.f32 0.0, %v6236
    %v6238 = vpop.f32.mrb[0].mxu0
    %6239 = vdwg.mxu0
    %s6240 = scalar_lea.vmem %s6, 48
    %v6241 = vld [vmem:[%s6240] sm:$0xf]
    %v6242 = vld [vmem:[%s6240 + $0x4] sm:$0xf]
    %v6245 = vunpack.c.l.b16 %v6241
    %v6246 = vunpack.c.l.b16 %v6242
    %v6247 = vpack.c.b16 %v6246, %v6245
    %v6249 = vsel %vm290, %v6247, 0
    %6251 = vmatprep.subr.bf16.mxu0 0
    %6252 = vmatpush1.bf16.msra.mxu0 %v5921
    %6253 = vmatprep.subr.bf16.mxu0 0
    %6254 = vmatpush1.bf16.msra.mxu0 %v5922
    %6255 = vmatprep.subr.bf16.mxu0 0
    %6256 = vmatpush1.bf16.msra.mxu0 %v5923
    %6257 = vmatprep.subr.bf16.mxu0 0
    %6258 = vmatpush1.bf16.msra.mxu0 %v5924
    %6259 = vmatprep.subr.bf16.mxu0 0
    %6260 = vmatpush1.bf16.msra.mxu0 0
    %6261 = vmatprep.subr.bf16.mxu0 0
    %6262 = vmatpush1.bf16.msra.mxu0 0
    %6263 = vmatprep.subr.bf16.mxu0 0
    %6264 = vmatpush1.bf16.msra.mxu0 0
    %6265 = vmatprep.subr.bf16.mxu0 0
    %6266 = vmatpush1.bf16.msra.mxu0 0
    %6267 = vmatprep.subr.bf16.mxu0 0
    %6268 = vmatpush1.bf16.msra.mxu0 0
    %6269 = vmatprep.subr.bf16.mxu0 0
    %6270 = vmatpush1.bf16.msra.mxu0 0
    %6271 = vmatprep.subr.bf16.mxu0 0
    %6272 = vmatpush1.bf16.msra.mxu0 0
    %6273 = vmatprep.subr.bf16.mxu0 0
    %6274 = vmatpush1.bf16.msra.mxu0 0
    %6275 = vmatprep.subr.bf16.mxu0 0
    %6276 = vmatpush1.bf16.msra.mxu0 0
    %6277 = vmatprep.subr.bf16.mxu0 0
    %6278 = vmatpush1.bf16.msra.mxu0 0
    %6279 = vmatprep.subr.bf16.mxu0 0
    %6280 = vmatpush1.bf16.msra.mxu0 0
    %6281 = vmatprep.subr.bf16.mxu0 0
    %6282 = vmatpush1.bf16.msra.mxu0 0
    %6283 = vmatprep.mubr.bf16.mxu0 0
    %6284 = vmatmul.mubr.bf16.gmra.mrb[0].mxu0 %v6249
    %v6285 = vpop.f32.mrb[0].mxu0
    %v6286 = vadd.f32 0.0, %v6285
    %v6287 = vpop.f32.mrb[0].mxu0
    %v6288 = vpop.f32.mrb[0].mxu0
    %v6289 = vadd.f32 0.0, %v6288
    %v6290 = vpop.f32.mrb[0].mxu0
    %6291 = vdwg.mxu0
    %s6292 = scalar_lea.vmem %s6, 56
    %v6293 = vld [vmem:[%s6292] sm:$0xf]
    %v6294 = vld [vmem:[%s6292 + $0x4] sm:$0xf]
    %v6297 = vunpack.c.l.b16 %v6293
    %v6298 = vunpack.c.l.b16 %v6294
    %v6299 = vpack.c.b16 %v6298, %v6297
    %v6301 = vsel %vm290, %v6299, 0
    %6303 = vmatprep.subr.bf16.mxu0 0
    %6304 = vmatpush1.bf16.msra.mxu0 %v5921
    %6305 = vmatprep.subr.bf16.mxu0 0
    %6306 = vmatpush1.bf16.msra.mxu0 %v5922
    %6307 = vmatprep.subr.bf16.mxu0 0
    %6308 = vmatpush1.bf16.msra.mxu0 %v5923
    %6309 = vmatprep.subr.bf16.mxu0 0
    %6310 = vmatpush1.bf16.msra.mxu0 %v5924
    %6311 = vmatprep.subr.bf16.mxu0 0
    %6312 = vmatpush1.bf16.msra.mxu0 0
    %6313 = vmatprep.subr.bf16.mxu0 0
    %6314 = vmatpush1.bf16.msra.mxu0 0
    %6315 = vmatprep.subr.bf16.mxu0 0
    %6316 = vmatpush1.bf16.msra.mxu0 0
    %6317 = vmatprep.subr.bf16.mxu0 0
    %6318 = vmatpush1.bf16.msra.mxu0 0
    %6319 = vmatprep.subr.bf16.mxu0 0
    %6320 = vmatpush1.bf16.msra.mxu0 0
    %6321 = vmatprep.subr.bf16.mxu0 0
    %6322 = vmatpush1.bf16.msra.mxu0 0
    %6323 = vmatprep.subr.bf16.mxu0 0
    %6324 = vmatpush1.bf16.msra.mxu0 0
    %6325 = vmatprep.subr.bf16.mxu0 0
    %6326 = vmatpush1.bf16.msra.mxu0 0
    %6327 = vmatprep.subr.bf16.mxu0 0
    %6328 = vmatpush1.bf16.msra.mxu0 0
    %6329 = vmatprep.subr.bf16.mxu0 0
    %6330 = vmatpush1.bf16.msra.mxu0 0
    %6331 = vmatprep.subr.bf16.mxu0 0
    %6332 = vmatpush1.bf16.msra.mxu0 0
    %6333 = vmatprep.subr.bf16.mxu0 0
    %6334 = vmatpush1.bf16.msra.mxu0 0
    %6335 = vmatprep.mubr.bf16.mxu0 0
    %6336 = vmatmul.mubr.bf16.gmra.mrb[0].mxu0 %v6301
    %v6337 = vpop.f32.mrb[0].mxu0
    %v6338 = vadd.f32 0.0, %v6337
    %v6339 = vpop.f32.mrb[0].mxu0
    %v6340 = vpop.f32.mrb[0].mxu0
    %v6341 = vadd.f32 0.0, %v6340
    %v6342 = vpop.f32.mrb[0].mxu0
    %6343 = vdwg.mxu0
    %s6344 = scalar_lea.vmem %s6, 64
    %v6345 = vld [vmem:[%s6344] sm:$0xf]
    %v6346 = vld [vmem:[%s6344 + $0x4] sm:$0xf]
    %v6349 = vunpack.c.l.b16 %v6345
    %v6350 = vunpack.c.l.b16 %v6346
    %v6351 = vpack.c.b16 %v6350, %v6349
    %v6353 = vsel %vm290, %v6351, 0
    %6355 = vmatprep.subr.bf16.mxu0 0
    %6356 = vmatpush1.bf16.msra.mxu0 %v5921
    %6357 = vmatprep.subr.bf16.mxu0 0
    %6358 = vmatpush1.bf16.msra.mxu0 %v5922
    %6359 = vmatprep.subr.bf16.mxu0 0
    %6360 = vmatpush1.bf16.msra.mxu0 %v5923
    %6361 = vmatprep.subr.bf16.mxu0 0
    %6362 = vmatpush1.bf16.msra.mxu0 %v5924
    %6363 = vmatprep.subr.bf16.mxu0 0
    %6364 = vmatpush1.bf16.msra.mxu0 0
    %6365 = vmatprep.subr.bf16.mxu0 0
    %6366 = vmatpush1.bf16.msra.mxu0 0
    %6367 = vmatprep.subr.bf16.mxu0 0
    %6368 = vmatpush1.bf16.msra.mxu0 0
    %6369 = vmatprep.subr.bf16.mxu0 0
    %6370 = vmatpush1.bf16.msra.mxu0 0
    %6371 = vmatprep.subr.bf16.mxu0 0
    %6372 = vmatpush1.bf16.msra.mxu0 0
    %6373 = vmatprep.subr.bf16.mxu0 0
    %6374 = vmatpush1.bf16.msra.mxu0 0
    %6375 = vmatprep.subr.bf16.mxu0 0
    %6376 = vmatpush1.bf16.msra.mxu0 0
    %6377 = vmatprep.subr.bf16.mxu0 0
    %6378 = vmatpush1.bf16.msra.mxu0 0
    %6379 = vmatprep.subr.bf16.mxu0 0
    %6380 = vmatpush1.bf16.msra.mxu0 0
    %6381 = vmatprep.subr.bf16.mxu0 0
    %6382 = vmatpush1.bf16.msra.mxu0 0
    %6383 = vmatprep.subr.bf16.mxu0 0
    %6384 = vmatpush1.bf16.msra.mxu0 0
    %6385 = vmatprep.subr.bf16.mxu0 0
    %6386 = vmatpush1.bf16.msra.mxu0 0
    %6387 = vmatprep.mubr.bf16.mxu0 0
    %6388 = vmatmul.mubr.bf16.gmra.mrb[0].mxu0 %v6353
    %v6389 = vpop.f32.mrb[0].mxu0
    %v6390 = vadd.f32 0.0, %v6389
    %v6391 = vpop.f32.mrb[0].mxu0
    %v6392 = vpop.f32.mrb[0].mxu0
    %v6393 = vadd.f32 0.0, %v6392
    %v6394 = vpop.f32.mrb[0].mxu0
    %6395 = vdwg.mxu0
    %s6396 = scalar_lea.vmem %s6, 72
    %v6397 = vld [vmem:[%s6396] sm:$0xf]
    %v6398 = vld [vmem:[%s6396 + $0x4] sm:$0xf]
    %v6401 = vunpack.c.l.b16 %v6397
    %v6402 = vunpack.c.l.b16 %v6398
    %v6403 = vpack.c.b16 %v6402, %v6401
    %v6405 = vsel %vm290, %v6403, 0
    %6407 = vmatprep.subr.bf16.mxu0 0
    %6408 = vmatpush1.bf16.msra.mxu0 %v5921
    %6409 = vmatprep.subr.bf16.mxu0 0
    %6410 = vmatpush1.bf16.msra.mxu0 %v5922
    %6411 = vmatprep.subr.bf16.mxu0 0
    %6412 = vmatpush1.bf16.msra.mxu0 %v5923
    %6413 = vmatprep.subr.bf16.mxu0 0
    %6414 = vmatpush1.bf16.msra.mxu0 %v5924
    %6415 = vmatprep.subr.bf16.mxu0 0
    %6416 = vmatpush1.bf16.msra.mxu0 0
    %6417 = vmatprep.subr.bf16.mxu0 0
    %6418 = vmatpush1.bf16.msra.mxu0 0
    %6419 = vmatprep.subr.bf16.mxu0 0
    %6420 = vmatpush1.bf16.msra.mxu0 0
    %6421 = vmatprep.subr.bf16.mxu0 0
    %6422 = vmatpush1.bf16.msra.mxu0 0
    %6423 = vmatprep.subr.bf16.mxu0 0
    %6424 = vmatpush1.bf16.msra.mxu0 0
    %6425 = vmatprep.subr.bf16.mxu0 0
    %6426 = vmatpush1.bf16.msra.mxu0 0
    %6427 = vmatprep.subr.bf16.mxu0 0
    %6428 = vmatpush1.bf16.msra.mxu0 0
    %6429 = vmatprep.subr.bf16.mxu0 0
    %6430 = vmatpush1.bf16.msra.mxu0 0
    %6431 = vmatprep.subr.bf16.mxu0 0
    %6432 = vmatpush1.bf16.msra.mxu0 0
    %6433 = vmatprep.subr.bf16.mxu0 0
    %6434 = vmatpush1.bf16.msra.mxu0 0
    %6435 = vmatprep.subr.bf16.mxu0 0
    %6436 = vmatpush1.bf16.msra.mxu0 0
    %6437 = vmatprep.subr.bf16.mxu0 0
    %6438 = vmatpush1.bf16.msra.mxu0 0
    %6439 = vmatprep.mubr.bf16.mxu0 0
    %6440 = vmatmul.mubr.bf16.gmra.mrb[0].mxu0 %v6405
    %v6441 = vpop.f32.mrb[0].mxu0
    %v6442 = vadd.f32 0.0, %v6441
    %v6443 = vpop.f32.mrb[0].mxu0
    %v6444 = vpop.f32.mrb[0].mxu0
    %v6445 = vadd.f32 0.0, %v6444
    %v6446 = vpop.f32.mrb[0].mxu0
    %6447 = vdwg.mxu0
    %s6448 = scalar_lea.vmem %s6, 80
    %v6449 = vld [vmem:[%s6448] sm:$0xf]
    %v6450 = vld [vmem:[%s6448 + $0x4] sm:$0xf]
    %v6453 = vunpack.c.l.b16 %v6449
    %v6454 = vunpack.c.l.b16 %v6450
    %v6455 = vpack.c.b16 %v6454, %v6453
    %v6457 = vsel %vm290, %v6455, 0
    %6459 = vmatprep.subr.bf16.mxu0 0
    %6460 = vmatpush1.bf16.msra.mxu0 %v5921
    %6461 = vmatprep.subr.bf16.mxu0 0
    %6462 = vmatpush1.bf16.msra.mxu0 %v5922
    %6463 = vmatprep.subr.bf16.mxu0 0
    %6464 = vmatpush1.bf16.msra.mxu0 %v5923
    %6465 = vmatprep.subr.bf16.mxu0 0
    %6466 = vmatpush1.bf16.msra.mxu0 %v5924
    %6467 = vmatprep.subr.bf16.mxu0 0
    %6468 = vmatpush1.bf16.msra.mxu0 0
    %6469 = vmatprep.subr.bf16.mxu0 0
    %6470 = vmatpush1.bf16.msra.mxu0 0
    %6471 = vmatprep.subr.bf16.mxu0 0
    %6472 = vmatpush1.bf16.msra.mxu0 0
    %6473 = vmatprep.subr.bf16.mxu0 0
    %6474 = vmatpush1.bf16.msra.mxu0 0
    %6475 = vmatprep.subr.bf16.mxu0 0
    %6476 = vmatpush1.bf16.msra.mxu0 0
    %6477 = vmatprep.subr.bf16.mxu0 0
    %6478 = vmatpush1.bf16.msra.mxu0 0
    %6479 = vmatprep.subr.bf16.mxu0 0
    %6480 = vmatpush1.bf16.msra.mxu0 0
    %6481 = vmatprep.subr.bf16.mxu0 0
    %6482 = vmatpush1.bf16.msra.mxu0 0
    %6483 = vmatprep.subr.bf16.mxu0 0
    %6484 = vmatpush1.bf16.msra.mxu0 0
    %6485 = vmatprep.subr.bf16.mxu0 0
    %6486 = vmatpush1.bf16.msra.mxu0 0
    %6487 = vmatprep.subr.bf16.mxu0 0
    %6488 = vmatpush1.bf16.msra.mxu0 0
    %6489 = vmatprep.subr.bf16.mxu0 0
    %6490 = vmatpush1.bf16.msra.mxu0 0
    %6491 = vmatprep.mubr.bf16.mxu0 0
    %6492 = vmatmul.mubr.bf16.gmra.mrb[0].mxu0 %v6457
    %v6493 = vpop.f32.mrb[0].mxu0
    %v6494 = vadd.f32 0.0, %v6493
    %v6495 = vpop.f32.mrb[0].mxu0
    %v6496 = vpop.f32.mrb[0].mxu0
    %v6497 = vadd.f32 0.0, %v6496
    %v6498 = vpop.f32.mrb[0].mxu0
    %6499 = vdwg.mxu0
    %s6500 = scalar_lea.vmem %s6, 88
    %v6501 = vld [vmem:[%s6500] sm:$0xf]
    %v6502 = vld [vmem:[%s6500 + $0x4] sm:$0xf]
    %v6505 = vunpack.c.l.b16 %v6501
    %v6506 = vunpack.c.l.b16 %v6502
    %v6507 = vpack.c.b16 %v6506, %v6505
    %v6509 = vsel %vm290, %v6507, 0
    %6511 = vmatprep.subr.bf16.mxu0 0
    %6512 = vmatpush1.bf16.msra.mxu0 %v5921
    %6513 = vmatprep.subr.bf16.mxu0 0
    %6514 = vmatpush1.bf16.msra.mxu0 %v5922
    %6515 = vmatprep.subr.bf16.mxu0 0
    %6516 = vmatpush1.bf16.msra.mxu0 %v5923
    %6517 = vmatprep.subr.bf16.mxu0 0
    %6518 = vmatpush1.bf16.msra.mxu0 %v5924
    %6519 = vmatprep.subr.bf16.mxu0 0
    %6520 = vmatpush1.bf16.msra.mxu0 0
    %6521 = vmatprep.subr.bf16.mxu0 0
    %6522 = vmatpush1.bf16.msra.mxu0 0
    %6523 = vmatprep.subr.bf16.mxu0 0
    %6524 = vmatpush1.bf16.msra.mxu0 0
    %6525 = vmatprep.subr.bf16.mxu0 0
    %6526 = vmatpush1.bf16.msra.mxu0 0
    %6527 = vmatprep.subr.bf16.mxu0 0
    %6528 = vmatpush1.bf16.msra.mxu0 0
    %6529 = vmatprep.subr.bf16.mxu0 0
    %6530 = vmatpush1.bf16.msra.mxu0 0
    %6531 = vmatprep.subr.bf16.mxu0 0
    %6532 = vmatpush1.bf16.msra.mxu0 0
    %6533 = vmatprep.subr.bf16.mxu0 0
    %6534 = vmatpush1.bf16.msra.mxu0 0
    %6535 = vmatprep.subr.bf16.mxu0 0
    %6536 = vmatpush1.bf16.msra.mxu0 0
    %6537 = vmatprep.subr.bf16.mxu0 0
    %6538 = vmatpush1.bf16.msra.mxu0 0
    %6539 = vmatprep.subr.bf16.mxu0 0
    %6540 = vmatpush1.bf16.msra.mxu0 0
    %6541 = vmatprep.subr.bf16.mxu0 0
    %6542 = vmatpush1.bf16.msra.mxu0 0
    %6543 = vmatprep.mubr.bf16.mxu0 0
    %6544 = vmatmul.mubr.bf16.gmra.mrb[0].mxu0 %v6509
    %v6545 = vpop.f32.mrb[0].mxu0
    %v6546 = vadd.f32 0.0, %v6545
    %v6547 = vpop.f32.mrb[0].mxu0
    %v6548 = vpop.f32.mrb[0].mxu0
    %v6549 = vadd.f32 0.0, %v6548
    %v6550 = vpop.f32.mrb[0].mxu0
    %6551 = vdwg.mxu0
    %s6552 = scalar_lea.vmem %s6, 96
    %v6553 = vld [vmem:[%s6552] sm:$0xf]
    %v6554 = vld [vmem:[%s6552 + $0x4] sm:$0xf]
    %v6557 = vunpack.c.l.b16 %v6553
    %v6558 = vunpack.c.l.b16 %v6554
    %v6559 = vpack.c.b16 %v6558, %v6557
    %v6561 = vsel %vm290, %v6559, 0
    %6563 = vmatprep.subr.bf16.mxu0 0
    %6564 = vmatpush1.bf16.msra.mxu0 %v5921
    %6565 = vmatprep.subr.bf16.mxu0 0
    %6566 = vmatpush1.bf16.msra.mxu0 %v5922
    %6567 = vmatprep.subr.bf16.mxu0 0
    %6568 = vmatpush1.bf16.msra.mxu0 %v5923
    %6569 = vmatprep.subr.bf16.mxu0 0
    %6570 = vmatpush1.bf16.msra.mxu0 %v5924
    %6571 = vmatprep.subr.bf16.mxu0 0
    %6572 = vmatpush1.bf16.msra.mxu0 0
    %6573 = vmatprep.subr.bf16.mxu0 0
    %6574 = vmatpush1.bf16.msra.mxu0 0
    %6575 = vmatprep.subr.bf16.mxu0 0
    %6576 = vmatpush1.bf16.msra.mxu0 0
    %6577 = vmatprep.subr.bf16.mxu0 0
    %6578 = vmatpush1.bf16.msra.mxu0 0
    %6579 = vmatprep.subr.bf16.mxu0 0
    %6580 = vmatpush1.bf16.msra.mxu0 0
    %6581 = vmatprep.subr.bf16.mxu0 0
    %6582 = vmatpush1.bf16.msra.mxu0 0
    %6583 = vmatprep.subr.bf16.mxu0 0
    %6584 = vmatpush1.bf16.msra.mxu0 0
    %6585 = vmatprep.subr.bf16.mxu0 0
    %6586 = vmatpush1.bf16.msra.mxu0 0
    %6587 = vmatprep.subr.bf16.mxu0 0
    %6588 = vmatpush1.bf16.msra.mxu0 0
    %6589 = vmatprep.subr.bf16.mxu0 0
    %6590 = vmatpush1.bf16.msra.mxu0 0
    %6591 = vmatprep.subr.bf16.mxu0 0
    %6592 = vmatpush1.bf16.msra.mxu0 0
    %6593 = vmatprep.subr.bf16.mxu0 0
    %6594 = vmatpush1.bf16.msra.mxu0 0
    %6595 = vmatprep.mubr.bf16.mxu0 0
    %6596 = vmatmul.mubr.bf16.gmra.mrb[0].mxu0 %v6561
    %v6597 = vpop.f32.mrb[0].mxu0
    %v6598 = vadd.f32 0.0, %v6597
    %v6599 = vpop.f32.mrb[0].mxu0
    %v6600 = vpop.f32.mrb[0].mxu0
    %v6601 = vadd.f32 0.0, %v6600
    %v6602 = vpop.f32.mrb[0].mxu0
    %6603 = vdwg.mxu0
    %s6604 = scalar_lea.vmem %s6, 104
    %v6605 = vld [vmem:[%s6604] sm:$0xf]
    %v6606 = vld [vmem:[%s6604 + $0x4] sm:$0xf]
    %v6609 = vunpack.c.l.b16 %v6605
    %v6610 = vunpack.c.l.b16 %v6606
    %v6611 = vpack.c.b16 %v6610, %v6609
    %v6613 = vsel %vm290, %v6611, 0
    %6615 = vmatprep.subr.bf16.mxu0 0
    %6616 = vmatpush1.bf16.msra.mxu0 %v5921
    %6617 = vmatprep.subr.bf16.mxu0 0
    %6618 = vmatpush1.bf16.msra.mxu0 %v5922
    %6619 = vmatprep.subr.bf16.mxu0 0
    %6620 = vmatpush1.bf16.msra.mxu0 %v5923
    %6621 = vmatprep.subr.bf16.mxu0 0
    %6622 = vmatpush1.bf16.msra.mxu0 %v5924
    %6623 = vmatprep.subr.bf16.mxu0 0
    %6624 = vmatpush1.bf16.msra.mxu0 0
    %6625 = vmatprep.subr.bf16.mxu0 0
    %6626 = vmatpush1.bf16.msra.mxu0 0
    %6627 = vmatprep.subr.bf16.mxu0 0
    %6628 = vmatpush1.bf16.msra.mxu0 0
    %6629 = vmatprep.subr.bf16.mxu0 0
    %6630 = vmatpush1.bf16.msra.mxu0 0
    %6631 = vmatprep.subr.bf16.mxu0 0
    %6632 = vmatpush1.bf16.msra.mxu0 0
    %6633 = vmatprep.subr.bf16.mxu0 0
    %6634 = vmatpush1.bf16.msra.mxu0 0
    %6635 = vmatprep.subr.bf16.mxu0 0
    %6636 = vmatpush1.bf16.msra.mxu0 0
    %6637 = vmatprep.subr.bf16.mxu0 0
    %6638 = vmatpush1.bf16.msra.mxu0 0
    %6639 = vmatprep.subr.bf16.mxu0 0
    %6640 = vmatpush1.bf16.msra.mxu0 0
    %6641 = vmatprep.subr.bf16.mxu0 0
    %6642 = vmatpush1.bf16.msra.mxu0 0
    %6643 = vmatprep.subr.bf16.mxu0 0
    %6644 = vmatpush1.bf16.msra.mxu0 0
    %6645 = vmatprep.subr.bf16.mxu0 0
    %6646 = vmatpush1.bf16.msra.mxu0 0
    %6647 = vmatprep.mubr.bf16.mxu0 0
    %6648 = vmatmul.mubr.bf16.gmra.mrb[0].mxu0 %v6613
    %v6649 = vpop.f32.mrb[0].mxu0
    %v6650 = vadd.f32 0.0, %v6649
    %v6651 = vpop.f32.mrb[0].mxu0
    %v6652 = vpop.f32.mrb[0].mxu0
    %v6653 = vadd.f32 0.0, %v6652
    %v6654 = vpop.f32.mrb[0].mxu0
    %6655 = vdwg.mxu0
    %s6656 = scalar_lea.vmem %s6, 112
    %v6657 = vld [vmem:[%s6656] sm:$0xf]
    %v6658 = vld [vmem:[%s6656 + $0x4] sm:$0xf]
    %v6661 = vunpack.c.l.b16 %v6657
    %v6662 = vunpack.c.l.b16 %v6658
    %v6663 = vpack.c.b16 %v6662, %v6661
    %v6665 = vsel %vm290, %v6663, 0
    %6667 = vmatprep.subr.bf16.mxu0 0
    %6668 = vmatpush1.bf16.msra.mxu0 %v5921
    %6669 = vmatprep.subr.bf16.mxu0 0
    %6670 = vmatpush1.bf16.msra.mxu0 %v5922
    %6671 = vmatprep.subr.bf16.mxu0 0
    %6672 = vmatpush1.bf16.msra.mxu0 %v5923
    %6673 = vmatprep.subr.bf16.mxu0 0
    %6674 = vmatpush1.bf16.msra.mxu0 %v5924
    %6675 = vmatprep.subr.bf16.mxu0 0
    %6676 = vmatpush1.bf16.msra.mxu0 0
    %6677 = vmatprep.subr.bf16.mxu0 0
    %6678 = vmatpush1.bf16.msra.mxu0 0
    %6679 = vmatprep.subr.bf16.mxu0 0
    %6680 = vmatpush1.bf16.msra.mxu0 0
    %6681 = vmatprep.subr.bf16.mxu0 0
    %6682 = vmatpush1.bf16.msra.mxu0 0
    %6683 = vmatprep.subr.bf16.mxu0 0
    %6684 = vmatpush1.bf16.msra.mxu0 0
    %6685 = vmatprep.subr.bf16.mxu0 0
    %6686 = vmatpush1.bf16.msra.mxu0 0
    %6687 = vmatprep.subr.bf16.mxu0 0
    %6688 = vmatpush1.bf16.msra.mxu0 0
    %6689 = vmatprep.subr.bf16.mxu0 0
    %6690 = vmatpush1.bf16.msra.mxu0 0
    %6691 = vmatprep.subr.bf16.mxu0 0
    %6692 = vmatpush1.bf16.msra.mxu0 0
    %6693 = vmatprep.subr.bf16.mxu0 0
    %6694 = vmatpush1.bf16.msra.mxu0 0
    %6695 = vmatprep.subr.bf16.mxu0 0
    %6696 = vmatpush1.bf16.msra.mxu0 0
    %6697 = vmatprep.subr.bf16.mxu0 0
    %6698 = vmatpush1.bf16.msra.mxu0 0
    %6699 = vmatprep.mubr.bf16.mxu0 0
    %6700 = vmatmul.mubr.bf16.gmra.mrb[0].mxu0 %v6665
    %v6701 = vpop.f32.mrb[0].mxu0
    %v6702 = vadd.f32 0.0, %v6701
    %v6703 = vpop.f32.mrb[0].mxu0
    %v6704 = vpop.f32.mrb[0].mxu0
    %v6705 = vadd.f32 0.0, %v6704
    %v6706 = vpop.f32.mrb[0].mxu0
    %6707 = vdwg.mxu0
    %s6708 = scalar_lea.vmem %s6, 120
    %v6709 = vld [vmem:[%s6708] sm:$0xf]
    %v6710 = vld [vmem:[%s6708 + $0x4] sm:$0xf]
    %v6713 = vunpack.c.l.b16 %v6709
    %v6714 = vunpack.c.l.b16 %v6710
    %v6715 = vpack.c.b16 %v6714, %v6713
    %v6717 = vsel %vm290, %v6715, 0
    %6719 = vmatprep.subr.bf16.mxu0 0
    %6720 = vmatpush1.bf16.msra.mxu0 %v5921
    %6721 = vmatprep.subr.bf16.mxu0 0
    %6722 = vmatpush1.bf16.msra.mxu0 %v5922
    %6723 = vmatprep.subr.bf16.mxu0 0
    %6724 = vmatpush1.bf16.msra.mxu0 %v5923
    %6725 = vmatprep.subr.bf16.mxu0 0
    %6726 = vmatpush1.bf16.msra.mxu0 %v5924
    %6727 = vmatprep.subr.bf16.mxu0 0
    %6728 = vmatpush1.bf16.msra.mxu0 0
    %6729 = vmatprep.subr.bf16.mxu0 0
    %6730 = vmatpush1.bf16.msra.mxu0 0
    %6731 = vmatprep.subr.bf16.mxu0 0
    %6732 = vmatpush1.bf16.msra.mxu0 0
    %6733 = vmatprep.subr.bf16.mxu0 0
    %6734 = vmatpush1.bf16.msra.mxu0 0
    %6735 = vmatprep.subr.bf16.mxu0 0
    %6736 = vmatpush1.bf16.msra.mxu0 0
    %6737 = vmatprep.subr.bf16.mxu0 0
    %6738 = vmatpush1.bf16.msra.mxu0 0
    %6739 = vmatprep.subr.bf16.mxu0 0
    %6740 = vmatpush1.bf16.msra.mxu0 0
    %6741 = vmatprep.subr.bf16.mxu0 0
    %6742 = vmatpush1.bf16.msra.mxu0 0
    %6743 = vmatprep.subr.bf16.mxu0 0
    %6744 = vmatpush1.bf16.msra.mxu0 0
    %6745 = vmatprep.subr.bf16.mxu0 0
    %6746 = vmatpush1.bf16.msra.mxu0 0
    %6747 = vmatprep.subr.bf16.mxu0 0
    %6748 = vmatpush1.bf16.msra.mxu0 0
    %6749 = vmatprep.subr.bf16.mxu0 0
    %6750 = vmatpush1.bf16.msra.mxu0 0
    %6751 = vmatprep.mubr.bf16.mxu0 0
    %6752 = vmatmul.mubr.bf16.gmra.mrb[0].mxu0 %v6717
    %v6753 = vpop.f32.mrb[0].mxu0
    %v6754 = vadd.f32 0.0, %v6753
    %v6755 = vpop.f32.mrb[0].mxu0
    %v6756 = vpop.f32.mrb[0].mxu0
    %v6757 = vadd.f32 0.0, %v6756
    %v6758 = vpop.f32.mrb[0].mxu0
    %6759 = vdwg.mxu0
    %6762 = vrot.lane.b32.xlu0 %v6026, 16
    %v6763 = vpop.permute.xlu0 %6762
    %6764 = vrot.lane.b32.xlu0 %v6029, 16
    %v6765 = vpop.permute.xlu0 %6764
    %6770 = vrot.lane.b32.xlu0 %v6078, 32
    %v6771 = vpop.permute.xlu0 %6770
    %6772 = vrot.lane.b32.xlu0 %v6081, 32
    %v6773 = vpop.permute.xlu0 %6772
    %6778 = vrot.lane.b32.xlu0 %v6130, 48
    %v6779 = vpop.permute.xlu0 %6778
    %6780 = vrot.lane.b32.xlu0 %v6133, 48
    %v6781 = vpop.permute.xlu0 %6780
    %6786 = vrot.lane.b32.xlu0 %v6182, 64
    %v6787 = vpop.permute.xlu0 %6786
    %6788 = vrot.lane.b32.xlu0 %v6185, 64
    %v6789 = vpop.permute.xlu0 %6788
    %6794 = vrot.lane.b32.xlu0 %v6234, 80
    %v6795 = vpop.permute.xlu0 %6794
    %6796 = vrot.lane.b32.xlu0 %v6237, 80
    %v6797 = vpop.permute.xlu0 %6796
    %6802 = vrot.lane.b32.xlu0 %v6286, 96
    %v6803 = vpop.permute.xlu0 %6802
    %6804 = vrot.lane.b32.xlu0 %v6289, 96
    %v6805 = vpop.permute.xlu0 %6804
    %6810 = vrot.lane.b32.xlu0 %v6338, 112
    %v6811 = vpop.permute.xlu0 %6810
    %6812 = vrot.lane.b32.xlu0 %v6341, 112
    %v6813 = vpop.permute.xlu0 %6812
    %6818 = vrot.lane.b32.xlu0 %v6442, 16
    %v6819 = vpop.permute.xlu0 %6818
    %6820 = vrot.lane.b32.xlu0 %v6445, 16
    %v6821 = vpop.permute.xlu0 %6820
    %6826 = vrot.lane.b32.xlu0 %v6494, 32
    %v6827 = vpop.permute.xlu0 %6826
    %6828 = vrot.lane.b32.xlu0 %v6497, 32
    %v6829 = vpop.permute.xlu0 %6828
    %6834 = vrot.lane.b32.xlu0 %v6546, 48
    %v6835 = vpop.permute.xlu0 %6834
    %6836 = vrot.lane.b32.xlu0 %v6549, 48
    %v6837 = vpop.permute.xlu0 %6836
    %6842 = vrot.lane.b32.xlu0 %v6598, 64
    %v6843 = vpop.permute.xlu0 %6842
    %6844 = vrot.lane.b32.xlu0 %v6601, 64
    %v6845 = vpop.permute.xlu0 %6844
    %6850 = vrot.lane.b32.xlu0 %v6650, 80
    %v6851 = vpop.permute.xlu0 %6850
    %6852 = vrot.lane.b32.xlu0 %v6653, 80
    %v6853 = vpop.permute.xlu0 %6852
    %6858 = vrot.lane.b32.xlu0 %v6702, 96
    %v6859 = vpop.permute.xlu0 %6858
    %6860 = vrot.lane.b32.xlu0 %v6705, 96
    %v6861 = vpop.permute.xlu0 %6860
    %6866 = vrot.lane.b32.xlu0 %v6754, 112
    %v6867 = vpop.permute.xlu0 %6866
    %6868 = vrot.lane.b32.xlu0 %v6757, 112
    %v6869 = vpop.permute.xlu0 %6868
    %v6872 = vsel %vm3751, %v5974, %v6763
    %v6873 = vsel %vm3751, %v5977, %v6765
    %v6874 = vsel %vm3769, %v6872, %v6771
    %v6875 = vsel %vm3769, %v6873, %v6773
    %v6876 = vsel %vm3787, %v6874, %v6779
    %v6877 = vsel %vm3787, %v6875, %v6781
    %v6878 = vsel %vm290, %v6876, %v6787
    %v6879 = vsel %vm290, %v6877, %v6789
    %v6880 = vsel %vm3822, %v6878, %v6795
    %v6881 = vsel %vm3822, %v6879, %v6797
    %v6882 = vsel %vm3840, %v6880, %v6803
    %v6883 = vsel %vm3840, %v6881, %v6805
    %v6884 = vsel %vm3858, %v6882, %v6811
    %v6885 = vsel %vm3858, %v6883, %v6813
    %v6886 = vsel %vm3751, %v6390, %v6819
    %v6887 = vsel %vm3751, %v6393, %v6821
    %v6888 = vsel %vm3769, %v6886, %v6827
    %v6889 = vsel %vm3769, %v6887, %v6829
    %v6890 = vsel %vm3787, %v6888, %v6835
    %v6891 = vsel %vm3787, %v6889, %v6837
    %v6892 = vsel %vm290, %v6890, %v6843
    %v6893 = vsel %vm290, %v6891, %v6845
    %v6894 = vsel %vm3822, %v6892, %v6851
    %v6895 = vsel %vm3822, %v6893, %v6853
    %v6896 = vsel %vm3840, %v6894, %v6859
    %v6897 = vsel %vm3840, %v6895, %v6861
    %v6898 = vsel %vm3858, %v6896, %v6867
    %v6899 = vsel %vm3858, %v6897, %v6869
    %v6900 = vpack.c.bf16 %v6885, %v6884
    %v6901 = vpack.c.bf16 %v6899, %v6898
    %v6902 = vld [vmem:[%s3] sm:$0xf]
    %v6903 = vld [vmem:[%s3 + $0x4] sm:$0xf]
    %v6904 = vld [vmem:[%s3 + $0x8] sm:$0xf]
    %v6905 = vld [vmem:[%s3 + $0xc] sm:$0xf]
    %v6906 = vld [vmem:[%s3 + $0x10] sm:$0xf]
    %v6907 = vld [vmem:[%s3 + $0x14] sm:$0xf]
    %v6908 = vld [vmem:[%s3 + $0x18] sm:$0xf]
    %v6909 = vld [vmem:[%s3 + $0x1c] sm:$0xf]
    %v6910 = vld [vmem:[%s3 + $0x20] sm:$0xf]
    %v6911 = vld [vmem:[%s3 + $0x24] sm:$0xf]
    %v6912 = vld [vmem:[%s3 + $0x28] sm:$0xf]
    %v6913 = vld [vmem:[%s3 + $0x2c] sm:$0xf]
    %v6914 = vld [vmem:[%s3 + $0x30] sm:$0xf]
    %v6915 = vld [vmem:[%s3 + $0x34] sm:$0xf]
    %v6916 = vld [vmem:[%s3 + $0x38] sm:$0xf]
    %v6917 = vld [vmem:[%s3 + $0x3c] sm:$0xf]
    %v6918 = vld [vmem:[%s3 + $0x40] sm:$0xf]
    %v6919 = vld [vmem:[%s3 + $0x44] sm:$0xf]
    %v6920 = vld [vmem:[%s3 + $0x48] sm:$0xf]
    %v6921 = vld [vmem:[%s3 + $0x4c] sm:$0xf]
    %v6922 = vld [vmem:[%s3 + $0x50] sm:$0xf]
    %v6923 = vld [vmem:[%s3 + $0x54] sm:$0xf]
    %v6924 = vld [vmem:[%s3 + $0x58] sm:$0xf]
    %v6925 = vld [vmem:[%s3 + $0x5c] sm:$0xf]
    %v6926 = vld [vmem:[%s3 + $0x60] sm:$0xf]
    %v6927 = vld [vmem:[%s3 + $0x64] sm:$0xf]
    %v6928 = vld [vmem:[%s3 + $0x68] sm:$0xf]
    %v6929 = vld [vmem:[%s3 + $0x6c] sm:$0xf]
    %v6930 = vld [vmem:[%s3 + $0x70] sm:$0xf]
    %v6931 = vld [vmem:[%s3 + $0x74] sm:$0xf]
    %v6932 = vld [vmem:[%s3 + $0x78] sm:$0xf]
    %v6933 = vld [vmem:[%s3 + $0x7c] sm:$0xf]
    %v6966 = vunpack.c.l.b16 %v6902
    %v6967 = vunpack.c.l.b16 %v6903
    %v6968 = vunpack.c.l.b16 %v6904
    %v6969 = vunpack.c.l.b16 %v6905
    %v6970 = vunpack.c.l.b16 %v6906
    %v6971 = vunpack.c.l.b16 %v6907
    %v6972 = vunpack.c.l.b16 %v6908
    %v6973 = vunpack.c.l.b16 %v6909
    %v6974 = vunpack.c.l.b16 %v6910
    %v6975 = vunpack.c.l.b16 %v6911
    %v6976 = vunpack.c.l.b16 %v6912
    %v6977 = vunpack.c.l.b16 %v6913
    %v6978 = vunpack.c.l.b16 %v6914
    %v6979 = vunpack.c.l.b16 %v6915
    %v6980 = vunpack.c.l.b16 %v6916
    %v6981 = vunpack.c.l.b16 %v6917
    %v6982 = vunpack.c.l.b16 %v6918
    %v6983 = vunpack.c.l.b16 %v6919
    %v6984 = vunpack.c.l.b16 %v6920
    %v6985 = vunpack.c.l.b16 %v6921
    %v6986 = vunpack.c.l.b16 %v6922
    %v6987 = vunpack.c.l.b16 %v6923
    %v6988 = vunpack.c.l.b16 %v6924
    %v6989 = vunpack.c.l.b16 %v6925
    %v6990 = vunpack.c.l.b16 %v6926
    %v6991 = vunpack.c.l.b16 %v6927
    %v6992 = vunpack.c.l.b16 %v6928
    %v6993 = vunpack.c.l.b16 %v6929
    %v6994 = vunpack.c.l.b16 %v6930
    %v6995 = vunpack.c.l.b16 %v6931
    %v6996 = vunpack.c.l.b16 %v6932
    %v6997 = vunpack.c.l.b16 %v6933
    %v6998 = vpack.c.b16 %v6967, %v6966
    %v6999 = vpack.c.b16 %v6969, %v6968
    %v7000 = vpack.c.b16 %v6971, %v6970
    %v7001 = vpack.c.b16 %v6973, %v6972
    %v7002 = vpack.c.b16 %v6975, %v6974
    %v7003 = vpack.c.b16 %v6977, %v6976
    %v7004 = vpack.c.b16 %v6979, %v6978
    %v7005 = vpack.c.b16 %v6981, %v6980
    %v7006 = vpack.c.b16 %v6983, %v6982
    %v7007 = vpack.c.b16 %v6985, %v6984
    %v7008 = vpack.c.b16 %v6987, %v6986
    %v7009 = vpack.c.b16 %v6989, %v6988
    %v7010 = vpack.c.b16 %v6991, %v6990
    %v7011 = vpack.c.b16 %v6993, %v6992
    %v7012 = vpack.c.b16 %v6995, %v6994
    %v7013 = vpack.c.b16 %v6997, %v6996
    %7030 = vmatprep.subr.bf16.mxu0 0
    %7031 = vmatpush1.bf16.msra.mxu0 %v6998
    %7032 = vmatprep.subr.bf16.mxu0 0
    %7033 = vmatpush1.bf16.msra.mxu0 %v6999
    %7034 = vmatprep.subr.bf16.mxu0 0
    %7035 = vmatpush1.bf16.msra.mxu0 %v7000
    %7036 = vmatprep.subr.bf16.mxu0 0
    %7037 = vmatpush1.bf16.msra.mxu0 %v7001
    %7038 = vmatprep.subr.bf16.mxu0 0
    %7039 = vmatpush1.bf16.msra.mxu0 %v7002
    %7040 = vmatprep.subr.bf16.mxu0 0
    %7041 = vmatpush1.bf16.msra.mxu0 %v7003
    %7042 = vmatprep.subr.bf16.mxu0 0
    %7043 = vmatpush1.bf16.msra.mxu0 %v7004
    %7044 = vmatprep.subr.bf16.mxu0 0
    %7045 = vmatpush1.bf16.msra.mxu0 %v7005
    %7046 = vmatprep.subr.bf16.mxu0 0
    %7047 = vmatpush1.bf16.msra.mxu0 %v7006
    %7048 = vmatprep.subr.bf16.mxu0 0
    %7049 = vmatpush1.bf16.msra.mxu0 %v7007
    %7050 = vmatprep.subr.bf16.mxu0 0
    %7051 = vmatpush1.bf16.msra.mxu0 %v7008
    %7052 = vmatprep.subr.bf16.mxu0 0
    %7053 = vmatpush1.bf16.msra.mxu0 %v7009
    %7054 = vmatprep.subr.bf16.mxu0 0
    %7055 = vmatpush1.bf16.msra.mxu0 %v7010
    %7056 = vmatprep.subr.bf16.mxu0 0
    %7057 = vmatpush1.bf16.msra.mxu0 %v7011
    %7058 = vmatprep.subr.bf16.mxu0 0
    %7059 = vmatpush1.bf16.msra.mxu0 %v7012
    %7060 = vmatprep.subr.bf16.mxu0 0
    %7061 = vmatpush1.bf16.msra.mxu0 %v7013
    %7062 = vmatprep.mubr.bf16.mxu0 %v6901
    %7063 = vmatmul.mubr.bf16.gmra.mrb[0].mxu0 %v6900
    %v7064 = vpop.f32.mrb[0].mxu0
    %v7065 = vadd.f32 0.0, %v7064
    %v7066 = vpop.f32.mrb[0].mxu0
    %v7067 = vpop.f32.mrb[0].mxu0
    %v7068 = vadd.f32 0.0, %v7067
    %v7069 = vpop.f32.mrb[0].mxu0
    %7070 = vdwg.mxu0
    %7071 = vmatprep.subr.bf16.mxu0 0
    %7072 = vmatpush1.bf16.msra.mxu0 %v5925
    %7073 = vmatprep.subr.bf16.mxu0 0
    %7074 = vmatpush1.bf16.msra.mxu0 %v5926
    %7075 = vmatprep.subr.bf16.mxu0 0
    %7076 = vmatpush1.bf16.msra.mxu0 %v5927
    %7077 = vmatprep.subr.bf16.mxu0 0
    %7078 = vmatpush1.bf16.msra.mxu0 %v5928
    %7079 = vmatprep.subr.bf16.mxu0 0
    %7080 = vmatpush1.bf16.msra.mxu0 0
    %7081 = vmatprep.subr.bf16.mxu0 0
    %7082 = vmatpush1.bf16.msra.mxu0 0
    %7083 = vmatprep.subr.bf16.mxu0 0
    %7084 = vmatpush1.bf16.msra.mxu0 0
    %7085 = vmatprep.subr.bf16.mxu0 0
    %7086 = vmatpush1.bf16.msra.mxu0 0
    %7087 = vmatprep.subr.bf16.mxu0 0
    %7088 = vmatpush1.bf16.msra.mxu0 0
    %7089 = vmatprep.subr.bf16.mxu0 0
    %7090 = vmatpush1.bf16.msra.mxu0 0
    %7091 = vmatprep.subr.bf16.mxu0 0
    %7092 = vmatpush1.bf16.msra.mxu0 0
    %7093 = vmatprep.subr.bf16.mxu0 0
    %7094 = vmatpush1.bf16.msra.mxu0 0
    %7095 = vmatprep.subr.bf16.mxu0 0
    %7096 = vmatpush1.bf16.msra.mxu0 0
    %7097 = vmatprep.subr.bf16.mxu0 0
    %7098 = vmatpush1.bf16.msra.mxu0 0
    %7099 = vmatprep.subr.bf16.mxu0 0
    %7100 = vmatpush1.bf16.msra.mxu0 0
    %7101 = vmatprep.subr.bf16.mxu0 0
    %7102 = vmatpush1.bf16.msra.mxu0 0
    %7103 = vmatprep.mubr.bf16.mxu0 0
    %7104 = vmatmul.mubr.bf16.gmra.mrb[0].mxu0 %v5937
    %v7105 = vpop.f32.mrb[0].mxu0
    %v7106 = vadd.f32 0.0, %v7105
    %v7107 = vpop.f32.mrb[0].mxu0
    %v7108 = vpop.f32.mrb[0].mxu0
    %v7109 = vadd.f32 0.0, %v7108
    %v7110 = vpop.f32.mrb[0].mxu0
    %7111 = vdwg.mxu0
    %7112 = vmatprep.subr.bf16.mxu0 0
    %7113 = vmatpush1.bf16.msra.mxu0 %v5925
    %7114 = vmatprep.subr.bf16.mxu0 0
    %7115 = vmatpush1.bf16.msra.mxu0 %v5926
    %7116 = vmatprep.subr.bf16.mxu0 0
    %7117 = vmatpush1.bf16.msra.mxu0 %v5927
    %7118 = vmatprep.subr.bf16.mxu0 0
    %7119 = vmatpush1.bf16.msra.mxu0 %v5928
    %7120 = vmatprep.subr.bf16.mxu0 0
    %7121 = vmatpush1.bf16.msra.mxu0 0
    %7122 = vmatprep.subr.bf16.mxu0 0
    %7123 = vmatpush1.bf16.msra.mxu0 0
    %7124 = vmatprep.subr.bf16.mxu0 0
    %7125 = vmatpush1.bf16.msra.mxu0 0
    %7126 = vmatprep.subr.bf16.mxu0 0
    %7127 = vmatpush1.bf16.msra.mxu0 0
    %7128 = vmatprep.subr.bf16.mxu0 0
    %7129 = vmatpush1.bf16.msra.mxu0 0
    %7130 = vmatprep.subr.bf16.mxu0 0
    %7131 = vmatpush1.bf16.msra.mxu0 0
    %7132 = vmatprep.subr.bf16.mxu0 0
    %7133 = vmatpush1.bf16.msra.mxu0 0
    %7134 = vmatprep.subr.bf16.mxu0 0
    %7135 = vmatpush1.bf16.msra.mxu0 0
    %7136 = vmatprep.subr.bf16.mxu0 0
    %7137 = vmatpush1.bf16.msra.mxu0 0
    %7138 = vmatprep.subr.bf16.mxu0 0
    %7139 = vmatpush1.bf16.msra.mxu0 0
    %7140 = vmatprep.subr.bf16.mxu0 0
    %7141 = vmatpush1.bf16.msra.mxu0 0
    %7142 = vmatprep.subr.bf16.mxu0 0
    %7143 = vmatpush1.bf16.msra.mxu0 0
    %7144 = vmatprep.mubr.bf16.mxu0 0
    %7145 = vmatmul.mubr.bf16.gmra.mrb[0].mxu0 %v5989
    %v7146 = vpop.f32.mrb[0].mxu0
    %v7147 = vadd.f32 0.0, %v7146
    %v7148 = vpop.f32.mrb[0].mxu0
    %v7149 = vpop.f32.mrb[0].mxu0
    %v7150 = vadd.f32 0.0, %v7149
    %v7151 = vpop.f32.mrb[0].mxu0
    %7152 = vdwg.mxu0
    %7153 = vmatprep.subr.bf16.mxu0 0
    %7154 = vmatpush1.bf16.msra.mxu0 %v5925
    %7155 = vmatprep.subr.bf16.mxu0 0
    %7156 = vmatpush1.bf16.msra.mxu0 %v5926
    %7157 = vmatprep.subr.bf16.mxu0 0
    %7158 = vmatpush1.bf16.msra.mxu0 %v5927
    %7159 = vmatprep.subr.bf16.mxu0 0
    %7160 = vmatpush1.bf16.msra.mxu0 %v5928
    %7161 = vmatprep.subr.bf16.mxu0 0
    %7162 = vmatpush1.bf16.msra.mxu0 0
    %7163 = vmatprep.subr.bf16.mxu0 0
    %7164 = vmatpush1.bf16.msra.mxu0 0
    %7165 = vmatprep.subr.bf16.mxu0 0
    %7166 = vmatpush1.bf16.msra.mxu0 0
    %7167 = vmatprep.subr.bf16.mxu0 0
    %7168 = vmatpush1.bf16.msra.mxu0 0
    %7169 = vmatprep.subr.bf16.mxu0 0
    %7170 = vmatpush1.bf16.msra.mxu0 0
    %7171 = vmatprep.subr.bf16.mxu0 0
    %7172 = vmatpush1.bf16.msra.mxu0 0
    %7173 = vmatprep.subr.bf16.mxu0 0
    %7174 = vmatpush1.bf16.msra.mxu0 0
    %7175 = vmatprep.subr.bf16.mxu0 0
    %7176 = vmatpush1.bf16.msra.mxu0 0
    %7177 = vmatprep.subr.bf16.mxu0 0
    %7178 = vmatpush1.bf16.msra.mxu0 0
    %7179 = vmatprep.subr.bf16.mxu0 0
    %7180 = vmatpush1.bf16.msra.mxu0 0
    %7181 = vmatprep.subr.bf16.mxu0 0
    %7182 = vmatpush1.bf16.msra.mxu0 0
    %7183 = vmatprep.subr.bf16.mxu0 0
    %7184 = vmatpush1.bf16.msra.mxu0 0
    %7185 = vmatprep.mubr.bf16.mxu0 0
    %7186 = vmatmul.mubr.bf16.gmra.mrb[0].mxu0 %v6041
    %v7187 = vpop.f32.mrb[0].mxu0
    %v7188 = vadd.f32 0.0, %v7187
    %v7189 = vpop.f32.mrb[0].mxu0
    %v7190 = vpop.f32.mrb[0].mxu0
    %v7191 = vadd.f32 0.0, %v7190
    %v7192 = vpop.f32.mrb[0].mxu0
    %7193 = vdwg.mxu0
    %7194 = vmatprep.subr.bf16.mxu0 0
    %7195 = vmatpush1.bf16.msra.mxu0 %v5925
    %7196 = vmatprep.subr.bf16.mxu0 0
    %7197 = vmatpush1.bf16.msra.mxu0 %v5926
    %7198 = vmatprep.subr.bf16.mxu0 0
    %7199 = vmatpush1.bf16.msra.mxu0 %v5927
    %7200 = vmatprep.subr.bf16.mxu0 0
    %7201 = vmatpush1.bf16.msra.mxu0 %v5928
    %7202 = vmatprep.subr.bf16.mxu0 0
    %7203 = vmatpush1.bf16.msra.mxu0 0
    %7204 = vmatprep.subr.bf16.mxu0 0
    %7205 = vmatpush1.bf16.msra.mxu0 0
    %7206 = vmatprep.subr.bf16.mxu0 0
    %7207 = vmatpush1.bf16.msra.mxu0 0
    %7208 = vmatprep.subr.bf16.mxu0 0
    %7209 = vmatpush1.bf16.msra.mxu0 0
    %7210 = vmatprep.subr.bf16.mxu0 0
    %7211 = vmatpush1.bf16.msra.mxu0 0
    %7212 = vmatprep.subr.bf16.mxu0 0
    %7213 = vmatpush1.bf16.msra.mxu0 0
    %7214 = vmatprep.subr.bf16.mxu0 0
    %7215 = vmatpush1.bf16.msra.mxu0 0
    %7216 = vmatprep.subr.bf16.mxu0 0
    %7217 = vmatpush1.bf16.msra.mxu0 0
    %7218 = vmatprep.subr.bf16.mxu0 0
    %7219 = vmatpush1.bf16.msra.mxu0 0
    %7220 = vmatprep.subr.bf16.mxu0 0
    %7221 = vmatpush1.bf16.msra.mxu0 0
    %7222 = vmatprep.subr.bf16.mxu0 0
    %7223 = vmatpush1.bf16.msra.mxu0 0
    %7224 = vmatprep.subr.bf16.mxu0 0
    %7225 = vmatpush1.bf16.msra.mxu0 0
    %7226 = vmatprep.mubr.bf16.mxu0 0
    %7227 = vmatmul.mubr.bf16.gmra.mrb[0].mxu0 %v6093
    %v7228 = vpop.f32.mrb[0].mxu0
    %v7229 = vadd.f32 0.0, %v7228
    %v7230 = vpop.f32.mrb[0].mxu0
    %v7231 = vpop.f32.mrb[0].mxu0
    %v7232 = vadd.f32 0.0, %v7231
    %v7233 = vpop.f32.mrb[0].mxu0
    %7234 = vdwg.mxu0
    %7235 = vmatprep.subr.bf16.mxu0 0
    %7236 = vmatpush1.bf16.msra.mxu0 %v5925
    %7237 = vmatprep.subr.bf16.mxu0 0
    %7238 = vmatpush1.bf16.msra.mxu0 %v5926
    %7239 = vmatprep.subr.bf16.mxu0 0
    %7240 = vmatpush1.bf16.msra.mxu0 %v5927
    %7241 = vmatprep.subr.bf16.mxu0 0
    %7242 = vmatpush1.bf16.msra.mxu0 %v5928
    %7243 = vmatprep.subr.bf16.mxu0 0
    %7244 = vmatpush1.bf16.msra.mxu0 0
    %7245 = vmatprep.subr.bf16.mxu0 0
    %7246 = vmatpush1.bf16.msra.mxu0 0
    %7247 = vmatprep.subr.bf16.mxu0 0
    %7248 = vmatpush1.bf16.msra.mxu0 0
    %7249 = vmatprep.subr.bf16.mxu0 0
    %7250 = vmatpush1.bf16.msra.mxu0 0
    %7251 = vmatprep.subr.bf16.mxu0 0
    %7252 = vmatpush1.bf16.msra.mxu0 0
    %7253 = vmatprep.subr.bf16.mxu0 0
    %7254 = vmatpush1.bf16.msra.mxu0 0
    %7255 = vmatprep.subr.bf16.mxu0 0
    %7256 = vmatpush1.bf16.msra.mxu0 0
    %7257 = vmatprep.subr.bf16.mxu0 0
    %7258 = vmatpush1.bf16.msra.mxu0 0
    %7259 = vmatprep.subr.bf16.mxu0 0
    %7260 = vmatpush1.bf16.msra.mxu0 0
    %7261 = vmatprep.subr.bf16.mxu0 0
    %7262 = vmatpush1.bf16.msra.mxu0 0
    %7263 = vmatprep.subr.bf16.mxu0 0
    %7264 = vmatpush1.bf16.msra.mxu0 0
    %7265 = vmatprep.subr.bf16.mxu0 0
    %7266 = vmatpush1.bf16.msra.mxu0 0
    %7267 = vmatprep.mubr.bf16.mxu0 0
    %7268 = vmatmul.mubr.bf16.gmra.mrb[0].mxu0 %v6145
    %v7269 = vpop.f32.mrb[0].mxu0
    %v7270 = vadd.f32 0.0, %v7269
    %v7271 = vpop.f32.mrb[0].mxu0
    %v7272 = vpop.f32.mrb[0].mxu0
    %v7273 = vadd.f32 0.0, %v7272
    %v7274 = vpop.f32.mrb[0].mxu0
    %7275 = vdwg.mxu0
    %7276 = vmatprep.subr.bf16.mxu0 0
    %7277 = vmatpush1.bf16.msra.mxu0 %v5925
    %7278 = vmatprep.subr.bf16.mxu0 0
    %7279 = vmatpush1.bf16.msra.mxu0 %v5926
    %7280 = vmatprep.subr.bf16.mxu0 0
    %7281 = vmatpush1.bf16.msra.mxu0 %v5927
    %7282 = vmatprep.subr.bf16.mxu0 0
    %7283 = vmatpush1.bf16.msra.mxu0 %v5928
    %7284 = vmatprep.subr.bf16.mxu0 0
    %7285 = vmatpush1.bf16.msra.mxu0 0
    %7286 = vmatprep.subr.bf16.mxu0 0
    %7287 = vmatpush1.bf16.msra.mxu0 0
    %7288 = vmatprep.subr.bf16.mxu0 0
    %7289 = vmatpush1.bf16.msra.mxu0 0
    %7290 = vmatprep.subr.bf16.mxu0 0
    %7291 = vmatpush1.bf16.msra.mxu0 0
    %7292 = vmatprep.subr.bf16.mxu0 0
    %7293 = vmatpush1.bf16.msra.mxu0 0
    %7294 = vmatprep.subr.bf16.mxu0 0
    %7295 = vmatpush1.bf16.msra.mxu0 0
    %7296 = vmatprep.subr.bf16.mxu0 0
    %7297 = vmatpush1.bf16.msra.mxu0 0
    %7298 = vmatprep.subr.bf16.mxu0 0
    %7299 = vmatpush1.bf16.msra.mxu0 0
    %7300 = vmatprep.subr.bf16.mxu0 0
    %7301 = vmatpush1.bf16.msra.mxu0 0
    %7302 = vmatprep.subr.bf16.mxu0 0
    %7303 = vmatpush1.bf16.msra.mxu0 0
    %7304 = vmatprep.subr.bf16.mxu0 0
    %7305 = vmatpush1.bf16.msra.mxu0 0
    %7306 = vmatprep.subr.bf16.mxu0 0
    %7307 = vmatpush1.bf16.msra.mxu0 0
    %7308 = vmatprep.mubr.bf16.mxu0 0
    %7309 = vmatmul.mubr.bf16.gmra.mrb[0].mxu0 %v6197
    %v7310 = vpop.f32.mrb[0].mxu0
    %v7311 = vadd.f32 0.0, %v7310
    %v7312 = vpop.f32.mrb[0].mxu0
    %v7313 = vpop.f32.mrb[0].mxu0
    %v7314 = vadd.f32 0.0, %v7313
    %v7315 = vpop.f32.mrb[0].mxu0
    %7316 = vdwg.mxu0
    %7317 = vmatprep.subr.bf16.mxu0 0
    %7318 = vmatpush1.bf16.msra.mxu0 %v5925
    %7319 = vmatprep.subr.bf16.mxu0 0
    %7320 = vmatpush1.bf16.msra.mxu0 %v5926
    %7321 = vmatprep.subr.bf16.mxu0 0
    %7322 = vmatpush1.bf16.msra.mxu0 %v5927
    %7323 = vmatprep.subr.bf16.mxu0 0
    %7324 = vmatpush1.bf16.msra.mxu0 %v5928
    %7325 = vmatprep.subr.bf16.mxu0 0
    %7326 = vmatpush1.bf16.msra.mxu0 0
    %7327 = vmatprep.subr.bf16.mxu0 0
    %7328 = vmatpush1.bf16.msra.mxu0 0
    %7329 = vmatprep.subr.bf16.mxu0 0
    %7330 = vmatpush1.bf16.msra.mxu0 0
    %7331 = vmatprep.subr.bf16.mxu0 0
    %7332 = vmatpush1.bf16.msra.mxu0 0
    %7333 = vmatprep.subr.bf16.mxu0 0
    %7334 = vmatpush1.bf16.msra.mxu0 0
    %7335 = vmatprep.subr.bf16.mxu0 0
    %7336 = vmatpush1.bf16.msra.mxu0 0
    %7337 = vmatprep.subr.bf16.mxu0 0
    %7338 = vmatpush1.bf16.msra.mxu0 0
    %7339 = vmatprep.subr.bf16.mxu0 0
    %7340 = vmatpush1.bf16.msra.mxu0 0
    %7341 = vmatprep.subr.bf16.mxu0 0
    %7342 = vmatpush1.bf16.msra.mxu0 0
    %7343 = vmatprep.subr.bf16.mxu0 0
    %7344 = vmatpush1.bf16.msra.mxu0 0
    %7345 = vmatprep.subr.bf16.mxu0 0
    %7346 = vmatpush1.bf16.msra.mxu0 0
    %7347 = vmatprep.subr.bf16.mxu0 0
    %7348 = vmatpush1.bf16.msra.mxu0 0
    %7349 = vmatprep.mubr.bf16.mxu0 0
    %7350 = vmatmul.mubr.bf16.gmra.mrb[0].mxu0 %v6249
    %v7351 = vpop.f32.mrb[0].mxu0
    %v7352 = vadd.f32 0.0, %v7351
    %v7353 = vpop.f32.mrb[0].mxu0
    %v7354 = vpop.f32.mrb[0].mxu0
    %v7355 = vadd.f32 0.0, %v7354
    %v7356 = vpop.f32.mrb[0].mxu0
    %7357 = vdwg.mxu0
    %7358 = vmatprep.subr.bf16.mxu0 0
    %7359 = vmatpush1.bf16.msra.mxu0 %v5925
    %7360 = vmatprep.subr.bf16.mxu0 0
    %7361 = vmatpush1.bf16.msra.mxu0 %v5926
    %7362 = vmatprep.subr.bf16.mxu0 0
    %7363 = vmatpush1.bf16.msra.mxu0 %v5927
    %7364 = vmatprep.subr.bf16.mxu0 0
    %7365 = vmatpush1.bf16.msra.mxu0 %v5928
    %7366 = vmatprep.subr.bf16.mxu0 0
    %7367 = vmatpush1.bf16.msra.mxu0 0
    %7368 = vmatprep.subr.bf16.mxu0 0
    %7369 = vmatpush1.bf16.msra.mxu0 0
    %7370 = vmatprep.subr.bf16.mxu0 0
    %7371 = vmatpush1.bf16.msra.mxu0 0
    %7372 = vmatprep.subr.bf16.mxu0 0
    %7373 = vmatpush1.bf16.msra.mxu0 0
    %7374 = vmatprep.subr.bf16.mxu0 0
    %7375 = vmatpush1.bf16.msra.mxu0 0
    %7376 = vmatprep.subr.bf16.mxu0 0
    %7377 = vmatpush1.bf16.msra.mxu0 0
    %7378 = vmatprep.subr.bf16.mxu0 0
    %7379 = vmatpush1.bf16.msra.mxu0 0
    %7380 = vmatprep.subr.bf16.mxu0 0
    %7381 = vmatpush1.bf16.msra.mxu0 0
    %7382 = vmatprep.subr.bf16.mxu0 0
    %7383 = vmatpush1.bf16.msra.mxu0 0
    %7384 = vmatprep.subr.bf16.mxu0 0
    %7385 = vmatpush1.bf16.msra.mxu0 0
    %7386 = vmatprep.subr.bf16.mxu0 0
    %7387 = vmatpush1.bf16.msra.mxu0 0
    %7388 = vmatprep.subr.bf16.mxu0 0
    %7389 = vmatpush1.bf16.msra.mxu0 0
    %7390 = vmatprep.mubr.bf16.mxu0 0
    %7391 = vmatmul.mubr.bf16.gmra.mrb[0].mxu0 %v6301
    %v7392 = vpop.f32.mrb[0].mxu0
    %v7393 = vadd.f32 0.0, %v7392
    %v7394 = vpop.f32.mrb[0].mxu0
    %v7395 = vpop.f32.mrb[0].mxu0
    %v7396 = vadd.f32 0.0, %v7395
    %v7397 = vpop.f32.mrb[0].mxu0
    %7398 = vdwg.mxu0
    %7399 = vmatprep.subr.bf16.mxu0 0
    %7400 = vmatpush1.bf16.msra.mxu0 %v5925
    %7401 = vmatprep.subr.bf16.mxu0 0
    %7402 = vmatpush1.bf16.msra.mxu0 %v5926
    %7403 = vmatprep.subr.bf16.mxu0 0
    %7404 = vmatpush1.bf16.msra.mxu0 %v5927
    %7405 = vmatprep.subr.bf16.mxu0 0
    %7406 = vmatpush1.bf16.msra.mxu0 %v5928
    %7407 = vmatprep.subr.bf16.mxu0 0
    %7408 = vmatpush1.bf16.msra.mxu0 0
    %7409 = vmatprep.subr.bf16.mxu0 0
    %7410 = vmatpush1.bf16.msra.mxu0 0
    %7411 = vmatprep.subr.bf16.mxu0 0
    %7412 = vmatpush1.bf16.msra.mxu0 0
    %7413 = vmatprep.subr.bf16.mxu0 0
    %7414 = vmatpush1.bf16.msra.mxu0 0
    %7415 = vmatprep.subr.bf16.mxu0 0
    %7416 = vmatpush1.bf16.msra.mxu0 0
    %7417 = vmatprep.subr.bf16.mxu0 0
    %7418 = vmatpush1.bf16.msra.mxu0 0
    %7419 = vmatprep.subr.bf16.mxu0 0
    %7420 = vmatpush1.bf16.msra.mxu0 0
    %7421 = vmatprep.subr.bf16.mxu0 0
    %7422 = vmatpush1.bf16.msra.mxu0 0
    %7423 = vmatprep.subr.bf16.mxu0 0
    %7424 = vmatpush1.bf16.msra.mxu0 0
    %7425 = vmatprep.subr.bf16.mxu0 0
    %7426 = vmatpush1.bf16.msra.mxu0 0
    %7427 = vmatprep.subr.bf16.mxu0 0
    %7428 = vmatpush1.bf16.msra.mxu0 0
    %7429 = vmatprep.subr.bf16.mxu0 0
    %7430 = vmatpush1.bf16.msra.mxu0 0
    %7431 = vmatprep.mubr.bf16.mxu0 0
    %7432 = vmatmul.mubr.bf16.gmra.mrb[0].mxu0 %v6353
    %v7433 = vpop.f32.mrb[0].mxu0
    %v7434 = vadd.f32 0.0, %v7433
    %v7435 = vpop.f32.mrb[0].mxu0
    %v7436 = vpop.f32.mrb[0].mxu0
    %v7437 = vadd.f32 0.0, %v7436
    %v7438 = vpop.f32.mrb[0].mxu0
    %7439 = vdwg.mxu0
    %7440 = vmatprep.subr.bf16.mxu0 0
    %7441 = vmatpush1.bf16.msra.mxu0 %v5925
    %7442 = vmatprep.subr.bf16.mxu0 0
    %7443 = vmatpush1.bf16.msra.mxu0 %v5926
    %7444 = vmatprep.subr.bf16.mxu0 0
    %7445 = vmatpush1.bf16.msra.mxu0 %v5927
    %7446 = vmatprep.subr.bf16.mxu0 0
    %7447 = vmatpush1.bf16.msra.mxu0 %v5928
    %7448 = vmatprep.subr.bf16.mxu0 0
    %7449 = vmatpush1.bf16.msra.mxu0 0
    %7450 = vmatprep.subr.bf16.mxu0 0
    %7451 = vmatpush1.bf16.msra.mxu0 0
    %7452 = vmatprep.subr.bf16.mxu0 0
    %7453 = vmatpush1.bf16.msra.mxu0 0
    %7454 = vmatprep.subr.bf16.mxu0 0
    %7455 = vmatpush1.bf16.msra.mxu0 0
    %7456 = vmatprep.subr.bf16.mxu0 0
    %7457 = vmatpush1.bf16.msra.mxu0 0
    %7458 = vmatprep.subr.bf16.mxu0 0
    %7459 = vmatpush1.bf16.msra.mxu0 0
    %7460 = vmatprep.subr.bf16.mxu0 0
    %7461 = vmatpush1.bf16.msra.mxu0 0
    %7462 = vmatprep.subr.bf16.mxu0 0
    %7463 = vmatpush1.bf16.msra.mxu0 0
    %7464 = vmatprep.subr.bf16.mxu0 0
    %7465 = vmatpush1.bf16.msra.mxu0 0
    %7466 = vmatprep.subr.bf16.mxu0 0
    %7467 = vmatpush1.bf16.msra.mxu0 0
    %7468 = vmatprep.subr.bf16.mxu0 0
    %7469 = vmatpush1.bf16.msra.mxu0 0
    %7470 = vmatprep.subr.bf16.mxu0 0
    %7471 = vmatpush1.bf16.msra.mxu0 0
    %7472 = vmatprep.mubr.bf16.mxu0 0
    %7473 = vmatmul.mubr.bf16.gmra.mrb[0].mxu0 %v6405
    %v7474 = vpop.f32.mrb[0].mxu0
    %v7475 = vadd.f32 0.0, %v7474
    %v7476 = vpop.f32.mrb[0].mxu0
    %v7477 = vpop.f32.mrb[0].mxu0
    %v7478 = vadd.f32 0.0, %v7477
    %v7479 = vpop.f32.mrb[0].mxu0
    %7480 = vdwg.mxu0
    %7481 = vmatprep.subr.bf16.mxu0 0
    %7482 = vmatpush1.bf16.msra.mxu0 %v5925
    %7483 = vmatprep.subr.bf16.mxu0 0
    %7484 = vmatpush1.bf16.msra.mxu0 %v5926
    %7485 = vmatprep.subr.bf16.mxu0 0
    %7486 = vmatpush1.bf16.msra.mxu0 %v5927
    %7487 = vmatprep.subr.bf16.mxu0 0
    %7488 = vmatpush1.bf16.msra.mxu0 %v5928
    %7489 = vmatprep.subr.bf16.mxu0 0
    %7490 = vmatpush1.bf16.msra.mxu0 0
    %7491 = vmatprep.subr.bf16.mxu0 0
    %7492 = vmatpush1.bf16.msra.mxu0 0
    %7493 = vmatprep.subr.bf16.mxu0 0
    %7494 = vmatpush1.bf16.msra.mxu0 0
    %7495 = vmatprep.subr.bf16.mxu0 0
    %7496 = vmatpush1.bf16.msra.mxu0 0
    %7497 = vmatprep.subr.bf16.mxu0 0
    %7498 = vmatpush1.bf16.msra.mxu0 0
    %7499 = vmatprep.subr.bf16.mxu0 0
    %7500 = vmatpush1.bf16.msra.mxu0 0
    %7501 = vmatprep.subr.bf16.mxu0 0
    %7502 = vmatpush1.bf16.msra.mxu0 0
    %7503 = vmatprep.subr.bf16.mxu0 0
    %7504 = vmatpush1.bf16.msra.mxu0 0
    %7505 = vmatprep.subr.bf16.mxu0 0
    %7506 = vmatpush1.bf16.msra.mxu0 0
    %7507 = vmatprep.subr.bf16.mxu0 0
    %7508 = vmatpush1.bf16.msra.mxu0 0
    %7509 = vmatprep.subr.bf16.mxu0 0
    %7510 = vmatpush1.bf16.msra.mxu0 0
    %7511 = vmatprep.subr.bf16.mxu0 0
    %7512 = vmatpush1.bf16.msra.mxu0 0
    %7513 = vmatprep.mubr.bf16.mxu0 0
    %7514 = vmatmul.mubr.bf16.gmra.mrb[0].mxu0 %v6457
    %v7515 = vpop.f32.mrb[0].mxu0
    %v7516 = vadd.f32 0.0, %v7515
    %v7517 = vpop.f32.mrb[0].mxu0
    %v7518 = vpop.f32.mrb[0].mxu0
    %v7519 = vadd.f32 0.0, %v7518
    %v7520 = vpop.f32.mrb[0].mxu0
    %7521 = vdwg.mxu0
    %7522 = vmatprep.subr.bf16.mxu0 0
    %7523 = vmatpush1.bf16.msra.mxu0 %v5925
    %7524 = vmatprep.subr.bf16.mxu0 0
    %7525 = vmatpush1.bf16.msra.mxu0 %v5926
    %7526 = vmatprep.subr.bf16.mxu0 0
    %7527 = vmatpush1.bf16.msra.mxu0 %v5927
    %7528 = vmatprep.subr.bf16.mxu0 0
    %7529 = vmatpush1.bf16.msra.mxu0 %v5928
    %7530 = vmatprep.subr.bf16.mxu0 0
    %7531 = vmatpush1.bf16.msra.mxu0 0
    %7532 = vmatprep.subr.bf16.mxu0 0
    %7533 = vmatpush1.bf16.msra.mxu0 0
    %7534 = vmatprep.subr.bf16.mxu0 0
    %7535 = vmatpush1.bf16.msra.mxu0 0
    %7536 = vmatprep.subr.bf16.mxu0 0
    %7537 = vmatpush1.bf16.msra.mxu0 0
    %7538 = vmatprep.subr.bf16.mxu0 0
    %7539 = vmatpush1.bf16.msra.mxu0 0
    %7540 = vmatprep.subr.bf16.mxu0 0
    %7541 = vmatpush1.bf16.msra.mxu0 0
    %7542 = vmatprep.subr.bf16.mxu0 0
    %7543 = vmatpush1.bf16.msra.mxu0 0
    %7544 = vmatprep.subr.bf16.mxu0 0
    %7545 = vmatpush1.bf16.msra.mxu0 0
    %7546 = vmatprep.subr.bf16.mxu0 0
    %7547 = vmatpush1.bf16.msra.mxu0 0
    %7548 = vmatprep.subr.bf16.mxu0 0
    %7549 = vmatpush1.bf16.msra.mxu0 0
    %7550 = vmatprep.subr.bf16.mxu0 0
    %7551 = vmatpush1.bf16.msra.mxu0 0
    %7552 = vmatprep.subr.bf16.mxu0 0
    %7553 = vmatpush1.bf16.msra.mxu0 0
    %7554 = vmatprep.mubr.bf16.mxu0 0
    %7555 = vmatmul.mubr.bf16.gmra.mrb[0].mxu0 %v6509
    %v7556 = vpop.f32.mrb[0].mxu0
    %v7557 = vadd.f32 0.0, %v7556
    %v7558 = vpop.f32.mrb[0].mxu0
    %v7559 = vpop.f32.mrb[0].mxu0
    %v7560 = vadd.f32 0.0, %v7559
    %v7561 = vpop.f32.mrb[0].mxu0
    %7562 = vdwg.mxu0
    %7563 = vmatprep.subr.bf16.mxu0 0
    %7564 = vmatpush1.bf16.msra.mxu0 %v5925
    %7565 = vmatprep.subr.bf16.mxu0 0
    %7566 = vmatpush1.bf16.msra.mxu0 %v5926
    %7567 = vmatprep.subr.bf16.mxu0 0
    %7568 = vmatpush1.bf16.msra.mxu0 %v5927
    %7569 = vmatprep.subr.bf16.mxu0 0
    %7570 = vmatpush1.bf16.msra.mxu0 %v5928
    %7571 = vmatprep.subr.bf16.mxu0 0
    %7572 = vmatpush1.bf16.msra.mxu0 0
    %7573 = vmatprep.subr.bf16.mxu0 0
    %7574 = vmatpush1.bf16.msra.mxu0 0
    %7575 = vmatprep.subr.bf16.mxu0 0
    %7576 = vmatpush1.bf16.msra.mxu0 0
    %7577 = vmatprep.subr.bf16.mxu0 0
    %7578 = vmatpush1.bf16.msra.mxu0 0
    %7579 = vmatprep.subr.bf16.mxu0 0
    %7580 = vmatpush1.bf16.msra.mxu0 0
    %7581 = vmatprep.subr.bf16.mxu0 0
    %7582 = vmatpush1.bf16.msra.mxu0 0
    %7583 = vmatprep.subr.bf16.mxu0 0
    %7584 = vmatpush1.bf16.msra.mxu0 0
    %7585 = vmatprep.subr.bf16.mxu0 0
    %7586 = vmatpush1.bf16.msra.mxu0 0
    %7587 = vmatprep.subr.bf16.mxu0 0
    %7588 = vmatpush1.bf16.msra.mxu0 0
    %7589 = vmatprep.subr.bf16.mxu0 0
    %7590 = vmatpush1.bf16.msra.mxu0 0
    %7591 = vmatprep.subr.bf16.mxu0 0
    %7592 = vmatpush1.bf16.msra.mxu0 0
    %7593 = vmatprep.subr.bf16.mxu0 0
    %7594 = vmatpush1.bf16.msra.mxu0 0
    %7595 = vmatprep.mubr.bf16.mxu0 0
    %7596 = vmatmul.mubr.bf16.gmra.mrb[0].mxu0 %v6561
    %v7597 = vpop.f32.mrb[0].mxu0
    %v7598 = vadd.f32 0.0, %v7597
    %v7599 = vpop.f32.mrb[0].mxu0
    %v7600 = vpop.f32.mrb[0].mxu0
    %v7601 = vadd.f32 0.0, %v7600
    %v7602 = vpop.f32.mrb[0].mxu0
    %7603 = vdwg.mxu0
    %7604 = vmatprep.subr.bf16.mxu0 0
    %7605 = vmatpush1.bf16.msra.mxu0 %v5925
    %7606 = vmatprep.subr.bf16.mxu0 0
    %7607 = vmatpush1.bf16.msra.mxu0 %v5926
    %7608 = vmatprep.subr.bf16.mxu0 0
    %7609 = vmatpush1.bf16.msra.mxu0 %v5927
    %7610 = vmatprep.subr.bf16.mxu0 0
    %7611 = vmatpush1.bf16.msra.mxu0 %v5928
    %7612 = vmatprep.subr.bf16.mxu0 0
    %7613 = vmatpush1.bf16.msra.mxu0 0
    %7614 = vmatprep.subr.bf16.mxu0 0
    %7615 = vmatpush1.bf16.msra.mxu0 0
    %7616 = vmatprep.subr.bf16.mxu0 0
    %7617 = vmatpush1.bf16.msra.mxu0 0
    %7618 = vmatprep.subr.bf16.mxu0 0
    %7619 = vmatpush1.bf16.msra.mxu0 0
    %7620 = vmatprep.subr.bf16.mxu0 0
    %7621 = vmatpush1.bf16.msra.mxu0 0
    %7622 = vmatprep.subr.bf16.mxu0 0
    %7623 = vmatpush1.bf16.msra.mxu0 0
    %7624 = vmatprep.subr.bf16.mxu0 0
    %7625 = vmatpush1.bf16.msra.mxu0 0
    %7626 = vmatprep.subr.bf16.mxu0 0
    %7627 = vmatpush1.bf16.msra.mxu0 0
    %7628 = vmatprep.subr.bf16.mxu0 0
    %7629 = vmatpush1.bf16.msra.mxu0 0
    %7630 = vmatprep.subr.bf16.mxu0 0
    %7631 = vmatpush1.bf16.msra.mxu0 0
    %7632 = vmatprep.subr.bf16.mxu0 0
    %7633 = vmatpush1.bf16.msra.mxu0 0
    %7634 = vmatprep.subr.bf16.mxu0 0
    %7635 = vmatpush1.bf16.msra.mxu0 0
    %7636 = vmatprep.mubr.bf16.mxu0 0
    %7637 = vmatmul.mubr.bf16.gmra.mrb[0].mxu0 %v6613
    %v7638 = vpop.f32.mrb[0].mxu0
    %v7639 = vadd.f32 0.0, %v7638
    %v7640 = vpop.f32.mrb[0].mxu0
    %v7641 = vpop.f32.mrb[0].mxu0
    %v7642 = vadd.f32 0.0, %v7641
    %v7643 = vpop.f32.mrb[0].mxu0
    %7644 = vdwg.mxu0
    %7645 = vmatprep.subr.bf16.mxu0 0
    %7646 = vmatpush1.bf16.msra.mxu0 %v5925
    %7647 = vmatprep.subr.bf16.mxu0 0
    %7648 = vmatpush1.bf16.msra.mxu0 %v5926
    %7649 = vmatprep.subr.bf16.mxu0 0
    %7650 = vmatpush1.bf16.msra.mxu0 %v5927
    %7651 = vmatprep.subr.bf16.mxu0 0
    %7652 = vmatpush1.bf16.msra.mxu0 %v5928
    %7653 = vmatprep.subr.bf16.mxu0 0
    %7654 = vmatpush1.bf16.msra.mxu0 0
    %7655 = vmatprep.subr.bf16.mxu0 0
    %7656 = vmatpush1.bf16.msra.mxu0 0
    %7657 = vmatprep.subr.bf16.mxu0 0
    %7658 = vmatpush1.bf16.msra.mxu0 0
    %7659 = vmatprep.subr.bf16.mxu0 0
    %7660 = vmatpush1.bf16.msra.mxu0 0
    %7661 = vmatprep.subr.bf16.mxu0 0
    %7662 = vmatpush1.bf16.msra.mxu0 0
    %7663 = vmatprep.subr.bf16.mxu0 0
    %7664 = vmatpush1.bf16.msra.mxu0 0
    %7665 = vmatprep.subr.bf16.mxu0 0
    %7666 = vmatpush1.bf16.msra.mxu0 0
    %7667 = vmatprep.subr.bf16.mxu0 0
    %7668 = vmatpush1.bf16.msra.mxu0 0
    %7669 = vmatprep.subr.bf16.mxu0 0
    %7670 = vmatpush1.bf16.msra.mxu0 0
    %7671 = vmatprep.subr.bf16.mxu0 0
    %7672 = vmatpush1.bf16.msra.mxu0 0
    %7673 = vmatprep.subr.bf16.mxu0 0
    %7674 = vmatpush1.bf16.msra.mxu0 0
    %7675 = vmatprep.subr.bf16.mxu0 0
    %7676 = vmatpush1.bf16.msra.mxu0 0
    %7677 = vmatprep.mubr.bf16.mxu0 0
    %7678 = vmatmul.mubr.bf16.gmra.mrb[0].mxu0 %v6665
    %v7679 = vpop.f32.mrb[0].mxu0
    %v7680 = vadd.f32 0.0, %v7679
    %v7681 = vpop.f32.mrb[0].mxu0
    %v7682 = vpop.f32.mrb[0].mxu0
    %v7683 = vadd.f32 0.0, %v7682
    %v7684 = vpop.f32.mrb[0].mxu0
    %7685 = vdwg.mxu0
    %7686 = vmatprep.subr.bf16.mxu0 0
    %7687 = vmatpush1.bf16.msra.mxu0 %v5925
    %7688 = vmatprep.subr.bf16.mxu0 0
    %7689 = vmatpush1.bf16.msra.mxu0 %v5926
    %7690 = vmatprep.subr.bf16.mxu0 0
    %7691 = vmatpush1.bf16.msra.mxu0 %v5927
    %7692 = vmatprep.subr.bf16.mxu0 0
    %7693 = vmatpush1.bf16.msra.mxu0 %v5928
    %7694 = vmatprep.subr.bf16.mxu0 0
    %7695 = vmatpush1.bf16.msra.mxu0 0
    %7696 = vmatprep.subr.bf16.mxu0 0
    %7697 = vmatpush1.bf16.msra.mxu0 0
    %7698 = vmatprep.subr.bf16.mxu0 0
    %7699 = vmatpush1.bf16.msra.mxu0 0
    %7700 = vmatprep.subr.bf16.mxu0 0
    %7701 = vmatpush1.bf16.msra.mxu0 0
    %7702 = vmatprep.subr.bf16.mxu0 0
    %7703 = vmatpush1.bf16.msra.mxu0 0
    %7704 = vmatprep.subr.bf16.mxu0 0
    %7705 = vmatpush1.bf16.msra.mxu0 0
    %7706 = vmatprep.subr.bf16.mxu0 0
    %7707 = vmatpush1.bf16.msra.mxu0 0
    %7708 = vmatprep.subr.bf16.mxu0 0
    %7709 = vmatpush1.bf16.msra.mxu0 0
    %7710 = vmatprep.subr.bf16.mxu0 0
    %7711 = vmatpush1.bf16.msra.mxu0 0
    %7712 = vmatprep.subr.bf16.mxu0 0
    %7713 = vmatpush1.bf16.msra.mxu0 0
    %7714 = vmatprep.subr.bf16.mxu0 0
    %7715 = vmatpush1.bf16.msra.mxu0 0
    %7716 = vmatprep.subr.bf16.mxu0 0
    %7717 = vmatpush1.bf16.msra.mxu0 0
    %7718 = vmatprep.mubr.bf16.mxu0 0
    %7719 = vmatmul.mubr.bf16.gmra.mrb[0].mxu0 %v6717
    %v7720 = vpop.f32.mrb[0].mxu0
    %v7721 = vadd.f32 0.0, %v7720
    %v7722 = vpop.f32.mrb[0].mxu0
    %v7723 = vpop.f32.mrb[0].mxu0
    %v7724 = vadd.f32 0.0, %v7723
    %v7725 = vpop.f32.mrb[0].mxu0
    %7726 = vdwg.mxu0
    %7729 = vrot.lane.b32.xlu0 %v7147, 16
    %v7730 = vpop.permute.xlu0 %7729
    %7731 = vrot.lane.b32.xlu0 %v7150, 16
    %v7732 = vpop.permute.xlu0 %7731
    %7737 = vrot.lane.b32.xlu0 %v7188, 32
    %v7738 = vpop.permute.xlu0 %7737
    %7739 = vrot.lane.b32.xlu0 %v7191, 32
    %v7740 = vpop.permute.xlu0 %7739
    %7745 = vrot.lane.b32.xlu0 %v7229, 48
    %v7746 = vpop.permute.xlu0 %7745
    %7747 = vrot.lane.b32.xlu0 %v7232, 48
    %v7748 = vpop.permute.xlu0 %7747
    %7753 = vrot.lane.b32.xlu0 %v7270, 64
    %v7754 = vpop.permute.xlu0 %7753
    %7755 = vrot.lane.b32.xlu0 %v7273, 64
    %v7756 = vpop.permute.xlu0 %7755
    %7761 = vrot.lane.b32.xlu0 %v7311, 80
    %v7762 = vpop.permute.xlu0 %7761
    %7763 = vrot.lane.b32.xlu0 %v7314, 80
    %v7764 = vpop.permute.xlu0 %7763
    %7769 = vrot.lane.b32.xlu0 %v7352, 96
    %v7770 = vpop.permute.xlu0 %7769
    %7771 = vrot.lane.b32.xlu0 %v7355, 96
    %v7772 = vpop.permute.xlu0 %7771
    %7777 = vrot.lane.b32.xlu0 %v7393, 112
    %v7778 = vpop.permute.xlu0 %7777
    %7779 = vrot.lane.b32.xlu0 %v7396, 112
    %v7780 = vpop.permute.xlu0 %7779
    %7785 = vrot.lane.b32.xlu0 %v7475, 16
    %v7786 = vpop.permute.xlu0 %7785
    %7787 = vrot.lane.b32.xlu0 %v7478, 16
    %v7788 = vpop.permute.xlu0 %7787
    %7793 = vrot.lane.b32.xlu0 %v7516, 32
    %v7794 = vpop.permute.xlu0 %7793
    %7795 = vrot.lane.b32.xlu0 %v7519, 32
    %v7796 = vpop.permute.xlu0 %7795
    %7801 = vrot.lane.b32.xlu0 %v7557, 48
    %v7802 = vpop.permute.xlu0 %7801
    %7803 = vrot.lane.b32.xlu0 %v7560, 48
    %v7804 = vpop.permute.xlu0 %7803
    %7809 = vrot.lane.b32.xlu0 %v7598, 64
    %v7810 = vpop.permute.xlu0 %7809
    %7811 = vrot.lane.b32.xlu0 %v7601, 64
    %v7812 = vpop.permute.xlu0 %7811
    %7817 = vrot.lane.b32.xlu0 %v7639, 80
    %v7818 = vpop.permute.xlu0 %7817
    %7819 = vrot.lane.b32.xlu0 %v7642, 80
    %v7820 = vpop.permute.xlu0 %7819
    %7825 = vrot.lane.b32.xlu0 %v7680, 96
    %v7826 = vpop.permute.xlu0 %7825
    %7827 = vrot.lane.b32.xlu0 %v7683, 96
    %v7828 = vpop.permute.xlu0 %7827
    %7833 = vrot.lane.b32.xlu0 %v7721, 112
    %v7834 = vpop.permute.xlu0 %7833
    %7835 = vrot.lane.b32.xlu0 %v7724, 112
    %v7836 = vpop.permute.xlu0 %7835
    %v7839 = vsel %vm3751, %v7106, %v7730
    %v7840 = vsel %vm3751, %v7109, %v7732
    %v7841 = vsel %vm3769, %v7839, %v7738
    %v7842 = vsel %vm3769, %v7840, %v7740
    %v7843 = vsel %vm3787, %v7841, %v7746
    %v7844 = vsel %vm3787, %v7842, %v7748
    %v7845 = vsel %vm290, %v7843, %v7754
    %v7846 = vsel %vm290, %v7844, %v7756
    %v7847 = vsel %vm3822, %v7845, %v7762
    %v7848 = vsel %vm3822, %v7846, %v7764
    %v7849 = vsel %vm3840, %v7847, %v7770
    %v7850 = vsel %vm3840, %v7848, %v7772
    %v7851 = vsel %vm3858, %v7849, %v7778
    %v7852 = vsel %vm3858, %v7850, %v7780
    %v7853 = vsel %vm3751, %v7434, %v7786
    %v7854 = vsel %vm3751, %v7437, %v7788
    %v7855 = vsel %vm3769, %v7853, %v7794
    %v7856 = vsel %vm3769, %v7854, %v7796
    %v7857 = vsel %vm3787, %v7855, %v7802
    %v7858 = vsel %vm3787, %v7856, %v7804
    %v7859 = vsel %vm290, %v7857, %v7810
    %v7860 = vsel %vm290, %v7858, %v7812
    %v7861 = vsel %vm3822, %v7859, %v7818
    %v7862 = vsel %vm3822, %v7860, %v7820
    %v7863 = vsel %vm3840, %v7861, %v7826
    %v7864 = vsel %vm3840, %v7862, %v7828
    %v7865 = vsel %vm3858, %v7863, %v7834
    %v7866 = vsel %vm3858, %v7864, %v7836
    %v7867 = vpack.c.bf16 %v7852, %v7851
    %v7868 = vpack.c.bf16 %v7866, %v7865
    %7869 = vmatprep.subr.bf16.mxu0 0
    %7870 = vmatpush1.bf16.msra.mxu0 %v6998
    %7871 = vmatprep.subr.bf16.mxu0 0
    %7872 = vmatpush1.bf16.msra.mxu0 %v6999
    %7873 = vmatprep.subr.bf16.mxu0 0
    %7874 = vmatpush1.bf16.msra.mxu0 %v7000
    %7875 = vmatprep.subr.bf16.mxu0 0
    %7876 = vmatpush1.bf16.msra.mxu0 %v7001
    %7877 = vmatprep.subr.bf16.mxu0 0
    %7878 = vmatpush1.bf16.msra.mxu0 %v7002
    %7879 = vmatprep.subr.bf16.mxu0 0
    %7880 = vmatpush1.bf16.msra.mxu0 %v7003
    %7881 = vmatprep.subr.bf16.mxu0 0
    %7882 = vmatpush1.bf16.msra.mxu0 %v7004
    %7883 = vmatprep.subr.bf16.mxu0 0
    %7884 = vmatpush1.bf16.msra.mxu0 %v7005
    %7885 = vmatprep.subr.bf16.mxu0 0
    %7886 = vmatpush1.bf16.msra.mxu0 %v7006
    %7887 = vmatprep.subr.bf16.mxu0 0
    %7888 = vmatpush1.bf16.msra.mxu0 %v7007
    %7889 = vmatprep.subr.bf16.mxu0 0
    %7890 = vmatpush1.bf16.msra.mxu0 %v7008
    %7891 = vmatprep.subr.bf16.mxu0 0
    %7892 = vmatpush1.bf16.msra.mxu0 %v7009
    %7893 = vmatprep.subr.bf16.mxu0 0
    %7894 = vmatpush1.bf16.msra.mxu0 %v7010
    %7895 = vmatprep.subr.bf16.mxu0 0
    %7896 = vmatpush1.bf16.msra.mxu0 %v7011
    %7897 = vmatprep.subr.bf16.mxu0 0
    %7898 = vmatpush1.bf16.msra.mxu0 %v7012
    %7899 = vmatprep.subr.bf16.mxu0 0
    %7900 = vmatpush1.bf16.msra.mxu0 %v7013
    %7901 = vmatprep.mubr.bf16.mxu0 %v7868
    %7902 = vmatmul.mubr.bf16.gmra.mrb[0].mxu0 %v7867
    %v7903 = vpop.f32.mrb[0].mxu0
    %v7904 = vadd.f32 0.0, %v7903
    %v7905 = vpop.f32.mrb[0].mxu0
    %v7906 = vpop.f32.mrb[0].mxu0
    %v7907 = vadd.f32 0.0, %v7906
    %v7908 = vpop.f32.mrb[0].mxu0
    %7909 = vdwg.mxu0
    %v7910 = vld [vmem:[%s8 + $0x4] sm:$0x1]
    %v7911 = vld [vmem:[%s8 + $0x5] sm:$0x1]
    %v7912 = vsel %vm3769, %v7065, 0.0
    %v7913 = vsel %vm3769, %v7068, 0.0
    %v7914 = vadd.f32 %v7912, %v7913
    %v7915 = vsel %vm3769, %v7904, 0.0
    %v7916 = vadd.f32 %v7914, %v7915
    %v7917 = vsel %vm3769, %v7907, 0.0
    %v7918 = vadd.f32 %v7916, %v7917
    %v7919 = vrot.slane %v7918, 4
    %v7920 = vadd.f32 %v7918, %v7919
    %v7921 = vrot.slane %v7920, 2
    %v7922 = vadd.f32 %v7920, %v7921
    %v7923 = vrot.slane %v7922, 1
    %v7924 = vadd.f32 %v7922, %v7923
    %v7925 = vmul.f32 %v7924, 0.03125
    %v7926 = vmul.f32 %v7065, %v7065
    %v7927 = vmul.f32 %v7068, %v7068
    %v7928 = vmul.f32 %v7904, %v7904
    %v7929 = vmul.f32 %v7907, %v7907
    %v7930 = vsel %vm3769, %v7926, 0.0
    %v7931 = vsel %vm3769, %v7927, 0.0
    %v7932 = vadd.f32 %v7930, %v7931
    %v7933 = vsel %vm3769, %v7928, 0.0
    %v7934 = vadd.f32 %v7932, %v7933
    %v7935 = vsel %vm3769, %v7929, 0.0
    %v7936 = vadd.f32 %v7934, %v7935
    %v7937 = vrot.slane %v7936, 4
    %v7938 = vadd.f32 %v7936, %v7937
    %v7939 = vrot.slane %v7938, 2
    %v7940 = vadd.f32 %v7938, %v7939
    %v7941 = vrot.slane %v7940, 1
    %v7942 = vadd.f32 %v7940, %v7941
    %v7943 = vmul.f32 %v7942, 0.03125
    %v7944 = vmul.f32 %v7925, %v7925
    %v7945 = vsub.f32 %v7943, %v7944
    %v7946 = vsub.f32 %v7065, %v7925
    %v7947 = vsub.f32 %v7068, %v7925
    %v7948 = vsub.f32 %v7904, %v7925
    %v7949 = vsub.f32 %v7907, %v7925
    %v7950 = vadd.f32 %v7945, 1e-05
    %v7951 = vrsqrt.pop %v7950
    %v7952 = vmul.f32 %v7951, %v7910
    %v7953 = vlaneseq
    %v7954 = vshrl.u32 %v7953, 7
    %v7955 = vsub.s32 0, %v7954
    %v7956 = vrot.slane %v7952, %v7955
    %v7957 = vmul.f32 %v7946, %v7956
    %v7958 = vmul.f32 %v7947, %v7956
    %v7959 = vmul.f32 %v7948, %v7956
    %v7960 = vmul.f32 %v7949, %v7956
    %v7961 = vlaneseq
    %v7962 = vshrl.u32 %v7961, 7
    %v7963 = vsub.s32 0, %v7962
    %v7964 = vrot.slane %v7911, %v7963
    %v7965 = vadd.f32 %v7957, %v7964
    %v7966 = vadd.f32 %v7958, %v7964
    %v7967 = vadd.f32 %v7959, %v7964
    %v7968 = vadd.f32 %v7960, %v7964
    %vm7969 = vcmp.gt.f32.partialorder %v7965, 0.0
    %vm7970 = vcmp.gt.f32.partialorder %v7966, 0.0
    %vm7971 = vcmp.gt.f32.partialorder %v7967, 0.0
    %vm7972 = vcmp.gt.f32.partialorder %v7968, 0.0
    %v7973 = vmul.f32 %v7965, 0.2
    %v7974 = vmul.f32 %v7966, 0.2
    %v7975 = vmul.f32 %v7967, 0.2
    %v7976 = vmul.f32 %v7968, 0.2
    %v7977 = vsel %vm7969, %v7965, %v7973
    %v7978 = vsel %vm7970, %v7966, %v7974
    %v7979 = vsel %vm7971, %v7967, %v7975
    %v7980 = vsel %vm7972, %v7968, %v7976
    %v7981 = vpack.c.bf16 %v7978, %v7977
    %v7982 = vpack.c.bf16 %v7980, %v7979
    %v7983 = vld [vmem:[%s7] sm:$0x1]
    %v7985 = vsel %vm3751, %v7983, 0
    %7987 = vmatprep.subr.bf16.mxu0 0
    %7988 = vmatpush1.bf16.msra.mxu0 %v7981
    %7989 = vmatprep.subr.bf16.mxu0 0
    %7990 = vmatpush1.bf16.msra.mxu0 0
    %7991 = vmatprep.subr.bf16.mxu0 0
    %7992 = vmatpush1.bf16.msra.mxu0 0
    %7993 = vmatprep.subr.bf16.mxu0 0
    %7994 = vmatpush1.bf16.msra.mxu0 0
    %7995 = vmatprep.subr.bf16.mxu0 0
    %7996 = vmatpush1.bf16.msra.mxu0 0
    %7997 = vmatprep.subr.bf16.mxu0 0
    %7998 = vmatpush1.bf16.msra.mxu0 0
    %7999 = vmatprep.subr.bf16.mxu0 0
    %8000 = vmatpush1.bf16.msra.mxu0 0
    %8001 = vmatprep.subr.bf16.mxu0 0
    %8002 = vmatpush1.bf16.msra.mxu0 0
    %8003 = vmatprep.subr.bf16.mxu0 0
    %8004 = vmatpush1.bf16.msra.mxu0 0
    %8005 = vmatprep.subr.bf16.mxu0 0
    %8006 = vmatpush1.bf16.msra.mxu0 0
    %8007 = vmatprep.subr.bf16.mxu0 0
    %8008 = vmatpush1.bf16.msra.mxu0 0
    %8009 = vmatprep.subr.bf16.mxu0 0
    %8010 = vmatpush1.bf16.msra.mxu0 0
    %8011 = vmatprep.subr.bf16.mxu0 0
    %8012 = vmatpush1.bf16.msra.mxu0 0
    %8013 = vmatprep.subr.bf16.mxu0 0
    %8014 = vmatpush1.bf16.msra.mxu0 0
    %8015 = vmatprep.subr.bf16.mxu0 0
    %8016 = vmatpush1.bf16.msra.mxu0 0
    %8017 = vmatprep.subr.bf16.mxu0 0
    %8018 = vmatpush1.bf16.msra.mxu0 0
    %8019 = vmatprep.mubr.bf16.mxu0 0
    %8020 = vmatmul.mubr.bf16.gmra.mrb[0].mxu0 %v7985
    %v8021 = vpop.f32.mrb[0].mxu0
    %v8022 = vadd.f32 0.0, %v8021
    %v8023 = vpop.f32.mrb[0].mxu0
    %v8024 = vpop.f32.mrb[0].mxu0
    %v8025 = vpop.f32.mrb[0].mxu0
    %8026 = vdwg.mxu0
    %s8027 = scalar_lea.vmem %s7, 1
    %v8028 = vld [vmem:[%s8027] sm:$0x1]
    %v8030 = vsel %vm3751, %v8028, 0
    %8032 = vmatprep.subr.bf16.mxu0 0
    %8033 = vmatpush1.bf16.msra.mxu0 %v7981
    %8034 = vmatprep.subr.bf16.mxu0 0
    %8035 = vmatpush1.bf16.msra.mxu0 0
    %8036 = vmatprep.subr.bf16.mxu0 0
    %8037 = vmatpush1.bf16.msra.mxu0 0
    %8038 = vmatprep.subr.bf16.mxu0 0
    %8039 = vmatpush1.bf16.msra.mxu0 0
    %8040 = vmatprep.subr.bf16.mxu0 0
    %8041 = vmatpush1.bf16.msra.mxu0 0
    %8042 = vmatprep.subr.bf16.mxu0 0
    %8043 = vmatpush1.bf16.msra.mxu0 0
    %8044 = vmatprep.subr.bf16.mxu0 0
    %8045 = vmatpush1.bf16.msra.mxu0 0
    %8046 = vmatprep.subr.bf16.mxu0 0
    %8047 = vmatpush1.bf16.msra.mxu0 0
    %8048 = vmatprep.subr.bf16.mxu0 0
    %8049 = vmatpush1.bf16.msra.mxu0 0
    %8050 = vmatprep.subr.bf16.mxu0 0
    %8051 = vmatpush1.bf16.msra.mxu0 0
    %8052 = vmatprep.subr.bf16.mxu0 0
    %8053 = vmatpush1.bf16.msra.mxu0 0
    %8054 = vmatprep.subr.bf16.mxu0 0
    %8055 = vmatpush1.bf16.msra.mxu0 0
    %8056 = vmatprep.subr.bf16.mxu0 0
    %8057 = vmatpush1.bf16.msra.mxu0 0
    %8058 = vmatprep.subr.bf16.mxu0 0
    %8059 = vmatpush1.bf16.msra.mxu0 0
    %8060 = vmatprep.subr.bf16.mxu0 0
    %8061 = vmatpush1.bf16.msra.mxu0 0
    %8062 = vmatprep.subr.bf16.mxu0 0
    %8063 = vmatpush1.bf16.msra.mxu0 0
    %8064 = vmatprep.mubr.bf16.mxu0 0
    %8065 = vmatmul.mubr.bf16.gmra.mrb[0].mxu0 %v8030
    %v8066 = vpop.f32.mrb[0].mxu0
    %v8067 = vadd.f32 0.0, %v8066
    %v8068 = vpop.f32.mrb[0].mxu0
    %v8069 = vpop.f32.mrb[0].mxu0
    %v8070 = vpop.f32.mrb[0].mxu0
    %8071 = vdwg.mxu0
    %s8072 = scalar_lea.vmem %s7, 2
    %v8073 = vld [vmem:[%s8072] sm:$0x1]
    %v8075 = vsel %vm3751, %v8073, 0
    %8077 = vmatprep.subr.bf16.mxu0 0
    %8078 = vmatpush1.bf16.msra.mxu0 %v7981
    %8079 = vmatprep.subr.bf16.mxu0 0
    %8080 = vmatpush1.bf16.msra.mxu0 0
    %8081 = vmatprep.subr.bf16.mxu0 0
    %8082 = vmatpush1.bf16.msra.mxu0 0
    %8083 = vmatprep.subr.bf16.mxu0 0
    %8084 = vmatpush1.bf16.msra.mxu0 0
    %8085 = vmatprep.subr.bf16.mxu0 0
    %8086 = vmatpush1.bf16.msra.mxu0 0
    %8087 = vmatprep.subr.bf16.mxu0 0
    %8088 = vmatpush1.bf16.msra.mxu0 0
    %8089 = vmatprep.subr.bf16.mxu0 0
    %8090 = vmatpush1.bf16.msra.mxu0 0
    %8091 = vmatprep.subr.bf16.mxu0 0
    %8092 = vmatpush1.bf16.msra.mxu0 0
    %8093 = vmatprep.subr.bf16.mxu0 0
    %8094 = vmatpush1.bf16.msra.mxu0 0
    %8095 = vmatprep.subr.bf16.mxu0 0
    %8096 = vmatpush1.bf16.msra.mxu0 0
    %8097 = vmatprep.subr.bf16.mxu0 0
    %8098 = vmatpush1.bf16.msra.mxu0 0
    %8099 = vmatprep.subr.bf16.mxu0 0
    %8100 = vmatpush1.bf16.msra.mxu0 0
    %8101 = vmatprep.subr.bf16.mxu0 0
    %8102 = vmatpush1.bf16.msra.mxu0 0
    %8103 = vmatprep.subr.bf16.mxu0 0
    %8104 = vmatpush1.bf16.msra.mxu0 0
    %8105 = vmatprep.subr.bf16.mxu0 0
    %8106 = vmatpush1.bf16.msra.mxu0 0
    %8107 = vmatprep.subr.bf16.mxu0 0
    %8108 = vmatpush1.bf16.msra.mxu0 0
    %8109 = vmatprep.mubr.bf16.mxu0 0
    %8110 = vmatmul.mubr.bf16.gmra.mrb[0].mxu0 %v8075
    %v8111 = vpop.f32.mrb[0].mxu0
    %v8112 = vadd.f32 0.0, %v8111
    %v8113 = vpop.f32.mrb[0].mxu0
    %v8114 = vpop.f32.mrb[0].mxu0
    %v8115 = vpop.f32.mrb[0].mxu0
    %8116 = vdwg.mxu0
    %s8117 = scalar_lea.vmem %s7, 3
    %v8118 = vld [vmem:[%s8117] sm:$0x1]
    %v8120 = vsel %vm3751, %v8118, 0
    %8122 = vmatprep.subr.bf16.mxu0 0
    %8123 = vmatpush1.bf16.msra.mxu0 %v7981
    %8124 = vmatprep.subr.bf16.mxu0 0
    %8125 = vmatpush1.bf16.msra.mxu0 0
    %8126 = vmatprep.subr.bf16.mxu0 0
    %8127 = vmatpush1.bf16.msra.mxu0 0
    %8128 = vmatprep.subr.bf16.mxu0 0
    %8129 = vmatpush1.bf16.msra.mxu0 0
    %8130 = vmatprep.subr.bf16.mxu0 0
    %8131 = vmatpush1.bf16.msra.mxu0 0
    %8132 = vmatprep.subr.bf16.mxu0 0
    %8133 = vmatpush1.bf16.msra.mxu0 0
    %8134 = vmatprep.subr.bf16.mxu0 0
    %8135 = vmatpush1.bf16.msra.mxu0 0
    %8136 = vmatprep.subr.bf16.mxu0 0
    %8137 = vmatpush1.bf16.msra.mxu0 0
    %8138 = vmatprep.subr.bf16.mxu0 0
    %8139 = vmatpush1.bf16.msra.mxu0 0
    %8140 = vmatprep.subr.bf16.mxu0 0
    %8141 = vmatpush1.bf16.msra.mxu0 0
    %8142 = vmatprep.subr.bf16.mxu0 0
    %8143 = vmatpush1.bf16.msra.mxu0 0
    %8144 = vmatprep.subr.bf16.mxu0 0
    %8145 = vmatpush1.bf16.msra.mxu0 0
    %8146 = vmatprep.subr.bf16.mxu0 0
    %8147 = vmatpush1.bf16.msra.mxu0 0
    %8148 = vmatprep.subr.bf16.mxu0 0
    %8149 = vmatpush1.bf16.msra.mxu0 0
    %8150 = vmatprep.subr.bf16.mxu0 0
    %8151 = vmatpush1.bf16.msra.mxu0 0
    %8152 = vmatprep.subr.bf16.mxu0 0
    %8153 = vmatpush1.bf16.msra.mxu0 0
    %8154 = vmatprep.mubr.bf16.mxu0 0
    %8155 = vmatmul.mubr.bf16.gmra.mrb[0].mxu0 %v8120
    %v8156 = vpop.f32.mrb[0].mxu0
    %v8157 = vadd.f32 0.0, %v8156
    %v8158 = vpop.f32.mrb[0].mxu0
    %v8159 = vpop.f32.mrb[0].mxu0
    %v8160 = vpop.f32.mrb[0].mxu0
    %8161 = vdwg.mxu0
    %s8162 = scalar_lea.vmem %s7, 4
    %v8163 = vld [vmem:[%s8162] sm:$0x1]
    %v8165 = vsel %vm3751, %v8163, 0
    %8167 = vmatprep.subr.bf16.mxu0 0
    %8168 = vmatpush1.bf16.msra.mxu0 %v7981
    %8169 = vmatprep.subr.bf16.mxu0 0
    %8170 = vmatpush1.bf16.msra.mxu0 0
    %8171 = vmatprep.subr.bf16.mxu0 0
    %8172 = vmatpush1.bf16.msra.mxu0 0
    %8173 = vmatprep.subr.bf16.mxu0 0
    %8174 = vmatpush1.bf16.msra.mxu0 0
    %8175 = vmatprep.subr.bf16.mxu0 0
    %8176 = vmatpush1.bf16.msra.mxu0 0
    %8177 = vmatprep.subr.bf16.mxu0 0
    %8178 = vmatpush1.bf16.msra.mxu0 0
    %8179 = vmatprep.subr.bf16.mxu0 0
    %8180 = vmatpush1.bf16.msra.mxu0 0
    %8181 = vmatprep.subr.bf16.mxu0 0
    %8182 = vmatpush1.bf16.msra.mxu0 0
    %8183 = vmatprep.subr.bf16.mxu0 0
    %8184 = vmatpush1.bf16.msra.mxu0 0
    %8185 = vmatprep.subr.bf16.mxu0 0
    %8186 = vmatpush1.bf16.msra.mxu0 0
    %8187 = vmatprep.subr.bf16.mxu0 0
    %8188 = vmatpush1.bf16.msra.mxu0 0
    %8189 = vmatprep.subr.bf16.mxu0 0
    %8190 = vmatpush1.bf16.msra.mxu0 0
    %8191 = vmatprep.subr.bf16.mxu0 0
    %8192 = vmatpush1.bf16.msra.mxu0 0
    %8193 = vmatprep.subr.bf16.mxu0 0
    %8194 = vmatpush1.bf16.msra.mxu0 0
    %8195 = vmatprep.subr.bf16.mxu0 0
    %8196 = vmatpush1.bf16.msra.mxu0 0
    %8197 = vmatprep.subr.bf16.mxu0 0
    %8198 = vmatpush1.bf16.msra.mxu0 0
    %8199 = vmatprep.mubr.bf16.mxu0 0
    %8200 = vmatmul.mubr.bf16.gmra.mrb[0].mxu0 %v8165
    %v8201 = vpop.f32.mrb[0].mxu0
    %v8202 = vadd.f32 0.0, %v8201
    %v8203 = vpop.f32.mrb[0].mxu0
    %v8204 = vpop.f32.mrb[0].mxu0
    %v8205 = vpop.f32.mrb[0].mxu0
    %8206 = vdwg.mxu0
    %s8207 = scalar_lea.vmem %s7, 5
    %v8208 = vld [vmem:[%s8207] sm:$0x1]
    %v8210 = vsel %vm3751, %v8208, 0
    %8212 = vmatprep.subr.bf16.mxu0 0
    %8213 = vmatpush1.bf16.msra.mxu0 %v7981
    %8214 = vmatprep.subr.bf16.mxu0 0
    %8215 = vmatpush1.bf16.msra.mxu0 0
    %8216 = vmatprep.subr.bf16.mxu0 0
    %8217 = vmatpush1.bf16.msra.mxu0 0
    %8218 = vmatprep.subr.bf16.mxu0 0
    %8219 = vmatpush1.bf16.msra.mxu0 0
    %8220 = vmatprep.subr.bf16.mxu0 0
    %8221 = vmatpush1.bf16.msra.mxu0 0
    %8222 = vmatprep.subr.bf16.mxu0 0
    %8223 = vmatpush1.bf16.msra.mxu0 0
    %8224 = vmatprep.subr.bf16.mxu0 0
    %8225 = vmatpush1.bf16.msra.mxu0 0
    %8226 = vmatprep.subr.bf16.mxu0 0
    %8227 = vmatpush1.bf16.msra.mxu0 0
    %8228 = vmatprep.subr.bf16.mxu0 0
    %8229 = vmatpush1.bf16.msra.mxu0 0
    %8230 = vmatprep.subr.bf16.mxu0 0
    %8231 = vmatpush1.bf16.msra.mxu0 0
    %8232 = vmatprep.subr.bf16.mxu0 0
    %8233 = vmatpush1.bf16.msra.mxu0 0
    %8234 = vmatprep.subr.bf16.mxu0 0
    %8235 = vmatpush1.bf16.msra.mxu0 0
    %8236 = vmatprep.subr.bf16.mxu0 0
    %8237 = vmatpush1.bf16.msra.mxu0 0
    %8238 = vmatprep.subr.bf16.mxu0 0
    %8239 = vmatpush1.bf16.msra.mxu0 0
    %8240 = vmatprep.subr.bf16.mxu0 0
    %8241 = vmatpush1.bf16.msra.mxu0 0
    %8242 = vmatprep.subr.bf16.mxu0 0
    %8243 = vmatpush1.bf16.msra.mxu0 0
    %8244 = vmatprep.mubr.bf16.mxu0 0
    %8245 = vmatmul.mubr.bf16.gmra.mrb[0].mxu0 %v8210
    %v8246 = vpop.f32.mrb[0].mxu0
    %v8247 = vadd.f32 0.0, %v8246
    %v8248 = vpop.f32.mrb[0].mxu0
    %v8249 = vpop.f32.mrb[0].mxu0
    %v8250 = vpop.f32.mrb[0].mxu0
    %8251 = vdwg.mxu0
    %s8252 = scalar_lea.vmem %s7, 6
    %v8253 = vld [vmem:[%s8252] sm:$0x1]
    %v8255 = vsel %vm3751, %v8253, 0
    %8257 = vmatprep.subr.bf16.mxu0 0
    %8258 = vmatpush1.bf16.msra.mxu0 %v7981
    %8259 = vmatprep.subr.bf16.mxu0 0
    %8260 = vmatpush1.bf16.msra.mxu0 0
    %8261 = vmatprep.subr.bf16.mxu0 0
    %8262 = vmatpush1.bf16.msra.mxu0 0
    %8263 = vmatprep.subr.bf16.mxu0 0
    %8264 = vmatpush1.bf16.msra.mxu0 0
    %8265 = vmatprep.subr.bf16.mxu0 0
    %8266 = vmatpush1.bf16.msra.mxu0 0
    %8267 = vmatprep.subr.bf16.mxu0 0
    %8268 = vmatpush1.bf16.msra.mxu0 0
    %8269 = vmatprep.subr.bf16.mxu0 0
    %8270 = vmatpush1.bf16.msra.mxu0 0
    %8271 = vmatprep.subr.bf16.mxu0 0
    %8272 = vmatpush1.bf16.msra.mxu0 0
    %8273 = vmatprep.subr.bf16.mxu0 0
    %8274 = vmatpush1.bf16.msra.mxu0 0
    %8275 = vmatprep.subr.bf16.mxu0 0
    %8276 = vmatpush1.bf16.msra.mxu0 0
    %8277 = vmatprep.subr.bf16.mxu0 0
    %8278 = vmatpush1.bf16.msra.mxu0 0
    %8279 = vmatprep.subr.bf16.mxu0 0
    %8280 = vmatpush1.bf16.msra.mxu0 0
    %8281 = vmatprep.subr.bf16.mxu0 0
    %8282 = vmatpush1.bf16.msra.mxu0 0
    %8283 = vmatprep.subr.bf16.mxu0 0
    %8284 = vmatpush1.bf16.msra.mxu0 0
    %8285 = vmatprep.subr.bf16.mxu0 0
    %8286 = vmatpush1.bf16.msra.mxu0 0
    %8287 = vmatprep.subr.bf16.mxu0 0
    %8288 = vmatpush1.bf16.msra.mxu0 0
    %8289 = vmatprep.mubr.bf16.mxu0 0
    %8290 = vmatmul.mubr.bf16.gmra.mrb[0].mxu0 %v8255
    %v8291 = vpop.f32.mrb[0].mxu0
    %v8292 = vadd.f32 0.0, %v8291
    %v8293 = vpop.f32.mrb[0].mxu0
    %v8294 = vpop.f32.mrb[0].mxu0
    %v8295 = vpop.f32.mrb[0].mxu0
    %8296 = vdwg.mxu0
    %s8297 = scalar_lea.vmem %s7, 7
    %v8298 = vld [vmem:[%s8297] sm:$0x1]
    %v8300 = vsel %vm3751, %v8298, 0
    %8302 = vmatprep.subr.bf16.mxu0 0
    %8303 = vmatpush1.bf16.msra.mxu0 %v7981
    %8304 = vmatprep.subr.bf16.mxu0 0
    %8305 = vmatpush1.bf16.msra.mxu0 0
    %8306 = vmatprep.subr.bf16.mxu0 0
    %8307 = vmatpush1.bf16.msra.mxu0 0
    %8308 = vmatprep.subr.bf16.mxu0 0
    %8309 = vmatpush1.bf16.msra.mxu0 0
    %8310 = vmatprep.subr.bf16.mxu0 0
    %8311 = vmatpush1.bf16.msra.mxu0 0
    %8312 = vmatprep.subr.bf16.mxu0 0
    %8313 = vmatpush1.bf16.msra.mxu0 0
    %8314 = vmatprep.subr.bf16.mxu0 0
    %8315 = vmatpush1.bf16.msra.mxu0 0
    %8316 = vmatprep.subr.bf16.mxu0 0
    %8317 = vmatpush1.bf16.msra.mxu0 0
    %8318 = vmatprep.subr.bf16.mxu0 0
    %8319 = vmatpush1.bf16.msra.mxu0 0
    %8320 = vmatprep.subr.bf16.mxu0 0
    %8321 = vmatpush1.bf16.msra.mxu0 0
    %8322 = vmatprep.subr.bf16.mxu0 0
    %8323 = vmatpush1.bf16.msra.mxu0 0
    %8324 = vmatprep.subr.bf16.mxu0 0
    %8325 = vmatpush1.bf16.msra.mxu0 0
    %8326 = vmatprep.subr.bf16.mxu0 0
    %8327 = vmatpush1.bf16.msra.mxu0 0
    %8328 = vmatprep.subr.bf16.mxu0 0
    %8329 = vmatpush1.bf16.msra.mxu0 0
    %8330 = vmatprep.subr.bf16.mxu0 0
    %8331 = vmatpush1.bf16.msra.mxu0 0
    %8332 = vmatprep.subr.bf16.mxu0 0
    %8333 = vmatpush1.bf16.msra.mxu0 0
    %8334 = vmatprep.mubr.bf16.mxu0 0
    %8335 = vmatmul.mubr.bf16.gmra.mrb[0].mxu0 %v8300
    %v8336 = vpop.f32.mrb[0].mxu0
    %v8337 = vadd.f32 0.0, %v8336
    %v8338 = vpop.f32.mrb[0].mxu0
    %v8339 = vpop.f32.mrb[0].mxu0
    %v8340 = vpop.f32.mrb[0].mxu0
    %8341 = vdwg.mxu0
    %s8342 = scalar_lea.vmem %s7, 8
    %v8343 = vld [vmem:[%s8342] sm:$0x1]
    %v8345 = vsel %vm3751, %v8343, 0
    %8347 = vmatprep.subr.bf16.mxu0 0
    %8348 = vmatpush1.bf16.msra.mxu0 %v7981
    %8349 = vmatprep.subr.bf16.mxu0 0
    %8350 = vmatpush1.bf16.msra.mxu0 0
    %8351 = vmatprep.subr.bf16.mxu0 0
    %8352 = vmatpush1.bf16.msra.mxu0 0
    %8353 = vmatprep.subr.bf16.mxu0 0
    %8354 = vmatpush1.bf16.msra.mxu0 0
    %8355 = vmatprep.subr.bf16.mxu0 0
    %8356 = vmatpush1.bf16.msra.mxu0 0
    %8357 = vmatprep.subr.bf16.mxu0 0
    %8358 = vmatpush1.bf16.msra.mxu0 0
    %8359 = vmatprep.subr.bf16.mxu0 0
    %8360 = vmatpush1.bf16.msra.mxu0 0
    %8361 = vmatprep.subr.bf16.mxu0 0
    %8362 = vmatpush1.bf16.msra.mxu0 0
    %8363 = vmatprep.subr.bf16.mxu0 0
    %8364 = vmatpush1.bf16.msra.mxu0 0
    %8365 = vmatprep.subr.bf16.mxu0 0
    %8366 = vmatpush1.bf16.msra.mxu0 0
    %8367 = vmatprep.subr.bf16.mxu0 0
    %8368 = vmatpush1.bf16.msra.mxu0 0
    %8369 = vmatprep.subr.bf16.mxu0 0
    %8370 = vmatpush1.bf16.msra.mxu0 0
    %8371 = vmatprep.subr.bf16.mxu0 0
    %8372 = vmatpush1.bf16.msra.mxu0 0
    %8373 = vmatprep.subr.bf16.mxu0 0
    %8374 = vmatpush1.bf16.msra.mxu0 0
    %8375 = vmatprep.subr.bf16.mxu0 0
    %8376 = vmatpush1.bf16.msra.mxu0 0
    %8377 = vmatprep.subr.bf16.mxu0 0
    %8378 = vmatpush1.bf16.msra.mxu0 0
    %8379 = vmatprep.mubr.bf16.mxu0 0
    %8380 = vmatmul.mubr.bf16.gmra.mrb[0].mxu0 %v8345
    %v8381 = vpop.f32.mrb[0].mxu0
    %v8382 = vadd.f32 0.0, %v8381
    %v8383 = vpop.f32.mrb[0].mxu0
    %v8384 = vpop.f32.mrb[0].mxu0
    %v8385 = vpop.f32.mrb[0].mxu0
    %8386 = vdwg.mxu0
    %8388 = vrot.lane.b32.xlu0 %v8067, 32
    %v8389 = vpop.permute.xlu0 %8388
    %8392 = vrot.lane.b32.xlu0 %v8112, 64
    %v8393 = vpop.permute.xlu0 %8392
    %8396 = vrot.lane.b32.xlu0 %v8157, 96
    %v8397 = vpop.permute.xlu0 %8396
    %8400 = vrot.lane.b32.xlu0 %v8247, 32
    %v8401 = vpop.permute.xlu0 %8400
    %8404 = vrot.lane.b32.xlu0 %v8292, 64
    %v8405 = vpop.permute.xlu0 %8404
    %8408 = vrot.lane.b32.xlu0 %v8337, 96
    %v8409 = vpop.permute.xlu0 %8408
    %v8411 = vsel %vm3769, %v8022, %v8389
    %v8412 = vsel %vm290, %v8411, %v8393
    %v8413 = vsel %vm3840, %v8412, %v8397
    %v8414 = vsel %vm3769, %v8202, %v8401
    %v8415 = vsel %vm290, %v8414, %v8405
    %v8416 = vsel %vm3840, %v8415, %v8409
    %v8417 = vpack.c.bf16 %v8413, %v8413
    %v8418 = vpack.c.bf16 %v8416, %v8416
    %v8419 = vpack.c.bf16 %v8382, %v8382
    %v8420 = vld [vmem:[%s4] sm:$0xf]
    %v8421 = vld [vmem:[%s4 + $0x4] sm:$0xf]
    %v8422 = vld [vmem:[%s4 + $0x8] sm:$0xf]
    %v8423 = vld [vmem:[%s4 + $0xc] sm:$0xf]
    %v8424 = vld [vmem:[%s4 + $0x10] sm:$0xf]
    %v8425 = vld [vmem:[%s4 + $0x14] sm:$0xf]
    %v8426 = vld [vmem:[%s4 + $0x18] sm:$0xf]
    %v8427 = vld [vmem:[%s4 + $0x1c] sm:$0xf]
    %v8428 = vld [vmem:[%s4 + $0x20] sm:$0xf]
    %v8429 = vld [vmem:[%s4 + $0x24] sm:$0xf]
    %v8430 = vld [vmem:[%s4 + $0x28] sm:$0xf]
    %v8431 = vld [vmem:[%s4 + $0x2c] sm:$0xf]
    %v8432 = vld [vmem:[%s4 + $0x30] sm:$0xf]
    %v8433 = vld [vmem:[%s4 + $0x34] sm:$0xf]
    %v8434 = vld [vmem:[%s4 + $0x38] sm:$0xf]
    %v8435 = vld [vmem:[%s4 + $0x3c] sm:$0xf]
    %v8436 = vld [vmem:[%s4 + $0x40] sm:$0xf]
    %v8437 = vld [vmem:[%s4 + $0x44] sm:$0xf]
    %v8438 = vld [vmem:[%s4 + $0x48] sm:$0xf]
    %v8439 = vld [vmem:[%s4 + $0x4c] sm:$0xf]
    %v8440 = vld [vmem:[%s4 + $0x50] sm:$0xf]
    %v8441 = vld [vmem:[%s4 + $0x54] sm:$0xf]
    %v8442 = vld [vmem:[%s4 + $0x58] sm:$0xf]
    %v8443 = vld [vmem:[%s4 + $0x5c] sm:$0xf]
    %v8444 = vld [vmem:[%s4 + $0x60] sm:$0xf]
    %v8445 = vld [vmem:[%s4 + $0x64] sm:$0xf]
    %v8446 = vld [vmem:[%s4 + $0x68] sm:$0xf]
    %v8447 = vld [vmem:[%s4 + $0x6c] sm:$0xf]
    %v8448 = vld [vmem:[%s4 + $0x70] sm:$0xf]
    %v8449 = vld [vmem:[%s4 + $0x74] sm:$0xf]
    %v8450 = vld [vmem:[%s4 + $0x78] sm:$0xf]
    %v8451 = vld [vmem:[%s4 + $0x7c] sm:$0xf]
    %v8452 = vld [vmem:[%s4 + $0x80] sm:$0xf]
    %v8453 = vld [vmem:[%s4 + $0x84] sm:$0xf]
    %v8454 = vld [vmem:[%s4 + $0x88] sm:$0xf]
    %v8455 = vld [vmem:[%s4 + $0x8c] sm:$0xf]
    %v8492 = vunpack.c.l.b16 %v8420
    %v8493 = vunpack.c.l.b16 %v8421
    %v8494 = vunpack.c.l.b16 %v8422
    %v8495 = vunpack.c.l.b16 %v8423
    %v8496 = vunpack.c.l.b16 %v8424
    %v8497 = vunpack.c.l.b16 %v8425
    %v8498 = vunpack.c.l.b16 %v8426
    %v8499 = vunpack.c.l.b16 %v8427
    %v8500 = vunpack.c.l.b16 %v8428
    %v8501 = vunpack.c.l.b16 %v8429
    %v8502 = vunpack.c.l.b16 %v8430
    %v8503 = vunpack.c.l.b16 %v8431
    %v8504 = vunpack.c.l.b16 %v8432
    %v8505 = vunpack.c.l.b16 %v8433
    %v8506 = vunpack.c.l.b16 %v8434
    %v8507 = vunpack.c.l.b16 %v8435
    %v8508 = vunpack.c.l.b16 %v8436
    %v8509 = vunpack.c.l.b16 %v8437
    %v8510 = vunpack.c.l.b16 %v8438
    %v8511 = vunpack.c.l.b16 %v8439
    %v8512 = vunpack.c.l.b16 %v8440
    %v8513 = vunpack.c.l.b16 %v8441
    %v8514 = vunpack.c.l.b16 %v8442
    %v8515 = vunpack.c.l.b16 %v8443
    %v8516 = vunpack.c.l.b16 %v8444
    %v8517 = vunpack.c.l.b16 %v8445
    %v8518 = vunpack.c.l.b16 %v8446
    %v8519 = vunpack.c.l.b16 %v8447
    %v8520 = vunpack.c.l.b16 %v8448
    %v8521 = vunpack.c.l.b16 %v8449
    %v8522 = vunpack.c.l.b16 %v8450
    %v8523 = vunpack.c.l.b16 %v8451
    %v8524 = vunpack.c.l.b16 %v8452
    %v8525 = vunpack.c.l.b16 %v8453
    %v8526 = vunpack.c.l.b16 %v8454
    %v8527 = vunpack.c.l.b16 %v8455
    %v8528 = vpack.c.b16 %v8493, %v8492
    %v8529 = vpack.c.b16 %v8495, %v8494
    %v8530 = vpack.c.b16 %v8497, %v8496
    %v8531 = vpack.c.b16 %v8499, %v8498
    %v8532 = vpack.c.b16 %v8501, %v8500
    %v8533 = vpack.c.b16 %v8503, %v8502
    %v8534 = vpack.c.b16 %v8505, %v8504
    %v8535 = vpack.c.b16 %v8507, %v8506
    %v8536 = vpack.c.b16 %v8509, %v8508
    %v8537 = vpack.c.b16 %v8511, %v8510
    %v8538 = vpack.c.b16 %v8513, %v8512
    %v8539 = vpack.c.b16 %v8515, %v8514
    %v8540 = vpack.c.b16 %v8517, %v8516
    %v8541 = vpack.c.b16 %v8519, %v8518
    %v8542 = vpack.c.b16 %v8521, %v8520
    %v8543 = vpack.c.b16 %v8523, %v8522
    %v8544 = vpack.c.b16 %v8525, %v8524
    %v8545 = vpack.c.b16 %v8527, %v8526
    %v8565 = vsel %vm3769, %v8419, 0
    %8567 = vmatprep.subr.bf16.mxu0 0
    %8568 = vmatpush1.bf16.msra.mxu0 %v8528
    %8569 = vmatprep.subr.bf16.mxu0 0
    %8570 = vmatpush1.bf16.msra.mxu0 %v8529
    %8571 = vmatprep.subr.bf16.mxu0 0
    %8572 = vmatpush1.bf16.msra.mxu0 %v8530
    %8573 = vmatprep.subr.bf16.mxu0 0
    %8574 = vmatpush1.bf16.msra.mxu0 %v8531
    %8575 = vmatprep.subr.bf16.mxu0 0
    %8576 = vmatpush1.bf16.msra.mxu0 %v8532
    %8577 = vmatprep.subr.bf16.mxu0 0
    %8578 = vmatpush1.bf16.msra.mxu0 %v8533
    %8579 = vmatprep.subr.bf16.mxu0 0
    %8580 = vmatpush1.bf16.msra.mxu0 %v8534
    %8581 = vmatprep.subr.bf16.mxu0 0
    %8582 = vmatpush1.bf16.msra.mxu0 %v8535
    %8583 = vmatprep.subr.bf16.mxu0 0
    %8584 = vmatpush1.bf16.msra.mxu0 %v8536
    %8585 = vmatprep.subr.bf16.mxu0 0
    %8586 = vmatpush1.bf16.msra.mxu0 %v8537
    %8587 = vmatprep.subr.bf16.mxu0 0
    %8588 = vmatpush1.bf16.msra.mxu0 %v8538
    %8589 = vmatprep.subr.bf16.mxu0 0
    %8590 = vmatpush1.bf16.msra.mxu0 %v8539
    %8591 = vmatprep.subr.bf16.mxu0 0
    %8592 = vmatpush1.bf16.msra.mxu0 %v8540
    %8593 = vmatprep.subr.bf16.mxu0 0
    %8594 = vmatpush1.bf16.msra.mxu0 %v8541
    %8595 = vmatprep.subr.bf16.mxu0 0
    %8596 = vmatpush1.bf16.msra.mxu0 %v8542
    %8597 = vmatprep.subr.bf16.mxu0 0
    %8598 = vmatpush1.bf16.msra.mxu0 %v8543
    %8599 = vmatprep.mubr.bf16.mxu0 %v8418
    %8600 = vmatmul.mubr.bf16.gmra.mrb[0].mxu0 %v8417
    %v8601 = vpop.f32.mrb[0].mxu0
    %v8602 = vadd.f32 0.0, %v8601
    %v8603 = vpop.f32.mrb[0].mxu0
    %v8604 = vpop.f32.mrb[0].mxu0
    %v8605 = vpop.f32.mrb[0].mxu0
    %8606 = vdwg.mxu0
    %8607 = vmatprep.subr.bf16.mxu0 0
    %8608 = vmatpush1.bf16.msra.mxu0 %v8544
    %8609 = vmatprep.subr.bf16.mxu0 0
    %8610 = vmatpush1.bf16.msra.mxu0 %v8545
    %8611 = vmatprep.subr.bf16.mxu0 0
    %8612 = vmatpush1.bf16.msra.mxu0 0
    %8613 = vmatprep.subr.bf16.mxu0 0
    %8614 = vmatpush1.bf16.msra.mxu0 0
    %8615 = vmatprep.subr.bf16.mxu0 0
    %8616 = vmatpush1.bf16.msra.mxu0 0
    %8617 = vmatprep.subr.bf16.mxu0 0
    %8618 = vmatpush1.bf16.msra.mxu0 0
    %8619 = vmatprep.subr.bf16.mxu0 0
    %8620 = vmatpush1.bf16.msra.mxu0 0
    %8621 = vmatprep.subr.bf16.mxu0 0
    %8622 = vmatpush1.bf16.msra.mxu0 0
    %8623 = vmatprep.subr.bf16.mxu0 0
    %8624 = vmatpush1.bf16.msra.mxu0 0
    %8625 = vmatprep.subr.bf16.mxu0 0
    %8626 = vmatpush1.bf16.msra.mxu0 0
    %8627 = vmatprep.subr.bf16.mxu0 0
    %8628 = vmatpush1.bf16.msra.mxu0 0
    %8629 = vmatprep.subr.bf16.mxu0 0
    %8630 = vmatpush1.bf16.msra.mxu0 0
    %8631 = vmatprep.subr.bf16.mxu0 0
    %8632 = vmatpush1.bf16.msra.mxu0 0
    %8633 = vmatprep.subr.bf16.mxu0 0
    %8634 = vmatpush1.bf16.msra.mxu0 0
    %8635 = vmatprep.subr.bf16.mxu0 0
    %8636 = vmatpush1.bf16.msra.mxu0 0
    %8637 = vmatprep.subr.bf16.mxu0 0
    %8638 = vmatpush1.bf16.msra.mxu0 0
    %8639 = vmatprep.mubr.bf16.mxu0 0
    %8640 = vmatmul.mubr.bf16.gmra.mrb[0].mxu0 %v8565
    %v8641 = vpop.f32.mrb[0].mxu0
    %v8642 = vadd.f32 %v8602, %v8641
    %v8643 = vpop.f32.mrb[0].mxu0
    %v8644 = vpop.f32.mrb[0].mxu0
    %v8645 = vpop.f32.mrb[0].mxu0
    %8646 = vdwg.mxu0
    %8647 = vmatprep.subr.bf16.mxu0 0
    %8648 = vmatpush1.bf16.msra.mxu0 %v7982
    %8649 = vmatprep.subr.bf16.mxu0 0
    %8650 = vmatpush1.bf16.msra.mxu0 0
    %8651 = vmatprep.subr.bf16.mxu0 0
    %8652 = vmatpush1.bf16.msra.mxu0 0
    %8653 = vmatprep.subr.bf16.mxu0 0
    %8654 = vmatpush1.bf16.msra.mxu0 0
    %8655 = vmatprep.subr.bf16.mxu0 0
    %8656 = vmatpush1.bf16.msra.mxu0 0
    %8657 = vmatprep.subr.bf16.mxu0 0
    %8658 = vmatpush1.bf16.msra.mxu0 0
    %8659 = vmatprep.subr.bf16.mxu0 0
    %8660 = vmatpush1.bf16.msra.mxu0 0
    %8661 = vmatprep.subr.bf16.mxu0 0
    %8662 = vmatpush1.bf16.msra.mxu0 0
    %8663 = vmatprep.subr.bf16.mxu0 0
    %8664 = vmatpush1.bf16.msra.mxu0 0
    %8665 = vmatprep.subr.bf16.mxu0 0
    %8666 = vmatpush1.bf16.msra.mxu0 0
    %8667 = vmatprep.subr.bf16.mxu0 0
    %8668 = vmatpush1.bf16.msra.mxu0 0
    %8669 = vmatprep.subr.bf16.mxu0 0
    %8670 = vmatpush1.bf16.msra.mxu0 0
    %8671 = vmatprep.subr.bf16.mxu0 0
    %8672 = vmatpush1.bf16.msra.mxu0 0
    %8673 = vmatprep.subr.bf16.mxu0 0
    %8674 = vmatpush1.bf16.msra.mxu0 0
    %8675 = vmatprep.subr.bf16.mxu0 0
    %8676 = vmatpush1.bf16.msra.mxu0 0
    %8677 = vmatprep.subr.bf16.mxu0 0
    %8678 = vmatpush1.bf16.msra.mxu0 0
    %8679 = vmatprep.mubr.bf16.mxu0 0
    %8680 = vmatmul.mubr.bf16.gmra.mrb[0].mxu0 %v7985
    %v8681 = vpop.f32.mrb[0].mxu0
    %v8682 = vadd.f32 0.0, %v8681
    %v8683 = vpop.f32.mrb[0].mxu0
    %v8684 = vpop.f32.mrb[0].mxu0
    %v8685 = vpop.f32.mrb[0].mxu0
    %8686 = vdwg.mxu0
    %8687 = vmatprep.subr.bf16.mxu0 0
    %8688 = vmatpush1.bf16.msra.mxu0 %v7982
    %8689 = vmatprep.subr.bf16.mxu0 0
    %8690 = vmatpush1.bf16.msra.mxu0 0
    %8691 = vmatprep.subr.bf16.mxu0 0
    %8692 = vmatpush1.bf16.msra.mxu0 0
    %8693 = vmatprep.subr.bf16.mxu0 0
    %8694 = vmatpush1.bf16.msra.mxu0 0
    %8695 = vmatprep.subr.bf16.mxu0 0
    %8696 = vmatpush1.bf16.msra.mxu0 0
    %8697 = vmatprep.subr.bf16.mxu0 0
    %8698 = vmatpush1.bf16.msra.mxu0 0
    %8699 = vmatprep.subr.bf16.mxu0 0
    %8700 = vmatpush1.bf16.msra.mxu0 0
    %8701 = vmatprep.subr.bf16.mxu0 0
    %8702 = vmatpush1.bf16.msra.mxu0 0
    %8703 = vmatprep.subr.bf16.mxu0 0
    %8704 = vmatpush1.bf16.msra.mxu0 0
    %8705 = vmatprep.subr.bf16.mxu0 0
    %8706 = vmatpush1.bf16.msra.mxu0 0
    %8707 = vmatprep.subr.bf16.mxu0 0
    %8708 = vmatpush1.bf16.msra.mxu0 0
    %8709 = vmatprep.subr.bf16.mxu0 0
    %8710 = vmatpush1.bf16.msra.mxu0 0
    %8711 = vmatprep.subr.bf16.mxu0 0
    %8712 = vmatpush1.bf16.msra.mxu0 0
    %8713 = vmatprep.subr.bf16.mxu0 0
    %8714 = vmatpush1.bf16.msra.mxu0 0
    %8715 = vmatprep.subr.bf16.mxu0 0
    %8716 = vmatpush1.bf16.msra.mxu0 0
    %8717 = vmatprep.subr.bf16.mxu0 0
    %8718 = vmatpush1.bf16.msra.mxu0 0
    %8719 = vmatprep.mubr.bf16.mxu0 0
    %8720 = vmatmul.mubr.bf16.gmra.mrb[0].mxu0 %v8030
    %v8721 = vpop.f32.mrb[0].mxu0
    %v8722 = vadd.f32 0.0, %v8721
    %v8723 = vpop.f32.mrb[0].mxu0
    %v8724 = vpop.f32.mrb[0].mxu0
    %v8725 = vpop.f32.mrb[0].mxu0
    %8726 = vdwg.mxu0
    %8727 = vmatprep.subr.bf16.mxu0 0
    %8728 = vmatpush1.bf16.msra.mxu0 %v7982
    %8729 = vmatprep.subr.bf16.mxu0 0
    %8730 = vmatpush1.bf16.msra.mxu0 0
    %8731 = vmatprep.subr.bf16.mxu0 0
    %8732 = vmatpush1.bf16.msra.mxu0 0
    %8733 = vmatprep.subr.bf16.mxu0 0
    %8734 = vmatpush1.bf16.msra.mxu0 0
    %8735 = vmatprep.subr.bf16.mxu0 0
    %8736 = vmatpush1.bf16.msra.mxu0 0
    %8737 = vmatprep.subr.bf16.mxu0 0
    %8738 = vmatpush1.bf16.msra.mxu0 0
    %8739 = vmatprep.subr.bf16.mxu0 0
    %8740 = vmatpush1.bf16.msra.mxu0 0
    %8741 = vmatprep.subr.bf16.mxu0 0
    %8742 = vmatpush1.bf16.msra.mxu0 0
    %8743 = vmatprep.subr.bf16.mxu0 0
    %8744 = vmatpush1.bf16.msra.mxu0 0
    %8745 = vmatprep.subr.bf16.mxu0 0
    %8746 = vmatpush1.bf16.msra.mxu0 0
    %8747 = vmatprep.subr.bf16.mxu0 0
    %8748 = vmatpush1.bf16.msra.mxu0 0
    %8749 = vmatprep.subr.bf16.mxu0 0
    %8750 = vmatpush1.bf16.msra.mxu0 0
    %8751 = vmatprep.subr.bf16.mxu0 0
    %8752 = vmatpush1.bf16.msra.mxu0 0
    %8753 = vmatprep.subr.bf16.mxu0 0
    %8754 = vmatpush1.bf16.msra.mxu0 0
    %8755 = vmatprep.subr.bf16.mxu0 0
    %8756 = vmatpush1.bf16.msra.mxu0 0
    %8757 = vmatprep.subr.bf16.mxu0 0
    %8758 = vmatpush1.bf16.msra.mxu0 0
    %8759 = vmatprep.mubr.bf16.mxu0 0
    %8760 = vmatmul.mubr.bf16.gmra.mrb[0].mxu0 %v8075
    %v8761 = vpop.f32.mrb[0].mxu0
    %v8762 = vadd.f32 0.0, %v8761
    %v8763 = vpop.f32.mrb[0].mxu0
    %v8764 = vpop.f32.mrb[0].mxu0
    %v8765 = vpop.f32.mrb[0].mxu0
    %8766 = vdwg.mxu0
    %8767 = vmatprep.subr.bf16.mxu0 0
    %8768 = vmatpush1.bf16.msra.mxu0 %v7982
    %8769 = vmatprep.subr.bf16.mxu0 0
    %8770 = vmatpush1.bf16.msra.mxu0 0
    %8771 = vmatprep.subr.bf16.mxu0 0
    %8772 = vmatpush1.bf16.msra.mxu0 0
    %8773 = vmatprep.subr.bf16.mxu0 0
    %8774 = vmatpush1.bf16.msra.mxu0 0
    %8775 = vmatprep.subr.bf16.mxu0 0
    %8776 = vmatpush1.bf16.msra.mxu0 0
    %8777 = vmatprep.subr.bf16.mxu0 0
    %8778 = vmatpush1.bf16.msra.mxu0 0
    %8779 = vmatprep.subr.bf16.mxu0 0
    %8780 = vmatpush1.bf16.msra.mxu0 0
    %8781 = vmatprep.subr.bf16.mxu0 0
    %8782 = vmatpush1.bf16.msra.mxu0 0
    %8783 = vmatprep.subr.bf16.mxu0 0
    %8784 = vmatpush1.bf16.msra.mxu0 0
    %8785 = vmatprep.subr.bf16.mxu0 0
    %8786 = vmatpush1.bf16.msra.mxu0 0
    %8787 = vmatprep.subr.bf16.mxu0 0
    %8788 = vmatpush1.bf16.msra.mxu0 0
    %8789 = vmatprep.subr.bf16.mxu0 0
    %8790 = vmatpush1.bf16.msra.mxu0 0
    %8791 = vmatprep.subr.bf16.mxu0 0
    %8792 = vmatpush1.bf16.msra.mxu0 0
    %8793 = vmatprep.subr.bf16.mxu0 0
    %8794 = vmatpush1.bf16.msra.mxu0 0
    %8795 = vmatprep.subr.bf16.mxu0 0
    %8796 = vmatpush1.bf16.msra.mxu0 0
    %8797 = vmatprep.subr.bf16.mxu0 0
    %8798 = vmatpush1.bf16.msra.mxu0 0
    %8799 = vmatprep.mubr.bf16.mxu0 0
    %8800 = vmatmul.mubr.bf16.gmra.mrb[0].mxu0 %v8120
    %v8801 = vpop.f32.mrb[0].mxu0
    %v8802 = vadd.f32 0.0, %v8801
    %v8803 = vpop.f32.mrb[0].mxu0
    %v8804 = vpop.f32.mrb[0].mxu0
    %v8805 = vpop.f32.mrb[0].mxu0
    %8806 = vdwg.mxu0
    %8807 = vmatprep.subr.bf16.mxu0 0
    %8808 = vmatpush1.bf16.msra.mxu0 %v7982
    %8809 = vmatprep.subr.bf16.mxu0 0
    %8810 = vmatpush1.bf16.msra.mxu0 0
    %8811 = vmatprep.subr.bf16.mxu0 0
    %8812 = vmatpush1.bf16.msra.mxu0 0
    %8813 = vmatprep.subr.bf16.mxu0 0
    %8814 = vmatpush1.bf16.msra.mxu0 0
    %8815 = vmatprep.subr.bf16.mxu0 0
    %8816 = vmatpush1.bf16.msra.mxu0 0
    %8817 = vmatprep.subr.bf16.mxu0 0
    %8818 = vmatpush1.bf16.msra.mxu0 0
    %8819 = vmatprep.subr.bf16.mxu0 0
    %8820 = vmatpush1.bf16.msra.mxu0 0
    %8821 = vmatprep.subr.bf16.mxu0 0
    %8822 = vmatpush1.bf16.msra.mxu0 0
    %8823 = vmatprep.subr.bf16.mxu0 0
    %8824 = vmatpush1.bf16.msra.mxu0 0
    %8825 = vmatprep.subr.bf16.mxu0 0
    %8826 = vmatpush1.bf16.msra.mxu0 0
    %8827 = vmatprep.subr.bf16.mxu0 0
    %8828 = vmatpush1.bf16.msra.mxu0 0
    %8829 = vmatprep.subr.bf16.mxu0 0
    %8830 = vmatpush1.bf16.msra.mxu0 0
    %8831 = vmatprep.subr.bf16.mxu0 0
    %8832 = vmatpush1.bf16.msra.mxu0 0
    %8833 = vmatprep.subr.bf16.mxu0 0
    %8834 = vmatpush1.bf16.msra.mxu0 0
    %8835 = vmatprep.subr.bf16.mxu0 0
    %8836 = vmatpush1.bf16.msra.mxu0 0
    %8837 = vmatprep.subr.bf16.mxu0 0
    %8838 = vmatpush1.bf16.msra.mxu0 0
    %8839 = vmatprep.mubr.bf16.mxu0 0
    %8840 = vmatmul.mubr.bf16.gmra.mrb[0].mxu0 %v8165
    %v8841 = vpop.f32.mrb[0].mxu0
    %v8842 = vadd.f32 0.0, %v8841
    %v8843 = vpop.f32.mrb[0].mxu0
    %v8844 = vpop.f32.mrb[0].mxu0
    %v8845 = vpop.f32.mrb[0].mxu0
    %8846 = vdwg.mxu0
    %8847 = vmatprep.subr.bf16.mxu0 0
    %8848 = vmatpush1.bf16.msra.mxu0 %v7982
    %8849 = vmatprep.subr.bf16.mxu0 0
    %8850 = vmatpush1.bf16.msra.mxu0 0
    %8851 = vmatprep.subr.bf16.mxu0 0
    %8852 = vmatpush1.bf16.msra.mxu0 0
    %8853 = vmatprep.subr.bf16.mxu0 0
    %8854 = vmatpush1.bf16.msra.mxu0 0
    %8855 = vmatprep.subr.bf16.mxu0 0
    %8856 = vmatpush1.bf16.msra.mxu0 0
    %8857 = vmatprep.subr.bf16.mxu0 0
    %8858 = vmatpush1.bf16.msra.mxu0 0
    %8859 = vmatprep.subr.bf16.mxu0 0
    %8860 = vmatpush1.bf16.msra.mxu0 0
    %8861 = vmatprep.subr.bf16.mxu0 0
    %8862 = vmatpush1.bf16.msra.mxu0 0
    %8863 = vmatprep.subr.bf16.mxu0 0
    %8864 = vmatpush1.bf16.msra.mxu0 0
    %8865 = vmatprep.subr.bf16.mxu0 0
    %8866 = vmatpush1.bf16.msra.mxu0 0
    %8867 = vmatprep.subr.bf16.mxu0 0
    %8868 = vmatpush1.bf16.msra.mxu0 0
    %8869 = vmatprep.subr.bf16.mxu0 0
    %8870 = vmatpush1.bf16.msra.mxu0 0
    %8871 = vmatprep.subr.bf16.mxu0 0
    %8872 = vmatpush1.bf16.msra.mxu0 0
    %8873 = vmatprep.subr.bf16.mxu0 0
    %8874 = vmatpush1.bf16.msra.mxu0 0
    %8875 = vmatprep.subr.bf16.mxu0 0
    %8876 = vmatpush1.bf16.msra.mxu0 0
    %8877 = vmatprep.subr.bf16.mxu0 0
    %8878 = vmatpush1.bf16.msra.mxu0 0
    %8879 = vmatprep.mubr.bf16.mxu0 0
    %8880 = vmatmul.mubr.bf16.gmra.mrb[0].mxu0 %v8210
    %v8881 = vpop.f32.mrb[0].mxu0
    %v8882 = vadd.f32 0.0, %v8881
    %v8883 = vpop.f32.mrb[0].mxu0
    %v8884 = vpop.f32.mrb[0].mxu0
    %v8885 = vpop.f32.mrb[0].mxu0
    %8886 = vdwg.mxu0
    %8887 = vmatprep.subr.bf16.mxu0 0
    %8888 = vmatpush1.bf16.msra.mxu0 %v7982
    %8889 = vmatprep.subr.bf16.mxu0 0
    %8890 = vmatpush1.bf16.msra.mxu0 0
    %8891 = vmatprep.subr.bf16.mxu0 0
    %8892 = vmatpush1.bf16.msra.mxu0 0
    %8893 = vmatprep.subr.bf16.mxu0 0
    %8894 = vmatpush1.bf16.msra.mxu0 0
    %8895 = vmatprep.subr.bf16.mxu0 0
    %8896 = vmatpush1.bf16.msra.mxu0 0
    %8897 = vmatprep.subr.bf16.mxu0 0
    %8898 = vmatpush1.bf16.msra.mxu0 0
    %8899 = vmatprep.subr.bf16.mxu0 0
    %8900 = vmatpush1.bf16.msra.mxu0 0
    %8901 = vmatprep.subr.bf16.mxu0 0
    %8902 = vmatpush1.bf16.msra.mxu0 0
    %8903 = vmatprep.subr.bf16.mxu0 0
    %8904 = vmatpush1.bf16.msra.mxu0 0
    %8905 = vmatprep.subr.bf16.mxu0 0
    %8906 = vmatpush1.bf16.msra.mxu0 0
    %8907 = vmatprep.subr.bf16.mxu0 0
    %8908 = vmatpush1.bf16.msra.mxu0 0
    %8909 = vmatprep.subr.bf16.mxu0 0
    %8910 = vmatpush1.bf16.msra.mxu0 0
    %8911 = vmatprep.subr.bf16.mxu0 0
    %8912 = vmatpush1.bf16.msra.mxu0 0
    %8913 = vmatprep.subr.bf16.mxu0 0
    %8914 = vmatpush1.bf16.msra.mxu0 0
    %8915 = vmatprep.subr.bf16.mxu0 0
    %8916 = vmatpush1.bf16.msra.mxu0 0
    %8917 = vmatprep.subr.bf16.mxu0 0
    %8918 = vmatpush1.bf16.msra.mxu0 0
    %8919 = vmatprep.mubr.bf16.mxu0 0
    %8920 = vmatmul.mubr.bf16.gmra.mrb[0].mxu0 %v8255
    %v8921 = vpop.f32.mrb[0].mxu0
    %v8922 = vadd.f32 0.0, %v8921
    %v8923 = vpop.f32.mrb[0].mxu0
    %v8924 = vpop.f32.mrb[0].mxu0
    %v8925 = vpop.f32.mrb[0].mxu0
    %8926 = vdwg.mxu0
    %8927 = vmatprep.subr.bf16.mxu0 0
    %8928 = vmatpush1.bf16.msra.mxu0 %v7982
    %8929 = vmatprep.subr.bf16.mxu0 0
    %8930 = vmatpush1.bf16.msra.mxu0 0
    %8931 = vmatprep.subr.bf16.mxu0 0
    %8932 = vmatpush1.bf16.msra.mxu0 0
    %8933 = vmatprep.subr.bf16.mxu0 0
    %8934 = vmatpush1.bf16.msra.mxu0 0
    %8935 = vmatprep.subr.bf16.mxu0 0
    %8936 = vmatpush1.bf16.msra.mxu0 0
    %8937 = vmatprep.subr.bf16.mxu0 0
    %8938 = vmatpush1.bf16.msra.mxu0 0
    %8939 = vmatprep.subr.bf16.mxu0 0
    %8940 = vmatpush1.bf16.msra.mxu0 0
    %8941 = vmatprep.subr.bf16.mxu0 0
    %8942 = vmatpush1.bf16.msra.mxu0 0
    %8943 = vmatprep.subr.bf16.mxu0 0
    %8944 = vmatpush1.bf16.msra.mxu0 0
    %8945 = vmatprep.subr.bf16.mxu0 0
    %8946 = vmatpush1.bf16.msra.mxu0 0
    %8947 = vmatprep.subr.bf16.mxu0 0
    %8948 = vmatpush1.bf16.msra.mxu0 0
    %8949 = vmatprep.subr.bf16.mxu0 0
    %8950 = vmatpush1.bf16.msra.mxu0 0
    %8951 = vmatprep.subr.bf16.mxu0 0
    %8952 = vmatpush1.bf16.msra.mxu0 0
    %8953 = vmatprep.subr.bf16.mxu0 0
    %8954 = vmatpush1.bf16.msra.mxu0 0
    %8955 = vmatprep.subr.bf16.mxu0 0
    %8956 = vmatpush1.bf16.msra.mxu0 0
    %8957 = vmatprep.subr.bf16.mxu0 0
    %8958 = vmatpush1.bf16.msra.mxu0 0
    %8959 = vmatprep.mubr.bf16.mxu0 0
    %8960 = vmatmul.mubr.bf16.gmra.mrb[0].mxu0 %v8300
    %v8961 = vpop.f32.mrb[0].mxu0
    %v8962 = vadd.f32 0.0, %v8961
    %v8963 = vpop.f32.mrb[0].mxu0
    %v8964 = vpop.f32.mrb[0].mxu0
    %v8965 = vpop.f32.mrb[0].mxu0
    %8966 = vdwg.mxu0
    %8967 = vmatprep.subr.bf16.mxu0 0
    %8968 = vmatpush1.bf16.msra.mxu0 %v7982
    %8969 = vmatprep.subr.bf16.mxu0 0
    %8970 = vmatpush1.bf16.msra.mxu0 0
    %8971 = vmatprep.subr.bf16.mxu0 0
    %8972 = vmatpush1.bf16.msra.mxu0 0
    %8973 = vmatprep.subr.bf16.mxu0 0
    %8974 = vmatpush1.bf16.msra.mxu0 0
    %8975 = vmatprep.subr.bf16.mxu0 0
    %8976 = vmatpush1.bf16.msra.mxu0 0
    %8977 = vmatprep.subr.bf16.mxu0 0
    %8978 = vmatpush1.bf16.msra.mxu0 0
    %8979 = vmatprep.subr.bf16.mxu0 0
    %8980 = vmatpush1.bf16.msra.mxu0 0
    %8981 = vmatprep.subr.bf16.mxu0 0
    %8982 = vmatpush1.bf16.msra.mxu0 0
    %8983 = vmatprep.subr.bf16.mxu0 0
    %8984 = vmatpush1.bf16.msra.mxu0 0
    %8985 = vmatprep.subr.bf16.mxu0 0
    %8986 = vmatpush1.bf16.msra.mxu0 0
    %8987 = vmatprep.subr.bf16.mxu0 0
    %8988 = vmatpush1.bf16.msra.mxu0 0
    %8989 = vmatprep.subr.bf16.mxu0 0
    %8990 = vmatpush1.bf16.msra.mxu0 0
    %8991 = vmatprep.subr.bf16.mxu0 0
    %8992 = vmatpush1.bf16.msra.mxu0 0
    %8993 = vmatprep.subr.bf16.mxu0 0
    %8994 = vmatpush1.bf16.msra.mxu0 0
    %8995 = vmatprep.subr.bf16.mxu0 0
    %8996 = vmatpush1.bf16.msra.mxu0 0
    %8997 = vmatprep.subr.bf16.mxu0 0
    %8998 = vmatpush1.bf16.msra.mxu0 0
    %8999 = vmatprep.mubr.bf16.mxu0 0
    %9000 = vmatmul.mubr.bf16.gmra.mrb[0].mxu0 %v8345
    %v9001 = vpop.f32.mrb[0].mxu0
    %v9002 = vadd.f32 0.0, %v9001
    %v9003 = vpop.f32.mrb[0].mxu0
    %v9004 = vpop.f32.mrb[0].mxu0
    %v9005 = vpop.f32.mrb[0].mxu0
    %9006 = vdwg.mxu0
    %9008 = vrot.lane.b32.xlu0 %v8722, 32
    %v9009 = vpop.permute.xlu0 %9008
    %9012 = vrot.lane.b32.xlu0 %v8762, 64
    %v9013 = vpop.permute.xlu0 %9012
    %9016 = vrot.lane.b32.xlu0 %v8802, 96
    %v9017 = vpop.permute.xlu0 %9016
    %9020 = vrot.lane.b32.xlu0 %v8882, 32
    %v9021 = vpop.permute.xlu0 %9020
    %9024 = vrot.lane.b32.xlu0 %v8922, 64
    %v9025 = vpop.permute.xlu0 %9024
    %9028 = vrot.lane.b32.xlu0 %v8962, 96
    %v9029 = vpop.permute.xlu0 %9028
    %v9031 = vsel %vm3769, %v8682, %v9009
    %v9032 = vsel %vm290, %v9031, %v9013
    %v9033 = vsel %vm3840, %v9032, %v9017
    %v9034 = vsel %vm3769, %v8842, %v9021
    %v9035 = vsel %vm290, %v9034, %v9025
    %v9036 = vsel %vm3840, %v9035, %v9029
    %v9037 = vpack.c.bf16 %v9033, %v9033
    %v9038 = vpack.c.bf16 %v9036, %v9036
    %v9039 = vpack.c.bf16 %v9002, %v9002
    %v9041 = vsel %vm3769, %v9039, 0
    %9043 = vmatprep.subr.bf16.mxu0 0
    %9044 = vmatpush1.bf16.msra.mxu0 %v8528
    %9045 = vmatprep.subr.bf16.mxu0 0
    %9046 = vmatpush1.bf16.msra.mxu0 %v8529
    %9047 = vmatprep.subr.bf16.mxu0 0
    %9048 = vmatpush1.bf16.msra.mxu0 %v8530
    %9049 = vmatprep.subr.bf16.mxu0 0
    %9050 = vmatpush1.bf16.msra.mxu0 %v8531
    %9051 = vmatprep.subr.bf16.mxu0 0
    %9052 = vmatpush1.bf16.msra.mxu0 %v8532
    %9053 = vmatprep.subr.bf16.mxu0 0
    %9054 = vmatpush1.bf16.msra.mxu0 %v8533
    %9055 = vmatprep.subr.bf16.mxu0 0
    %9056 = vmatpush1.bf16.msra.mxu0 %v8534
    %9057 = vmatprep.subr.bf16.mxu0 0
    %9058 = vmatpush1.bf16.msra.mxu0 %v8535
    %9059 = vmatprep.subr.bf16.mxu0 0
    %9060 = vmatpush1.bf16.msra.mxu0 %v8536
    %9061 = vmatprep.subr.bf16.mxu0 0
    %9062 = vmatpush1.bf16.msra.mxu0 %v8537
    %9063 = vmatprep.subr.bf16.mxu0 0
    %9064 = vmatpush1.bf16.msra.mxu0 %v8538
    %9065 = vmatprep.subr.bf16.mxu0 0
    %9066 = vmatpush1.bf16.msra.mxu0 %v8539
    %9067 = vmatprep.subr.bf16.mxu0 0
    %9068 = vmatpush1.bf16.msra.mxu0 %v8540
    %9069 = vmatprep.subr.bf16.mxu0 0
    %9070 = vmatpush1.bf16.msra.mxu0 %v8541
    %9071 = vmatprep.subr.bf16.mxu0 0
    %9072 = vmatpush1.bf16.msra.mxu0 %v8542
    %9073 = vmatprep.subr.bf16.mxu0 0
    %9074 = vmatpush1.bf16.msra.mxu0 %v8543
    %9075 = vmatprep.mubr.bf16.mxu0 %v9038
    %9076 = vmatmul.mubr.bf16.gmra.mrb[0].mxu0 %v9037
    %v9077 = vpop.f32.mrb[0].mxu0
    %v9078 = vadd.f32 0.0, %v9077
    %v9079 = vpop.f32.mrb[0].mxu0
    %v9080 = vpop.f32.mrb[0].mxu0
    %v9081 = vpop.f32.mrb[0].mxu0
    %9082 = vdwg.mxu0
    %9083 = vmatprep.subr.bf16.mxu0 0
    %9084 = vmatpush1.bf16.msra.mxu0 %v8544
    %9085 = vmatprep.subr.bf16.mxu0 0
    %9086 = vmatpush1.bf16.msra.mxu0 %v8545
    %9087 = vmatprep.subr.bf16.mxu0 0
    %9088 = vmatpush1.bf16.msra.mxu0 0
    %9089 = vmatprep.subr.bf16.mxu0 0
    %9090 = vmatpush1.bf16.msra.mxu0 0
    %9091 = vmatprep.subr.bf16.mxu0 0
    %9092 = vmatpush1.bf16.msra.mxu0 0
    %9093 = vmatprep.subr.bf16.mxu0 0
    %9094 = vmatpush1.bf16.msra.mxu0 0
    %9095 = vmatprep.subr.bf16.mxu0 0
    %9096 = vmatpush1.bf16.msra.mxu0 0
    %9097 = vmatprep.subr.bf16.mxu0 0
    %9098 = vmatpush1.bf16.msra.mxu0 0
    %9099 = vmatprep.subr.bf16.mxu0 0
    %9100 = vmatpush1.bf16.msra.mxu0 0
    %9101 = vmatprep.subr.bf16.mxu0 0
    %9102 = vmatpush1.bf16.msra.mxu0 0
    %9103 = vmatprep.subr.bf16.mxu0 0
    %9104 = vmatpush1.bf16.msra.mxu0 0
    %9105 = vmatprep.subr.bf16.mxu0 0
    %9106 = vmatpush1.bf16.msra.mxu0 0
    %9107 = vmatprep.subr.bf16.mxu0 0
    %9108 = vmatpush1.bf16.msra.mxu0 0
    %9109 = vmatprep.subr.bf16.mxu0 0
    %9110 = vmatpush1.bf16.msra.mxu0 0
    %9111 = vmatprep.subr.bf16.mxu0 0
    %9112 = vmatpush1.bf16.msra.mxu0 0
    %9113 = vmatprep.subr.bf16.mxu0 0
    %9114 = vmatpush1.bf16.msra.mxu0 0
    %9115 = vmatprep.mubr.bf16.mxu0 0
    %9116 = vmatmul.mubr.bf16.gmra.mrb[0].mxu0 %v9041
    %v9117 = vpop.f32.mrb[0].mxu0
    %v9118 = vadd.f32 %v9078, %v9117
    %v9119 = vpop.f32.mrb[0].mxu0
    %v9120 = vpop.f32.mrb[0].mxu0
    %v9121 = vpop.f32.mrb[0].mxu0
    %9122 = vdwg.mxu0
    %v9124 = vrot.slane %v9118, 7
    %vm9126 = vcmask 1040384
    %v9127 = vsel %vm9126, %v8642, %v9124
    %v9128 = vsub.f32 0.0, %v9127
    %v9129 = vmul.f32 %v9128, 1.442695
    %v9130 = vpow.pop %v9129
    %v9131 = vadd.f32 %v9130, 1.0
    %v9132 = vrcp.pop %v9131
    %v9133 = vmul.f32 1.0, %v9132
    %vm9134 = vcmask 123904
    %9135 = vst.msk [vmem:[#allocation2] sm:$0x3] %vm9134, %v9133
    // Predicated region
    $region38: #{encoder_forward.1} parent=1 // pred_check
      _
    $region39: #{encoder_forward.1} parent=1 // pred_check_branch
      %9137 = sbr.rel (0) target = $region41
    $region40: #{encoder_forward.1} parent=1 // pred_region
      %s9139 = ssub.s32 32, 32
      %9140 = vsyncadd [#allocation3], %s9139
      %s9142 = sshll.u32 [#allocation2], 4
      %s9143 = int_to_ptr.vmem [resolvable:$true] %s9142
      %9145 = dma.vmem_to_hbm [thread:$0]  %s9143, 32, %s9, [#allocation3]
    $region41: #{encoder_forward.1} parent=1 // pred_fallthru
      _
    // Predicated region
    $region42: #{encoder_forward.1} parent=1 // pred_check
      _
    $region43: #{encoder_forward.1} parent=1 // pred_check_branch
      %9147 = sbr.rel (0) target = $region45
    $region44: #{encoder_forward.1} parent=1 // pred_region
      %9148 = dma.done [#allocation3], 32
    $region45: #{encoder_forward.1} parent=1 // pred_fallthru
      _
    %9149 = vsyncpa [#allocation3], 1

</llo_original>
